<compile_context>
chip_gen: v7x
topology: tpu7x:2x2x1
jax: 0.10.0
libtpu: 0.0.40
codegen_flags: <defaults>
</compile_context>

<pallas_src>
import numpy as np
import jax
import jax.numpy as jnp
from jax import lax
from jax.experimental import pallas as pl
from jax.experimental.pallas import tpu as pltpu

# ---- small synthetic dimensions ------------------------------------------
TEXT_DIM   = 16            # text_feature_dim
ENC_HIDDEN = 32            # stands in for the hard-coded 1873
AUDIO_DIM  = ENC_HIDDEN    # audio_feature_dim (must match encoder hidden)
HIDDEN_DIM = 32            # hidden_dim
BATCH = 8                  # >= 8 keeps all VPU/EUP sublanes busy
SEQ   = 8
LANE  = 128                # output lane-padding target


# ---------------------------------------------------------------------------
# Fused Pallas kernel: 4 LSTM layers (wavefront) + Linear head in one launch
# ---------------------------------------------------------------------------
def _fused_kernel(x_ref,
                  wih1, whh1, b1, wih2, whh2, b2,
                  wih3, whh3, b3, wih4, whh4, b4,
                  wlin, blin,
                  out_ref):
    """All refs whole-array in VMEM.

      x_ref   (T, B, TEXT_DIM)        time-major input
      wih_l   (Din, 4H)  whh_l (H, 4H)  b_l (1, 4H)   per LSTM layer
              (g-gate columns pre-scaled by 2 in the wrapper)
      wlin    (H, OUT_PAD)  blin (1, OUT_PAD)          zero-padded head
      out_ref (T, B, OUT_PAD)         time-major padded output
    """
    T, B, _ = x_ref.shape
    L = 4

    # ---- hoisted loads (loop invariant) -----------------------------------
    wihs = (wih1[...], wih2[...], wih3[...], wih4[...])
    whhs = (whh1[...], whh2[...], whh3[...], whh4[...])
    biases = (b1[...], b2[...], b3[...], b4[...])
    wl = wlin[...]
    bl = blin[...]
    Hs = [w.shape[0] for w in whhs]

    # g-gate lane mask, built once per distinct hidden size.
    masks = {}
    for H in set(Hs):
        lane = lax.broadcasted_iota(jnp.int32, (B, 4 * H), 1)
        masks[H] = jnp.logical_and(lane >= 2 * H, lane < 3 * H)

    x_all = x_ref[...]                                   # (T, B, D)

    # Recurrent state lives entirely in values (vregs) — no scratch.
    h = [jnp.zeros((B, Hs[l]), jnp.float32) for l in range(L)]
    c = [jnp.zeros((B, Hs[l]), jnp.float32) for l in range(L)]

    # Diagonal wavefront: at diagonal d, layer l processes timestep t = d - l.
    # Layers are visited high->low so layer l reads layer l-1's output from
    # the previous diagonal (same timestep) before layer l-1 overwrites it.
    for d in range(T + L - 1):
        for l in reversed(range(L)):
            t = d - l
            if not (0 <= t < T):
                continue
            H = Hs[l]
            x_t = x_all[t] if l == 0 else h[l - 1]        # (B, Din)

            # Input projection (off the recurrence critical path) + recurrent
            # matmul.  g-gate columns are pre-scaled by 2, so a single
            # sigmoid pass covers all four gates.
            gates = (jnp.dot(x_t, wihs[l], preferred_element_type=jnp.float32)
                     + biases[l]
                     + jnp.dot(h[l], whhs[l],
                               preferred_element_type=jnp.float32))  # (B, 4H)
            s = jax.nn.sigmoid(gates)                    # single EUP pass
            act = jnp.where(masks[H], 2.0 * s - 1.0, s)  # tanh(z)=2*sigm(2z)-1

            i = act[:, 0 * H:1 * H]
            f = act[:, 1 * H:2 * H]
            g = act[:, 2 * H:3 * H]
            o = act[:, 3 * H:4 * H]
            c[l] = f * c[l] + i * g
            h[l] = o * jnp.tanh(c[l])

            # Top layer: apply the Linear head immediately and store one
            # lane-dense (B, OUT_PAD=128) slab (unmasked vst).
            if l == L - 1:
                out_ref[t] = (jnp.dot(h[l], wl,
                                      preferred_element_type=jnp.float32)
                              + bl)


def fused_forward_tm(x_tm, kparams):
    """Runs the fused kernel on a time-major (T, B, TEXT_DIM) input."""
    T, B, _ = x_tm.shape
    flat_args = [x_tm]
    for layer in kparams["layers"]:
        flat_args += [layer["w_ih_t"], layer["w_hh_t"], layer["bias"]]
    flat_args += [kparams["lin_w_t"], kparams["lin_b"]]
    out_pad = kparams["lin_w_t"].shape[1]

    return pl.pallas_call(
        _fused_kernel,
        out_shape=jax.ShapeDtypeStruct((T, B, out_pad), jnp.float32),
        in_specs=[pl.BlockSpec(memory_space=pltpu.MemorySpace.VMEM)]
        * len(flat_args),
        out_specs=pl.BlockSpec(memory_space=pltpu.MemorySpace.VMEM),
    )(*flat_args)


# ---------------------------------------------------------------------------
# Parameter construction (deterministic, PyTorch-style uniform init)
# ---------------------------------------------------------------------------
def _init_lstm(key, input_size, hidden_size, num_layers):
    layers = []
    bound = 1.0 / np.sqrt(hidden_size)
    for l in range(num_layers):
        d_in = input_size if l == 0 else hidden_size
        key, k1, k2, k3, k4 = jax.random.split(key, 5)
        w_ih = jax.random.uniform(k1, (4 * hidden_size, d_in), jnp.float32, -bound, bound)
        w_hh = jax.random.uniform(k2, (4 * hidden_size, hidden_size), jnp.float32, -bound, bound)
        b_ih = jax.random.uniform(k3, (4 * hidden_size,), jnp.float32, -bound, bound)
        b_hh = jax.random.uniform(k4, (4 * hidden_size,), jnp.float32, -bound, bound)
        layers.append(dict(w_ih_t=w_ih.T, w_hh_t=w_hh.T,
                           bias=(b_ih + b_hh).reshape(1, -1)))
    return key, layers


def init_params(key):
    key, enc = _init_lstm(key, TEXT_DIM, ENC_HIDDEN, num_layers=2)
    key, dec = _init_lstm(key, AUDIO_DIM, HIDDEN_DIM, num_layers=2)
    bound = 1.0 / np.sqrt(HIDDEN_DIM)
    key, k1, k2 = jax.random.split(key, 3)
    lin_w = jax.random.uniform(k1, (AUDIO_DIM, HIDDEN_DIM), jnp.float32, -bound, bound)
    lin_b = jax.random.uniform(k2, (AUDIO_DIM,), jnp.float32, -bound, bound)
    return dict(text_encoder=enc, audio_decoder=dec,
                lin_w_t=lin_w.T, lin_b=lin_b.reshape(1, -1))


def _prepare_kernel_params(params):
    """Pre-scale g-gate columns by 2 (single-sigmoid gate trick) and zero-pad
    the head to a lane-dense 128-wide output."""
    layers = []
    for layer in params["text_encoder"] + params["audio_decoder"]:
        H = layer["w_hh_t"].shape[0]
        scale = jnp.ones((4 * H,), jnp.float32).at[2 * H:3 * H].set(2.0)
        layers.append(dict(w_ih_t=layer["w_ih_t"] * scale,
                           w_hh_t=layer["w_hh_t"] * scale,
                           bias=layer["bias"] * scale))
    lin_w_t = params["lin_w_t"]          # (H, AUDIO_DIM)
    lin_b = params["lin_b"]              # (1, AUDIO_DIM)
    H, A = lin_w_t.shape
    out_pad = ((A + LANE - 1) // LANE) * LANE
    lin_w_pad = jnp.zeros((H, out_pad), jnp.float32).at[:, :A].set(lin_w_t)
    lin_b_pad = jnp.zeros((1, out_pad), jnp.float32).at[:, :A].set(lin_b)
    return dict(layers=layers, lin_w_t=lin_w_pad, lin_b=lin_b_pad)


# ---------------------------------------------------------------------------
# Forward pass (wrapper glue around the single fused Pallas kernel)
# ---------------------------------------------------------------------------
@jax.jit
def music_generation_forward(text_features, params):
    # text_features: (B, T, TEXT_DIM), batch_first like PyTorch
    out_dim = params["lin_b"].shape[1]
    kparams = _prepare_kernel_params(params)
    # TODO(synk): at real size fold these transposes into BlockSpec index_maps
    # (or accept time-major I/O); at synthetic size they are noise.
    x_tm = jnp.transpose(text_features, (1, 0, 2))        # (T, B, D)
    y_tm = fused_forward_tm(x_tm, kparams)                # (T, B, OUT_PAD)
    y = jnp.transpose(y_tm, (1, 0, 2))[:, :, :out_dim]    # (B, T, AUDIO_DIM)
    return y


# ---------------------------------------------------------------------------
# Pure-JAX reference (faithful LSTM, for correctness check)
# ---------------------------------------------------------------------------
def _ref_lstm_layer(x_tm, w_ih_t, w_hh_t, bias):
    T, B, _ = x_tm.shape
    H = w_hh_t.shape[0]

    def step(carry, x_t):
        h, c = carry
        gates = x_t @ w_ih_t + h @ w_hh_t + bias
        i = jax.nn.sigmoid(gates[:, :H])
        f = jax.nn.sigmoid(gates[:, H:2 * H])
        g = jnp.tanh(gates[:, 2 * H:3 * H])
        o = jax.nn.sigmoid(gates[:, 3 * H:])
        c = f * c + i * g
        h = o * jnp.tanh(c)
        return (h, c), h

    init = (jnp.zeros((B, H), jnp.float32), jnp.zeros((B, H), jnp.float32))
    _, hs = lax.scan(step, init, x_tm)
    return hs


def reference_forward(text_features, params):
    x = jnp.transpose(text_features, (1, 0, 2))
    for layer in params["text_encoder"]:
        x = _ref_lstm_layer(x, layer["w_ih_t"], layer["w_hh_t"], layer["bias"])
    for layer in params["audio_decoder"]:
        x = _ref_lstm_layer(x, layer["w_ih_t"], layer["w_hh_t"], layer["bias"])
    y = x @ params["lin_w_t"] + params["lin_b"]
    return jnp.transpose(y, (1, 0, 2))


# ---------------------------------------------------------------------------
if __name__ == "__main__":
    key = jax.random.PRNGKey(0)
    key, pkey, xkey = jax.random.split(key, 3)
    params = init_params(pkey)
    text_features = jax.random.normal(xkey, (BATCH, SEQ, TEXT_DIM), jnp.float32)

    out = music_generation_forward(text_features, params)
    out = jax.block_until_ready(out)
    assert out.shape == (BATCH, SEQ, AUDIO_DIM), out.shape

    ref = jax.block_until_ready(reference_forward(text_features, params))
    np.testing.assert_allclose(np.asarray(out), np.asarray(ref), rtol=2e-5, atol=2e-5)

    print("KERNEL_OK")
</pallas_src>

<mosaic_0001>
module attributes {stable_mosaic.version = 11 : i64} {
  func.func @_fused_kernel(%arg0: memref<8x8x16xf32, #tpu.memory_space<vmem>>, %arg1: memref<16x128xf32, #tpu.memory_space<vmem>>, %arg2: memref<32x128xf32, #tpu.memory_space<vmem>>, %arg3: memref<1x128xf32, #tpu.memory_space<vmem>>, %arg4: memref<32x128xf32, #tpu.memory_space<vmem>>, %arg5: memref<32x128xf32, #tpu.memory_space<vmem>>, %arg6: memref<1x128xf32, #tpu.memory_space<vmem>>, %arg7: memref<32x128xf32, #tpu.memory_space<vmem>>, %arg8: memref<32x128xf32, #tpu.memory_space<vmem>>, %arg9: memref<1x128xf32, #tpu.memory_space<vmem>>, %arg10: memref<32x128xf32, #tpu.memory_space<vmem>>, %arg11: memref<32x128xf32, #tpu.memory_space<vmem>>, %arg12: memref<1x128xf32, #tpu.memory_space<vmem>>, %arg13: memref<32x128xf32, #tpu.memory_space<vmem>>, %arg14: memref<1x128xf32, #tpu.memory_space<vmem>>, %arg15: memref<8x8x128xf32, #tpu.memory_space<vmem>>) attributes {dimension_semantics = [], scalar_prefetch = 0 : i64, scratch_operands = 0 : i64, tpu.core_type = #tpu.core_type<tc>} {
    %c0 = arith.constant 0 : index
    %c0_0 = arith.constant 0 : index
    %0 = vector.load %arg1[%c0, %c0_0] : memref<16x128xf32, #tpu.memory_space<vmem>>, vector<16x128xf32>
    %c0_1 = arith.constant 0 : index
    %c0_2 = arith.constant 0 : index
    %1 = vector.load %arg4[%c0_1, %c0_2] : memref<32x128xf32, #tpu.memory_space<vmem>>, vector<32x128xf32>
    %c0_3 = arith.constant 0 : index
    %c0_4 = arith.constant 0 : index
    %2 = vector.load %arg7[%c0_3, %c0_4] : memref<32x128xf32, #tpu.memory_space<vmem>>, vector<32x128xf32>
    %c0_5 = arith.constant 0 : index
    %c0_6 = arith.constant 0 : index
    %3 = vector.load %arg10[%c0_5, %c0_6] : memref<32x128xf32, #tpu.memory_space<vmem>>, vector<32x128xf32>
    %c0_7 = arith.constant 0 : index
    %c0_8 = arith.constant 0 : index
    %4 = vector.load %arg2[%c0_7, %c0_8] : memref<32x128xf32, #tpu.memory_space<vmem>>, vector<32x128xf32>
    %c0_9 = arith.constant 0 : index
    %c0_10 = arith.constant 0 : index
    %5 = vector.load %arg5[%c0_9, %c0_10] : memref<32x128xf32, #tpu.memory_space<vmem>>, vector<32x128xf32>
    %c0_11 = arith.constant 0 : index
    %c0_12 = arith.constant 0 : index
    %6 = vector.load %arg8[%c0_11, %c0_12] : memref<32x128xf32, #tpu.memory_space<vmem>>, vector<32x128xf32>
    %c0_13 = arith.constant 0 : index
    %c0_14 = arith.constant 0 : index
    %7 = vector.load %arg11[%c0_13, %c0_14] : memref<32x128xf32, #tpu.memory_space<vmem>>, vector<32x128xf32>
    %c0_15 = arith.constant 0 : index
    %c0_16 = arith.constant 0 : index
    %8 = vector.load %arg3[%c0_15, %c0_16] : memref<1x128xf32, #tpu.memory_space<vmem>>, vector<1x128xf32>
    %c0_17 = arith.constant 0 : index
    %c0_18 = arith.constant 0 : index
    %9 = vector.load %arg6[%c0_17, %c0_18] : memref<1x128xf32, #tpu.memory_space<vmem>>, vector<1x128xf32>
    %c0_19 = arith.constant 0 : index
    %c0_20 = arith.constant 0 : index
    %10 = vector.load %arg9[%c0_19, %c0_20] : memref<1x128xf32, #tpu.memory_space<vmem>>, vector<1x128xf32>
    %c0_21 = arith.constant 0 : index
    %c0_22 = arith.constant 0 : index
    %11 = vector.load %arg12[%c0_21, %c0_22] : memref<1x128xf32, #tpu.memory_space<vmem>>, vector<1x128xf32>
    %c0_23 = arith.constant 0 : index
    %c0_24 = arith.constant 0 : index
    %12 = vector.load %arg13[%c0_23, %c0_24] : memref<32x128xf32, #tpu.memory_space<vmem>>, vector<32x128xf32>
    %c0_25 = arith.constant 0 : index
    %c0_26 = arith.constant 0 : index
    %13 = vector.load %arg14[%c0_25, %c0_26] : memref<1x128xf32, #tpu.memory_space<vmem>>, vector<1x128xf32>
    %14 = tpu.iota {dimensions = array<i32: 1>} : vector<8x128xi32>
    %c64_i32 = arith.constant 64 : i32
    %15 = vector.broadcast %c64_i32 : i32 to vector<8x128xi32>
    %16 = arith.cmpi sge, %14, %15 : vector<8x128xi32>
    %c96_i32 = arith.constant 96 : i32
    %17 = vector.broadcast %c96_i32 : i32 to vector<8x128xi32>
    %18 = arith.cmpi slt, %14, %17 : vector<8x128xi32>
    %19 = arith.andi %16, %18 : vector<8x128xi1>
    %c0_27 = arith.constant 0 : index
    %c0_28 = arith.constant 0 : index
    %c0_29 = arith.constant 0 : index
    %20 = vector.load %arg0[%c0_27, %c0_28, %c0_29] : memref<8x8x16xf32, #tpu.memory_space<vmem>>, vector<8x8x16xf32>
    %cst = arith.constant 0.000000e+00 : f32
    %21 = vector.broadcast %cst : f32 to vector<8x32xf32>
    %cst_30 = arith.constant 0.000000e+00 : f32
    %22 = vector.broadcast %cst_30 : f32 to vector<8x32xf32>
    %cst_31 = arith.constant 0.000000e+00 : f32
    %23 = vector.broadcast %cst_31 : f32 to vector<8x32xf32>
    %cst_32 = arith.constant 0.000000e+00 : f32
    %24 = vector.broadcast %cst_32 : f32 to vector<8x32xf32>
    %cst_33 = arith.constant 0.000000e+00 : f32
    %25 = vector.broadcast %cst_33 : f32 to vector<8x32xf32>
    %cst_34 = arith.constant 0.000000e+00 : f32
    %26 = vector.broadcast %cst_34 : f32 to vector<8x32xf32>
    %cst_35 = arith.constant 0.000000e+00 : f32
    %27 = vector.broadcast %cst_35 : f32 to vector<8x32xf32>
    %cst_36 = arith.constant 0.000000e+00 : f32
    %28 = vector.broadcast %cst_36 : f32 to vector<8x32xf32>
    %29 = vector.extract_strided_slice %20 {offsets = [0, 0, 0], sizes = [1, 8, 16], strides = [1, 1, 1]} : vector<8x8x16xf32> to vector<1x8x16xf32>
    %30 = vector.shape_cast %29 : vector<1x8x16xf32> to vector<8x16xf32>
    %cst_37 = arith.constant dense<0.000000e+00> : vector<8x128xf32>
    %31 = tpu.matmul %30, %0, %cst_37 {dimension_numbers = #tpu.dot_dimension_numbers<[1], [0], [0], [1], [0, 0, 1, 1], [], []>} : vector<8x16xf32>, vector<16x128xf32>, vector<8x128xf32> -> vector<8x128xf32>
    %32 = vector.broadcast %8 : vector<1x128xf32> to vector<8x128xf32>
    %33 = arith.addf %31, %32 : vector<8x128xf32>
    %cst_38 = arith.constant dense<0.000000e+00> : vector<8x128xf32>
    %34 = tpu.matmul %21, %4, %cst_38 {dimension_numbers = #tpu.dot_dimension_numbers<[1], [0], [0], [1], [0, 0, 1, 1], [], []>} : vector<8x32xf32>, vector<32x128xf32>, vector<8x128xf32> -> vector<8x128xf32>
    %35 = arith.addf %33, %34 : vector<8x128xf32>
    %36 = arith.negf %35 : vector<8x128xf32>
    %37 = math.exp %36 : vector<8x128xf32>
    %cst_39 = arith.constant 1.000000e+00 : f32
    %38 = vector.broadcast %cst_39 : f32 to vector<8x128xf32>
    %39 = arith.addf %38, %37 : vector<8x128xf32>
    %40 = arith.divf %38, %39 : vector<8x128xf32>
    %cst_40 = arith.constant 2.000000e+00 : f32
    %41 = vector.broadcast %cst_40 : f32 to vector<8x128xf32>
    %42 = arith.mulf %41, %40 : vector<8x128xf32>
    %cst_41 = arith.constant 1.000000e+00 : f32
    %43 = vector.broadcast %cst_41 : f32 to vector<8x128xf32>
    %44 = arith.subf %42, %43 : vector<8x128xf32>
    %45 = arith.select %19, %44, %40 : vector<8x128xi1>, vector<8x128xf32>
    %46 = vector.extract_strided_slice %45 {offsets = [0, 0], sizes = [8, 32], strides = [1, 1]} : vector<8x128xf32> to vector<8x32xf32>
    %47 = vector.extract_strided_slice %45 {offsets = [0, 32], sizes = [8, 32], strides = [1, 1]} : vector<8x128xf32> to vector<8x32xf32>
    %48 = vector.extract_strided_slice %45 {offsets = [0, 64], sizes = [8, 32], strides = [1, 1]} : vector<8x128xf32> to vector<8x32xf32>
    %49 = vector.extract_strided_slice %45 {offsets = [0, 96], sizes = [8, 32], strides = [1, 1]} : vector<8x128xf32> to vector<8x32xf32>
    %50 = arith.mulf %47, %25 : vector<8x32xf32>
    %51 = arith.mulf %46, %48 : vector<8x32xf32>
    %52 = arith.addf %50, %51 : vector<8x32xf32>
    %53 = math.tanh %52 : vector<8x32xf32>
    %54 = arith.mulf %49, %53 : vector<8x32xf32>
    %cst_42 = arith.constant dense<0.000000e+00> : vector<8x128xf32>
    %55 = tpu.matmul %54, %1, %cst_42 {dimension_numbers = #tpu.dot_dimension_numbers<[1], [0], [0], [1], [0, 0, 1, 1], [], []>} : vector<8x32xf32>, vector<32x128xf32>, vector<8x128xf32> -> vector<8x128xf32>
    %56 = vector.broadcast %9 : vector<1x128xf32> to vector<8x128xf32>
    %57 = arith.addf %55, %56 : vector<8x128xf32>
    %cst_43 = arith.constant dense<0.000000e+00> : vector<8x128xf32>
    %58 = tpu.matmul %22, %5, %cst_43 {dimension_numbers = #tpu.dot_dimension_numbers<[1], [0], [0], [1], [0, 0, 1, 1], [], []>} : vector<8x32xf32>, vector<32x128xf32>, vector<8x128xf32> -> vector<8x128xf32>
    %59 = arith.addf %57, %58 : vector<8x128xf32>
    %60 = arith.negf %59 : vector<8x128xf32>
    %61 = math.exp %60 : vector<8x128xf32>
    %cst_44 = arith.constant 1.000000e+00 : f32
    %62 = vector.broadcast %cst_44 : f32 to vector<8x128xf32>
    %63 = arith.addf %62, %61 : vector<8x128xf32>
    %64 = arith.divf %62, %63 : vector<8x128xf32>
    %cst_45 = arith.constant 2.000000e+00 : f32
    %65 = vector.broadcast %cst_45 : f32 to vector<8x128xf32>
    %66 = arith.mulf %65, %64 : vector<8x128xf32>
    %cst_46 = arith.constant 1.000000e+00 : f32
    %67 = vector.broadcast %cst_46 : f32 to vector<8x128xf32>
    %68 = arith.subf %66, %67 : vector<8x128xf32>
    %69 = arith.select %19, %68, %64 : vector<8x128xi1>, vector<8x128xf32>
    %70 = vector.extract_strided_slice %69 {offsets = [0, 0], sizes = [8, 32], strides = [1, 1]} : vector<8x128xf32> to vector<8x32xf32>
    %71 = vector.extract_strided_slice %69 {offsets = [0, 32], sizes = [8, 32], strides = [1, 1]} : vector<8x128xf32> to vector<8x32xf32>
    %72 = vector.extract_strided_slice %69 {offsets = [0, 64], sizes = [8, 32], strides = [1, 1]} : vector<8x128xf32> to vector<8x32xf32>
    %73 = vector.extract_strided_slice %69 {offsets = [0, 96], sizes = [8, 32], strides = [1, 1]} : vector<8x128xf32> to vector<8x32xf32>
    %74 = arith.mulf %71, %26 : vector<8x32xf32>
    %75 = arith.mulf %70, %72 : vector<8x32xf32>
    %76 = arith.addf %74, %75 : vector<8x32xf32>
    %77 = math.tanh %76 : vector<8x32xf32>
    %78 = arith.mulf %73, %77 : vector<8x32xf32>
    %79 = vector.extract_strided_slice %20 {offsets = [1, 0, 0], sizes = [1, 8, 16], strides = [1, 1, 1]} : vector<8x8x16xf32> to vector<1x8x16xf32>
    %80 = vector.shape_cast %79 : vector<1x8x16xf32> to vector<8x16xf32>
    %cst_47 = arith.constant dense<0.000000e+00> : vector<8x128xf32>
    %81 = tpu.matmul %80, %0, %cst_47 {dimension_numbers = #tpu.dot_dimension_numbers<[1], [0], [0], [1], [0, 0, 1, 1], [], []>} : vector<8x16xf32>, vector<16x128xf32>, vector<8x128xf32> -> vector<8x128xf32>
    %82 = vector.broadcast %8 : vector<1x128xf32> to vector<8x128xf32>
    %83 = arith.addf %81, %82 : vector<8x128xf32>
    %cst_48 = arith.constant dense<0.000000e+00> : vector<8x128xf32>
    %84 = tpu.matmul %54, %4, %cst_48 {dimension_numbers = #tpu.dot_dimension_numbers<[1], [0], [0], [1], [0, 0, 1, 1], [], []>} : vector<8x32xf32>, vector<32x128xf32>, vector<8x128xf32> -> vector<8x128xf32>
    %85 = arith.addf %83, %84 : vector<8x128xf32>
    %86 = arith.negf %85 : vector<8x128xf32>
    %87 = math.exp %86 : vector<8x128xf32>
    %cst_49 = arith.constant 1.000000e+00 : f32
    %88 = vector.broadcast %cst_49 : f32 to vector<8x128xf32>
    %89 = arith.addf %88, %87 : vector<8x128xf32>
    %90 = arith.divf %88, %89 : vector<8x128xf32>
    %cst_50 = arith.constant 2.000000e+00 : f32
    %91 = vector.broadcast %cst_50 : f32 to vector<8x128xf32>
    %92 = arith.mulf %91, %90 : vector<8x128xf32>
    %cst_51 = arith.constant 1.000000e+00 : f32
    %93 = vector.broadcast %cst_51 : f32 to vector<8x128xf32>
    %94 = arith.subf %92, %93 : vector<8x128xf32>
    %95 = arith.select %19, %94, %90 : vector<8x128xi1>, vector<8x128xf32>
    %96 = vector.extract_strided_slice %95 {offsets = [0, 0], sizes = [8, 32], strides = [1, 1]} : vector<8x128xf32> to vector<8x32xf32>
    %97 = vector.extract_strided_slice %95 {offsets = [0, 32], sizes = [8, 32], strides = [1, 1]} : vector<8x128xf32> to vector<8x32xf32>
    %98 = vector.extract_strided_slice %95 {offsets = [0, 64], sizes = [8, 32], strides = [1, 1]} : vector<8x128xf32> to vector<8x32xf32>
    %99 = vector.extract_strided_slice %95 {offsets = [0, 96], sizes = [8, 32], strides = [1, 1]} : vector<8x128xf32> to vector<8x32xf32>
    %100 = arith.mulf %97, %52 : vector<8x32xf32>
    %101 = arith.mulf %96, %98 : vector<8x32xf32>
    %102 = arith.addf %100, %101 : vector<8x32xf32>
    %103 = math.tanh %102 : vector<8x32xf32>
    %104 = arith.mulf %99, %103 : vector<8x32xf32>
    %cst_52 = arith.constant dense<0.000000e+00> : vector<8x128xf32>
    %105 = tpu.matmul %78, %2, %cst_52 {dimension_numbers = #tpu.dot_dimension_numbers<[1], [0], [0], [1], [0, 0, 1, 1], [], []>} : vector<8x32xf32>, vector<32x128xf32>, vector<8x128xf32> -> vector<8x128xf32>
    %106 = vector.broadcast %10 : vector<1x128xf32> to vector<8x128xf32>
    %107 = arith.addf %105, %106 : vector<8x128xf32>
    %cst_53 = arith.constant dense<0.000000e+00> : vector<8x128xf32>
    %108 = tpu.matmul %23, %6, %cst_53 {dimension_numbers = #tpu.dot_dimension_numbers<[1], [0], [0], [1], [0, 0, 1, 1], [], []>} : vector<8x32xf32>, vector<32x128xf32>, vector<8x128xf32> -> vector<8x128xf32>
    %109 = arith.addf %107, %108 : vector<8x128xf32>
    %110 = arith.negf %109 : vector<8x128xf32>
    %111 = math.exp %110 : vector<8x128xf32>
    %cst_54 = arith.constant 1.000000e+00 : f32
    %112 = vector.broadcast %cst_54 : f32 to vector<8x128xf32>
    %113 = arith.addf %112, %111 : vector<8x128xf32>
    %114 = arith.divf %112, %113 : vector<8x128xf32>
    %cst_55 = arith.constant 2.000000e+00 : f32
    %115 = vector.broadcast %cst_55 : f32 to vector<8x128xf32>
    %116 = arith.mulf %115, %114 : vector<8x128xf32>
    %cst_56 = arith.constant 1.000000e+00 : f32
    %117 = vector.broadcast %cst_56 : f32 to vector<8x128xf32>
    %118 = arith.subf %116, %117 : vector<8x128xf32>
    %119 = arith.select %19, %118, %114 : vector<8x128xi1>, vector<8x128xf32>
    %120 = vector.extract_strided_slice %119 {offsets = [0, 0], sizes = [8, 32], strides = [1, 1]} : vector<8x128xf32> to vector<8x32xf32>
    %121 = vector.extract_strided_slice %119 {offsets = [0, 32], sizes = [8, 32], strides = [1, 1]} : vector<8x128xf32> to vector<8x32xf32>
    %122 = vector.extract_strided_slice %119 {offsets = [0, 64], sizes = [8, 32], strides = [1, 1]} : vector<8x128xf32> to vector<8x32xf32>
    %123 = vector.extract_strided_slice %119 {offsets = [0, 96], sizes = [8, 32], strides = [1, 1]} : vector<8x128xf32> to vector<8x32xf32>
    %124 = arith.mulf %121, %27 : vector<8x32xf32>
    %125 = arith.mulf %120, %122 : vector<8x32xf32>
    %126 = arith.addf %124, %125 : vector<8x32xf32>
    %127 = math.tanh %126 : vector<8x32xf32>
    %128 = arith.mulf %123, %127 : vector<8x32xf32>
    %cst_57 = arith.constant dense<0.000000e+00> : vector<8x128xf32>
    %129 = tpu.matmul %104, %1, %cst_57 {dimension_numbers = #tpu.dot_dimension_numbers<[1], [0], [0], [1], [0, 0, 1, 1], [], []>} : vector<8x32xf32>, vector<32x128xf32>, vector<8x128xf32> -> vector<8x128xf32>
    %130 = vector.broadcast %9 : vector<1x128xf32> to vector<8x128xf32>
    %131 = arith.addf %129, %130 : vector<8x128xf32>
    %cst_58 = arith.constant dense<0.000000e+00> : vector<8x128xf32>
    %132 = tpu.matmul %78, %5, %cst_58 {dimension_numbers = #tpu.dot_dimension_numbers<[1], [0], [0], [1], [0, 0, 1, 1], [], []>} : vector<8x32xf32>, vector<32x128xf32>, vector<8x128xf32> -> vector<8x128xf32>
    %133 = arith.addf %131, %132 : vector<8x128xf32>
    %134 = arith.negf %133 : vector<8x128xf32>
    %135 = math.exp %134 : vector<8x128xf32>
    %cst_59 = arith.constant 1.000000e+00 : f32
    %136 = vector.broadcast %cst_59 : f32 to vector<8x128xf32>
    %137 = arith.addf %136, %135 : vector<8x128xf32>
    %138 = arith.divf %136, %137 : vector<8x128xf32>
    %cst_60 = arith.constant 2.000000e+00 : f32
    %139 = vector.broadcast %cst_60 : f32 to vector<8x128xf32>
    %140 = arith.mulf %139, %138 : vector<8x128xf32>
    %cst_61 = arith.constant 1.000000e+00 : f32
    %141 = vector.broadcast %cst_61 : f32 to vector<8x128xf32>
    %142 = arith.subf %140, %141 : vector<8x128xf32>
    %143 = arith.select %19, %142, %138 : vector<8x128xi1>, vector<8x128xf32>
    %144 = vector.extract_strided_slice %143 {offsets = [0, 0], sizes = [8, 32], strides = [1, 1]} : vector<8x128xf32> to vector<8x32xf32>
    %145 = vector.extract_strided_slice %143 {offsets = [0, 32], sizes = [8, 32], strides = [1, 1]} : vector<8x128xf32> to vector<8x32xf32>
    %146 = vector.extract_strided_slice %143 {offsets = [0, 64], sizes = [8, 32], strides = [1, 1]} : vector<8x128xf32> to vector<8x32xf32>
    %147 = vector.extract_strided_slice %143 {offsets = [0, 96], sizes = [8, 32], strides = [1, 1]} : vector<8x128xf32> to vector<8x32xf32>
    %148 = arith.mulf %145, %76 : vector<8x32xf32>
    %149 = arith.mulf %144, %146 : vector<8x32xf32>
    %150 = arith.addf %148, %149 : vector<8x32xf32>
    %151 = math.tanh %150 : vector<8x32xf32>
    %152 = arith.mulf %147, %151 : vector<8x32xf32>
    %153 = vector.extract_strided_slice %20 {offsets = [2, 0, 0], sizes = [1, 8, 16], strides = [1, 1, 1]} : vector<8x8x16xf32> to vector<1x8x16xf32>
    %154 = vector.shape_cast %153 : vector<1x8x16xf32> to vector<8x16xf32>
    %cst_62 = arith.constant dense<0.000000e+00> : vector<8x128xf32>
    %155 = tpu.matmul %154, %0, %cst_62 {dimension_numbers = #tpu.dot_dimension_numbers<[1], [0], [0], [1], [0, 0, 1, 1], [], []>} : vector<8x16xf32>, vector<16x128xf32>, vector<8x128xf32> -> vector<8x128xf32>
    %156 = vector.broadcast %8 : vector<1x128xf32> to vector<8x128xf32>
    %157 = arith.addf %155, %156 : vector<8x128xf32>
    %cst_63 = arith.constant dense<0.000000e+00> : vector<8x128xf32>
    %158 = tpu.matmul %104, %4, %cst_63 {dimension_numbers = #tpu.dot_dimension_numbers<[1], [0], [0], [1], [0, 0, 1, 1], [], []>} : vector<8x32xf32>, vector<32x128xf32>, vector<8x128xf32> -> vector<8x128xf32>
    %159 = arith.addf %157, %158 : vector<8x128xf32>
    %160 = arith.negf %159 : vector<8x128xf32>
    %161 = math.exp %160 : vector<8x128xf32>
    %cst_64 = arith.constant 1.000000e+00 : f32
    %162 = vector.broadcast %cst_64 : f32 to vector<8x128xf32>
    %163 = arith.addf %162, %161 : vector<8x128xf32>
    %164 = arith.divf %162, %163 : vector<8x128xf32>
    %cst_65 = arith.constant 2.000000e+00 : f32
    %165 = vector.broadcast %cst_65 : f32 to vector<8x128xf32>
    %166 = arith.mulf %165, %164 : vector<8x128xf32>
    %cst_66 = arith.constant 1.000000e+00 : f32
    %167 = vector.broadcast %cst_66 : f32 to vector<8x128xf32>
    %168 = arith.subf %166, %167 : vector<8x128xf32>
    %169 = arith.select %19, %168, %164 : vector<8x128xi1>, vector<8x128xf32>
    %170 = vector.extract_strided_slice %169 {offsets = [0, 0], sizes = [8, 32], strides = [1, 1]} : vector<8x128xf32> to vector<8x32xf32>
    %171 = vector.extract_strided_slice %169 {offsets = [0, 32], sizes = [8, 32], strides = [1, 1]} : vector<8x128xf32> to vector<8x32xf32>
    %172 = vector.extract_strided_slice %169 {offsets = [0, 64], sizes = [8, 32], strides = [1, 1]} : vector<8x128xf32> to vector<8x32xf32>
    %173 = vector.extract_strided_slice %169 {offsets = [0, 96], sizes = [8, 32], strides = [1, 1]} : vector<8x128xf32> to vector<8x32xf32>
    %174 = arith.mulf %171, %102 : vector<8x32xf32>
    %175 = arith.mulf %170, %172 : vector<8x32xf32>
    %176 = arith.addf %174, %175 : vector<8x32xf32>
    %177 = math.tanh %176 : vector<8x32xf32>
    %178 = arith.mulf %173, %177 : vector<8x32xf32>
    %cst_67 = arith.constant dense<0.000000e+00> : vector<8x128xf32>
    %179 = tpu.matmul %128, %3, %cst_67 {dimension_numbers = #tpu.dot_dimension_numbers<[1], [0], [0], [1], [0, 0, 1, 1], [], []>} : vector<8x32xf32>, vector<32x128xf32>, vector<8x128xf32> -> vector<8x128xf32>
    %180 = vector.broadcast %11 : vector<1x128xf32> to vector<8x128xf32>
    %181 = arith.addf %179, %180 : vector<8x128xf32>
    %cst_68 = arith.constant dense<0.000000e+00> : vector<8x128xf32>
    %182 = tpu.matmul %24, %7, %cst_68 {dimension_numbers = #tpu.dot_dimension_numbers<[1], [0], [0], [1], [0, 0, 1, 1], [], []>} : vector<8x32xf32>, vector<32x128xf32>, vector<8x128xf32> -> vector<8x128xf32>
    %183 = arith.addf %181, %182 : vector<8x128xf32>
    %184 = arith.negf %183 : vector<8x128xf32>
    %185 = math.exp %184 : vector<8x128xf32>
    %cst_69 = arith.constant 1.000000e+00 : f32
    %186 = vector.broadcast %cst_69 : f32 to vector<8x128xf32>
    %187 = arith.addf %186, %185 : vector<8x128xf32>
    %188 = arith.divf %186, %187 : vector<8x128xf32>
    %cst_70 = arith.constant 2.000000e+00 : f32
    %189 = vector.broadcast %cst_70 : f32 to vector<8x128xf32>
    %190 = arith.mulf %189, %188 : vector<8x128xf32>
    %cst_71 = arith.constant 1.000000e+00 : f32
    %191 = vector.broadcast %cst_71 : f32 to vector<8x128xf32>
    %192 = arith.subf %190, %191 : vector<8x128xf32>
    %193 = arith.select %19, %192, %188 : vector<8x128xi1>, vector<8x128xf32>
    %194 = vector.extract_strided_slice %193 {offsets = [0, 0], sizes = [8, 32], strides = [1, 1]} : vector<8x128xf32> to vector<8x32xf32>
    %195 = vector.extract_strided_slice %193 {offsets = [0, 32], sizes = [8, 32], strides = [1, 1]} : vector<8x128xf32> to vector<8x32xf32>
    %196 = vector.extract_strided_slice %193 {offsets = [0, 64], sizes = [8, 32], strides = [1, 1]} : vector<8x128xf32> to vector<8x32xf32>
    %197 = vector.extract_strided_slice %193 {offsets = [0, 96], sizes = [8, 32], strides = [1, 1]} : vector<8x128xf32> to vector<8x32xf32>
    %198 = arith.mulf %195, %28 : vector<8x32xf32>
    %199 = arith.mulf %194, %196 : vector<8x32xf32>
    %200 = arith.addf %198, %199 : vector<8x32xf32>
    %201 = math.tanh %200 : vector<8x32xf32>
    %202 = arith.mulf %197, %201 : vector<8x32xf32>
    %cst_72 = arith.constant dense<0.000000e+00> : vector<8x128xf32>
    %203 = tpu.matmul %202, %12, %cst_72 {dimension_numbers = #tpu.dot_dimension_numbers<[1], [0], [0], [1], [0, 0, 1, 1], [], []>} : vector<8x32xf32>, vector<32x128xf32>, vector<8x128xf32> -> vector<8x128xf32>
    %204 = vector.broadcast %13 : vector<1x128xf32> to vector<8x128xf32>
    %205 = arith.addf %203, %204 : vector<8x128xf32>
    %c0_73 = arith.constant 0 : index
    %c0_74 = arith.constant 0 : index
    %c0_75 = arith.constant 0 : index
    %206 = vector.load %arg15[%c0_73, %c0_74, %c0_75] : memref<8x8x128xf32, #tpu.memory_space<vmem>>, vector<1x8x128xf32>
    %207 = vector.shape_cast %206 : vector<1x8x128xf32> to vector<8x128xf32>
    %208 = vector.shape_cast %205 : vector<8x128xf32> to vector<1x8x128xf32>
    tpu.vector_store %arg15[%c0_73, %c0_74, %c0_75], %208 {strides = array<i32>} : memref<8x8x128xf32, #tpu.memory_space<vmem>>, vector<1x8x128xf32>,
    %cst_76 = arith.constant dense<0.000000e+00> : vector<8x128xf32>
    %209 = tpu.matmul %152, %2, %cst_76 {dimension_numbers = #tpu.dot_dimension_numbers<[1], [0], [0], [1], [0, 0, 1, 1], [], []>} : vector<8x32xf32>, vector<32x128xf32>, vector<8x128xf32> -> vector<8x128xf32>
    %210 = vector.broadcast %10 : vector<1x128xf32> to vector<8x128xf32>
    %211 = arith.addf %209, %210 : vector<8x128xf32>
    %cst_77 = arith.constant dense<0.000000e+00> : vector<8x128xf32>
    %212 = tpu.matmul %128, %6, %cst_77 {dimension_numbers = #tpu.dot_dimension_numbers<[1], [0], [0], [1], [0, 0, 1, 1], [], []>} : vector<8x32xf32>, vector<32x128xf32>, vector<8x128xf32> -> vector<8x128xf32>
    %213 = arith.addf %211, %212 : vector<8x128xf32>
    %214 = arith.negf %213 : vector<8x128xf32>
    %215 = math.exp %214 : vector<8x128xf32>
    %cst_78 = arith.constant 1.000000e+00 : f32
    %216 = vector.broadcast %cst_78 : f32 to vector<8x128xf32>
    %217 = arith.addf %216, %215 : vector<8x128xf32>
    %218 = arith.divf %216, %217 : vector<8x128xf32>
    %cst_79 = arith.constant 2.000000e+00 : f32
    %219 = vector.broadcast %cst_79 : f32 to vector<8x128xf32>
    %220 = arith.mulf %219, %218 : vector<8x128xf32>
    %cst_80 = arith.constant 1.000000e+00 : f32
    %221 = vector.broadcast %cst_80 : f32 to vector<8x128xf32>
    %222 = arith.subf %220, %221 : vector<8x128xf32>
    %223 = arith.select %19, %222, %218 : vector<8x128xi1>, vector<8x128xf32>
    %224 = vector.extract_strided_slice %223 {offsets = [0, 0], sizes = [8, 32], strides = [1, 1]} : vector<8x128xf32> to vector<8x32xf32>
    %225 = vector.extract_strided_slice %223 {offsets = [0, 32], sizes = [8, 32], strides = [1, 1]} : vector<8x128xf32> to vector<8x32xf32>
    %226 = vector.extract_strided_slice %223 {offsets = [0, 64], sizes = [8, 32], strides = [1, 1]} : vector<8x128xf32> to vector<8x32xf32>
    %227 = vector.extract_strided_slice %223 {offsets = [0, 96], sizes = [8, 32], strides = [1, 1]} : vector<8x128xf32> to vector<8x32xf32>
    %228 = arith.mulf %225, %126 : vector<8x32xf32>
    %229 = arith.mulf %224, %226 : vector<8x32xf32>
    %230 = arith.addf %228, %229 : vector<8x32xf32>
    %231 = math.tanh %230 : vector<8x32xf32>
    %232 = arith.mulf %227, %231 : vector<8x32xf32>
    %cst_81 = arith.constant dense<0.000000e+00> : vector<8x128xf32>
    %233 = tpu.matmul %178, %1, %cst_81 {dimension_numbers = #tpu.dot_dimension_numbers<[1], [0], [0], [1], [0, 0, 1, 1], [], []>} : vector<8x32xf32>, vector<32x128xf32>, vector<8x128xf32> -> vector<8x128xf32>
    %234 = vector.broadcast %9 : vector<1x128xf32> to vector<8x128xf32>
    %235 = arith.addf %233, %234 : vector<8x128xf32>
    %cst_82 = arith.constant dense<0.000000e+00> : vector<8x128xf32>
    %236 = tpu.matmul %152, %5, %cst_82 {dimension_numbers = #tpu.dot_dimension_numbers<[1], [0], [0], [1], [0, 0, 1, 1], [], []>} : vector<8x32xf32>, vector<32x128xf32>, vector<8x128xf32> -> vector<8x128xf32>
    %237 = arith.addf %235, %236 : vector<8x128xf32>
    %238 = arith.negf %237 : vector<8x128xf32>
    %239 = math.exp %238 : vector<8x128xf32>
    %cst_83 = arith.constant 1.000000e+00 : f32
    %240 = vector.broadcast %cst_83 : f32 to vector<8x128xf32>
    %241 = arith.addf %240, %239 : vector<8x128xf32>
    %242 = arith.divf %240, %241 : vector<8x128xf32>
    %cst_84 = arith.constant 2.000000e+00 : f32
    %243 = vector.broadcast %cst_84 : f32 to vector<8x128xf32>
    %244 = arith.mulf %243, %242 : vector<8x128xf32>
    %cst_85 = arith.constant 1.000000e+00 : f32
    %245 = vector.broadcast %cst_85 : f32 to vector<8x128xf32>
    %246 = arith.subf %244, %245 : vector<8x128xf32>
    %247 = arith.select %19, %246, %242 : vector<8x128xi1>, vector<8x128xf32>
    %248 = vector.extract_strided_slice %247 {offsets = [0, 0], sizes = [8, 32], strides = [1, 1]} : vector<8x128xf32> to vector<8x32xf32>
    %249 = vector.extract_strided_slice %247 {offsets = [0, 32], sizes = [8, 32], strides = [1, 1]} : vector<8x128xf32> to vector<8x32xf32>
    %250 = vector.extract_strided_slice %247 {offsets = [0, 64], sizes = [8, 32], strides = [1, 1]} : vector<8x128xf32> to vector<8x32xf32>
    %251 = vector.extract_strided_slice %247 {offsets = [0, 96], sizes = [8, 32], strides = [1, 1]} : vector<8x128xf32> to vector<8x32xf32>
    %252 = arith.mulf %249, %150 : vector<8x32xf32>
    %253 = arith.mulf %248, %250 : vector<8x32xf32>
    %254 = arith.addf %252, %253 : vector<8x32xf32>
    %255 = math.tanh %254 : vector<8x32xf32>
    %256 = arith.mulf %251, %255 : vector<8x32xf32>
    %257 = vector.extract_strided_slice %20 {offsets = [3, 0, 0], sizes = [1, 8, 16], strides = [1, 1, 1]} : vector<8x8x16xf32> to vector<1x8x16xf32>
    %258 = vector.shape_cast %257 : vector<1x8x16xf32> to vector<8x16xf32>
    %cst_86 = arith.constant dense<0.000000e+00> : vector<8x128xf32>
    %259 = tpu.matmul %258, %0, %cst_86 {dimension_numbers = #tpu.dot_dimension_numbers<[1], [0], [0], [1], [0, 0, 1, 1], [], []>} : vector<8x16xf32>, vector<16x128xf32>, vector<8x128xf32> -> vector<8x128xf32>
    %260 = vector.broadcast %8 : vector<1x128xf32> to vector<8x128xf32>
    %261 = arith.addf %259, %260 : vector<8x128xf32>
    %cst_87 = arith.constant dense<0.000000e+00> : vector<8x128xf32>
    %262 = tpu.matmul %178, %4, %cst_87 {dimension_numbers = #tpu.dot_dimension_numbers<[1], [0], [0], [1], [0, 0, 1, 1], [], []>} : vector<8x32xf32>, vector<32x128xf32>, vector<8x128xf32> -> vector<8x128xf32>
    %263 = arith.addf %261, %262 : vector<8x128xf32>
    %264 = arith.negf %263 : vector<8x128xf32>
    %265 = math.exp %264 : vector<8x128xf32>
    %cst_88 = arith.constant 1.000000e+00 : f32
    %266 = vector.broadcast %cst_88 : f32 to vector<8x128xf32>
    %267 = arith.addf %266, %265 : vector<8x128xf32>
    %268 = arith.divf %266, %267 : vector<8x128xf32>
    %cst_89 = arith.constant 2.000000e+00 : f32
    %269 = vector.broadcast %cst_89 : f32 to vector<8x128xf32>
    %270 = arith.mulf %269, %268 : vector<8x128xf32>
    %cst_90 = arith.constant 1.000000e+00 : f32
    %271 = vector.broadcast %cst_90 : f32 to vector<8x128xf32>
    %272 = arith.subf %270, %271 : vector<8x128xf32>
    %273 = arith.select %19, %272, %268 : vector<8x128xi1>, vector<8x128xf32>
    %274 = vector.extract_strided_slice %273 {offsets = [0, 0], sizes = [8, 32], strides = [1, 1]} : vector<8x128xf32> to vector<8x32xf32>
    %275 = vector.extract_strided_slice %273 {offsets = [0, 32], sizes = [8, 32], strides = [1, 1]} : vector<8x128xf32> to vector<8x32xf32>
    %276 = vector.extract_strided_slice %273 {offsets = [0, 64], sizes = [8, 32], strides = [1, 1]} : vector<8x128xf32> to vector<8x32xf32>
    %277 = vector.extract_strided_slice %273 {offsets = [0, 96], sizes = [8, 32], strides = [1, 1]} : vector<8x128xf32> to vector<8x32xf32>
    %278 = arith.mulf %275, %176 : vector<8x32xf32>
    %279 = arith.mulf %274, %276 : vector<8x32xf32>
    %280 = arith.addf %278, %279 : vector<8x32xf32>
    %281 = math.tanh %280 : vector<8x32xf32>
    %282 = arith.mulf %277, %281 : vector<8x32xf32>
    %cst_91 = arith.constant dense<0.000000e+00> : vector<8x128xf32>
    %283 = tpu.matmul %232, %3, %cst_91 {dimension_numbers = #tpu.dot_dimension_numbers<[1], [0], [0], [1], [0, 0, 1, 1], [], []>} : vector<8x32xf32>, vector<32x128xf32>, vector<8x128xf32> -> vector<8x128xf32>
    %284 = vector.broadcast %11 : vector<1x128xf32> to vector<8x128xf32>
    %285 = arith.addf %283, %284 : vector<8x128xf32>
    %cst_92 = arith.constant dense<0.000000e+00> : vector<8x128xf32>
    %286 = tpu.matmul %202, %7, %cst_92 {dimension_numbers = #tpu.dot_dimension_numbers<[1], [0], [0], [1], [0, 0, 1, 1], [], []>} : vector<8x32xf32>, vector<32x128xf32>, vector<8x128xf32> -> vector<8x128xf32>
    %287 = arith.addf %285, %286 : vector<8x128xf32>
    %288 = arith.negf %287 : vector<8x128xf32>
    %289 = math.exp %288 : vector<8x128xf32>
    %cst_93 = arith.constant 1.000000e+00 : f32
    %290 = vector.broadcast %cst_93 : f32 to vector<8x128xf32>
    %291 = arith.addf %290, %289 : vector<8x128xf32>
    %292 = arith.divf %290, %291 : vector<8x128xf32>
    %cst_94 = arith.constant 2.000000e+00 : f32
    %293 = vector.broadcast %cst_94 : f32 to vector<8x128xf32>
    %294 = arith.mulf %293, %292 : vector<8x128xf32>
    %cst_95 = arith.constant 1.000000e+00 : f32
    %295 = vector.broadcast %cst_95 : f32 to vector<8x128xf32>
    %296 = arith.subf %294, %295 : vector<8x128xf32>
    %297 = arith.select %19, %296, %292 : vector<8x128xi1>, vector<8x128xf32>
    %298 = vector.extract_strided_slice %297 {offsets = [0, 0], sizes = [8, 32], strides = [1, 1]} : vector<8x128xf32> to vector<8x32xf32>
    %299 = vector.extract_strided_slice %297 {offsets = [0, 32], sizes = [8, 32], strides = [1, 1]} : vector<8x128xf32> to vector<8x32xf32>
    %300 = vector.extract_strided_slice %297 {offsets = [0, 64], sizes = [8, 32], strides = [1, 1]} : vector<8x128xf32> to vector<8x32xf32>
    %301 = vector.extract_strided_slice %297 {offsets = [0, 96], sizes = [8, 32], strides = [1, 1]} : vector<8x128xf32> to vector<8x32xf32>
    %302 = arith.mulf %299, %200 : vector<8x32xf32>
    %303 = arith.mulf %298, %300 : vector<8x32xf32>
    %304 = arith.addf %302, %303 : vector<8x32xf32>
    %305 = math.tanh %304 : vector<8x32xf32>
    %306 = arith.mulf %301, %305 : vector<8x32xf32>
    %cst_96 = arith.constant dense<0.000000e+00> : vector<8x128xf32>
    %307 = tpu.matmul %306, %12, %cst_96 {dimension_numbers = #tpu.dot_dimension_numbers<[1], [0], [0], [1], [0, 0, 1, 1], [], []>} : vector<8x32xf32>, vector<32x128xf32>, vector<8x128xf32> -> vector<8x128xf32>
    %308 = vector.broadcast %13 : vector<1x128xf32> to vector<8x128xf32>
    %309 = arith.addf %307, %308 : vector<8x128xf32>
    %c1 = arith.constant 1 : index
    %c0_97 = arith.constant 0 : index
    %c0_98 = arith.constant 0 : index
    %310 = vector.load %arg15[%c1, %c0_97, %c0_98] : memref<8x8x128xf32, #tpu.memory_space<vmem>>, vector<1x8x128xf32>
    %311 = vector.shape_cast %310 : vector<1x8x128xf32> to vector<8x128xf32>
    %312 = vector.shape_cast %309 : vector<8x128xf32> to vector<1x8x128xf32>
    tpu.vector_store %arg15[%c1, %c0_97, %c0_98], %312 {strides = array<i32>} : memref<8x8x128xf32, #tpu.memory_space<vmem>>, vector<1x8x128xf32>,
    %cst_99 = arith.constant dense<0.000000e+00> : vector<8x128xf32>
    %313 = tpu.matmul %256, %2, %cst_99 {dimension_numbers = #tpu.dot_dimension_numbers<[1], [0], [0], [1], [0, 0, 1, 1], [], []>} : vector<8x32xf32>, vector<32x128xf32>, vector<8x128xf32> -> vector<8x128xf32>
    %314 = vector.broadcast %10 : vector<1x128xf32> to vector<8x128xf32>
    %315 = arith.addf %313, %314 : vector<8x128xf32>
    %cst_100 = arith.constant dense<0.000000e+00> : vector<8x128xf32>
    %316 = tpu.matmul %232, %6, %cst_100 {dimension_numbers = #tpu.dot_dimension_numbers<[1], [0], [0], [1], [0, 0, 1, 1], [], []>} : vector<8x32xf32>, vector<32x128xf32>, vector<8x128xf32> -> vector<8x128xf32>
    %317 = arith.addf %315, %316 : vector<8x128xf32>
    %318 = arith.negf %317 : vector<8x128xf32>
    %319 = math.exp %318 : vector<8x128xf32>
    %cst_101 = arith.constant 1.000000e+00 : f32
    %320 = vector.broadcast %cst_101 : f32 to vector<8x128xf32>
    %321 = arith.addf %320, %319 : vector<8x128xf32>
    %322 = arith.divf %320, %321 : vector<8x128xf32>
    %cst_102 = arith.constant 2.000000e+00 : f32
    %323 = vector.broadcast %cst_102 : f32 to vector<8x128xf32>
    %324 = arith.mulf %323, %322 : vector<8x128xf32>
    %cst_103 = arith.constant 1.000000e+00 : f32
    %325 = vector.broadcast %cst_103 : f32 to vector<8x128xf32>
    %326 = arith.subf %324, %325 : vector<8x128xf32>
    %327 = arith.select %19, %326, %322 : vector<8x128xi1>, vector<8x128xf32>
    %328 = vector.extract_strided_slice %327 {offsets = [0, 0], sizes = [8, 32], strides = [1, 1]} : vector<8x128xf32> to vector<8x32xf32>
    %329 = vector.extract_strided_slice %327 {offsets = [0, 32], sizes = [8, 32], strides = [1, 1]} : vector<8x128xf32> to vector<8x32xf32>
    %330 = vector.extract_strided_slice %327 {offsets = [0, 64], sizes = [8, 32], strides = [1, 1]} : vector<8x128xf32> to vector<8x32xf32>
    %331 = vector.extract_strided_slice %327 {offsets = [0, 96], sizes = [8, 32], strides = [1, 1]} : vector<8x128xf32> to vector<8x32xf32>
    %332 = arith.mulf %329, %230 : vector<8x32xf32>
    %333 = arith.mulf %328, %330 : vector<8x32xf32>
    %334 = arith.addf %332, %333 : vector<8x32xf32>
    %335 = math.tanh %334 : vector<8x32xf32>
    %336 = arith.mulf %331, %335 : vector<8x32xf32>
    %cst_104 = arith.constant dense<0.000000e+00> : vector<8x128xf32>
    %337 = tpu.matmul %282, %1, %cst_104 {dimension_numbers = #tpu.dot_dimension_numbers<[1], [0], [0], [1], [0, 0, 1, 1], [], []>} : vector<8x32xf32>, vector<32x128xf32>, vector<8x128xf32> -> vector<8x128xf32>
    %338 = vector.broadcast %9 : vector<1x128xf32> to vector<8x128xf32>
    %339 = arith.addf %337, %338 : vector<8x128xf32>
    %cst_105 = arith.constant dense<0.000000e+00> : vector<8x128xf32>
    %340 = tpu.matmul %256, %5, %cst_105 {dimension_numbers = #tpu.dot_dimension_numbers<[1], [0], [0], [1], [0, 0, 1, 1], [], []>} : vector<8x32xf32>, vector<32x128xf32>, vector<8x128xf32> -> vector<8x128xf32>
    %341 = arith.addf %339, %340 : vector<8x128xf32>
    %342 = arith.negf %341 : vector<8x128xf32>
    %343 = math.exp %342 : vector<8x128xf32>
    %cst_106 = arith.constant 1.000000e+00 : f32
    %344 = vector.broadcast %cst_106 : f32 to vector<8x128xf32>
    %345 = arith.addf %344, %343 : vector<8x128xf32>
    %346 = arith.divf %344, %345 : vector<8x128xf32>
    %cst_107 = arith.constant 2.000000e+00 : f32
    %347 = vector.broadcast %cst_107 : f32 to vector<8x128xf32>
    %348 = arith.mulf %347, %346 : vector<8x128xf32>
    %cst_108 = arith.constant 1.000000e+00 : f32
    %349 = vector.broadcast %cst_108 : f32 to vector<8x128xf32>
    %350 = arith.subf %348, %349 : vector<8x128xf32>
    %351 = arith.select %19, %350, %346 : vector<8x128xi1>, vector<8x128xf32>
    %352 = vector.extract_strided_slice %351 {offsets = [0, 0], sizes = [8, 32], strides = [1, 1]} : vector<8x128xf32> to vector<8x32xf32>
    %353 = vector.extract_strided_slice %351 {offsets = [0, 32], sizes = [8, 32], strides = [1, 1]} : vector<8x128xf32> to vector<8x32xf32>
    %354 = vector.extract_strided_slice %351 {offsets = [0, 64], sizes = [8, 32], strides = [1, 1]} : vector<8x128xf32> to vector<8x32xf32>
    %355 = vector.extract_strided_slice %351 {offsets = [0, 96], sizes = [8, 32], strides = [1, 1]} : vector<8x128xf32> to vector<8x32xf32>
    %356 = arith.mulf %353, %254 : vector<8x32xf32>
    %357 = arith.mulf %352, %354 : vector<8x32xf32>
    %358 = arith.addf %356, %357 : vector<8x32xf32>
    %359 = math.tanh %358 : vector<8x32xf32>
    %360 = arith.mulf %355, %359 : vector<8x32xf32>
    %361 = vector.extract_strided_slice %20 {offsets = [4, 0, 0], sizes = [1, 8, 16], strides = [1, 1, 1]} : vector<8x8x16xf32> to vector<1x8x16xf32>
    %362 = vector.shape_cast %361 : vector<1x8x16xf32> to vector<8x16xf32>
    %cst_109 = arith.constant dense<0.000000e+00> : vector<8x128xf32>
    %363 = tpu.matmul %362, %0, %cst_109 {dimension_numbers = #tpu.dot_dimension_numbers<[1], [0], [0], [1], [0, 0, 1, 1], [], []>} : vector<8x16xf32>, vector<16x128xf32>, vector<8x128xf32> -> vector<8x128xf32>
    %364 = vector.broadcast %8 : vector<1x128xf32> to vector<8x128xf32>
    %365 = arith.addf %363, %364 : vector<8x128xf32>
    %cst_110 = arith.constant dense<0.000000e+00> : vector<8x128xf32>
    %366 = tpu.matmul %282, %4, %cst_110 {dimension_numbers = #tpu.dot_dimension_numbers<[1], [0], [0], [1], [0, 0, 1, 1], [], []>} : vector<8x32xf32>, vector<32x128xf32>, vector<8x128xf32> -> vector<8x128xf32>
    %367 = arith.addf %365, %366 : vector<8x128xf32>
    %368 = arith.negf %367 : vector<8x128xf32>
    %369 = math.exp %368 : vector<8x128xf32>
    %cst_111 = arith.constant 1.000000e+00 : f32
    %370 = vector.broadcast %cst_111 : f32 to vector<8x128xf32>
    %371 = arith.addf %370, %369 : vector<8x128xf32>
    %372 = arith.divf %370, %371 : vector<8x128xf32>
    %cst_112 = arith.constant 2.000000e+00 : f32
    %373 = vector.broadcast %cst_112 : f32 to vector<8x128xf32>
    %374 = arith.mulf %373, %372 : vector<8x128xf32>
    %cst_113 = arith.constant 1.000000e+00 : f32
    %375 = vector.broadcast %cst_113 : f32 to vector<8x128xf32>
    %376 = arith.subf %374, %375 : vector<8x128xf32>
    %377 = arith.select %19, %376, %372 : vector<8x128xi1>, vector<8x128xf32>
    %378 = vector.extract_strided_slice %377 {offsets = [0, 0], sizes = [8, 32], strides = [1, 1]} : vector<8x128xf32> to vector<8x32xf32>
    %379 = vector.extract_strided_slice %377 {offsets = [0, 32], sizes = [8, 32], strides = [1, 1]} : vector<8x128xf32> to vector<8x32xf32>
    %380 = vector.extract_strided_slice %377 {offsets = [0, 64], sizes = [8, 32], strides = [1, 1]} : vector<8x128xf32> to vector<8x32xf32>
    %381 = vector.extract_strided_slice %377 {offsets = [0, 96], sizes = [8, 32], strides = [1, 1]} : vector<8x128xf32> to vector<8x32xf32>
    %382 = arith.mulf %379, %280 : vector<8x32xf32>
    %383 = arith.mulf %378, %380 : vector<8x32xf32>
    %384 = arith.addf %382, %383 : vector<8x32xf32>
    %385 = math.tanh %384 : vector<8x32xf32>
    %386 = arith.mulf %381, %385 : vector<8x32xf32>
    %cst_114 = arith.constant dense<0.000000e+00> : vector<8x128xf32>
    %387 = tpu.matmul %336, %3, %cst_114 {dimension_numbers = #tpu.dot_dimension_numbers<[1], [0], [0], [1], [0, 0, 1, 1], [], []>} : vector<8x32xf32>, vector<32x128xf32>, vector<8x128xf32> -> vector<8x128xf32>
    %388 = vector.broadcast %11 : vector<1x128xf32> to vector<8x128xf32>
    %389 = arith.addf %387, %388 : vector<8x128xf32>
    %cst_115 = arith.constant dense<0.000000e+00> : vector<8x128xf32>
    %390 = tpu.matmul %306, %7, %cst_115 {dimension_numbers = #tpu.dot_dimension_numbers<[1], [0], [0], [1], [0, 0, 1, 1], [], []>} : vector<8x32xf32>, vector<32x128xf32>, vector<8x128xf32> -> vector<8x128xf32>
    %391 = arith.addf %389, %390 : vector<8x128xf32>
    %392 = arith.negf %391 : vector<8x128xf32>
    %393 = math.exp %392 : vector<8x128xf32>
    %cst_116 = arith.constant 1.000000e+00 : f32
    %394 = vector.broadcast %cst_116 : f32 to vector<8x128xf32>
    %395 = arith.addf %394, %393 : vector<8x128xf32>
    %396 = arith.divf %394, %395 : vector<8x128xf32>
    %cst_117 = arith.constant 2.000000e+00 : f32
    %397 = vector.broadcast %cst_117 : f32 to vector<8x128xf32>
    %398 = arith.mulf %397, %396 : vector<8x128xf32>
    %cst_118 = arith.constant 1.000000e+00 : f32
    %399 = vector.broadcast %cst_118 : f32 to vector<8x128xf32>
    %400 = arith.subf %398, %399 : vector<8x128xf32>
    %401 = arith.select %19, %400, %396 : vector<8x128xi1>, vector<8x128xf32>
    %402 = vector.extract_strided_slice %401 {offsets = [0, 0], sizes = [8, 32], strides = [1, 1]} : vector<8x128xf32> to vector<8x32xf32>
    %403 = vector.extract_strided_slice %401 {offsets = [0, 32], sizes = [8, 32], strides = [1, 1]} : vector<8x128xf32> to vector<8x32xf32>
    %404 = vector.extract_strided_slice %401 {offsets = [0, 64], sizes = [8, 32], strides = [1, 1]} : vector<8x128xf32> to vector<8x32xf32>
    %405 = vector.extract_strided_slice %401 {offsets = [0, 96], sizes = [8, 32], strides = [1, 1]} : vector<8x128xf32> to vector<8x32xf32>
    %406 = arith.mulf %403, %304 : vector<8x32xf32>
    %407 = arith.mulf %402, %404 : vector<8x32xf32>
    %408 = arith.addf %406, %407 : vector<8x32xf32>
    %409 = math.tanh %408 : vector<8x32xf32>
    %410 = arith.mulf %405, %409 : vector<8x32xf32>
    %cst_119 = arith.constant dense<0.000000e+00> : vector<8x128xf32>
    %411 = tpu.matmul %410, %12, %cst_119 {dimension_numbers = #tpu.dot_dimension_numbers<[1], [0], [0], [1], [0, 0, 1, 1], [], []>} : vector<8x32xf32>, vector<32x128xf32>, vector<8x128xf32> -> vector<8x128xf32>
    %412 = vector.broadcast %13 : vector<1x128xf32> to vector<8x128xf32>
    %413 = arith.addf %411, %412 : vector<8x128xf32>
    %c2 = arith.constant 2 : index
    %c0_120 = arith.constant 0 : index
    %c0_121 = arith.constant 0 : index
    %414 = vector.load %arg15[%c2, %c0_120, %c0_121] : memref<8x8x128xf32, #tpu.memory_space<vmem>>, vector<1x8x128xf32>
    %415 = vector.shape_cast %414 : vector<1x8x128xf32> to vector<8x128xf32>
    %416 = vector.shape_cast %413 : vector<8x128xf32> to vector<1x8x128xf32>
    tpu.vector_store %arg15[%c2, %c0_120, %c0_121], %416 {strides = array<i32>} : memref<8x8x128xf32, #tpu.memory_space<vmem>>, vector<1x8x128xf32>,
    %cst_122 = arith.constant dense<0.000000e+00> : vector<8x128xf32>
    %417 = tpu.matmul %360, %2, %cst_122 {dimension_numbers = #tpu.dot_dimension_numbers<[1], [0], [0], [1], [0, 0, 1, 1], [], []>} : vector<8x32xf32>, vector<32x128xf32>, vector<8x128xf32> -> vector<8x128xf32>
    %418 = vector.broadcast %10 : vector<1x128xf32> to vector<8x128xf32>
    %419 = arith.addf %417, %418 : vector<8x128xf32>
    %cst_123 = arith.constant dense<0.000000e+00> : vector<8x128xf32>
    %420 = tpu.matmul %336, %6, %cst_123 {dimension_numbers = #tpu.dot_dimension_numbers<[1], [0], [0], [1], [0, 0, 1, 1], [], []>} : vector<8x32xf32>, vector<32x128xf32>, vector<8x128xf32> -> vector<8x128xf32>
    %421 = arith.addf %419, %420 : vector<8x128xf32>
    %422 = arith.negf %421 : vector<8x128xf32>
    %423 = math.exp %422 : vector<8x128xf32>
    %cst_124 = arith.constant 1.000000e+00 : f32
    %424 = vector.broadcast %cst_124 : f32 to vector<8x128xf32>
    %425 = arith.addf %424, %423 : vector<8x128xf32>
    %426 = arith.divf %424, %425 : vector<8x128xf32>
    %cst_125 = arith.constant 2.000000e+00 : f32
    %427 = vector.broadcast %cst_125 : f32 to vector<8x128xf32>
    %428 = arith.mulf %427, %426 : vector<8x128xf32>
    %cst_126 = arith.constant 1.000000e+00 : f32
    %429 = vector.broadcast %cst_126 : f32 to vector<8x128xf32>
    %430 = arith.subf %428, %429 : vector<8x128xf32>
    %431 = arith.select %19, %430, %426 : vector<8x128xi1>, vector<8x128xf32>
    %432 = vector.extract_strided_slice %431 {offsets = [0, 0], sizes = [8, 32], strides = [1, 1]} : vector<8x128xf32> to vector<8x32xf32>
    %433 = vector.extract_strided_slice %431 {offsets = [0, 32], sizes = [8, 32], strides = [1, 1]} : vector<8x128xf32> to vector<8x32xf32>
    %434 = vector.extract_strided_slice %431 {offsets = [0, 64], sizes = [8, 32], strides = [1, 1]} : vector<8x128xf32> to vector<8x32xf32>
    %435 = vector.extract_strided_slice %431 {offsets = [0, 96], sizes = [8, 32], strides = [1, 1]} : vector<8x128xf32> to vector<8x32xf32>
    %436 = arith.mulf %433, %334 : vector<8x32xf32>
    %437 = arith.mulf %432, %434 : vector<8x32xf32>
    %438 = arith.addf %436, %437 : vector<8x32xf32>
    %439 = math.tanh %438 : vector<8x32xf32>
    %440 = arith.mulf %435, %439 : vector<8x32xf32>
    %cst_127 = arith.constant dense<0.000000e+00> : vector<8x128xf32>
    %441 = tpu.matmul %386, %1, %cst_127 {dimension_numbers = #tpu.dot_dimension_numbers<[1], [0], [0], [1], [0, 0, 1, 1], [], []>} : vector<8x32xf32>, vector<32x128xf32>, vector<8x128xf32> -> vector<8x128xf32>
    %442 = vector.broadcast %9 : vector<1x128xf32> to vector<8x128xf32>
    %443 = arith.addf %441, %442 : vector<8x128xf32>
    %cst_128 = arith.constant dense<0.000000e+00> : vector<8x128xf32>
    %444 = tpu.matmul %360, %5, %cst_128 {dimension_numbers = #tpu.dot_dimension_numbers<[1], [0], [0], [1], [0, 0, 1, 1], [], []>} : vector<8x32xf32>, vector<32x128xf32>, vector<8x128xf32> -> vector<8x128xf32>
    %445 = arith.addf %443, %444 : vector<8x128xf32>
    %446 = arith.negf %445 : vector<8x128xf32>
    %447 = math.exp %446 : vector<8x128xf32>
    %cst_129 = arith.constant 1.000000e+00 : f32
    %448 = vector.broadcast %cst_129 : f32 to vector<8x128xf32>
    %449 = arith.addf %448, %447 : vector<8x128xf32>
    %450 = arith.divf %448, %449 : vector<8x128xf32>
    %cst_130 = arith.constant 2.000000e+00 : f32
    %451 = vector.broadcast %cst_130 : f32 to vector<8x128xf32>
    %452 = arith.mulf %451, %450 : vector<8x128xf32>
    %cst_131 = arith.constant 1.000000e+00 : f32
    %453 = vector.broadcast %cst_131 : f32 to vector<8x128xf32>
    %454 = arith.subf %452, %453 : vector<8x128xf32>
    %455 = arith.select %19, %454, %450 : vector<8x128xi1>, vector<8x128xf32>
    %456 = vector.extract_strided_slice %455 {offsets = [0, 0], sizes = [8, 32], strides = [1, 1]} : vector<8x128xf32> to vector<8x32xf32>
    %457 = vector.extract_strided_slice %455 {offsets = [0, 32], sizes = [8, 32], strides = [1, 1]} : vector<8x128xf32> to vector<8x32xf32>
    %458 = vector.extract_strided_slice %455 {offsets = [0, 64], sizes = [8, 32], strides = [1, 1]} : vector<8x128xf32> to vector<8x32xf32>
    %459 = vector.extract_strided_slice %455 {offsets = [0, 96], sizes = [8, 32], strides = [1, 1]} : vector<8x128xf32> to vector<8x32xf32>
    %460 = arith.mulf %457, %358 : vector<8x32xf32>
    %461 = arith.mulf %456, %458 : vector<8x32xf32>
    %462 = arith.addf %460, %461 : vector<8x32xf32>
    %463 = math.tanh %462 : vector<8x32xf32>
    %464 = arith.mulf %459, %463 : vector<8x32xf32>
    %465 = vector.extract_strided_slice %20 {offsets = [5, 0, 0], sizes = [1, 8, 16], strides = [1, 1, 1]} : vector<8x8x16xf32> to vector<1x8x16xf32>
    %466 = vector.shape_cast %465 : vector<1x8x16xf32> to vector<8x16xf32>
    %cst_132 = arith.constant dense<0.000000e+00> : vector<8x128xf32>
    %467 = tpu.matmul %466, %0, %cst_132 {dimension_numbers = #tpu.dot_dimension_numbers<[1], [0], [0], [1], [0, 0, 1, 1], [], []>} : vector<8x16xf32>, vector<16x128xf32>, vector<8x128xf32> -> vector<8x128xf32>
    %468 = vector.broadcast %8 : vector<1x128xf32> to vector<8x128xf32>
    %469 = arith.addf %467, %468 : vector<8x128xf32>
    %cst_133 = arith.constant dense<0.000000e+00> : vector<8x128xf32>
    %470 = tpu.matmul %386, %4, %cst_133 {dimension_numbers = #tpu.dot_dimension_numbers<[1], [0], [0], [1], [0, 0, 1, 1], [], []>} : vector<8x32xf32>, vector<32x128xf32>, vector<8x128xf32> -> vector<8x128xf32>
    %471 = arith.addf %469, %470 : vector<8x128xf32>
    %472 = arith.negf %471 : vector<8x128xf32>
    %473 = math.exp %472 : vector<8x128xf32>
    %cst_134 = arith.constant 1.000000e+00 : f32
    %474 = vector.broadcast %cst_134 : f32 to vector<8x128xf32>
    %475 = arith.addf %474, %473 : vector<8x128xf32>
    %476 = arith.divf %474, %475 : vector<8x128xf32>
    %cst_135 = arith.constant 2.000000e+00 : f32
    %477 = vector.broadcast %cst_135 : f32 to vector<8x128xf32>
    %478 = arith.mulf %477, %476 : vector<8x128xf32>
    %cst_136 = arith.constant 1.000000e+00 : f32
    %479 = vector.broadcast %cst_136 : f32 to vector<8x128xf32>
    %480 = arith.subf %478, %479 : vector<8x128xf32>
    %481 = arith.select %19, %480, %476 : vector<8x128xi1>, vector<8x128xf32>
    %482 = vector.extract_strided_slice %481 {offsets = [0, 0], sizes = [8, 32], strides = [1, 1]} : vector<8x128xf32> to vector<8x32xf32>
    %483 = vector.extract_strided_slice %481 {offsets = [0, 32], sizes = [8, 32], strides = [1, 1]} : vector<8x128xf32> to vector<8x32xf32>
    %484 = vector.extract_strided_slice %481 {offsets = [0, 64], sizes = [8, 32], strides = [1, 1]} : vector<8x128xf32> to vector<8x32xf32>
    %485 = vector.extract_strided_slice %481 {offsets = [0, 96], sizes = [8, 32], strides = [1, 1]} : vector<8x128xf32> to vector<8x32xf32>
    %486 = arith.mulf %483, %384 : vector<8x32xf32>
    %487 = arith.mulf %482, %484 : vector<8x32xf32>
    %488 = arith.addf %486, %487 : vector<8x32xf32>
    %489 = math.tanh %488 : vector<8x32xf32>
    %490 = arith.mulf %485, %489 : vector<8x32xf32>
    %cst_137 = arith.constant dense<0.000000e+00> : vector<8x128xf32>
    %491 = tpu.matmul %440, %3, %cst_137 {dimension_numbers = #tpu.dot_dimension_numbers<[1], [0], [0], [1], [0, 0, 1, 1], [], []>} : vector<8x32xf32>, vector<32x128xf32>, vector<8x128xf32> -> vector<8x128xf32>
    %492 = vector.broadcast %11 : vector<1x128xf32> to vector<8x128xf32>
    %493 = arith.addf %491, %492 : vector<8x128xf32>
    %cst_138 = arith.constant dense<0.000000e+00> : vector<8x128xf32>
    %494 = tpu.matmul %410, %7, %cst_138 {dimension_numbers = #tpu.dot_dimension_numbers<[1], [0], [0], [1], [0, 0, 1, 1], [], []>} : vector<8x32xf32>, vector<32x128xf32>, vector<8x128xf32> -> vector<8x128xf32>
    %495 = arith.addf %493, %494 : vector<8x128xf32>
    %496 = arith.negf %495 : vector<8x128xf32>
    %497 = math.exp %496 : vector<8x128xf32>
    %cst_139 = arith.constant 1.000000e+00 : f32
    %498 = vector.broadcast %cst_139 : f32 to vector<8x128xf32>
    %499 = arith.addf %498, %497 : vector<8x128xf32>
    %500 = arith.divf %498, %499 : vector<8x128xf32>
    %cst_140 = arith.constant 2.000000e+00 : f32
    %501 = vector.broadcast %cst_140 : f32 to vector<8x128xf32>
    %502 = arith.mulf %501, %500 : vector<8x128xf32>
    %cst_141 = arith.constant 1.000000e+00 : f32
    %503 = vector.broadcast %cst_141 : f32 to vector<8x128xf32>
    %504 = arith.subf %502, %503 : vector<8x128xf32>
    %505 = arith.select %19, %504, %500 : vector<8x128xi1>, vector<8x128xf32>
    %506 = vector.extract_strided_slice %505 {offsets = [0, 0], sizes = [8, 32], strides = [1, 1]} : vector<8x128xf32> to vector<8x32xf32>
    %507 = vector.extract_strided_slice %505 {offsets = [0, 32], sizes = [8, 32], strides = [1, 1]} : vector<8x128xf32> to vector<8x32xf32>
    %508 = vector.extract_strided_slice %505 {offsets = [0, 64], sizes = [8, 32], strides = [1, 1]} : vector<8x128xf32> to vector<8x32xf32>
    %509 = vector.extract_strided_slice %505 {offsets = [0, 96], sizes = [8, 32], strides = [1, 1]} : vector<8x128xf32> to vector<8x32xf32>
    %510 = arith.mulf %507, %408 : vector<8x32xf32>
    %511 = arith.mulf %506, %508 : vector<8x32xf32>
    %512 = arith.addf %510, %511 : vector<8x32xf32>
    %513 = math.tanh %512 : vector<8x32xf32>
    %514 = arith.mulf %509, %513 : vector<8x32xf32>
    %cst_142 = arith.constant dense<0.000000e+00> : vector<8x128xf32>
    %515 = tpu.matmul %514, %12, %cst_142 {dimension_numbers = #tpu.dot_dimension_numbers<[1], [0], [0], [1], [0, 0, 1, 1], [], []>} : vector<8x32xf32>, vector<32x128xf32>, vector<8x128xf32> -> vector<8x128xf32>
    %516 = vector.broadcast %13 : vector<1x128xf32> to vector<8x128xf32>
    %517 = arith.addf %515, %516 : vector<8x128xf32>
    %c3 = arith.constant 3 : index
    %c0_143 = arith.constant 0 : index
    %c0_144 = arith.constant 0 : index
    %518 = vector.load %arg15[%c3, %c0_143, %c0_144] : memref<8x8x128xf32, #tpu.memory_space<vmem>>, vector<1x8x128xf32>
    %519 = vector.shape_cast %518 : vector<1x8x128xf32> to vector<8x128xf32>
    %520 = vector.shape_cast %517 : vector<8x128xf32> to vector<1x8x128xf32>
    tpu.vector_store %arg15[%c3, %c0_143, %c0_144], %520 {strides = array<i32>} : memref<8x8x128xf32, #tpu.memory_space<vmem>>, vector<1x8x128xf32>,
    %cst_145 = arith.constant dense<0.000000e+00> : vector<8x128xf32>
    %521 = tpu.matmul %464, %2, %cst_145 {dimension_numbers = #tpu.dot_dimension_numbers<[1], [0], [0], [1], [0, 0, 1, 1], [], []>} : vector<8x32xf32>, vector<32x128xf32>, vector<8x128xf32> -> vector<8x128xf32>
    %522 = vector.broadcast %10 : vector<1x128xf32> to vector<8x128xf32>
    %523 = arith.addf %521, %522 : vector<8x128xf32>
    %cst_146 = arith.constant dense<0.000000e+00> : vector<8x128xf32>
    %524 = tpu.matmul %440, %6, %cst_146 {dimension_numbers = #tpu.dot_dimension_numbers<[1], [0], [0], [1], [0, 0, 1, 1], [], []>} : vector<8x32xf32>, vector<32x128xf32>, vector<8x128xf32> -> vector<8x128xf32>
    %525 = arith.addf %523, %524 : vector<8x128xf32>
    %526 = arith.negf %525 : vector<8x128xf32>
    %527 = math.exp %526 : vector<8x128xf32>
    %cst_147 = arith.constant 1.000000e+00 : f32
    %528 = vector.broadcast %cst_147 : f32 to vector<8x128xf32>
    %529 = arith.addf %528, %527 : vector<8x128xf32>
    %530 = arith.divf %528, %529 : vector<8x128xf32>
    %cst_148 = arith.constant 2.000000e+00 : f32
    %531 = vector.broadcast %cst_148 : f32 to vector<8x128xf32>
    %532 = arith.mulf %531, %530 : vector<8x128xf32>
    %cst_149 = arith.constant 1.000000e+00 : f32
    %533 = vector.broadcast %cst_149 : f32 to vector<8x128xf32>
    %534 = arith.subf %532, %533 : vector<8x128xf32>
    %535 = arith.select %19, %534, %530 : vector<8x128xi1>, vector<8x128xf32>
    %536 = vector.extract_strided_slice %535 {offsets = [0, 0], sizes = [8, 32], strides = [1, 1]} : vector<8x128xf32> to vector<8x32xf32>
    %537 = vector.extract_strided_slice %535 {offsets = [0, 32], sizes = [8, 32], strides = [1, 1]} : vector<8x128xf32> to vector<8x32xf32>
    %538 = vector.extract_strided_slice %535 {offsets = [0, 64], sizes = [8, 32], strides = [1, 1]} : vector<8x128xf32> to vector<8x32xf32>
    %539 = vector.extract_strided_slice %535 {offsets = [0, 96], sizes = [8, 32], strides = [1, 1]} : vector<8x128xf32> to vector<8x32xf32>
    %540 = arith.mulf %537, %438 : vector<8x32xf32>
    %541 = arith.mulf %536, %538 : vector<8x32xf32>
    %542 = arith.addf %540, %541 : vector<8x32xf32>
    %543 = math.tanh %542 : vector<8x32xf32>
    %544 = arith.mulf %539, %543 : vector<8x32xf32>
    %cst_150 = arith.constant dense<0.000000e+00> : vector<8x128xf32>
    %545 = tpu.matmul %490, %1, %cst_150 {dimension_numbers = #tpu.dot_dimension_numbers<[1], [0], [0], [1], [0, 0, 1, 1], [], []>} : vector<8x32xf32>, vector<32x128xf32>, vector<8x128xf32> -> vector<8x128xf32>
    %546 = vector.broadcast %9 : vector<1x128xf32> to vector<8x128xf32>
    %547 = arith.addf %545, %546 : vector<8x128xf32>
    %cst_151 = arith.constant dense<0.000000e+00> : vector<8x128xf32>
    %548 = tpu.matmul %464, %5, %cst_151 {dimension_numbers = #tpu.dot_dimension_numbers<[1], [0], [0], [1], [0, 0, 1, 1], [], []>} : vector<8x32xf32>, vector<32x128xf32>, vector<8x128xf32> -> vector<8x128xf32>
    %549 = arith.addf %547, %548 : vector<8x128xf32>
    %550 = arith.negf %549 : vector<8x128xf32>
    %551 = math.exp %550 : vector<8x128xf32>
    %cst_152 = arith.constant 1.000000e+00 : f32
    %552 = vector.broadcast %cst_152 : f32 to vector<8x128xf32>
    %553 = arith.addf %552, %551 : vector<8x128xf32>
    %554 = arith.divf %552, %553 : vector<8x128xf32>
    %cst_153 = arith.constant 2.000000e+00 : f32
    %555 = vector.broadcast %cst_153 : f32 to vector<8x128xf32>
    %556 = arith.mulf %555, %554 : vector<8x128xf32>
    %cst_154 = arith.constant 1.000000e+00 : f32
    %557 = vector.broadcast %cst_154 : f32 to vector<8x128xf32>
    %558 = arith.subf %556, %557 : vector<8x128xf32>
    %559 = arith.select %19, %558, %554 : vector<8x128xi1>, vector<8x128xf32>
    %560 = vector.extract_strided_slice %559 {offsets = [0, 0], sizes = [8, 32], strides = [1, 1]} : vector<8x128xf32> to vector<8x32xf32>
    %561 = vector.extract_strided_slice %559 {offsets = [0, 32], sizes = [8, 32], strides = [1, 1]} : vector<8x128xf32> to vector<8x32xf32>
    %562 = vector.extract_strided_slice %559 {offsets = [0, 64], sizes = [8, 32], strides = [1, 1]} : vector<8x128xf32> to vector<8x32xf32>
    %563 = vector.extract_strided_slice %559 {offsets = [0, 96], sizes = [8, 32], strides = [1, 1]} : vector<8x128xf32> to vector<8x32xf32>
    %564 = arith.mulf %561, %462 : vector<8x32xf32>
    %565 = arith.mulf %560, %562 : vector<8x32xf32>
    %566 = arith.addf %564, %565 : vector<8x32xf32>
    %567 = math.tanh %566 : vector<8x32xf32>
    %568 = arith.mulf %563, %567 : vector<8x32xf32>
    %569 = vector.extract_strided_slice %20 {offsets = [6, 0, 0], sizes = [1, 8, 16], strides = [1, 1, 1]} : vector<8x8x16xf32> to vector<1x8x16xf32>
    %570 = vector.shape_cast %569 : vector<1x8x16xf32> to vector<8x16xf32>
    %cst_155 = arith.constant dense<0.000000e+00> : vector<8x128xf32>
    %571 = tpu.matmul %570, %0, %cst_155 {dimension_numbers = #tpu.dot_dimension_numbers<[1], [0], [0], [1], [0, 0, 1, 1], [], []>} : vector<8x16xf32>, vector<16x128xf32>, vector<8x128xf32> -> vector<8x128xf32>
    %572 = vector.broadcast %8 : vector<1x128xf32> to vector<8x128xf32>
    %573 = arith.addf %571, %572 : vector<8x128xf32>
    %cst_156 = arith.constant dense<0.000000e+00> : vector<8x128xf32>
    %574 = tpu.matmul %490, %4, %cst_156 {dimension_numbers = #tpu.dot_dimension_numbers<[1], [0], [0], [1], [0, 0, 1, 1], [], []>} : vector<8x32xf32>, vector<32x128xf32>, vector<8x128xf32> -> vector<8x128xf32>
    %575 = arith.addf %573, %574 : vector<8x128xf32>
    %576 = arith.negf %575 : vector<8x128xf32>
    %577 = math.exp %576 : vector<8x128xf32>
    %cst_157 = arith.constant 1.000000e+00 : f32
    %578 = vector.broadcast %cst_157 : f32 to vector<8x128xf32>
    %579 = arith.addf %578, %577 : vector<8x128xf32>
    %580 = arith.divf %578, %579 : vector<8x128xf32>
    %cst_158 = arith.constant 2.000000e+00 : f32
    %581 = vector.broadcast %cst_158 : f32 to vector<8x128xf32>
    %582 = arith.mulf %581, %580 : vector<8x128xf32>
    %cst_159 = arith.constant 1.000000e+00 : f32
    %583 = vector.broadcast %cst_159 : f32 to vector<8x128xf32>
    %584 = arith.subf %582, %583 : vector<8x128xf32>
    %585 = arith.select %19, %584, %580 : vector<8x128xi1>, vector<8x128xf32>
    %586 = vector.extract_strided_slice %585 {offsets = [0, 0], sizes = [8, 32], strides = [1, 1]} : vector<8x128xf32> to vector<8x32xf32>
    %587 = vector.extract_strided_slice %585 {offsets = [0, 32], sizes = [8, 32], strides = [1, 1]} : vector<8x128xf32> to vector<8x32xf32>
    %588 = vector.extract_strided_slice %585 {offsets = [0, 64], sizes = [8, 32], strides = [1, 1]} : vector<8x128xf32> to vector<8x32xf32>
    %589 = vector.extract_strided_slice %585 {offsets = [0, 96], sizes = [8, 32], strides = [1, 1]} : vector<8x128xf32> to vector<8x32xf32>
    %590 = arith.mulf %587, %488 : vector<8x32xf32>
    %591 = arith.mulf %586, %588 : vector<8x32xf32>
    %592 = arith.addf %590, %591 : vector<8x32xf32>
    %593 = math.tanh %592 : vector<8x32xf32>
    %594 = arith.mulf %589, %593 : vector<8x32xf32>
    %cst_160 = arith.constant dense<0.000000e+00> : vector<8x128xf32>
    %595 = tpu.matmul %544, %3, %cst_160 {dimension_numbers = #tpu.dot_dimension_numbers<[1], [0], [0], [1], [0, 0, 1, 1], [], []>} : vector<8x32xf32>, vector<32x128xf32>, vector<8x128xf32> -> vector<8x128xf32>
    %596 = vector.broadcast %11 : vector<1x128xf32> to vector<8x128xf32>
    %597 = arith.addf %595, %596 : vector<8x128xf32>
    %cst_161 = arith.constant dense<0.000000e+00> : vector<8x128xf32>
    %598 = tpu.matmul %514, %7, %cst_161 {dimension_numbers = #tpu.dot_dimension_numbers<[1], [0], [0], [1], [0, 0, 1, 1], [], []>} : vector<8x32xf32>, vector<32x128xf32>, vector<8x128xf32> -> vector<8x128xf32>
    %599 = arith.addf %597, %598 : vector<8x128xf32>
    %600 = arith.negf %599 : vector<8x128xf32>
    %601 = math.exp %600 : vector<8x128xf32>
    %cst_162 = arith.constant 1.000000e+00 : f32
    %602 = vector.broadcast %cst_162 : f32 to vector<8x128xf32>
    %603 = arith.addf %602, %601 : vector<8x128xf32>
    %604 = arith.divf %602, %603 : vector<8x128xf32>
    %cst_163 = arith.constant 2.000000e+00 : f32
    %605 = vector.broadcast %cst_163 : f32 to vector<8x128xf32>
    %606 = arith.mulf %605, %604 : vector<8x128xf32>
    %cst_164 = arith.constant 1.000000e+00 : f32
    %607 = vector.broadcast %cst_164 : f32 to vector<8x128xf32>
    %608 = arith.subf %606, %607 : vector<8x128xf32>
    %609 = arith.select %19, %608, %604 : vector<8x128xi1>, vector<8x128xf32>
    %610 = vector.extract_strided_slice %609 {offsets = [0, 0], sizes = [8, 32], strides = [1, 1]} : vector<8x128xf32> to vector<8x32xf32>
    %611 = vector.extract_strided_slice %609 {offsets = [0, 32], sizes = [8, 32], strides = [1, 1]} : vector<8x128xf32> to vector<8x32xf32>
    %612 = vector.extract_strided_slice %609 {offsets = [0, 64], sizes = [8, 32], strides = [1, 1]} : vector<8x128xf32> to vector<8x32xf32>
    %613 = vector.extract_strided_slice %609 {offsets = [0, 96], sizes = [8, 32], strides = [1, 1]} : vector<8x128xf32> to vector<8x32xf32>
    %614 = arith.mulf %611, %512 : vector<8x32xf32>
    %615 = arith.mulf %610, %612 : vector<8x32xf32>
    %616 = arith.addf %614, %615 : vector<8x32xf32>
    %617 = math.tanh %616 : vector<8x32xf32>
    %618 = arith.mulf %613, %617 : vector<8x32xf32>
    %cst_165 = arith.constant dense<0.000000e+00> : vector<8x128xf32>
    %619 = tpu.matmul %618, %12, %cst_165 {dimension_numbers = #tpu.dot_dimension_numbers<[1], [0], [0], [1], [0, 0, 1, 1], [], []>} : vector<8x32xf32>, vector<32x128xf32>, vector<8x128xf32> -> vector<8x128xf32>
    %620 = vector.broadcast %13 : vector<1x128xf32> to vector<8x128xf32>
    %621 = arith.addf %619, %620 : vector<8x128xf32>
    %c4 = arith.constant 4 : index
    %c0_166 = arith.constant 0 : index
    %c0_167 = arith.constant 0 : index
    %622 = vector.load %arg15[%c4, %c0_166, %c0_167] : memref<8x8x128xf32, #tpu.memory_space<vmem>>, vector<1x8x128xf32>
    %623 = vector.shape_cast %622 : vector<1x8x128xf32> to vector<8x128xf32>
    %624 = vector.shape_cast %621 : vector<8x128xf32> to vector<1x8x128xf32>
    tpu.vector_store %arg15[%c4, %c0_166, %c0_167], %624 {strides = array<i32>} : memref<8x8x128xf32, #tpu.memory_space<vmem>>, vector<1x8x128xf32>,
    %cst_168 = arith.constant dense<0.000000e+00> : vector<8x128xf32>
    %625 = tpu.matmul %568, %2, %cst_168 {dimension_numbers = #tpu.dot_dimension_numbers<[1], [0], [0], [1], [0, 0, 1, 1], [], []>} : vector<8x32xf32>, vector<32x128xf32>, vector<8x128xf32> -> vector<8x128xf32>
    %626 = vector.broadcast %10 : vector<1x128xf32> to vector<8x128xf32>
    %627 = arith.addf %625, %626 : vector<8x128xf32>
    %cst_169 = arith.constant dense<0.000000e+00> : vector<8x128xf32>
    %628 = tpu.matmul %544, %6, %cst_169 {dimension_numbers = #tpu.dot_dimension_numbers<[1], [0], [0], [1], [0, 0, 1, 1], [], []>} : vector<8x32xf32>, vector<32x128xf32>, vector<8x128xf32> -> vector<8x128xf32>
    %629 = arith.addf %627, %628 : vector<8x128xf32>
    %630 = arith.negf %629 : vector<8x128xf32>
    %631 = math.exp %630 : vector<8x128xf32>
    %cst_170 = arith.constant 1.000000e+00 : f32
    %632 = vector.broadcast %cst_170 : f32 to vector<8x128xf32>
    %633 = arith.addf %632, %631 : vector<8x128xf32>
    %634 = arith.divf %632, %633 : vector<8x128xf32>
    %cst_171 = arith.constant 2.000000e+00 : f32
    %635 = vector.broadcast %cst_171 : f32 to vector<8x128xf32>
    %636 = arith.mulf %635, %634 : vector<8x128xf32>
    %cst_172 = arith.constant 1.000000e+00 : f32
    %637 = vector.broadcast %cst_172 : f32 to vector<8x128xf32>
    %638 = arith.subf %636, %637 : vector<8x128xf32>
    %639 = arith.select %19, %638, %634 : vector<8x128xi1>, vector<8x128xf32>
    %640 = vector.extract_strided_slice %639 {offsets = [0, 0], sizes = [8, 32], strides = [1, 1]} : vector<8x128xf32> to vector<8x32xf32>
    %641 = vector.extract_strided_slice %639 {offsets = [0, 32], sizes = [8, 32], strides = [1, 1]} : vector<8x128xf32> to vector<8x32xf32>
    %642 = vector.extract_strided_slice %639 {offsets = [0, 64], sizes = [8, 32], strides = [1, 1]} : vector<8x128xf32> to vector<8x32xf32>
    %643 = vector.extract_strided_slice %639 {offsets = [0, 96], sizes = [8, 32], strides = [1, 1]} : vector<8x128xf32> to vector<8x32xf32>
    %644 = arith.mulf %641, %542 : vector<8x32xf32>
    %645 = arith.mulf %640, %642 : vector<8x32xf32>
    %646 = arith.addf %644, %645 : vector<8x32xf32>
    %647 = math.tanh %646 : vector<8x32xf32>
    %648 = arith.mulf %643, %647 : vector<8x32xf32>
    %cst_173 = arith.constant dense<0.000000e+00> : vector<8x128xf32>
    %649 = tpu.matmul %594, %1, %cst_173 {dimension_numbers = #tpu.dot_dimension_numbers<[1], [0], [0], [1], [0, 0, 1, 1], [], []>} : vector<8x32xf32>, vector<32x128xf32>, vector<8x128xf32> -> vector<8x128xf32>
    %650 = vector.broadcast %9 : vector<1x128xf32> to vector<8x128xf32>
    %651 = arith.addf %649, %650 : vector<8x128xf32>
    %cst_174 = arith.constant dense<0.000000e+00> : vector<8x128xf32>
    %652 = tpu.matmul %568, %5, %cst_174 {dimension_numbers = #tpu.dot_dimension_numbers<[1], [0], [0], [1], [0, 0, 1, 1], [], []>} : vector<8x32xf32>, vector<32x128xf32>, vector<8x128xf32> -> vector<8x128xf32>
    %653 = arith.addf %651, %652 : vector<8x128xf32>
    %654 = arith.negf %653 : vector<8x128xf32>
    %655 = math.exp %654 : vector<8x128xf32>
    %cst_175 = arith.constant 1.000000e+00 : f32
    %656 = vector.broadcast %cst_175 : f32 to vector<8x128xf32>
    %657 = arith.addf %656, %655 : vector<8x128xf32>
    %658 = arith.divf %656, %657 : vector<8x128xf32>
    %cst_176 = arith.constant 2.000000e+00 : f32
    %659 = vector.broadcast %cst_176 : f32 to vector<8x128xf32>
    %660 = arith.mulf %659, %658 : vector<8x128xf32>
    %cst_177 = arith.constant 1.000000e+00 : f32
    %661 = vector.broadcast %cst_177 : f32 to vector<8x128xf32>
    %662 = arith.subf %660, %661 : vector<8x128xf32>
    %663 = arith.select %19, %662, %658 : vector<8x128xi1>, vector<8x128xf32>
    %664 = vector.extract_strided_slice %663 {offsets = [0, 0], sizes = [8, 32], strides = [1, 1]} : vector<8x128xf32> to vector<8x32xf32>
    %665 = vector.extract_strided_slice %663 {offsets = [0, 32], sizes = [8, 32], strides = [1, 1]} : vector<8x128xf32> to vector<8x32xf32>
    %666 = vector.extract_strided_slice %663 {offsets = [0, 64], sizes = [8, 32], strides = [1, 1]} : vector<8x128xf32> to vector<8x32xf32>
    %667 = vector.extract_strided_slice %663 {offsets = [0, 96], sizes = [8, 32], strides = [1, 1]} : vector<8x128xf32> to vector<8x32xf32>
    %668 = arith.mulf %665, %566 : vector<8x32xf32>
    %669 = arith.mulf %664, %666 : vector<8x32xf32>
    %670 = arith.addf %668, %669 : vector<8x32xf32>
    %671 = math.tanh %670 : vector<8x32xf32>
    %672 = arith.mulf %667, %671 : vector<8x32xf32>
    %673 = vector.extract_strided_slice %20 {offsets = [7, 0, 0], sizes = [1, 8, 16], strides = [1, 1, 1]} : vector<8x8x16xf32> to vector<1x8x16xf32>
    %674 = vector.shape_cast %673 : vector<1x8x16xf32> to vector<8x16xf32>
    %cst_178 = arith.constant dense<0.000000e+00> : vector<8x128xf32>
    %675 = tpu.matmul %674, %0, %cst_178 {dimension_numbers = #tpu.dot_dimension_numbers<[1], [0], [0], [1], [0, 0, 1, 1], [], []>} : vector<8x16xf32>, vector<16x128xf32>, vector<8x128xf32> -> vector<8x128xf32>
    %676 = vector.broadcast %8 : vector<1x128xf32> to vector<8x128xf32>
    %677 = arith.addf %675, %676 : vector<8x128xf32>
    %cst_179 = arith.constant dense<0.000000e+00> : vector<8x128xf32>
    %678 = tpu.matmul %594, %4, %cst_179 {dimension_numbers = #tpu.dot_dimension_numbers<[1], [0], [0], [1], [0, 0, 1, 1], [], []>} : vector<8x32xf32>, vector<32x128xf32>, vector<8x128xf32> -> vector<8x128xf32>
    %679 = arith.addf %677, %678 : vector<8x128xf32>
    %680 = arith.negf %679 : vector<8x128xf32>
    %681 = math.exp %680 : vector<8x128xf32>
    %cst_180 = arith.constant 1.000000e+00 : f32
    %682 = vector.broadcast %cst_180 : f32 to vector<8x128xf32>
    %683 = arith.addf %682, %681 : vector<8x128xf32>
    %684 = arith.divf %682, %683 : vector<8x128xf32>
    %cst_181 = arith.constant 2.000000e+00 : f32
    %685 = vector.broadcast %cst_181 : f32 to vector<8x128xf32>
    %686 = arith.mulf %685, %684 : vector<8x128xf32>
    %cst_182 = arith.constant 1.000000e+00 : f32
    %687 = vector.broadcast %cst_182 : f32 to vector<8x128xf32>
    %688 = arith.subf %686, %687 : vector<8x128xf32>
    %689 = arith.select %19, %688, %684 : vector<8x128xi1>, vector<8x128xf32>
    %690 = vector.extract_strided_slice %689 {offsets = [0, 0], sizes = [8, 32], strides = [1, 1]} : vector<8x128xf32> to vector<8x32xf32>
    %691 = vector.extract_strided_slice %689 {offsets = [0, 32], sizes = [8, 32], strides = [1, 1]} : vector<8x128xf32> to vector<8x32xf32>
    %692 = vector.extract_strided_slice %689 {offsets = [0, 64], sizes = [8, 32], strides = [1, 1]} : vector<8x128xf32> to vector<8x32xf32>
    %693 = vector.extract_strided_slice %689 {offsets = [0, 96], sizes = [8, 32], strides = [1, 1]} : vector<8x128xf32> to vector<8x32xf32>
    %694 = arith.mulf %691, %592 : vector<8x32xf32>
    %695 = arith.mulf %690, %692 : vector<8x32xf32>
    %696 = arith.addf %694, %695 : vector<8x32xf32>
    %697 = math.tanh %696 : vector<8x32xf32>
    %698 = arith.mulf %693, %697 : vector<8x32xf32>
    %cst_183 = arith.constant dense<0.000000e+00> : vector<8x128xf32>
    %699 = tpu.matmul %648, %3, %cst_183 {dimension_numbers = #tpu.dot_dimension_numbers<[1], [0], [0], [1], [0, 0, 1, 1], [], []>} : vector<8x32xf32>, vector<32x128xf32>, vector<8x128xf32> -> vector<8x128xf32>
    %700 = vector.broadcast %11 : vector<1x128xf32> to vector<8x128xf32>
    %701 = arith.addf %699, %700 : vector<8x128xf32>
    %cst_184 = arith.constant dense<0.000000e+00> : vector<8x128xf32>
    %702 = tpu.matmul %618, %7, %cst_184 {dimension_numbers = #tpu.dot_dimension_numbers<[1], [0], [0], [1], [0, 0, 1, 1], [], []>} : vector<8x32xf32>, vector<32x128xf32>, vector<8x128xf32> -> vector<8x128xf32>
    %703 = arith.addf %701, %702 : vector<8x128xf32>
    %704 = arith.negf %703 : vector<8x128xf32>
    %705 = math.exp %704 : vector<8x128xf32>
    %cst_185 = arith.constant 1.000000e+00 : f32
    %706 = vector.broadcast %cst_185 : f32 to vector<8x128xf32>
    %707 = arith.addf %706, %705 : vector<8x128xf32>
    %708 = arith.divf %706, %707 : vector<8x128xf32>
    %cst_186 = arith.constant 2.000000e+00 : f32
    %709 = vector.broadcast %cst_186 : f32 to vector<8x128xf32>
    %710 = arith.mulf %709, %708 : vector<8x128xf32>
    %cst_187 = arith.constant 1.000000e+00 : f32
    %711 = vector.broadcast %cst_187 : f32 to vector<8x128xf32>
    %712 = arith.subf %710, %711 : vector<8x128xf32>
    %713 = arith.select %19, %712, %708 : vector<8x128xi1>, vector<8x128xf32>
    %714 = vector.extract_strided_slice %713 {offsets = [0, 0], sizes = [8, 32], strides = [1, 1]} : vector<8x128xf32> to vector<8x32xf32>
    %715 = vector.extract_strided_slice %713 {offsets = [0, 32], sizes = [8, 32], strides = [1, 1]} : vector<8x128xf32> to vector<8x32xf32>
    %716 = vector.extract_strided_slice %713 {offsets = [0, 64], sizes = [8, 32], strides = [1, 1]} : vector<8x128xf32> to vector<8x32xf32>
    %717 = vector.extract_strided_slice %713 {offsets = [0, 96], sizes = [8, 32], strides = [1, 1]} : vector<8x128xf32> to vector<8x32xf32>
    %718 = arith.mulf %715, %616 : vector<8x32xf32>
    %719 = arith.mulf %714, %716 : vector<8x32xf32>
    %720 = arith.addf %718, %719 : vector<8x32xf32>
    %721 = math.tanh %720 : vector<8x32xf32>
    %722 = arith.mulf %717, %721 : vector<8x32xf32>
    %cst_188 = arith.constant dense<0.000000e+00> : vector<8x128xf32>
    %723 = tpu.matmul %722, %12, %cst_188 {dimension_numbers = #tpu.dot_dimension_numbers<[1], [0], [0], [1], [0, 0, 1, 1], [], []>} : vector<8x32xf32>, vector<32x128xf32>, vector<8x128xf32> -> vector<8x128xf32>
    %724 = vector.broadcast %13 : vector<1x128xf32> to vector<8x128xf32>
    %725 = arith.addf %723, %724 : vector<8x128xf32>
    %c5 = arith.constant 5 : index
    %c0_189 = arith.constant 0 : index
    %c0_190 = arith.constant 0 : index
    %726 = vector.load %arg15[%c5, %c0_189, %c0_190] : memref<8x8x128xf32, #tpu.memory_space<vmem>>, vector<1x8x128xf32>
    %727 = vector.shape_cast %726 : vector<1x8x128xf32> to vector<8x128xf32>
    %728 = vector.shape_cast %725 : vector<8x128xf32> to vector<1x8x128xf32>
    tpu.vector_store %arg15[%c5, %c0_189, %c0_190], %728 {strides = array<i32>} : memref<8x8x128xf32, #tpu.memory_space<vmem>>, vector<1x8x128xf32>,
    %cst_191 = arith.constant dense<0.000000e+00> : vector<8x128xf32>
    %729 = tpu.matmul %672, %2, %cst_191 {dimension_numbers = #tpu.dot_dimension_numbers<[1], [0], [0], [1], [0, 0, 1, 1], [], []>} : vector<8x32xf32>, vector<32x128xf32>, vector<8x128xf32> -> vector<8x128xf32>
    %730 = vector.broadcast %10 : vector<1x128xf32> to vector<8x128xf32>
    %731 = arith.addf %729, %730 : vector<8x128xf32>
    %cst_192 = arith.constant dense<0.000000e+00> : vector<8x128xf32>
    %732 = tpu.matmul %648, %6, %cst_192 {dimension_numbers = #tpu.dot_dimension_numbers<[1], [0], [0], [1], [0, 0, 1, 1], [], []>} : vector<8x32xf32>, vector<32x128xf32>, vector<8x128xf32> -> vector<8x128xf32>
    %733 = arith.addf %731, %732 : vector<8x128xf32>
    %734 = arith.negf %733 : vector<8x128xf32>
    %735 = math.exp %734 : vector<8x128xf32>
    %cst_193 = arith.constant 1.000000e+00 : f32
    %736 = vector.broadcast %cst_193 : f32 to vector<8x128xf32>
    %737 = arith.addf %736, %735 : vector<8x128xf32>
    %738 = arith.divf %736, %737 : vector<8x128xf32>
    %cst_194 = arith.constant 2.000000e+00 : f32
    %739 = vector.broadcast %cst_194 : f32 to vector<8x128xf32>
    %740 = arith.mulf %739, %738 : vector<8x128xf32>
    %cst_195 = arith.constant 1.000000e+00 : f32
    %741 = vector.broadcast %cst_195 : f32 to vector<8x128xf32>
    %742 = arith.subf %740, %741 : vector<8x128xf32>
    %743 = arith.select %19, %742, %738 : vector<8x128xi1>, vector<8x128xf32>
    %744 = vector.extract_strided_slice %743 {offsets = [0, 0], sizes = [8, 32], strides = [1, 1]} : vector<8x128xf32> to vector<8x32xf32>
    %745 = vector.extract_strided_slice %743 {offsets = [0, 32], sizes = [8, 32], strides = [1, 1]} : vector<8x128xf32> to vector<8x32xf32>
    %746 = vector.extract_strided_slice %743 {offsets = [0, 64], sizes = [8, 32], strides = [1, 1]} : vector<8x128xf32> to vector<8x32xf32>
    %747 = vector.extract_strided_slice %743 {offsets = [0, 96], sizes = [8, 32], strides = [1, 1]} : vector<8x128xf32> to vector<8x32xf32>
    %748 = arith.mulf %745, %646 : vector<8x32xf32>
    %749 = arith.mulf %744, %746 : vector<8x32xf32>
    %750 = arith.addf %748, %749 : vector<8x32xf32>
    %751 = math.tanh %750 : vector<8x32xf32>
    %752 = arith.mulf %747, %751 : vector<8x32xf32>
    %cst_196 = arith.constant dense<0.000000e+00> : vector<8x128xf32>
    %753 = tpu.matmul %698, %1, %cst_196 {dimension_numbers = #tpu.dot_dimension_numbers<[1], [0], [0], [1], [0, 0, 1, 1], [], []>} : vector<8x32xf32>, vector<32x128xf32>, vector<8x128xf32> -> vector<8x128xf32>
    %754 = vector.broadcast %9 : vector<1x128xf32> to vector<8x128xf32>
    %755 = arith.addf %753, %754 : vector<8x128xf32>
    %cst_197 = arith.constant dense<0.000000e+00> : vector<8x128xf32>
    %756 = tpu.matmul %672, %5, %cst_197 {dimension_numbers = #tpu.dot_dimension_numbers<[1], [0], [0], [1], [0, 0, 1, 1], [], []>} : vector<8x32xf32>, vector<32x128xf32>, vector<8x128xf32> -> vector<8x128xf32>
    %757 = arith.addf %755, %756 : vector<8x128xf32>
    %758 = arith.negf %757 : vector<8x128xf32>
    %759 = math.exp %758 : vector<8x128xf32>
    %cst_198 = arith.constant 1.000000e+00 : f32
    %760 = vector.broadcast %cst_198 : f32 to vector<8x128xf32>
    %761 = arith.addf %760, %759 : vector<8x128xf32>
    %762 = arith.divf %760, %761 : vector<8x128xf32>
    %cst_199 = arith.constant 2.000000e+00 : f32
    %763 = vector.broadcast %cst_199 : f32 to vector<8x128xf32>
    %764 = arith.mulf %763, %762 : vector<8x128xf32>
    %cst_200 = arith.constant 1.000000e+00 : f32
    %765 = vector.broadcast %cst_200 : f32 to vector<8x128xf32>
    %766 = arith.subf %764, %765 : vector<8x128xf32>
    %767 = arith.select %19, %766, %762 : vector<8x128xi1>, vector<8x128xf32>
    %768 = vector.extract_strided_slice %767 {offsets = [0, 0], sizes = [8, 32], strides = [1, 1]} : vector<8x128xf32> to vector<8x32xf32>
    %769 = vector.extract_strided_slice %767 {offsets = [0, 32], sizes = [8, 32], strides = [1, 1]} : vector<8x128xf32> to vector<8x32xf32>
    %770 = vector.extract_strided_slice %767 {offsets = [0, 64], sizes = [8, 32], strides = [1, 1]} : vector<8x128xf32> to vector<8x32xf32>
    %771 = vector.extract_strided_slice %767 {offsets = [0, 96], sizes = [8, 32], strides = [1, 1]} : vector<8x128xf32> to vector<8x32xf32>
    %772 = arith.mulf %769, %670 : vector<8x32xf32>
    %773 = arith.mulf %768, %770 : vector<8x32xf32>
    %774 = arith.addf %772, %773 : vector<8x32xf32>
    %775 = math.tanh %774 : vector<8x32xf32>
    %776 = arith.mulf %771, %775 : vector<8x32xf32>
    %cst_201 = arith.constant dense<0.000000e+00> : vector<8x128xf32>
    %777 = tpu.matmul %752, %3, %cst_201 {dimension_numbers = #tpu.dot_dimension_numbers<[1], [0], [0], [1], [0, 0, 1, 1], [], []>} : vector<8x32xf32>, vector<32x128xf32>, vector<8x128xf32> -> vector<8x128xf32>
    %778 = vector.broadcast %11 : vector<1x128xf32> to vector<8x128xf32>
    %779 = arith.addf %777, %778 : vector<8x128xf32>
    %cst_202 = arith.constant dense<0.000000e+00> : vector<8x128xf32>
    %780 = tpu.matmul %722, %7, %cst_202 {dimension_numbers = #tpu.dot_dimension_numbers<[1], [0], [0], [1], [0, 0, 1, 1], [], []>} : vector<8x32xf32>, vector<32x128xf32>, vector<8x128xf32> -> vector<8x128xf32>
    %781 = arith.addf %779, %780 : vector<8x128xf32>
    %782 = arith.negf %781 : vector<8x128xf32>
    %783 = math.exp %782 : vector<8x128xf32>
    %cst_203 = arith.constant 1.000000e+00 : f32
    %784 = vector.broadcast %cst_203 : f32 to vector<8x128xf32>
    %785 = arith.addf %784, %783 : vector<8x128xf32>
    %786 = arith.divf %784, %785 : vector<8x128xf32>
    %cst_204 = arith.constant 2.000000e+00 : f32
    %787 = vector.broadcast %cst_204 : f32 to vector<8x128xf32>
    %788 = arith.mulf %787, %786 : vector<8x128xf32>
    %cst_205 = arith.constant 1.000000e+00 : f32
    %789 = vector.broadcast %cst_205 : f32 to vector<8x128xf32>
    %790 = arith.subf %788, %789 : vector<8x128xf32>
    %791 = arith.select %19, %790, %786 : vector<8x128xi1>, vector<8x128xf32>
    %792 = vector.extract_strided_slice %791 {offsets = [0, 0], sizes = [8, 32], strides = [1, 1]} : vector<8x128xf32> to vector<8x32xf32>
    %793 = vector.extract_strided_slice %791 {offsets = [0, 32], sizes = [8, 32], strides = [1, 1]} : vector<8x128xf32> to vector<8x32xf32>
    %794 = vector.extract_strided_slice %791 {offsets = [0, 64], sizes = [8, 32], strides = [1, 1]} : vector<8x128xf32> to vector<8x32xf32>
    %795 = vector.extract_strided_slice %791 {offsets = [0, 96], sizes = [8, 32], strides = [1, 1]} : vector<8x128xf32> to vector<8x32xf32>
    %796 = arith.mulf %793, %720 : vector<8x32xf32>
    %797 = arith.mulf %792, %794 : vector<8x32xf32>
    %798 = arith.addf %796, %797 : vector<8x32xf32>
    %799 = math.tanh %798 : vector<8x32xf32>
    %800 = arith.mulf %795, %799 : vector<8x32xf32>
    %cst_206 = arith.constant dense<0.000000e+00> : vector<8x128xf32>
    %801 = tpu.matmul %800, %12, %cst_206 {dimension_numbers = #tpu.dot_dimension_numbers<[1], [0], [0], [1], [0, 0, 1, 1], [], []>} : vector<8x32xf32>, vector<32x128xf32>, vector<8x128xf32> -> vector<8x128xf32>
    %802 = vector.broadcast %13 : vector<1x128xf32> to vector<8x128xf32>
    %803 = arith.addf %801, %802 : vector<8x128xf32>
    %c6 = arith.constant 6 : index
    %c0_207 = arith.constant 0 : index
    %c0_208 = arith.constant 0 : index
    %804 = vector.load %arg15[%c6, %c0_207, %c0_208] : memref<8x8x128xf32, #tpu.memory_space<vmem>>, vector<1x8x128xf32>
    %805 = vector.shape_cast %804 : vector<1x8x128xf32> to vector<8x128xf32>
    %806 = vector.shape_cast %803 : vector<8x128xf32> to vector<1x8x128xf32>
    tpu.vector_store %arg15[%c6, %c0_207, %c0_208], %806 {strides = array<i32>} : memref<8x8x128xf32, #tpu.memory_space<vmem>>, vector<1x8x128xf32>,
    %cst_209 = arith.constant dense<0.000000e+00> : vector<8x128xf32>
    %807 = tpu.matmul %776, %2, %cst_209 {dimension_numbers = #tpu.dot_dimension_numbers<[1], [0], [0], [1], [0, 0, 1, 1], [], []>} : vector<8x32xf32>, vector<32x128xf32>, vector<8x128xf32> -> vector<8x128xf32>
    %808 = vector.broadcast %10 : vector<1x128xf32> to vector<8x128xf32>
    %809 = arith.addf %807, %808 : vector<8x128xf32>
    %cst_210 = arith.constant dense<0.000000e+00> : vector<8x128xf32>
    %810 = tpu.matmul %752, %6, %cst_210 {dimension_numbers = #tpu.dot_dimension_numbers<[1], [0], [0], [1], [0, 0, 1, 1], [], []>} : vector<8x32xf32>, vector<32x128xf32>, vector<8x128xf32> -> vector<8x128xf32>
    %811 = arith.addf %809, %810 : vector<8x128xf32>
    %812 = arith.negf %811 : vector<8x128xf32>
    %813 = math.exp %812 : vector<8x128xf32>
    %cst_211 = arith.constant 1.000000e+00 : f32
    %814 = vector.broadcast %cst_211 : f32 to vector<8x128xf32>
    %815 = arith.addf %814, %813 : vector<8x128xf32>
    %816 = arith.divf %814, %815 : vector<8x128xf32>
    %cst_212 = arith.constant 2.000000e+00 : f32
    %817 = vector.broadcast %cst_212 : f32 to vector<8x128xf32>
    %818 = arith.mulf %817, %816 : vector<8x128xf32>
    %cst_213 = arith.constant 1.000000e+00 : f32
    %819 = vector.broadcast %cst_213 : f32 to vector<8x128xf32>
    %820 = arith.subf %818, %819 : vector<8x128xf32>
    %821 = arith.select %19, %820, %816 : vector<8x128xi1>, vector<8x128xf32>
    %822 = vector.extract_strided_slice %821 {offsets = [0, 0], sizes = [8, 32], strides = [1, 1]} : vector<8x128xf32> to vector<8x32xf32>
    %823 = vector.extract_strided_slice %821 {offsets = [0, 32], sizes = [8, 32], strides = [1, 1]} : vector<8x128xf32> to vector<8x32xf32>
    %824 = vector.extract_strided_slice %821 {offsets = [0, 64], sizes = [8, 32], strides = [1, 1]} : vector<8x128xf32> to vector<8x32xf32>
    %825 = vector.extract_strided_slice %821 {offsets = [0, 96], sizes = [8, 32], strides = [1, 1]} : vector<8x128xf32> to vector<8x32xf32>
    %826 = arith.mulf %823, %750 : vector<8x32xf32>
    %827 = arith.mulf %822, %824 : vector<8x32xf32>
    %828 = arith.addf %826, %827 : vector<8x32xf32>
    %829 = math.tanh %828 : vector<8x32xf32>
    %830 = arith.mulf %825, %829 : vector<8x32xf32>
    %cst_214 = arith.constant dense<0.000000e+00> : vector<8x128xf32>
    %831 = tpu.matmul %830, %3, %cst_214 {dimension_numbers = #tpu.dot_dimension_numbers<[1], [0], [0], [1], [0, 0, 1, 1], [], []>} : vector<8x32xf32>, vector<32x128xf32>, vector<8x128xf32> -> vector<8x128xf32>
    %832 = vector.broadcast %11 : vector<1x128xf32> to vector<8x128xf32>
    %833 = arith.addf %831, %832 : vector<8x128xf32>
    %cst_215 = arith.constant dense<0.000000e+00> : vector<8x128xf32>
    %834 = tpu.matmul %800, %7, %cst_215 {dimension_numbers = #tpu.dot_dimension_numbers<[1], [0], [0], [1], [0, 0, 1, 1], [], []>} : vector<8x32xf32>, vector<32x128xf32>, vector<8x128xf32> -> vector<8x128xf32>
    %835 = arith.addf %833, %834 : vector<8x128xf32>
    %836 = arith.negf %835 : vector<8x128xf32>
    %837 = math.exp %836 : vector<8x128xf32>
    %cst_216 = arith.constant 1.000000e+00 : f32
    %838 = vector.broadcast %cst_216 : f32 to vector<8x128xf32>
    %839 = arith.addf %838, %837 : vector<8x128xf32>
    %840 = arith.divf %838, %839 : vector<8x128xf32>
    %cst_217 = arith.constant 2.000000e+00 : f32
    %841 = vector.broadcast %cst_217 : f32 to vector<8x128xf32>
    %842 = arith.mulf %841, %840 : vector<8x128xf32>
    %cst_218 = arith.constant 1.000000e+00 : f32
    %843 = vector.broadcast %cst_218 : f32 to vector<8x128xf32>
    %844 = arith.subf %842, %843 : vector<8x128xf32>
    %845 = arith.select %19, %844, %840 : vector<8x128xi1>, vector<8x128xf32>
    %846 = vector.extract_strided_slice %845 {offsets = [0, 0], sizes = [8, 32], strides = [1, 1]} : vector<8x128xf32> to vector<8x32xf32>
    %847 = vector.extract_strided_slice %845 {offsets = [0, 32], sizes = [8, 32], strides = [1, 1]} : vector<8x128xf32> to vector<8x32xf32>
    %848 = vector.extract_strided_slice %845 {offsets = [0, 64], sizes = [8, 32], strides = [1, 1]} : vector<8x128xf32> to vector<8x32xf32>
    %849 = vector.extract_strided_slice %845 {offsets = [0, 96], sizes = [8, 32], strides = [1, 1]} : vector<8x128xf32> to vector<8x32xf32>
    %850 = arith.mulf %847, %798 : vector<8x32xf32>
    %851 = arith.mulf %846, %848 : vector<8x32xf32>
    %852 = arith.addf %850, %851 : vector<8x32xf32>
    %853 = math.tanh %852 : vector<8x32xf32>
    %854 = arith.mulf %849, %853 : vector<8x32xf32>
    %cst_219 = arith.constant dense<0.000000e+00> : vector<8x128xf32>
    %855 = tpu.matmul %854, %12, %cst_219 {dimension_numbers = #tpu.dot_dimension_numbers<[1], [0], [0], [1], [0, 0, 1, 1], [], []>} : vector<8x32xf32>, vector<32x128xf32>, vector<8x128xf32> -> vector<8x128xf32>
    %856 = vector.broadcast %13 : vector<1x128xf32> to vector<8x128xf32>
    %857 = arith.addf %855, %856 : vector<8x128xf32>
    %c7 = arith.constant 7 : index
    %c0_220 = arith.constant 0 : index
    %c0_221 = arith.constant 0 : index
    %858 = vector.load %arg15[%c7, %c0_220, %c0_221] : memref<8x8x128xf32, #tpu.memory_space<vmem>>, vector<1x8x128xf32>
    %859 = vector.shape_cast %858 : vector<1x8x128xf32> to vector<8x128xf32>
    %860 = vector.shape_cast %857 : vector<8x128xf32> to vector<1x8x128xf32>
    tpu.vector_store %arg15[%c7, %c0_220, %c0_221], %860 {strides = array<i32>} : memref<8x8x128xf32, #tpu.memory_space<vmem>>, vector<1x8x128xf32>,
    return
  }
}

</mosaic_0001>

<llo_original>
// kernel: music_generation_forward.1
$region0: #{music_generation_forward.1}
  #allocation0 [shape = 'u32[]', space=smem, size = 0x4, offset = 0x4, fixed_abs, tag = 'smem constant byte address 0x4 - core index']
  #allocation1 [shape = 'u32[144,128]{1,0:T(1,128)}', space=vmem, size = 0x12000, scoped, tag = 'internal scratch']
  %s0 = inlined_call_operand.vmem [shape: f32[8,8,16], index: 0, kind: input, shape index: {}]
  %s1 = inlined_call_operand.vmem [shape: f32[16,128], index: 1, kind: input, shape index: {}]
  %s2 = inlined_call_operand.vmem [shape: f32[32,128], index: 2, kind: input, shape index: {}]
  %s3 = inlined_call_operand.vmem [shape: f32[1,128], index: 3, kind: input, shape index: {}]
  %s4 = inlined_call_operand.vmem [shape: f32[32,128], index: 4, kind: input, shape index: {}]
  %s5 = inlined_call_operand.vmem [shape: f32[32,128], index: 5, kind: input, shape index: {}]
  %s6 = inlined_call_operand.vmem [shape: f32[1,128], index: 6, kind: input, shape index: {}]
  %s7 = inlined_call_operand.vmem [shape: f32[32,128], index: 7, kind: input, shape index: {}]
  %s8 = inlined_call_operand.vmem [shape: f32[32,128], index: 8, kind: input, shape index: {}]
  %s9 = inlined_call_operand.vmem [shape: f32[1,128], index: 9, kind: input, shape index: {}]
  %s10 = inlined_call_operand.vmem [shape: f32[32,128], index: 10, kind: input, shape index: {}]
  %s11 = inlined_call_operand.vmem [shape: f32[32,128], index: 11, kind: input, shape index: {}]
  %s12 = inlined_call_operand.vmem [shape: f32[1,128], index: 12, kind: input, shape index: {}]
  %s13 = inlined_call_operand.vmem [shape: f32[32,128], index: 13, kind: input, shape index: {}]
  %s14 = inlined_call_operand.vmem [shape: f32[1,128], index: 14, kind: input, shape index: {}]
  %s15 = inlined_call_operand.vmem [shape: f32[8,8,128], index: 15, kind: output, shape index: {}]
  %s16 = sld [smem:[#allocation0]]
  $region70: #{music_generation_forward.1} parent=0
    _
  %s18 = ssub.s32 1, %s16
  %s19 = scalar_select 0, %s18, %s16
  // Predicated region
  $region2: #{music_generation_forward.1} parent=0 // pred_check
    _
  $region3: #{music_generation_forward.1} parent=0 // pred_check_branch
    %21 = sbr.rel (0) target = $region5
  $region4: #{music_generation_forward.1} parent=0 // pred_region
    _
  $region5: #{music_generation_forward.1} parent=0 // pred_fallthru
    _
  // Predicated region
  $region6: #{music_generation_forward.1} parent=0 // pred_check
    _
  $region7: #{music_generation_forward.1} parent=0 // pred_check_branch
    %23 = sbr.rel (0) target = $region9
  $region8: #{music_generation_forward.1} parent=0 // pred_region
    _
  $region9: #{music_generation_forward.1} parent=0 // pred_fallthru
    _
  // Predicated region
  $region10: #{music_generation_forward.1} parent=0 // pred_check
    _
  $region11: #{music_generation_forward.1} parent=0 // pred_check_branch
    %25 = sbr.rel (0) target = $region13
  $region12: #{music_generation_forward.1} parent=0 // pred_region
    _
  $region13: #{music_generation_forward.1} parent=0 // pred_fallthru
    _
  // Predicated region
  $region14: #{music_generation_forward.1} parent=0 // pred_check
    _
  $region15: #{music_generation_forward.1} parent=0 // pred_check_branch
    %27 = sbr.rel (0) target = $region17
  $region16: #{music_generation_forward.1} parent=0 // pred_region
    _
  $region17: #{music_generation_forward.1} parent=0 // pred_fallthru
    _
  // Predicated region
  $region18: #{music_generation_forward.1} parent=0 // pred_check
    _
  $region19: #{music_generation_forward.1} parent=0 // pred_check_branch
    %29 = sbr.rel (0) target = $region21
  $region20: #{music_generation_forward.1} parent=0 // pred_region
    _
  $region21: #{music_generation_forward.1} parent=0 // pred_fallthru
    _
  // Predicated region
  $region22: #{music_generation_forward.1} parent=0 // pred_check
    _
  $region23: #{music_generation_forward.1} parent=0 // pred_check_branch
    %31 = sbr.rel (0) target = $region25
  $region24: #{music_generation_forward.1} parent=0 // pred_region
    _
  $region25: #{music_generation_forward.1} parent=0 // pred_fallthru
    _
  // Predicated region
  $region26: #{music_generation_forward.1} parent=0 // pred_check
    _
  $region27: #{music_generation_forward.1} parent=0 // pred_check_branch
    %33 = sbr.rel (0) target = $region29
  $region28: #{music_generation_forward.1} parent=0 // pred_region
    _
  $region29: #{music_generation_forward.1} parent=0 // pred_fallthru
    _
  // Predicated region
  $region30: #{music_generation_forward.1} parent=0 // pred_check
    _
  $region31: #{music_generation_forward.1} parent=0 // pred_check_branch
    %35 = sbr.rel (0) target = $region33
  $region32: #{music_generation_forward.1} parent=0 // pred_region
    _
  $region33: #{music_generation_forward.1} parent=0 // pred_fallthru
    _
  // Predicated region
  $region34: #{music_generation_forward.1} parent=0 // pred_check
    _
  $region35: #{music_generation_forward.1} parent=0 // pred_check_branch
    %37 = sbr.rel (0) target = $region37
  $region36: #{music_generation_forward.1} parent=0 // pred_region
    _
  $region37: #{music_generation_forward.1} parent=0 // pred_fallthru
    _
  // Predicated region
  $region38: #{music_generation_forward.1} parent=0 // pred_check
    _
  $region39: #{music_generation_forward.1} parent=0 // pred_check_branch
    %39 = sbr.rel (0) target = $region41
  $region40: #{music_generation_forward.1} parent=0 // pred_region
    _
  $region41: #{music_generation_forward.1} parent=0 // pred_fallthru
    _
  // Predicated region
  $region42: #{music_generation_forward.1} parent=0 // pred_check
    _
  $region43: #{music_generation_forward.1} parent=0 // pred_check_branch
    %41 = sbr.rel (0) target = $region45
  $region44: #{music_generation_forward.1} parent=0 // pred_region
    _
  $region45: #{music_generation_forward.1} parent=0 // pred_fallthru
    _
  // Predicated region
  $region46: #{music_generation_forward.1} parent=0 // pred_check
    _
  $region47: #{music_generation_forward.1} parent=0 // pred_check_branch
    %43 = sbr.rel (0) target = $region49
  $region48: #{music_generation_forward.1} parent=0 // pred_region
    _
  $region49: #{music_generation_forward.1} parent=0 // pred_fallthru
    _
  // Predicated region
  $region50: #{music_generation_forward.1} parent=0 // pred_check
    _
  $region51: #{music_generation_forward.1} parent=0 // pred_check_branch
    %45 = sbr.rel (0) target = $region53
  $region52: #{music_generation_forward.1} parent=0 // pred_region
    _
  $region53: #{music_generation_forward.1} parent=0 // pred_fallthru
    _
  // Predicated region
  $region54: #{music_generation_forward.1} parent=0 // pred_check
    _
  $region55: #{music_generation_forward.1} parent=0 // pred_check_branch
    %47 = sbr.rel (0) target = $region57
  $region56: #{music_generation_forward.1} parent=0 // pred_region
    _
  $region57: #{music_generation_forward.1} parent=0 // pred_fallthru
    _
  // Predicated region
  $region58: #{music_generation_forward.1} parent=0 // pred_check
    _
  $region59: #{music_generation_forward.1} parent=0 // pred_check_branch
    %49 = sbr.rel (0) target = $region61
  $region60: #{music_generation_forward.1} parent=0 // pred_region
    _
  $region61: #{music_generation_forward.1} parent=0 // pred_fallthru
    _
  %v50 = vld [vmem:[%s1] sm:$0xff]
  %v51 = vld [vmem:[%s1 + $0x8] sm:$0xff]
  %v52 = vld [vmem:[%s4] sm:$0xff]
  %v53 = vld [vmem:[%s4 + $0x8] sm:$0xff]
  %v54 = vld [vmem:[%s4 + $0x10] sm:$0xff]
  %v55 = vld [vmem:[%s4 + $0x18] sm:$0xff]
  %v56 = vld [vmem:[%s7] sm:$0xff]
  %v57 = vld [vmem:[%s7 + $0x8] sm:$0xff]
  %v58 = vld [vmem:[%s7 + $0x10] sm:$0xff]
  %v59 = vld [vmem:[%s7 + $0x18] sm:$0xff]
  %v60 = vld [vmem:[%s10] sm:$0xff]
  %v61 = vld [vmem:[%s10 + $0x8] sm:$0xff]
  %v62 = vld [vmem:[%s10 + $0x10] sm:$0xff]
  %v63 = vld [vmem:[%s10 + $0x18] sm:$0xff]
  %v64 = vld [vmem:[%s2] sm:$0xff]
  %v65 = vld [vmem:[%s2 + $0x8] sm:$0xff]
  %v66 = vld [vmem:[%s2 + $0x10] sm:$0xff]
  %v67 = vld [vmem:[%s2 + $0x18] sm:$0xff]
  %v68 = vld [vmem:[%s5] sm:$0xff]
  %v69 = vld [vmem:[%s5 + $0x8] sm:$0xff]
  %v70 = vld [vmem:[%s5 + $0x10] sm:$0xff]
  %v71 = vld [vmem:[%s5 + $0x18] sm:$0xff]
  %v72 = vld [vmem:[%s8] sm:$0xff]
  %v73 = vld [vmem:[%s8 + $0x8] sm:$0xff]
  %v74 = vld [vmem:[%s8 + $0x10] sm:$0xff]
  %v75 = vld [vmem:[%s8 + $0x18] sm:$0xff]
  %v76 = vld [vmem:[%s11] sm:$0xff]
  %v77 = vld [vmem:[%s11 + $0x8] sm:$0xff]
  %v78 = vld [vmem:[%s11 + $0x10] sm:$0xff]
  %v79 = vld [vmem:[%s11 + $0x18] sm:$0xff]
  %v80 = vld [vmem:[%s3] sm:$0x1]
  %v81 = vld [vmem:[%s6] sm:$0x1]
  %v82 = vld [vmem:[%s9] sm:$0x1]
  %v83 = vld [vmem:[%s12] sm:$0x1]
  %v84 = vld [vmem:[%s13] sm:$0xff]
  %v85 = vld [vmem:[%s13 + $0x8] sm:$0xff]
  %v86 = vld [vmem:[%s13 + $0x10] sm:$0xff]
  %v87 = vld [vmem:[%s13 + $0x18] sm:$0xff]
  %v88 = vld [vmem:[%s14] sm:$0x1]
  %v89 = vlaneseq
  %v90 = vand.u32 %v89, 127
  %vm91 = vcmp.ge.s32.totalorder %v90, 64
  %vm92 = vcmp.lt.s32.totalorder %v90, 96
  %vm93 = vmand %vm91, %vm92
  %v94 = vld [vmem:[%s0] sm:$0xff]
  %v95 = vld [vmem:[%s0 + $0x8] sm:$0xff]
  %v96 = vld [vmem:[%s0 + $0x10] sm:$0xff]
  %v97 = vld [vmem:[%s0 + $0x18] sm:$0xff]
  %v98 = vld [vmem:[%s0 + $0x20] sm:$0xff]
  %v99 = vld [vmem:[%s0 + $0x28] sm:$0xff]
  %v100 = vld [vmem:[%s0 + $0x30] sm:$0xff]
  %v101 = vld [vmem:[%s0 + $0x38] sm:$0xff]
  %v103 = vlaneseq
  %v104 = vshrl.u32 %v103, 7
  %v105 = vsub.s32 0, %v104
  %v106 = vrot.slane %v80, %v105
  %vm108 = vcmask 130048
  %v110 = vsel %vm108, %v94, 0
  %112 = vmatprep.subr.mxu0 0.0
  %113 = vmatpush1.msra.mxu0 %v50
  %114 = vmatprep.subr.mxu0 0.0
  %115 = vmatpush1.msra.mxu0 %v51
  %116 = vmatprep.subr.mxu0 0.0
  %117 = vmatpush1.msra.mxu0 0.0
  %118 = vmatprep.subr.mxu0 0.0
  %119 = vmatpush1.msra.mxu0 0.0
  %120 = vmatprep.subr.mxu0 0.0
  %121 = vmatpush1.msra.mxu0 0.0
  %122 = vmatprep.subr.mxu0 0.0
  %123 = vmatpush1.msra.mxu0 0.0
  %124 = vmatprep.subr.mxu0 0.0
  %125 = vmatpush1.msra.mxu0 0.0
  %126 = vmatprep.subr.mxu0 0.0
  %127 = vmatpush1.msra.mxu0 0.0
  %128 = vmatprep.subr.mxu0 0.0
  %129 = vmatpush1.msra.mxu0 0.0
  %130 = vmatprep.subr.mxu0 0.0
  %131 = vmatpush1.msra.mxu0 0.0
  %132 = vmatprep.subr.mxu0 0.0
  %133 = vmatpush1.msra.mxu0 0.0
  %134 = vmatprep.subr.mxu0 0.0
  %135 = vmatpush1.msra.mxu0 0.0
  %136 = vmatprep.subr.mxu0 0.0
  %137 = vmatpush1.msra.mxu0 0.0
  %138 = vmatprep.subr.mxu0 0.0
  %139 = vmatpush1.msra.mxu0 0.0
  %140 = vmatprep.subr.mxu0 0.0
  %141 = vmatpush1.msra.mxu0 0.0
  %142 = vmatprep.subr.mxu0 0.0
  %143 = vmatpush1.msra.mxu0 0.0
  %144 = vmatprep.subr.mxu0 0.0
  %145 = vmatpush1.msra.mxu0 0.0
  %146 = vmatprep.subr.mxu0 0.0
  %147 = vmatpush1.msra.mxu0 0.0
  %148 = vmatprep.subr.mxu0 0.0
  %149 = vmatpush1.msra.mxu0 0.0
  %150 = vmatprep.subr.mxu0 0.0
  %151 = vmatpush1.msra.mxu0 0.0
  %152 = vmatprep.subr.mxu0 0.0
  %153 = vmatpush1.msra.mxu0 0.0
  %154 = vmatprep.subr.mxu0 0.0
  %155 = vmatpush1.msra.mxu0 0.0
  %156 = vmatprep.subr.mxu0 0.0
  %157 = vmatpush1.msra.mxu0 0.0
  %158 = vmatprep.subr.mxu0 0.0
  %159 = vmatpush1.msra.mxu0 0.0
  %160 = vmatprep.subr.mxu0 0.0
  %161 = vmatpush1.msra.mxu0 0.0
  %162 = vmatprep.subr.mxu0 0.0
  %163 = vmatpush1.msra.mxu0 0.0
  %164 = vmatprep.subr.mxu0 0.0
  %165 = vmatpush1.msra.mxu0 0.0
  %166 = vmatprep.subr.mxu0 0.0
  %167 = vmatpush1.msra.mxu0 0.0
  %168 = vmatprep.subr.mxu0 0.0
  %169 = vmatpush1.msra.mxu0 0.0
  %170 = vmatprep.subr.mxu0 0.0
  %171 = vmatpush1.msra.mxu0 0.0
  %172 = vmatprep.subr.mxu0 0.0
  %173 = vmatpush1.msra.mxu0 0.0
  %174 = vmatprep.subr.mxu0 0.0
  %175 = vmatpush1.msra.mxu0 0.0
  %176 = vmatprep.mubr.f32.mxu0 0.0
  %177 = vmatmul.mubr.f32.gmra.mrb[0].mxu0 %v110
  %v178 = vpop.f32.mrb[0].mxu0
  %v179 = vadd.f32 %v106, %v178
  %v180 = vpop.f32.mrb[0].mxu0
  %181 = vdwg.mxu0
  %vm182 = vcmask 261120
  %v184 = vsel %vm182, 0.0, 0
  %186 = vmatprep.subr.mxu0 0.0
  %187 = vmatpush1.msra.mxu0 %v64
  %188 = vmatprep.subr.mxu0 0.0
  %189 = vmatpush1.msra.mxu0 %v65
  %190 = vmatprep.subr.mxu0 0.0
  %191 = vmatpush1.msra.mxu0 %v66
  %192 = vmatprep.subr.mxu0 0.0
  %193 = vmatpush1.msra.mxu0 %v67
  %194 = vmatprep.subr.mxu0 0.0
  %195 = vmatpush1.msra.mxu0 0.0
  %196 = vmatprep.subr.mxu0 0.0
  %197 = vmatpush1.msra.mxu0 0.0
  %198 = vmatprep.subr.mxu0 0.0
  %199 = vmatpush1.msra.mxu0 0.0
  %200 = vmatprep.subr.mxu0 0.0
  %201 = vmatpush1.msra.mxu0 0.0
  %202 = vmatprep.subr.mxu0 0.0
  %203 = vmatpush1.msra.mxu0 0.0
  %204 = vmatprep.subr.mxu0 0.0
  %205 = vmatpush1.msra.mxu0 0.0
  %206 = vmatprep.subr.mxu0 0.0
  %207 = vmatpush1.msra.mxu0 0.0
  %208 = vmatprep.subr.mxu0 0.0
  %209 = vmatpush1.msra.mxu0 0.0
  %210 = vmatprep.subr.mxu0 0.0
  %211 = vmatpush1.msra.mxu0 0.0
  %212 = vmatprep.subr.mxu0 0.0
  %213 = vmatpush1.msra.mxu0 0.0
  %214 = vmatprep.subr.mxu0 0.0
  %215 = vmatpush1.msra.mxu0 0.0
  %216 = vmatprep.subr.mxu0 0.0
  %217 = vmatpush1.msra.mxu0 0.0
  %218 = vmatprep.subr.mxu0 0.0
  %219 = vmatpush1.msra.mxu0 0.0
  %220 = vmatprep.subr.mxu0 0.0
  %221 = vmatpush1.msra.mxu0 0.0
  %222 = vmatprep.subr.mxu0 0.0
  %223 = vmatpush1.msra.mxu0 0.0
  %224 = vmatprep.subr.mxu0 0.0
  %225 = vmatpush1.msra.mxu0 0.0
  %226 = vmatprep.subr.mxu0 0.0
  %227 = vmatpush1.msra.mxu0 0.0
  %228 = vmatprep.subr.mxu0 0.0
  %229 = vmatpush1.msra.mxu0 0.0
  %230 = vmatprep.subr.mxu0 0.0
  %231 = vmatpush1.msra.mxu0 0.0
  %232 = vmatprep.subr.mxu0 0.0
  %233 = vmatpush1.msra.mxu0 0.0
  %234 = vmatprep.subr.mxu0 0.0
  %235 = vmatpush1.msra.mxu0 0.0
  %236 = vmatprep.subr.mxu0 0.0
  %237 = vmatpush1.msra.mxu0 0.0
  %238 = vmatprep.subr.mxu0 0.0
  %239 = vmatpush1.msra.mxu0 0.0
  %240 = vmatprep.subr.mxu0 0.0
  %241 = vmatpush1.msra.mxu0 0.0
  %242 = vmatprep.subr.mxu0 0.0
  %243 = vmatpush1.msra.mxu0 0.0
  %244 = vmatprep.subr.mxu0 0.0
  %245 = vmatpush1.msra.mxu0 0.0
  %246 = vmatprep.subr.mxu0 0.0
  %247 = vmatpush1.msra.mxu0 0.0
  %248 = vmatprep.subr.mxu0 0.0
  %249 = vmatpush1.msra.mxu0 0.0
  %250 = vmatprep.mubr.f32.mxu0 0.0
  %251 = vmatmul.mubr.f32.gmra.mrb[0].mxu0 %v184
  %v252 = vpop.f32.mrb[0].mxu0
  %v253 = vadd.f32 0.0, %v252
  %v254 = vpop.f32.mrb[0].mxu0
  %255 = vdwg.mxu0
  %v256 = vadd.f32 %v179, %v253
  %v257 = vxor.u32 %v256, 2147483648
  %v258 = vmul.f32 %v257, 1.442695
  %v259 = vpow.pop %v258
  %v260 = vadd.f32 %v259, 1.0
  %v261 = vrcp.pop %v260
  %v262 = vmul.f32 1.0, %v261
  %v263 = vmul.f32 %v262, 2.0
  %v264 = vsub.f32 %v263, 1.0
  %v265 = vsel %vm93, %v264, %v262
  %v266 = vmul.f32 %v265, 0.0
  %268 = vrot.lane.b32.xlu0 %v265, 64
  %v269 = vpop.permute.xlu0 %268
  %v271 = vmul.f32 %v265, %v269
  %273 = vrot.lane.b32.xlu0 %v271, 32
  %v274 = vpop.permute.xlu0 %273
  %v276 = vadd.f32 %v266, %v274
  %v277 = vtanh.pop %v276
  %279 = vrot.lane.b32.xlu0 %v277, 64
  %v280 = vpop.permute.xlu0 %279
  %v282 = vmul.f32 %v265, %v280
  %v284 = vlaneseq
  %v285 = vshrl.u32 %v284, 7
  %v286 = vsub.s32 0, %v285
  %v287 = vrot.slane %v81, %v286
  %290 = vrot.lane.b32.xlu0 %v282, 32
  %v291 = vpop.permute.xlu0 %290
  %v292 = vsel %vm182, %v291, 0
  %294 = vmatprep.subr.mxu0 0.0
  %295 = vmatpush1.msra.mxu0 %v52
  %296 = vmatprep.subr.mxu0 0.0
  %297 = vmatpush1.msra.mxu0 %v53
  %298 = vmatprep.subr.mxu0 0.0
  %299 = vmatpush1.msra.mxu0 %v54
  %300 = vmatprep.subr.mxu0 0.0
  %301 = vmatpush1.msra.mxu0 %v55
  %302 = vmatprep.subr.mxu0 0.0
  %303 = vmatpush1.msra.mxu0 0.0
  %304 = vmatprep.subr.mxu0 0.0
  %305 = vmatpush1.msra.mxu0 0.0
  %306 = vmatprep.subr.mxu0 0.0
  %307 = vmatpush1.msra.mxu0 0.0
  %308 = vmatprep.subr.mxu0 0.0
  %309 = vmatpush1.msra.mxu0 0.0
  %310 = vmatprep.subr.mxu0 0.0
  %311 = vmatpush1.msra.mxu0 0.0
  %312 = vmatprep.subr.mxu0 0.0
  %313 = vmatpush1.msra.mxu0 0.0
  %314 = vmatprep.subr.mxu0 0.0
  %315 = vmatpush1.msra.mxu0 0.0
  %316 = vmatprep.subr.mxu0 0.0
  %317 = vmatpush1.msra.mxu0 0.0
  %318 = vmatprep.subr.mxu0 0.0
  %319 = vmatpush1.msra.mxu0 0.0
  %320 = vmatprep.subr.mxu0 0.0
  %321 = vmatpush1.msra.mxu0 0.0
  %322 = vmatprep.subr.mxu0 0.0
  %323 = vmatpush1.msra.mxu0 0.0
  %324 = vmatprep.subr.mxu0 0.0
  %325 = vmatpush1.msra.mxu0 0.0
  %326 = vmatprep.subr.mxu0 0.0
  %327 = vmatpush1.msra.mxu0 0.0
  %328 = vmatprep.subr.mxu0 0.0
  %329 = vmatpush1.msra.mxu0 0.0
  %330 = vmatprep.subr.mxu0 0.0
  %331 = vmatpush1.msra.mxu0 0.0
  %332 = vmatprep.subr.mxu0 0.0
  %333 = vmatpush1.msra.mxu0 0.0
  %334 = vmatprep.subr.mxu0 0.0
  %335 = vmatpush1.msra.mxu0 0.0
  %336 = vmatprep.subr.mxu0 0.0
  %337 = vmatpush1.msra.mxu0 0.0
  %338 = vmatprep.subr.mxu0 0.0
  %339 = vmatpush1.msra.mxu0 0.0
  %340 = vmatprep.subr.mxu0 0.0
  %341 = vmatpush1.msra.mxu0 0.0
  %342 = vmatprep.subr.mxu0 0.0
  %343 = vmatpush1.msra.mxu0 0.0
  %344 = vmatprep.subr.mxu0 0.0
  %345 = vmatpush1.msra.mxu0 0.0
  %346 = vmatprep.subr.mxu0 0.0
  %347 = vmatpush1.msra.mxu0 0.0
  %348 = vmatprep.subr.mxu0 0.0
  %349 = vmatpush1.msra.mxu0 0.0
  %350 = vmatprep.subr.mxu0 0.0
  %351 = vmatpush1.msra.mxu0 0.0
  %352 = vmatprep.subr.mxu0 0.0
  %353 = vmatpush1.msra.mxu0 0.0
  %354 = vmatprep.subr.mxu0 0.0
  %355 = vmatpush1.msra.mxu0 0.0
  %356 = vmatprep.subr.mxu0 0.0
  %357 = vmatpush1.msra.mxu0 0.0
  %358 = vmatprep.mubr.f32.mxu0 0.0
  %359 = vmatmul.mubr.f32.gmra.mrb[0].mxu0 %v292
  %v360 = vpop.f32.mrb[0].mxu0
  %v361 = vadd.f32 %v287, %v360
  %v362 = vpop.f32.mrb[0].mxu0
  %363 = vdwg.mxu0
  %364 = vmatprep.subr.mxu0 0.0
  %365 = vmatpush1.msra.mxu0 %v68
  %366 = vmatprep.subr.mxu0 0.0
  %367 = vmatpush1.msra.mxu0 %v69
  %368 = vmatprep.subr.mxu0 0.0
  %369 = vmatpush1.msra.mxu0 %v70
  %370 = vmatprep.subr.mxu0 0.0
  %371 = vmatpush1.msra.mxu0 %v71
  %372 = vmatprep.subr.mxu0 0.0
  %373 = vmatpush1.msra.mxu0 0.0
  %374 = vmatprep.subr.mxu0 0.0
  %375 = vmatpush1.msra.mxu0 0.0
  %376 = vmatprep.subr.mxu0 0.0
  %377 = vmatpush1.msra.mxu0 0.0
  %378 = vmatprep.subr.mxu0 0.0
  %379 = vmatpush1.msra.mxu0 0.0
  %380 = vmatprep.subr.mxu0 0.0
  %381 = vmatpush1.msra.mxu0 0.0
  %382 = vmatprep.subr.mxu0 0.0
  %383 = vmatpush1.msra.mxu0 0.0
  %384 = vmatprep.subr.mxu0 0.0
  %385 = vmatpush1.msra.mxu0 0.0
  %386 = vmatprep.subr.mxu0 0.0
  %387 = vmatpush1.msra.mxu0 0.0
  %388 = vmatprep.subr.mxu0 0.0
  %389 = vmatpush1.msra.mxu0 0.0
  %390 = vmatprep.subr.mxu0 0.0
  %391 = vmatpush1.msra.mxu0 0.0
  %392 = vmatprep.subr.mxu0 0.0
  %393 = vmatpush1.msra.mxu0 0.0
  %394 = vmatprep.subr.mxu0 0.0
  %395 = vmatpush1.msra.mxu0 0.0
  %396 = vmatprep.subr.mxu0 0.0
  %397 = vmatpush1.msra.mxu0 0.0
  %398 = vmatprep.subr.mxu0 0.0
  %399 = vmatpush1.msra.mxu0 0.0
  %400 = vmatprep.subr.mxu0 0.0
  %401 = vmatpush1.msra.mxu0 0.0
  %402 = vmatprep.subr.mxu0 0.0
  %403 = vmatpush1.msra.mxu0 0.0
  %404 = vmatprep.subr.mxu0 0.0
  %405 = vmatpush1.msra.mxu0 0.0
  %406 = vmatprep.subr.mxu0 0.0
  %407 = vmatpush1.msra.mxu0 0.0
  %408 = vmatprep.subr.mxu0 0.0
  %409 = vmatpush1.msra.mxu0 0.0
  %410 = vmatprep.subr.mxu0 0.0
  %411 = vmatpush1.msra.mxu0 0.0
  %412 = vmatprep.subr.mxu0 0.0
  %413 = vmatpush1.msra.mxu0 0.0
  %414 = vmatprep.subr.mxu0 0.0
  %415 = vmatpush1.msra.mxu0 0.0
  %416 = vmatprep.subr.mxu0 0.0
  %417 = vmatpush1.msra.mxu0 0.0
  %418 = vmatprep.subr.mxu0 0.0
  %419 = vmatpush1.msra.mxu0 0.0
  %420 = vmatprep.subr.mxu0 0.0
  %421 = vmatpush1.msra.mxu0 0.0
  %422 = vmatprep.subr.mxu0 0.0
  %423 = vmatpush1.msra.mxu0 0.0
  %424 = vmatprep.subr.mxu0 0.0
  %425 = vmatpush1.msra.mxu0 0.0
  %426 = vmatprep.subr.mxu0 0.0
  %427 = vmatpush1.msra.mxu0 0.0
  %428 = vmatprep.mubr.f32.mxu0 0.0
  %429 = vmatmul.mubr.f32.gmra.mrb[0].mxu0 %v184
  %v430 = vpop.f32.mrb[0].mxu0
  %v431 = vadd.f32 0.0, %v430
  %v432 = vpop.f32.mrb[0].mxu0
  %433 = vdwg.mxu0
  %v434 = vadd.f32 %v361, %v431
  %v435 = vxor.u32 %v434, 2147483648
  %v436 = vmul.f32 %v435, 1.442695
  %v437 = vpow.pop %v436
  %v438 = vadd.f32 %v437, 1.0
  %v439 = vrcp.pop %v438
  %v440 = vmul.f32 1.0, %v439
  %v441 = vmul.f32 %v440, 2.0
  %v442 = vsub.f32 %v441, 1.0
  %v443 = vsel %vm93, %v442, %v440
  %v444 = vmul.f32 %v443, 0.0
  %446 = vrot.lane.b32.xlu0 %v443, 64
  %v447 = vpop.permute.xlu0 %446
  %v449 = vmul.f32 %v443, %v447
  %451 = vrot.lane.b32.xlu0 %v449, 32
  %v452 = vpop.permute.xlu0 %451
  %v454 = vadd.f32 %v444, %v452
  %v455 = vtanh.pop %v454
  %457 = vrot.lane.b32.xlu0 %v455, 64
  %v458 = vpop.permute.xlu0 %457
  %v460 = vmul.f32 %v443, %v458
  %v462 = vsel %vm108, %v95, 0
  %464 = vmatprep.subr.mxu0 0.0
  %465 = vmatpush1.msra.mxu0 %v50
  %466 = vmatprep.subr.mxu0 0.0
  %467 = vmatpush1.msra.mxu0 %v51
  %468 = vmatprep.subr.mxu0 0.0
  %469 = vmatpush1.msra.mxu0 0.0
  %470 = vmatprep.subr.mxu0 0.0
  %471 = vmatpush1.msra.mxu0 0.0
  %472 = vmatprep.subr.mxu0 0.0
  %473 = vmatpush1.msra.mxu0 0.0
  %474 = vmatprep.subr.mxu0 0.0
  %475 = vmatpush1.msra.mxu0 0.0
  %476 = vmatprep.subr.mxu0 0.0
  %477 = vmatpush1.msra.mxu0 0.0
  %478 = vmatprep.subr.mxu0 0.0
  %479 = vmatpush1.msra.mxu0 0.0
  %480 = vmatprep.subr.mxu0 0.0
  %481 = vmatpush1.msra.mxu0 0.0
  %482 = vmatprep.subr.mxu0 0.0
  %483 = vmatpush1.msra.mxu0 0.0
  %484 = vmatprep.subr.mxu0 0.0
  %485 = vmatpush1.msra.mxu0 0.0
  %486 = vmatprep.subr.mxu0 0.0
  %487 = vmatpush1.msra.mxu0 0.0
  %488 = vmatprep.subr.mxu0 0.0
  %489 = vmatpush1.msra.mxu0 0.0
  %490 = vmatprep.subr.mxu0 0.0
  %491 = vmatpush1.msra.mxu0 0.0
  %492 = vmatprep.subr.mxu0 0.0
  %493 = vmatpush1.msra.mxu0 0.0
  %494 = vmatprep.subr.mxu0 0.0
  %495 = vmatpush1.msra.mxu0 0.0
  %496 = vmatprep.subr.mxu0 0.0
  %497 = vmatpush1.msra.mxu0 0.0
  %498 = vmatprep.subr.mxu0 0.0
  %499 = vmatpush1.msra.mxu0 0.0
  %500 = vmatprep.subr.mxu0 0.0
  %501 = vmatpush1.msra.mxu0 0.0
  %502 = vmatprep.subr.mxu0 0.0
  %503 = vmatpush1.msra.mxu0 0.0
  %504 = vmatprep.subr.mxu0 0.0
  %505 = vmatpush1.msra.mxu0 0.0
  %506 = vmatprep.subr.mxu0 0.0
  %507 = vmatpush1.msra.mxu0 0.0
  %508 = vmatprep.subr.mxu0 0.0
  %509 = vmatpush1.msra.mxu0 0.0
  %510 = vmatprep.subr.mxu0 0.0
  %511 = vmatpush1.msra.mxu0 0.0
  %512 = vmatprep.subr.mxu0 0.0
  %513 = vmatpush1.msra.mxu0 0.0
  %514 = vmatprep.subr.mxu0 0.0
  %515 = vmatpush1.msra.mxu0 0.0
  %516 = vmatprep.subr.mxu0 0.0
  %517 = vmatpush1.msra.mxu0 0.0
  %518 = vmatprep.subr.mxu0 0.0
  %519 = vmatpush1.msra.mxu0 0.0
  %520 = vmatprep.subr.mxu0 0.0
  %521 = vmatpush1.msra.mxu0 0.0
  %522 = vmatprep.subr.mxu0 0.0
  %523 = vmatpush1.msra.mxu0 0.0
  %524 = vmatprep.subr.mxu0 0.0
  %525 = vmatpush1.msra.mxu0 0.0
  %526 = vmatprep.subr.mxu0 0.0
  %527 = vmatpush1.msra.mxu0 0.0
  %528 = vmatprep.mubr.f32.mxu0 0.0
  %529 = vmatmul.mubr.f32.gmra.mrb[0].mxu0 %v462
  %v530 = vpop.f32.mrb[0].mxu0
  %v531 = vadd.f32 %v106, %v530
  %v532 = vpop.f32.mrb[0].mxu0
  %533 = vdwg.mxu0
  %534 = vmatprep.subr.mxu0 0.0
  %535 = vmatpush1.msra.mxu0 %v64
  %536 = vmatprep.subr.mxu0 0.0
  %537 = vmatpush1.msra.mxu0 %v65
  %538 = vmatprep.subr.mxu0 0.0
  %539 = vmatpush1.msra.mxu0 %v66
  %540 = vmatprep.subr.mxu0 0.0
  %541 = vmatpush1.msra.mxu0 %v67
  %542 = vmatprep.subr.mxu0 0.0
  %543 = vmatpush1.msra.mxu0 0.0
  %544 = vmatprep.subr.mxu0 0.0
  %545 = vmatpush1.msra.mxu0 0.0
  %546 = vmatprep.subr.mxu0 0.0
  %547 = vmatpush1.msra.mxu0 0.0
  %548 = vmatprep.subr.mxu0 0.0
  %549 = vmatpush1.msra.mxu0 0.0
  %550 = vmatprep.subr.mxu0 0.0
  %551 = vmatpush1.msra.mxu0 0.0
  %552 = vmatprep.subr.mxu0 0.0
  %553 = vmatpush1.msra.mxu0 0.0
  %554 = vmatprep.subr.mxu0 0.0
  %555 = vmatpush1.msra.mxu0 0.0
  %556 = vmatprep.subr.mxu0 0.0
  %557 = vmatpush1.msra.mxu0 0.0
  %558 = vmatprep.subr.mxu0 0.0
  %559 = vmatpush1.msra.mxu0 0.0
  %560 = vmatprep.subr.mxu0 0.0
  %561 = vmatpush1.msra.mxu0 0.0
  %562 = vmatprep.subr.mxu0 0.0
  %563 = vmatpush1.msra.mxu0 0.0
  %564 = vmatprep.subr.mxu0 0.0
  %565 = vmatpush1.msra.mxu0 0.0
  %566 = vmatprep.subr.mxu0 0.0
  %567 = vmatpush1.msra.mxu0 0.0
  %568 = vmatprep.subr.mxu0 0.0
  %569 = vmatpush1.msra.mxu0 0.0
  %570 = vmatprep.subr.mxu0 0.0
  %571 = vmatpush1.msra.mxu0 0.0
  %572 = vmatprep.subr.mxu0 0.0
  %573 = vmatpush1.msra.mxu0 0.0
  %574 = vmatprep.subr.mxu0 0.0
  %575 = vmatpush1.msra.mxu0 0.0
  %576 = vmatprep.subr.mxu0 0.0
  %577 = vmatpush1.msra.mxu0 0.0
  %578 = vmatprep.subr.mxu0 0.0
  %579 = vmatpush1.msra.mxu0 0.0
  %580 = vmatprep.subr.mxu0 0.0
  %581 = vmatpush1.msra.mxu0 0.0
  %582 = vmatprep.subr.mxu0 0.0
  %583 = vmatpush1.msra.mxu0 0.0
  %584 = vmatprep.subr.mxu0 0.0
  %585 = vmatpush1.msra.mxu0 0.0
  %586 = vmatprep.subr.mxu0 0.0
  %587 = vmatpush1.msra.mxu0 0.0
  %588 = vmatprep.subr.mxu0 0.0
  %589 = vmatpush1.msra.mxu0 0.0
  %590 = vmatprep.subr.mxu0 0.0
  %591 = vmatpush1.msra.mxu0 0.0
  %592 = vmatprep.subr.mxu0 0.0
  %593 = vmatpush1.msra.mxu0 0.0
  %594 = vmatprep.subr.mxu0 0.0
  %595 = vmatpush1.msra.mxu0 0.0
  %596 = vmatprep.subr.mxu0 0.0
  %597 = vmatpush1.msra.mxu0 0.0
  %598 = vmatprep.mubr.f32.mxu0 0.0
  %599 = vmatmul.mubr.f32.gmra.mrb[0].mxu0 %v292
  %v600 = vpop.f32.mrb[0].mxu0
  %v601 = vadd.f32 0.0, %v600
  %v602 = vpop.f32.mrb[0].mxu0
  %603 = vdwg.mxu0
  %v604 = vadd.f32 %v531, %v601
  %v605 = vxor.u32 %v604, 2147483648
  %v606 = vmul.f32 %v605, 1.442695
  %v607 = vpow.pop %v606
  %v608 = vadd.f32 %v607, 1.0
  %v609 = vrcp.pop %v608
  %v610 = vmul.f32 1.0, %v609
  %v611 = vmul.f32 %v610, 2.0
  %v612 = vsub.f32 %v611, 1.0
  %v613 = vsel %vm93, %v612, %v610
  %v614 = vmul.f32 %v613, %v276
  %616 = vrot.lane.b32.xlu0 %v613, 64
  %v617 = vpop.permute.xlu0 %616
  %v619 = vmul.f32 %v613, %v617
  %621 = vrot.lane.b32.xlu0 %v619, 32
  %v622 = vpop.permute.xlu0 %621
  %v624 = vadd.f32 %v614, %v622
  %v625 = vtanh.pop %v624
  %627 = vrot.lane.b32.xlu0 %v625, 64
  %v628 = vpop.permute.xlu0 %627
  %v630 = vmul.f32 %v613, %v628
  %v632 = vlaneseq
  %v633 = vshrl.u32 %v632, 7
  %v634 = vsub.s32 0, %v633
  %v635 = vrot.slane %v82, %v634
  %638 = vrot.lane.b32.xlu0 %v460, 32
  %v639 = vpop.permute.xlu0 %638
  %v640 = vsel %vm182, %v639, 0
  %642 = vmatprep.subr.mxu0 0.0
  %643 = vmatpush1.msra.mxu0 %v56
  %644 = vmatprep.subr.mxu0 0.0
  %645 = vmatpush1.msra.mxu0 %v57
  %646 = vmatprep.subr.mxu0 0.0
  %647 = vmatpush1.msra.mxu0 %v58
  %648 = vmatprep.subr.mxu0 0.0
  %649 = vmatpush1.msra.mxu0 %v59
  %650 = vmatprep.subr.mxu0 0.0
  %651 = vmatpush1.msra.mxu0 0.0
  %652 = vmatprep.subr.mxu0 0.0
  %653 = vmatpush1.msra.mxu0 0.0
  %654 = vmatprep.subr.mxu0 0.0
  %655 = vmatpush1.msra.mxu0 0.0
  %656 = vmatprep.subr.mxu0 0.0
  %657 = vmatpush1.msra.mxu0 0.0
  %658 = vmatprep.subr.mxu0 0.0
  %659 = vmatpush1.msra.mxu0 0.0
  %660 = vmatprep.subr.mxu0 0.0
  %661 = vmatpush1.msra.mxu0 0.0
  %662 = vmatprep.subr.mxu0 0.0
  %663 = vmatpush1.msra.mxu0 0.0
  %664 = vmatprep.subr.mxu0 0.0
  %665 = vmatpush1.msra.mxu0 0.0
  %666 = vmatprep.subr.mxu0 0.0
  %667 = vmatpush1.msra.mxu0 0.0
  %668 = vmatprep.subr.mxu0 0.0
  %669 = vmatpush1.msra.mxu0 0.0
  %670 = vmatprep.subr.mxu0 0.0
  %671 = vmatpush1.msra.mxu0 0.0
  %672 = vmatprep.subr.mxu0 0.0
  %673 = vmatpush1.msra.mxu0 0.0
  %674 = vmatprep.subr.mxu0 0.0
  %675 = vmatpush1.msra.mxu0 0.0
  %676 = vmatprep.subr.mxu0 0.0
  %677 = vmatpush1.msra.mxu0 0.0
  %678 = vmatprep.subr.mxu0 0.0
  %679 = vmatpush1.msra.mxu0 0.0
  %680 = vmatprep.subr.mxu0 0.0
  %681 = vmatpush1.msra.mxu0 0.0
  %682 = vmatprep.subr.mxu0 0.0
  %683 = vmatpush1.msra.mxu0 0.0
  %684 = vmatprep.subr.mxu0 0.0
  %685 = vmatpush1.msra.mxu0 0.0
  %686 = vmatprep.subr.mxu0 0.0
  %687 = vmatpush1.msra.mxu0 0.0
  %688 = vmatprep.subr.mxu0 0.0
  %689 = vmatpush1.msra.mxu0 0.0
  %690 = vmatprep.subr.mxu0 0.0
  %691 = vmatpush1.msra.mxu0 0.0
  %692 = vmatprep.subr.mxu0 0.0
  %693 = vmatpush1.msra.mxu0 0.0
  %694 = vmatprep.subr.mxu0 0.0
  %695 = vmatpush1.msra.mxu0 0.0
  %696 = vmatprep.subr.mxu0 0.0
  %697 = vmatpush1.msra.mxu0 0.0
  %698 = vmatprep.subr.mxu0 0.0
  %699 = vmatpush1.msra.mxu0 0.0
  %700 = vmatprep.subr.mxu0 0.0
  %701 = vmatpush1.msra.mxu0 0.0
  %702 = vmatprep.subr.mxu0 0.0
  %703 = vmatpush1.msra.mxu0 0.0
  %704 = vmatprep.subr.mxu0 0.0
  %705 = vmatpush1.msra.mxu0 0.0
  %706 = vmatprep.mubr.f32.mxu0 0.0
  %707 = vmatmul.mubr.f32.gmra.mrb[0].mxu0 %v640
  %v708 = vpop.f32.mrb[0].mxu0
  %v709 = vadd.f32 %v635, %v708
  %v710 = vpop.f32.mrb[0].mxu0
  %711 = vdwg.mxu0
  %712 = vmatprep.subr.mxu0 0.0
  %713 = vmatpush1.msra.mxu0 %v72
  %714 = vmatprep.subr.mxu0 0.0
  %715 = vmatpush1.msra.mxu0 %v73
  %716 = vmatprep.subr.mxu0 0.0
  %717 = vmatpush1.msra.mxu0 %v74
  %718 = vmatprep.subr.mxu0 0.0
  %719 = vmatpush1.msra.mxu0 %v75
  %720 = vmatprep.subr.mxu0 0.0
  %721 = vmatpush1.msra.mxu0 0.0
  %722 = vmatprep.subr.mxu0 0.0
  %723 = vmatpush1.msra.mxu0 0.0
  %724 = vmatprep.subr.mxu0 0.0
  %725 = vmatpush1.msra.mxu0 0.0
  %726 = vmatprep.subr.mxu0 0.0
  %727 = vmatpush1.msra.mxu0 0.0
  %728 = vmatprep.subr.mxu0 0.0
  %729 = vmatpush1.msra.mxu0 0.0
  %730 = vmatprep.subr.mxu0 0.0
  %731 = vmatpush1.msra.mxu0 0.0
  %732 = vmatprep.subr.mxu0 0.0
  %733 = vmatpush1.msra.mxu0 0.0
  %734 = vmatprep.subr.mxu0 0.0
  %735 = vmatpush1.msra.mxu0 0.0
  %736 = vmatprep.subr.mxu0 0.0
  %737 = vmatpush1.msra.mxu0 0.0
  %738 = vmatprep.subr.mxu0 0.0
  %739 = vmatpush1.msra.mxu0 0.0
  %740 = vmatprep.subr.mxu0 0.0
  %741 = vmatpush1.msra.mxu0 0.0
  %742 = vmatprep.subr.mxu0 0.0
  %743 = vmatpush1.msra.mxu0 0.0
  %744 = vmatprep.subr.mxu0 0.0
  %745 = vmatpush1.msra.mxu0 0.0
  %746 = vmatprep.subr.mxu0 0.0
  %747 = vmatpush1.msra.mxu0 0.0
  %748 = vmatprep.subr.mxu0 0.0
  %749 = vmatpush1.msra.mxu0 0.0
  %750 = vmatprep.subr.mxu0 0.0
  %751 = vmatpush1.msra.mxu0 0.0
  %752 = vmatprep.subr.mxu0 0.0
  %753 = vmatpush1.msra.mxu0 0.0
  %754 = vmatprep.subr.mxu0 0.0
  %755 = vmatpush1.msra.mxu0 0.0
  %756 = vmatprep.subr.mxu0 0.0
  %757 = vmatpush1.msra.mxu0 0.0
  %758 = vmatprep.subr.mxu0 0.0
  %759 = vmatpush1.msra.mxu0 0.0
  %760 = vmatprep.subr.mxu0 0.0
  %761 = vmatpush1.msra.mxu0 0.0
  %762 = vmatprep.subr.mxu0 0.0
  %763 = vmatpush1.msra.mxu0 0.0
  %764 = vmatprep.subr.mxu0 0.0
  %765 = vmatpush1.msra.mxu0 0.0
  %766 = vmatprep.subr.mxu0 0.0
  %767 = vmatpush1.msra.mxu0 0.0
  %768 = vmatprep.subr.mxu0 0.0
  %769 = vmatpush1.msra.mxu0 0.0
  %770 = vmatprep.subr.mxu0 0.0
  %771 = vmatpush1.msra.mxu0 0.0
  %772 = vmatprep.subr.mxu0 0.0
  %773 = vmatpush1.msra.mxu0 0.0
  %774 = vmatprep.subr.mxu0 0.0
  %775 = vmatpush1.msra.mxu0 0.0
  %776 = vmatprep.mubr.f32.mxu0 0.0
  %777 = vmatmul.mubr.f32.gmra.mrb[0].mxu0 %v184
  %v778 = vpop.f32.mrb[0].mxu0
  %v779 = vadd.f32 0.0, %v778
  %v780 = vpop.f32.mrb[0].mxu0
  %781 = vdwg.mxu0
  %v782 = vadd.f32 %v709, %v779
  %v783 = vxor.u32 %v782, 2147483648
  %v784 = vmul.f32 %v783, 1.442695
  %v785 = vpow.pop %v784
  %v786 = vadd.f32 %v785, 1.0
  %v787 = vrcp.pop %v786
  %v788 = vmul.f32 1.0, %v787
  %v789 = vmul.f32 %v788, 2.0
  %v790 = vsub.f32 %v789, 1.0
  %v791 = vsel %vm93, %v790, %v788
  %v792 = vmul.f32 %v791, 0.0
  %794 = vrot.lane.b32.xlu0 %v791, 64
  %v795 = vpop.permute.xlu0 %794
  %v797 = vmul.f32 %v791, %v795
  %799 = vrot.lane.b32.xlu0 %v797, 32
  %v800 = vpop.permute.xlu0 %799
  %v802 = vadd.f32 %v792, %v800
  %v803 = vtanh.pop %v802
  %805 = vrot.lane.b32.xlu0 %v803, 64
  %v806 = vpop.permute.xlu0 %805
  %v808 = vmul.f32 %v791, %v806
  %810 = vrot.lane.b32.xlu0 %v630, 32
  %v811 = vpop.permute.xlu0 %810
  %v812 = vsel %vm182, %v811, 0
  %814 = vmatprep.subr.mxu0 0.0
  %815 = vmatpush1.msra.mxu0 %v52
  %816 = vmatprep.subr.mxu0 0.0
  %817 = vmatpush1.msra.mxu0 %v53
  %818 = vmatprep.subr.mxu0 0.0
  %819 = vmatpush1.msra.mxu0 %v54
  %820 = vmatprep.subr.mxu0 0.0
  %821 = vmatpush1.msra.mxu0 %v55
  %822 = vmatprep.subr.mxu0 0.0
  %823 = vmatpush1.msra.mxu0 0.0
  %824 = vmatprep.subr.mxu0 0.0
  %825 = vmatpush1.msra.mxu0 0.0
  %826 = vmatprep.subr.mxu0 0.0
  %827 = vmatpush1.msra.mxu0 0.0
  %828 = vmatprep.subr.mxu0 0.0
  %829 = vmatpush1.msra.mxu0 0.0
  %830 = vmatprep.subr.mxu0 0.0
  %831 = vmatpush1.msra.mxu0 0.0
  %832 = vmatprep.subr.mxu0 0.0
  %833 = vmatpush1.msra.mxu0 0.0
  %834 = vmatprep.subr.mxu0 0.0
  %835 = vmatpush1.msra.mxu0 0.0
  %836 = vmatprep.subr.mxu0 0.0
  %837 = vmatpush1.msra.mxu0 0.0
  %838 = vmatprep.subr.mxu0 0.0
  %839 = vmatpush1.msra.mxu0 0.0
  %840 = vmatprep.subr.mxu0 0.0
  %841 = vmatpush1.msra.mxu0 0.0
  %842 = vmatprep.subr.mxu0 0.0
  %843 = vmatpush1.msra.mxu0 0.0
  %844 = vmatprep.subr.mxu0 0.0
  %845 = vmatpush1.msra.mxu0 0.0
  %846 = vmatprep.subr.mxu0 0.0
  %847 = vmatpush1.msra.mxu0 0.0
  %848 = vmatprep.subr.mxu0 0.0
  %849 = vmatpush1.msra.mxu0 0.0
  %850 = vmatprep.subr.mxu0 0.0
  %851 = vmatpush1.msra.mxu0 0.0
  %852 = vmatprep.subr.mxu0 0.0
  %853 = vmatpush1.msra.mxu0 0.0
  %854 = vmatprep.subr.mxu0 0.0
  %855 = vmatpush1.msra.mxu0 0.0
  %856 = vmatprep.subr.mxu0 0.0
  %857 = vmatpush1.msra.mxu0 0.0
  %858 = vmatprep.subr.mxu0 0.0
  %859 = vmatpush1.msra.mxu0 0.0
  %860 = vmatprep.subr.mxu0 0.0
  %861 = vmatpush1.msra.mxu0 0.0
  %862 = vmatprep.subr.mxu0 0.0
  %863 = vmatpush1.msra.mxu0 0.0
  %864 = vmatprep.subr.mxu0 0.0
  %865 = vmatpush1.msra.mxu0 0.0
  %866 = vmatprep.subr.mxu0 0.0
  %867 = vmatpush1.msra.mxu0 0.0
  %868 = vmatprep.subr.mxu0 0.0
  %869 = vmatpush1.msra.mxu0 0.0
  %870 = vmatprep.subr.mxu0 0.0
  %871 = vmatpush1.msra.mxu0 0.0
  %872 = vmatprep.subr.mxu0 0.0
  %873 = vmatpush1.msra.mxu0 0.0
  %874 = vmatprep.subr.mxu0 0.0
  %875 = vmatpush1.msra.mxu0 0.0
  %876 = vmatprep.subr.mxu0 0.0
  %877 = vmatpush1.msra.mxu0 0.0
  %878 = vmatprep.mubr.f32.mxu0 0.0
  %879 = vmatmul.mubr.f32.gmra.mrb[0].mxu0 %v812
  %v880 = vpop.f32.mrb[0].mxu0
  %v881 = vadd.f32 %v287, %v880
  %v882 = vpop.f32.mrb[0].mxu0
  %883 = vdwg.mxu0
  %884 = vmatprep.subr.mxu0 0.0
  %885 = vmatpush1.msra.mxu0 %v68
  %886 = vmatprep.subr.mxu0 0.0
  %887 = vmatpush1.msra.mxu0 %v69
  %888 = vmatprep.subr.mxu0 0.0
  %889 = vmatpush1.msra.mxu0 %v70
  %890 = vmatprep.subr.mxu0 0.0
  %891 = vmatpush1.msra.mxu0 %v71
  %892 = vmatprep.subr.mxu0 0.0
  %893 = vmatpush1.msra.mxu0 0.0
  %894 = vmatprep.subr.mxu0 0.0
  %895 = vmatpush1.msra.mxu0 0.0
  %896 = vmatprep.subr.mxu0 0.0
  %897 = vmatpush1.msra.mxu0 0.0
  %898 = vmatprep.subr.mxu0 0.0
  %899 = vmatpush1.msra.mxu0 0.0
  %900 = vmatprep.subr.mxu0 0.0
  %901 = vmatpush1.msra.mxu0 0.0
  %902 = vmatprep.subr.mxu0 0.0
  %903 = vmatpush1.msra.mxu0 0.0
  %904 = vmatprep.subr.mxu0 0.0
  %905 = vmatpush1.msra.mxu0 0.0
  %906 = vmatprep.subr.mxu0 0.0
  %907 = vmatpush1.msra.mxu0 0.0
  %908 = vmatprep.subr.mxu0 0.0
  %909 = vmatpush1.msra.mxu0 0.0
  %910 = vmatprep.subr.mxu0 0.0
  %911 = vmatpush1.msra.mxu0 0.0
  %912 = vmatprep.subr.mxu0 0.0
  %913 = vmatpush1.msra.mxu0 0.0
  %914 = vmatprep.subr.mxu0 0.0
  %915 = vmatpush1.msra.mxu0 0.0
  %916 = vmatprep.subr.mxu0 0.0
  %917 = vmatpush1.msra.mxu0 0.0
  %918 = vmatprep.subr.mxu0 0.0
  %919 = vmatpush1.msra.mxu0 0.0
  %920 = vmatprep.subr.mxu0 0.0
  %921 = vmatpush1.msra.mxu0 0.0
  %922 = vmatprep.subr.mxu0 0.0
  %923 = vmatpush1.msra.mxu0 0.0
  %924 = vmatprep.subr.mxu0 0.0
  %925 = vmatpush1.msra.mxu0 0.0
  %926 = vmatprep.subr.mxu0 0.0
  %927 = vmatpush1.msra.mxu0 0.0
  %928 = vmatprep.subr.mxu0 0.0
  %929 = vmatpush1.msra.mxu0 0.0
  %930 = vmatprep.subr.mxu0 0.0
  %931 = vmatpush1.msra.mxu0 0.0
  %932 = vmatprep.subr.mxu0 0.0
  %933 = vmatpush1.msra.mxu0 0.0
  %934 = vmatprep.subr.mxu0 0.0
  %935 = vmatpush1.msra.mxu0 0.0
  %936 = vmatprep.subr.mxu0 0.0
  %937 = vmatpush1.msra.mxu0 0.0
  %938 = vmatprep.subr.mxu0 0.0
  %939 = vmatpush1.msra.mxu0 0.0
  %940 = vmatprep.subr.mxu0 0.0
  %941 = vmatpush1.msra.mxu0 0.0
  %942 = vmatprep.subr.mxu0 0.0
  %943 = vmatpush1.msra.mxu0 0.0
  %944 = vmatprep.subr.mxu0 0.0
  %945 = vmatpush1.msra.mxu0 0.0
  %946 = vmatprep.subr.mxu0 0.0
  %947 = vmatpush1.msra.mxu0 0.0
  %948 = vmatprep.mubr.f32.mxu0 0.0
  %949 = vmatmul.mubr.f32.gmra.mrb[0].mxu0 %v640
  %v950 = vpop.f32.mrb[0].mxu0
  %v951 = vadd.f32 0.0, %v950
  %v952 = vpop.f32.mrb[0].mxu0
  %953 = vdwg.mxu0
  %v954 = vadd.f32 %v881, %v951
  %v955 = vxor.u32 %v954, 2147483648
  %v956 = vmul.f32 %v955, 1.442695
  %v957 = vpow.pop %v956
  %v958 = vadd.f32 %v957, 1.0
  %v959 = vrcp.pop %v958
  %v960 = vmul.f32 1.0, %v959
  %v961 = vmul.f32 %v960, 2.0
  %v962 = vsub.f32 %v961, 1.0
  %v963 = vsel %vm93, %v962, %v960
  %v964 = vmul.f32 %v963, %v454
  %966 = vrot.lane.b32.xlu0 %v963, 64
  %v967 = vpop.permute.xlu0 %966
  %v969 = vmul.f32 %v963, %v967
  %971 = vrot.lane.b32.xlu0 %v969, 32
  %v972 = vpop.permute.xlu0 %971
  %v974 = vadd.f32 %v964, %v972
  %v975 = vtanh.pop %v974
  %977 = vrot.lane.b32.xlu0 %v975, 64
  %v978 = vpop.permute.xlu0 %977
  %v980 = vmul.f32 %v963, %v978
  %v982 = vsel %vm108, %v96, 0
  %984 = vmatprep.subr.mxu0 0.0
  %985 = vmatpush1.msra.mxu0 %v50
  %986 = vmatprep.subr.mxu0 0.0
  %987 = vmatpush1.msra.mxu0 %v51
  %988 = vmatprep.subr.mxu0 0.0
  %989 = vmatpush1.msra.mxu0 0.0
  %990 = vmatprep.subr.mxu0 0.0
  %991 = vmatpush1.msra.mxu0 0.0
  %992 = vmatprep.subr.mxu0 0.0
  %993 = vmatpush1.msra.mxu0 0.0
  %994 = vmatprep.subr.mxu0 0.0
  %995 = vmatpush1.msra.mxu0 0.0
  %996 = vmatprep.subr.mxu0 0.0
  %997 = vmatpush1.msra.mxu0 0.0
  %998 = vmatprep.subr.mxu0 0.0
  %999 = vmatpush1.msra.mxu0 0.0
  %1000 = vmatprep.subr.mxu0 0.0
  %1001 = vmatpush1.msra.mxu0 0.0
  %1002 = vmatprep.subr.mxu0 0.0
  %1003 = vmatpush1.msra.mxu0 0.0
  %1004 = vmatprep.subr.mxu0 0.0
  %1005 = vmatpush1.msra.mxu0 0.0
  %1006 = vmatprep.subr.mxu0 0.0
  %1007 = vmatpush1.msra.mxu0 0.0
  %1008 = vmatprep.subr.mxu0 0.0
  %1009 = vmatpush1.msra.mxu0 0.0
  %1010 = vmatprep.subr.mxu0 0.0
  %1011 = vmatpush1.msra.mxu0 0.0
  %1012 = vmatprep.subr.mxu0 0.0
  %1013 = vmatpush1.msra.mxu0 0.0
  %1014 = vmatprep.subr.mxu0 0.0
  %1015 = vmatpush1.msra.mxu0 0.0
  %1016 = vmatprep.subr.mxu0 0.0
  %1017 = vmatpush1.msra.mxu0 0.0
  %1018 = vmatprep.subr.mxu0 0.0
  %1019 = vmatpush1.msra.mxu0 0.0
  %1020 = vmatprep.subr.mxu0 0.0
  %1021 = vmatpush1.msra.mxu0 0.0
  %1022 = vmatprep.subr.mxu0 0.0
  %1023 = vmatpush1.msra.mxu0 0.0
  %1024 = vmatprep.subr.mxu0 0.0
  %1025 = vmatpush1.msra.mxu0 0.0
  %1026 = vmatprep.subr.mxu0 0.0
  %1027 = vmatpush1.msra.mxu0 0.0
  %1028 = vmatprep.subr.mxu0 0.0
  %1029 = vmatpush1.msra.mxu0 0.0
  %1030 = vmatprep.subr.mxu0 0.0
  %1031 = vmatpush1.msra.mxu0 0.0
  %1032 = vmatprep.subr.mxu0 0.0
  %1033 = vmatpush1.msra.mxu0 0.0
  %1034 = vmatprep.subr.mxu0 0.0
  %1035 = vmatpush1.msra.mxu0 0.0
  %1036 = vmatprep.subr.mxu0 0.0
  %1037 = vmatpush1.msra.mxu0 0.0
  %1038 = vmatprep.subr.mxu0 0.0
  %1039 = vmatpush1.msra.mxu0 0.0
  %1040 = vmatprep.subr.mxu0 0.0
  %1041 = vmatpush1.msra.mxu0 0.0
  %1042 = vmatprep.subr.mxu0 0.0
  %1043 = vmatpush1.msra.mxu0 0.0
  %1044 = vmatprep.subr.mxu0 0.0
  %1045 = vmatpush1.msra.mxu0 0.0
  %1046 = vmatprep.subr.mxu0 0.0
  %1047 = vmatpush1.msra.mxu0 0.0
  %1048 = vmatprep.mubr.f32.mxu0 0.0
  %1049 = vmatmul.mubr.f32.gmra.mrb[0].mxu0 %v982
  %v1050 = vpop.f32.mrb[0].mxu0
  %v1051 = vadd.f32 %v106, %v1050
  %v1052 = vpop.f32.mrb[0].mxu0
  %1053 = vdwg.mxu0
  %1054 = vmatprep.subr.mxu0 0.0
  %1055 = vmatpush1.msra.mxu0 %v64
  %1056 = vmatprep.subr.mxu0 0.0
  %1057 = vmatpush1.msra.mxu0 %v65
  %1058 = vmatprep.subr.mxu0 0.0
  %1059 = vmatpush1.msra.mxu0 %v66
  %1060 = vmatprep.subr.mxu0 0.0
  %1061 = vmatpush1.msra.mxu0 %v67
  %1062 = vmatprep.subr.mxu0 0.0
  %1063 = vmatpush1.msra.mxu0 0.0
  %1064 = vmatprep.subr.mxu0 0.0
  %1065 = vmatpush1.msra.mxu0 0.0
  %1066 = vmatprep.subr.mxu0 0.0
  %1067 = vmatpush1.msra.mxu0 0.0
  %1068 = vmatprep.subr.mxu0 0.0
  %1069 = vmatpush1.msra.mxu0 0.0
  %1070 = vmatprep.subr.mxu0 0.0
  %1071 = vmatpush1.msra.mxu0 0.0
  %1072 = vmatprep.subr.mxu0 0.0
  %1073 = vmatpush1.msra.mxu0 0.0
  %1074 = vmatprep.subr.mxu0 0.0
  %1075 = vmatpush1.msra.mxu0 0.0
  %1076 = vmatprep.subr.mxu0 0.0
  %1077 = vmatpush1.msra.mxu0 0.0
  %1078 = vmatprep.subr.mxu0 0.0
  %1079 = vmatpush1.msra.mxu0 0.0
  %1080 = vmatprep.subr.mxu0 0.0
  %1081 = vmatpush1.msra.mxu0 0.0
  %1082 = vmatprep.subr.mxu0 0.0
  %1083 = vmatpush1.msra.mxu0 0.0
  %1084 = vmatprep.subr.mxu0 0.0
  %1085 = vmatpush1.msra.mxu0 0.0
  %1086 = vmatprep.subr.mxu0 0.0
  %1087 = vmatpush1.msra.mxu0 0.0
  %1088 = vmatprep.subr.mxu0 0.0
  %1089 = vmatpush1.msra.mxu0 0.0
  %1090 = vmatprep.subr.mxu0 0.0
  %1091 = vmatpush1.msra.mxu0 0.0
  %1092 = vmatprep.subr.mxu0 0.0
  %1093 = vmatpush1.msra.mxu0 0.0
  %1094 = vmatprep.subr.mxu0 0.0
  %1095 = vmatpush1.msra.mxu0 0.0
  %1096 = vmatprep.subr.mxu0 0.0
  %1097 = vmatpush1.msra.mxu0 0.0
  %1098 = vmatprep.subr.mxu0 0.0
  %1099 = vmatpush1.msra.mxu0 0.0
  %1100 = vmatprep.subr.mxu0 0.0
  %1101 = vmatpush1.msra.mxu0 0.0
  %1102 = vmatprep.subr.mxu0 0.0
  %1103 = vmatpush1.msra.mxu0 0.0
  %1104 = vmatprep.subr.mxu0 0.0
  %1105 = vmatpush1.msra.mxu0 0.0
  %1106 = vmatprep.subr.mxu0 0.0
  %1107 = vmatpush1.msra.mxu0 0.0
  %1108 = vmatprep.subr.mxu0 0.0
  %1109 = vmatpush1.msra.mxu0 0.0
  %1110 = vmatprep.subr.mxu0 0.0
  %1111 = vmatpush1.msra.mxu0 0.0
  %1112 = vmatprep.subr.mxu0 0.0
  %1113 = vmatpush1.msra.mxu0 0.0
  %1114 = vmatprep.subr.mxu0 0.0
  %1115 = vmatpush1.msra.mxu0 0.0
  %1116 = vmatprep.subr.mxu0 0.0
  %1117 = vmatpush1.msra.mxu0 0.0
  %1118 = vmatprep.mubr.f32.mxu0 0.0
  %1119 = vmatmul.mubr.f32.gmra.mrb[0].mxu0 %v812
  %v1120 = vpop.f32.mrb[0].mxu0
  %v1121 = vadd.f32 0.0, %v1120
  %v1122 = vpop.f32.mrb[0].mxu0
  %1123 = vdwg.mxu0
  %v1124 = vadd.f32 %v1051, %v1121
  %v1125 = vxor.u32 %v1124, 2147483648
  %v1126 = vmul.f32 %v1125, 1.442695
  %v1127 = vpow.pop %v1126
  %v1128 = vadd.f32 %v1127, 1.0
  %v1129 = vrcp.pop %v1128
  %v1130 = vmul.f32 1.0, %v1129
  %v1131 = vmul.f32 %v1130, 2.0
  %v1132 = vsub.f32 %v1131, 1.0
  %v1133 = vsel %vm93, %v1132, %v1130
  %v1134 = vmul.f32 %v1133, %v624
  %1136 = vrot.lane.b32.xlu0 %v1133, 64
  %v1137 = vpop.permute.xlu0 %1136
  %v1139 = vmul.f32 %v1133, %v1137
  %1141 = vrot.lane.b32.xlu0 %v1139, 32
  %v1142 = vpop.permute.xlu0 %1141
  %v1144 = vadd.f32 %v1134, %v1142
  %v1145 = vtanh.pop %v1144
  %1147 = vrot.lane.b32.xlu0 %v1145, 64
  %v1148 = vpop.permute.xlu0 %1147
  %v1150 = vmul.f32 %v1133, %v1148
  %v1152 = vlaneseq
  %v1153 = vshrl.u32 %v1152, 7
  %v1154 = vsub.s32 0, %v1153
  %v1155 = vrot.slane %v83, %v1154
  %1158 = vrot.lane.b32.xlu0 %v808, 32
  %v1159 = vpop.permute.xlu0 %1158
  %v1160 = vsel %vm182, %v1159, 0
  %1162 = vmatprep.subr.mxu0 0.0
  %1163 = vmatpush1.msra.mxu0 %v60
  %1164 = vmatprep.subr.mxu0 0.0
  %1165 = vmatpush1.msra.mxu0 %v61
  %1166 = vmatprep.subr.mxu0 0.0
  %1167 = vmatpush1.msra.mxu0 %v62
  %1168 = vmatprep.subr.mxu0 0.0
  %1169 = vmatpush1.msra.mxu0 %v63
  %1170 = vmatprep.subr.mxu0 0.0
  %1171 = vmatpush1.msra.mxu0 0.0
  %1172 = vmatprep.subr.mxu0 0.0
  %1173 = vmatpush1.msra.mxu0 0.0
  %1174 = vmatprep.subr.mxu0 0.0
  %1175 = vmatpush1.msra.mxu0 0.0
  %1176 = vmatprep.subr.mxu0 0.0
  %1177 = vmatpush1.msra.mxu0 0.0
  %1178 = vmatprep.subr.mxu0 0.0
  %1179 = vmatpush1.msra.mxu0 0.0
  %1180 = vmatprep.subr.mxu0 0.0
  %1181 = vmatpush1.msra.mxu0 0.0
  %1182 = vmatprep.subr.mxu0 0.0
  %1183 = vmatpush1.msra.mxu0 0.0
  %1184 = vmatprep.subr.mxu0 0.0
  %1185 = vmatpush1.msra.mxu0 0.0
  %1186 = vmatprep.subr.mxu0 0.0
  %1187 = vmatpush1.msra.mxu0 0.0
  %1188 = vmatprep.subr.mxu0 0.0
  %1189 = vmatpush1.msra.mxu0 0.0
  %1190 = vmatprep.subr.mxu0 0.0
  %1191 = vmatpush1.msra.mxu0 0.0
  %1192 = vmatprep.subr.mxu0 0.0
  %1193 = vmatpush1.msra.mxu0 0.0
  %1194 = vmatprep.subr.mxu0 0.0
  %1195 = vmatpush1.msra.mxu0 0.0
  %1196 = vmatprep.subr.mxu0 0.0
  %1197 = vmatpush1.msra.mxu0 0.0
  %1198 = vmatprep.subr.mxu0 0.0
  %1199 = vmatpush1.msra.mxu0 0.0
  %1200 = vmatprep.subr.mxu0 0.0
  %1201 = vmatpush1.msra.mxu0 0.0
  %1202 = vmatprep.subr.mxu0 0.0
  %1203 = vmatpush1.msra.mxu0 0.0
  %1204 = vmatprep.subr.mxu0 0.0
  %1205 = vmatpush1.msra.mxu0 0.0
  %1206 = vmatprep.subr.mxu0 0.0
  %1207 = vmatpush1.msra.mxu0 0.0
  %1208 = vmatprep.subr.mxu0 0.0
  %1209 = vmatpush1.msra.mxu0 0.0
  %1210 = vmatprep.subr.mxu0 0.0
  %1211 = vmatpush1.msra.mxu0 0.0
  %1212 = vmatprep.subr.mxu0 0.0
  %1213 = vmatpush1.msra.mxu0 0.0
  %1214 = vmatprep.subr.mxu0 0.0
  %1215 = vmatpush1.msra.mxu0 0.0
  %1216 = vmatprep.subr.mxu0 0.0
  %1217 = vmatpush1.msra.mxu0 0.0
  %1218 = vmatprep.subr.mxu0 0.0
  %1219 = vmatpush1.msra.mxu0 0.0
  %1220 = vmatprep.subr.mxu0 0.0
  %1221 = vmatpush1.msra.mxu0 0.0
  %1222 = vmatprep.subr.mxu0 0.0
  %1223 = vmatpush1.msra.mxu0 0.0
  %1224 = vmatprep.subr.mxu0 0.0
  %1225 = vmatpush1.msra.mxu0 0.0
  %1226 = vmatprep.mubr.f32.mxu0 0.0
  %1227 = vmatmul.mubr.f32.gmra.mrb[0].mxu0 %v1160
  %v1228 = vpop.f32.mrb[0].mxu0
  %v1229 = vadd.f32 %v1155, %v1228
  %v1230 = vpop.f32.mrb[0].mxu0
  %1231 = vdwg.mxu0
  %1232 = vmatprep.subr.mxu0 0.0
  %1233 = vmatpush1.msra.mxu0 %v76
  %1234 = vmatprep.subr.mxu0 0.0
  %1235 = vmatpush1.msra.mxu0 %v77
  %1236 = vmatprep.subr.mxu0 0.0
  %1237 = vmatpush1.msra.mxu0 %v78
  %1238 = vmatprep.subr.mxu0 0.0
  %1239 = vmatpush1.msra.mxu0 %v79
  %1240 = vmatprep.subr.mxu0 0.0
  %1241 = vmatpush1.msra.mxu0 0.0
  %1242 = vmatprep.subr.mxu0 0.0
  %1243 = vmatpush1.msra.mxu0 0.0
  %1244 = vmatprep.subr.mxu0 0.0
  %1245 = vmatpush1.msra.mxu0 0.0
  %1246 = vmatprep.subr.mxu0 0.0
  %1247 = vmatpush1.msra.mxu0 0.0
  %1248 = vmatprep.subr.mxu0 0.0
  %1249 = vmatpush1.msra.mxu0 0.0
  %1250 = vmatprep.subr.mxu0 0.0
  %1251 = vmatpush1.msra.mxu0 0.0
  %1252 = vmatprep.subr.mxu0 0.0
  %1253 = vmatpush1.msra.mxu0 0.0
  %1254 = vmatprep.subr.mxu0 0.0
  %1255 = vmatpush1.msra.mxu0 0.0
  %1256 = vmatprep.subr.mxu0 0.0
  %1257 = vmatpush1.msra.mxu0 0.0
  %1258 = vmatprep.subr.mxu0 0.0
  %1259 = vmatpush1.msra.mxu0 0.0
  %1260 = vmatprep.subr.mxu0 0.0
  %1261 = vmatpush1.msra.mxu0 0.0
  %1262 = vmatprep.subr.mxu0 0.0
  %1263 = vmatpush1.msra.mxu0 0.0
  %1264 = vmatprep.subr.mxu0 0.0
  %1265 = vmatpush1.msra.mxu0 0.0
  %1266 = vmatprep.subr.mxu0 0.0
  %1267 = vmatpush1.msra.mxu0 0.0
  %1268 = vmatprep.subr.mxu0 0.0
  %1269 = vmatpush1.msra.mxu0 0.0
  %1270 = vmatprep.subr.mxu0 0.0
  %1271 = vmatpush1.msra.mxu0 0.0
  %1272 = vmatprep.subr.mxu0 0.0
  %1273 = vmatpush1.msra.mxu0 0.0
  %1274 = vmatprep.subr.mxu0 0.0
  %1275 = vmatpush1.msra.mxu0 0.0
  %1276 = vmatprep.subr.mxu0 0.0
  %1277 = vmatpush1.msra.mxu0 0.0
  %1278 = vmatprep.subr.mxu0 0.0
  %1279 = vmatpush1.msra.mxu0 0.0
  %1280 = vmatprep.subr.mxu0 0.0
  %1281 = vmatpush1.msra.mxu0 0.0
  %1282 = vmatprep.subr.mxu0 0.0
  %1283 = vmatpush1.msra.mxu0 0.0
  %1284 = vmatprep.subr.mxu0 0.0
  %1285 = vmatpush1.msra.mxu0 0.0
  %1286 = vmatprep.subr.mxu0 0.0
  %1287 = vmatpush1.msra.mxu0 0.0
  %1288 = vmatprep.subr.mxu0 0.0
  %1289 = vmatpush1.msra.mxu0 0.0
  %1290 = vmatprep.subr.mxu0 0.0
  %1291 = vmatpush1.msra.mxu0 0.0
  %1292 = vmatprep.subr.mxu0 0.0
  %1293 = vmatpush1.msra.mxu0 0.0
  %1294 = vmatprep.subr.mxu0 0.0
  %1295 = vmatpush1.msra.mxu0 0.0
  %1296 = vmatprep.mubr.f32.mxu0 0.0
  %1297 = vmatmul.mubr.f32.gmra.mrb[0].mxu0 %v184
  %v1298 = vpop.f32.mrb[0].mxu0
  %v1299 = vadd.f32 0.0, %v1298
  %v1300 = vpop.f32.mrb[0].mxu0
  %1301 = vdwg.mxu0
  %v1302 = vadd.f32 %v1229, %v1299
  %v1303 = vxor.u32 %v1302, 2147483648
  %v1304 = vmul.f32 %v1303, 1.442695
  %v1305 = vpow.pop %v1304
  %v1306 = vadd.f32 %v1305, 1.0
  %v1307 = vrcp.pop %v1306
  %v1308 = vmul.f32 1.0, %v1307
  %v1309 = vmul.f32 %v1308, 2.0
  %v1310 = vsub.f32 %v1309, 1.0
  %v1311 = vsel %vm93, %v1310, %v1308
  %v1312 = vmul.f32 %v1311, 0.0
  %1314 = vrot.lane.b32.xlu0 %v1311, 64
  %v1315 = vpop.permute.xlu0 %1314
  %v1317 = vmul.f32 %v1311, %v1315
  %1319 = vrot.lane.b32.xlu0 %v1317, 32
  %v1320 = vpop.permute.xlu0 %1319
  %v1322 = vadd.f32 %v1312, %v1320
  %v1323 = vtanh.pop %v1322
  %1325 = vrot.lane.b32.xlu0 %v1323, 64
  %v1326 = vpop.permute.xlu0 %1325
  %v1328 = vmul.f32 %v1311, %v1326
  %v1330 = vlaneseq
  %v1331 = vshrl.u32 %v1330, 7
  %v1332 = vsub.s32 0, %v1331
  %v1333 = vrot.slane %v88, %v1332
  %1336 = vrot.lane.b32.xlu0 %v1328, 32
  %v1337 = vpop.permute.xlu0 %1336
  %v1338 = vsel %vm182, %v1337, 0
  %1340 = vmatprep.subr.mxu0 0.0
  %1341 = vmatpush1.msra.mxu0 %v84
  %1342 = vmatprep.subr.mxu0 0.0
  %1343 = vmatpush1.msra.mxu0 %v85
  %1344 = vmatprep.subr.mxu0 0.0
  %1345 = vmatpush1.msra.mxu0 %v86
  %1346 = vmatprep.subr.mxu0 0.0
  %1347 = vmatpush1.msra.mxu0 %v87
  %1348 = vmatprep.subr.mxu0 0.0
  %1349 = vmatpush1.msra.mxu0 0.0
  %1350 = vmatprep.subr.mxu0 0.0
  %1351 = vmatpush1.msra.mxu0 0.0
  %1352 = vmatprep.subr.mxu0 0.0
  %1353 = vmatpush1.msra.mxu0 0.0
  %1354 = vmatprep.subr.mxu0 0.0
  %1355 = vmatpush1.msra.mxu0 0.0
  %1356 = vmatprep.subr.mxu0 0.0
  %1357 = vmatpush1.msra.mxu0 0.0
  %1358 = vmatprep.subr.mxu0 0.0
  %1359 = vmatpush1.msra.mxu0 0.0
  %1360 = vmatprep.subr.mxu0 0.0
  %1361 = vmatpush1.msra.mxu0 0.0
  %1362 = vmatprep.subr.mxu0 0.0
  %1363 = vmatpush1.msra.mxu0 0.0
  %1364 = vmatprep.subr.mxu0 0.0
  %1365 = vmatpush1.msra.mxu0 0.0
  %1366 = vmatprep.subr.mxu0 0.0
  %1367 = vmatpush1.msra.mxu0 0.0
  %1368 = vmatprep.subr.mxu0 0.0
  %1369 = vmatpush1.msra.mxu0 0.0
  %1370 = vmatprep.subr.mxu0 0.0
  %1371 = vmatpush1.msra.mxu0 0.0
  %1372 = vmatprep.subr.mxu0 0.0
  %1373 = vmatpush1.msra.mxu0 0.0
  %1374 = vmatprep.subr.mxu0 0.0
  %1375 = vmatpush1.msra.mxu0 0.0
  %1376 = vmatprep.subr.mxu0 0.0
  %1377 = vmatpush1.msra.mxu0 0.0
  %1378 = vmatprep.subr.mxu0 0.0
  %1379 = vmatpush1.msra.mxu0 0.0
  %1380 = vmatprep.subr.mxu0 0.0
  %1381 = vmatpush1.msra.mxu0 0.0
  %1382 = vmatprep.subr.mxu0 0.0
  %1383 = vmatpush1.msra.mxu0 0.0
  %1384 = vmatprep.subr.mxu0 0.0
  %1385 = vmatpush1.msra.mxu0 0.0
  %1386 = vmatprep.subr.mxu0 0.0
  %1387 = vmatpush1.msra.mxu0 0.0
  %1388 = vmatprep.subr.mxu0 0.0
  %1389 = vmatpush1.msra.mxu0 0.0
  %1390 = vmatprep.subr.mxu0 0.0
  %1391 = vmatpush1.msra.mxu0 0.0
  %1392 = vmatprep.subr.mxu0 0.0
  %1393 = vmatpush1.msra.mxu0 0.0
  %1394 = vmatprep.subr.mxu0 0.0
  %1395 = vmatpush1.msra.mxu0 0.0
  %1396 = vmatprep.subr.mxu0 0.0
  %1397 = vmatpush1.msra.mxu0 0.0
  %1398 = vmatprep.subr.mxu0 0.0
  %1399 = vmatpush1.msra.mxu0 0.0
  %1400 = vmatprep.subr.mxu0 0.0
  %1401 = vmatpush1.msra.mxu0 0.0
  %1402 = vmatprep.subr.mxu0 0.0
  %1403 = vmatpush1.msra.mxu0 0.0
  %1404 = vmatprep.mubr.f32.mxu0 0.0
  %1405 = vmatmul.mubr.f32.gmra.mrb[0].mxu0 %v1338
  %v1406 = vpop.f32.mrb[0].mxu0
  %v1407 = vadd.f32 %v1333, %v1406
  %v1408 = vpop.f32.mrb[0].mxu0
  %1409 = vdwg.mxu0
  %1410 = vst [vmem:[%s15] sm:$0xff] %v1407
  %1412 = vrot.lane.b32.xlu0 %v980, 32
  %v1413 = vpop.permute.xlu0 %1412
  %v1414 = vsel %vm182, %v1413, 0
  %1416 = vmatprep.subr.mxu0 0.0
  %1417 = vmatpush1.msra.mxu0 %v56
  %1418 = vmatprep.subr.mxu0 0.0
  %1419 = vmatpush1.msra.mxu0 %v57
  %1420 = vmatprep.subr.mxu0 0.0
  %1421 = vmatpush1.msra.mxu0 %v58
  %1422 = vmatprep.subr.mxu0 0.0
  %1423 = vmatpush1.msra.mxu0 %v59
  %1424 = vmatprep.subr.mxu0 0.0
  %1425 = vmatpush1.msra.mxu0 0.0
  %1426 = vmatprep.subr.mxu0 0.0
  %1427 = vmatpush1.msra.mxu0 0.0
  %1428 = vmatprep.subr.mxu0 0.0
  %1429 = vmatpush1.msra.mxu0 0.0
  %1430 = vmatprep.subr.mxu0 0.0
  %1431 = vmatpush1.msra.mxu0 0.0
  %1432 = vmatprep.subr.mxu0 0.0
  %1433 = vmatpush1.msra.mxu0 0.0
  %1434 = vmatprep.subr.mxu0 0.0
  %1435 = vmatpush1.msra.mxu0 0.0
  %1436 = vmatprep.subr.mxu0 0.0
  %1437 = vmatpush1.msra.mxu0 0.0
  %1438 = vmatprep.subr.mxu0 0.0
  %1439 = vmatpush1.msra.mxu0 0.0
  %1440 = vmatprep.subr.mxu0 0.0
  %1441 = vmatpush1.msra.mxu0 0.0
  %1442 = vmatprep.subr.mxu0 0.0
  %1443 = vmatpush1.msra.mxu0 0.0
  %1444 = vmatprep.subr.mxu0 0.0
  %1445 = vmatpush1.msra.mxu0 0.0
  %1446 = vmatprep.subr.mxu0 0.0
  %1447 = vmatpush1.msra.mxu0 0.0
  %1448 = vmatprep.subr.mxu0 0.0
  %1449 = vmatpush1.msra.mxu0 0.0
  %1450 = vmatprep.subr.mxu0 0.0
  %1451 = vmatpush1.msra.mxu0 0.0
  %1452 = vmatprep.subr.mxu0 0.0
  %1453 = vmatpush1.msra.mxu0 0.0
  %1454 = vmatprep.subr.mxu0 0.0
  %1455 = vmatpush1.msra.mxu0 0.0
  %1456 = vmatprep.subr.mxu0 0.0
  %1457 = vmatpush1.msra.mxu0 0.0
  %1458 = vmatprep.subr.mxu0 0.0
  %1459 = vmatpush1.msra.mxu0 0.0
  %1460 = vmatprep.subr.mxu0 0.0
  %1461 = vmatpush1.msra.mxu0 0.0
  %1462 = vmatprep.subr.mxu0 0.0
  %1463 = vmatpush1.msra.mxu0 0.0
  %1464 = vmatprep.subr.mxu0 0.0
  %1465 = vmatpush1.msra.mxu0 0.0
  %1466 = vmatprep.subr.mxu0 0.0
  %1467 = vmatpush1.msra.mxu0 0.0
  %1468 = vmatprep.subr.mxu0 0.0
  %1469 = vmatpush1.msra.mxu0 0.0
  %1470 = vmatprep.subr.mxu0 0.0
  %1471 = vmatpush1.msra.mxu0 0.0
  %1472 = vmatprep.subr.mxu0 0.0
  %1473 = vmatpush1.msra.mxu0 0.0
  %1474 = vmatprep.subr.mxu0 0.0
  %1475 = vmatpush1.msra.mxu0 0.0
  %1476 = vmatprep.subr.mxu0 0.0
  %1477 = vmatpush1.msra.mxu0 0.0
  %1478 = vmatprep.subr.mxu0 0.0
  %1479 = vmatpush1.msra.mxu0 0.0
  %1480 = vmatprep.mubr.f32.mxu0 0.0
  %1481 = vmatmul.mubr.f32.gmra.mrb[0].mxu0 %v1414
  %v1482 = vpop.f32.mrb[0].mxu0
  %v1483 = vadd.f32 %v635, %v1482
  %v1484 = vpop.f32.mrb[0].mxu0
  %1485 = vdwg.mxu0
  %1486 = vmatprep.subr.mxu0 0.0
  %1487 = vmatpush1.msra.mxu0 %v72
  %1488 = vmatprep.subr.mxu0 0.0
  %1489 = vmatpush1.msra.mxu0 %v73
  %1490 = vmatprep.subr.mxu0 0.0
  %1491 = vmatpush1.msra.mxu0 %v74
  %1492 = vmatprep.subr.mxu0 0.0
  %1493 = vmatpush1.msra.mxu0 %v75
  %1494 = vmatprep.subr.mxu0 0.0
  %1495 = vmatpush1.msra.mxu0 0.0
  %1496 = vmatprep.subr.mxu0 0.0
  %1497 = vmatpush1.msra.mxu0 0.0
  %1498 = vmatprep.subr.mxu0 0.0
  %1499 = vmatpush1.msra.mxu0 0.0
  %1500 = vmatprep.subr.mxu0 0.0
  %1501 = vmatpush1.msra.mxu0 0.0
  %1502 = vmatprep.subr.mxu0 0.0
  %1503 = vmatpush1.msra.mxu0 0.0
  %1504 = vmatprep.subr.mxu0 0.0
  %1505 = vmatpush1.msra.mxu0 0.0
  %1506 = vmatprep.subr.mxu0 0.0
  %1507 = vmatpush1.msra.mxu0 0.0
  %1508 = vmatprep.subr.mxu0 0.0
  %1509 = vmatpush1.msra.mxu0 0.0
  %1510 = vmatprep.subr.mxu0 0.0
  %1511 = vmatpush1.msra.mxu0 0.0
  %1512 = vmatprep.subr.mxu0 0.0
  %1513 = vmatpush1.msra.mxu0 0.0
  %1514 = vmatprep.subr.mxu0 0.0
  %1515 = vmatpush1.msra.mxu0 0.0
  %1516 = vmatprep.subr.mxu0 0.0
  %1517 = vmatpush1.msra.mxu0 0.0
  %1518 = vmatprep.subr.mxu0 0.0
  %1519 = vmatpush1.msra.mxu0 0.0
  %1520 = vmatprep.subr.mxu0 0.0
  %1521 = vmatpush1.msra.mxu0 0.0
  %1522 = vmatprep.subr.mxu0 0.0
  %1523 = vmatpush1.msra.mxu0 0.0
  %1524 = vmatprep.subr.mxu0 0.0
  %1525 = vmatpush1.msra.mxu0 0.0
  %1526 = vmatprep.subr.mxu0 0.0
  %1527 = vmatpush1.msra.mxu0 0.0
  %1528 = vmatprep.subr.mxu0 0.0
  %1529 = vmatpush1.msra.mxu0 0.0
  %1530 = vmatprep.subr.mxu0 0.0
  %1531 = vmatpush1.msra.mxu0 0.0
  %1532 = vmatprep.subr.mxu0 0.0
  %1533 = vmatpush1.msra.mxu0 0.0
  %1534 = vmatprep.subr.mxu0 0.0
  %1535 = vmatpush1.msra.mxu0 0.0
  %1536 = vmatprep.subr.mxu0 0.0
  %1537 = vmatpush1.msra.mxu0 0.0
  %1538 = vmatprep.subr.mxu0 0.0
  %1539 = vmatpush1.msra.mxu0 0.0
  %1540 = vmatprep.subr.mxu0 0.0
  %1541 = vmatpush1.msra.mxu0 0.0
  %1542 = vmatprep.subr.mxu0 0.0
  %1543 = vmatpush1.msra.mxu0 0.0
  %1544 = vmatprep.subr.mxu0 0.0
  %1545 = vmatpush1.msra.mxu0 0.0
  %1546 = vmatprep.subr.mxu0 0.0
  %1547 = vmatpush1.msra.mxu0 0.0
  %1548 = vmatprep.subr.mxu0 0.0
  %1549 = vmatpush1.msra.mxu0 0.0
  %1550 = vmatprep.mubr.f32.mxu0 0.0
  %1551 = vmatmul.mubr.f32.gmra.mrb[0].mxu0 %v1160
  %v1552 = vpop.f32.mrb[0].mxu0
  %v1553 = vadd.f32 0.0, %v1552
  %v1554 = vpop.f32.mrb[0].mxu0
  %1555 = vdwg.mxu0
  %v1556 = vadd.f32 %v1483, %v1553
  %v1557 = vxor.u32 %v1556, 2147483648
  %v1558 = vmul.f32 %v1557, 1.442695
  %v1559 = vpow.pop %v1558
  %v1560 = vadd.f32 %v1559, 1.0
  %v1561 = vrcp.pop %v1560
  %v1562 = vmul.f32 1.0, %v1561
  %v1563 = vmul.f32 %v1562, 2.0
  %v1564 = vsub.f32 %v1563, 1.0
  %v1565 = vsel %vm93, %v1564, %v1562
  %v1566 = vmul.f32 %v1565, %v802
  %1568 = vrot.lane.b32.xlu0 %v1565, 64
  %v1569 = vpop.permute.xlu0 %1568
  %v1571 = vmul.f32 %v1565, %v1569
  %1573 = vrot.lane.b32.xlu0 %v1571, 32
  %v1574 = vpop.permute.xlu0 %1573
  %v1576 = vadd.f32 %v1566, %v1574
  %v1577 = vtanh.pop %v1576
  %1579 = vrot.lane.b32.xlu0 %v1577, 64
  %v1580 = vpop.permute.xlu0 %1579
  %v1582 = vmul.f32 %v1565, %v1580
  %1584 = vrot.lane.b32.xlu0 %v1150, 32
  %v1585 = vpop.permute.xlu0 %1584
  %v1586 = vsel %vm182, %v1585, 0
  %1588 = vmatprep.subr.mxu0 0.0
  %1589 = vmatpush1.msra.mxu0 %v52
  %1590 = vmatprep.subr.mxu0 0.0
  %1591 = vmatpush1.msra.mxu0 %v53
  %1592 = vmatprep.subr.mxu0 0.0
  %1593 = vmatpush1.msra.mxu0 %v54
  %1594 = vmatprep.subr.mxu0 0.0
  %1595 = vmatpush1.msra.mxu0 %v55
  %1596 = vmatprep.subr.mxu0 0.0
  %1597 = vmatpush1.msra.mxu0 0.0
  %1598 = vmatprep.subr.mxu0 0.0
  %1599 = vmatpush1.msra.mxu0 0.0
  %1600 = vmatprep.subr.mxu0 0.0
  %1601 = vmatpush1.msra.mxu0 0.0
  %1602 = vmatprep.subr.mxu0 0.0
  %1603 = vmatpush1.msra.mxu0 0.0
  %1604 = vmatprep.subr.mxu0 0.0
  %1605 = vmatpush1.msra.mxu0 0.0
  %1606 = vmatprep.subr.mxu0 0.0
  %1607 = vmatpush1.msra.mxu0 0.0
  %1608 = vmatprep.subr.mxu0 0.0
  %1609 = vmatpush1.msra.mxu0 0.0
  %1610 = vmatprep.subr.mxu0 0.0
  %1611 = vmatpush1.msra.mxu0 0.0
  %1612 = vmatprep.subr.mxu0 0.0
  %1613 = vmatpush1.msra.mxu0 0.0
  %1614 = vmatprep.subr.mxu0 0.0
  %1615 = vmatpush1.msra.mxu0 0.0
  %1616 = vmatprep.subr.mxu0 0.0
  %1617 = vmatpush1.msra.mxu0 0.0
  %1618 = vmatprep.subr.mxu0 0.0
  %1619 = vmatpush1.msra.mxu0 0.0
  %1620 = vmatprep.subr.mxu0 0.0
  %1621 = vmatpush1.msra.mxu0 0.0
  %1622 = vmatprep.subr.mxu0 0.0
  %1623 = vmatpush1.msra.mxu0 0.0
  %1624 = vmatprep.subr.mxu0 0.0
  %1625 = vmatpush1.msra.mxu0 0.0
  %1626 = vmatprep.subr.mxu0 0.0
  %1627 = vmatpush1.msra.mxu0 0.0
  %1628 = vmatprep.subr.mxu0 0.0
  %1629 = vmatpush1.msra.mxu0 0.0
  %1630 = vmatprep.subr.mxu0 0.0
  %1631 = vmatpush1.msra.mxu0 0.0
  %1632 = vmatprep.subr.mxu0 0.0
  %1633 = vmatpush1.msra.mxu0 0.0
  %1634 = vmatprep.subr.mxu0 0.0
  %1635 = vmatpush1.msra.mxu0 0.0
  %1636 = vmatprep.subr.mxu0 0.0
  %1637 = vmatpush1.msra.mxu0 0.0
  %1638 = vmatprep.subr.mxu0 0.0
  %1639 = vmatpush1.msra.mxu0 0.0
  %1640 = vmatprep.subr.mxu0 0.0
  %1641 = vmatpush1.msra.mxu0 0.0
  %1642 = vmatprep.subr.mxu0 0.0
  %1643 = vmatpush1.msra.mxu0 0.0
  %1644 = vmatprep.subr.mxu0 0.0
  %1645 = vmatpush1.msra.mxu0 0.0
  %1646 = vmatprep.subr.mxu0 0.0
  %1647 = vmatpush1.msra.mxu0 0.0
  %1648 = vmatprep.subr.mxu0 0.0
  %1649 = vmatpush1.msra.mxu0 0.0
  %1650 = vmatprep.subr.mxu0 0.0
  %1651 = vmatpush1.msra.mxu0 0.0
  %1652 = vmatprep.mubr.f32.mxu0 0.0
  %1653 = vmatmul.mubr.f32.gmra.mrb[0].mxu0 %v1586
  %v1654 = vpop.f32.mrb[0].mxu0
  %v1655 = vadd.f32 %v287, %v1654
  %v1656 = vpop.f32.mrb[0].mxu0
  %1657 = vdwg.mxu0
  %1658 = vmatprep.subr.mxu0 0.0
  %1659 = vmatpush1.msra.mxu0 %v68
  %1660 = vmatprep.subr.mxu0 0.0
  %1661 = vmatpush1.msra.mxu0 %v69
  %1662 = vmatprep.subr.mxu0 0.0
  %1663 = vmatpush1.msra.mxu0 %v70
  %1664 = vmatprep.subr.mxu0 0.0
  %1665 = vmatpush1.msra.mxu0 %v71
  %1666 = vmatprep.subr.mxu0 0.0
  %1667 = vmatpush1.msra.mxu0 0.0
  %1668 = vmatprep.subr.mxu0 0.0
  %1669 = vmatpush1.msra.mxu0 0.0
  %1670 = vmatprep.subr.mxu0 0.0
  %1671 = vmatpush1.msra.mxu0 0.0
  %1672 = vmatprep.subr.mxu0 0.0
  %1673 = vmatpush1.msra.mxu0 0.0
  %1674 = vmatprep.subr.mxu0 0.0
  %1675 = vmatpush1.msra.mxu0 0.0
  %1676 = vmatprep.subr.mxu0 0.0
  %1677 = vmatpush1.msra.mxu0 0.0
  %1678 = vmatprep.subr.mxu0 0.0
  %1679 = vmatpush1.msra.mxu0 0.0
  %1680 = vmatprep.subr.mxu0 0.0
  %1681 = vmatpush1.msra.mxu0 0.0
  %1682 = vmatprep.subr.mxu0 0.0
  %1683 = vmatpush1.msra.mxu0 0.0
  %1684 = vmatprep.subr.mxu0 0.0
  %1685 = vmatpush1.msra.mxu0 0.0
  %1686 = vmatprep.subr.mxu0 0.0
  %1687 = vmatpush1.msra.mxu0 0.0
  %1688 = vmatprep.subr.mxu0 0.0
  %1689 = vmatpush1.msra.mxu0 0.0
  %1690 = vmatprep.subr.mxu0 0.0
  %1691 = vmatpush1.msra.mxu0 0.0
  %1692 = vmatprep.subr.mxu0 0.0
  %1693 = vmatpush1.msra.mxu0 0.0
  %1694 = vmatprep.subr.mxu0 0.0
  %1695 = vmatpush1.msra.mxu0 0.0
  %1696 = vmatprep.subr.mxu0 0.0
  %1697 = vmatpush1.msra.mxu0 0.0
  %1698 = vmatprep.subr.mxu0 0.0
  %1699 = vmatpush1.msra.mxu0 0.0
  %1700 = vmatprep.subr.mxu0 0.0
  %1701 = vmatpush1.msra.mxu0 0.0
  %1702 = vmatprep.subr.mxu0 0.0
  %1703 = vmatpush1.msra.mxu0 0.0
  %1704 = vmatprep.subr.mxu0 0.0
  %1705 = vmatpush1.msra.mxu0 0.0
  %1706 = vmatprep.subr.mxu0 0.0
  %1707 = vmatpush1.msra.mxu0 0.0
  %1708 = vmatprep.subr.mxu0 0.0
  %1709 = vmatpush1.msra.mxu0 0.0
  %1710 = vmatprep.subr.mxu0 0.0
  %1711 = vmatpush1.msra.mxu0 0.0
  %1712 = vmatprep.subr.mxu0 0.0
  %1713 = vmatpush1.msra.mxu0 0.0
  %1714 = vmatprep.subr.mxu0 0.0
  %1715 = vmatpush1.msra.mxu0 0.0
  %1716 = vmatprep.subr.mxu0 0.0
  %1717 = vmatpush1.msra.mxu0 0.0
  %1718 = vmatprep.subr.mxu0 0.0
  %1719 = vmatpush1.msra.mxu0 0.0
  %1720 = vmatprep.subr.mxu0 0.0
  %1721 = vmatpush1.msra.mxu0 0.0
  %1722 = vmatprep.mubr.f32.mxu0 0.0
  %1723 = vmatmul.mubr.f32.gmra.mrb[0].mxu0 %v1414
  %v1724 = vpop.f32.mrb[0].mxu0
  %v1725 = vadd.f32 0.0, %v1724
  %v1726 = vpop.f32.mrb[0].mxu0
  %1727 = vdwg.mxu0
  %v1728 = vadd.f32 %v1655, %v1725
  %v1729 = vxor.u32 %v1728, 2147483648
  %v1730 = vmul.f32 %v1729, 1.442695
  %v1731 = vpow.pop %v1730
  %v1732 = vadd.f32 %v1731, 1.0
  %v1733 = vrcp.pop %v1732
  %v1734 = vmul.f32 1.0, %v1733
  %v1735 = vmul.f32 %v1734, 2.0
  %v1736 = vsub.f32 %v1735, 1.0
  %v1737 = vsel %vm93, %v1736, %v1734
  %v1738 = vmul.f32 %v1737, %v974
  %1740 = vrot.lane.b32.xlu0 %v1737, 64
  %v1741 = vpop.permute.xlu0 %1740
  %v1743 = vmul.f32 %v1737, %v1741
  %1745 = vrot.lane.b32.xlu0 %v1743, 32
  %v1746 = vpop.permute.xlu0 %1745
  %v1748 = vadd.f32 %v1738, %v1746
  %v1749 = vtanh.pop %v1748
  %1751 = vrot.lane.b32.xlu0 %v1749, 64
  %v1752 = vpop.permute.xlu0 %1751
  %v1754 = vmul.f32 %v1737, %v1752
  %v1756 = vsel %vm108, %v97, 0
  %1758 = vmatprep.subr.mxu0 0.0
  %1759 = vmatpush1.msra.mxu0 %v50
  %1760 = vmatprep.subr.mxu0 0.0
  %1761 = vmatpush1.msra.mxu0 %v51
  %1762 = vmatprep.subr.mxu0 0.0
  %1763 = vmatpush1.msra.mxu0 0.0
  %1764 = vmatprep.subr.mxu0 0.0
  %1765 = vmatpush1.msra.mxu0 0.0
  %1766 = vmatprep.subr.mxu0 0.0
  %1767 = vmatpush1.msra.mxu0 0.0
  %1768 = vmatprep.subr.mxu0 0.0
  %1769 = vmatpush1.msra.mxu0 0.0
  %1770 = vmatprep.subr.mxu0 0.0
  %1771 = vmatpush1.msra.mxu0 0.0
  %1772 = vmatprep.subr.mxu0 0.0
  %1773 = vmatpush1.msra.mxu0 0.0
  %1774 = vmatprep.subr.mxu0 0.0
  %1775 = vmatpush1.msra.mxu0 0.0
  %1776 = vmatprep.subr.mxu0 0.0
  %1777 = vmatpush1.msra.mxu0 0.0
  %1778 = vmatprep.subr.mxu0 0.0
  %1779 = vmatpush1.msra.mxu0 0.0
  %1780 = vmatprep.subr.mxu0 0.0
  %1781 = vmatpush1.msra.mxu0 0.0
  %1782 = vmatprep.subr.mxu0 0.0
  %1783 = vmatpush1.msra.mxu0 0.0
  %1784 = vmatprep.subr.mxu0 0.0
  %1785 = vmatpush1.msra.mxu0 0.0
  %1786 = vmatprep.subr.mxu0 0.0
  %1787 = vmatpush1.msra.mxu0 0.0
  %1788 = vmatprep.subr.mxu0 0.0
  %1789 = vmatpush1.msra.mxu0 0.0
  %1790 = vmatprep.subr.mxu0 0.0
  %1791 = vmatpush1.msra.mxu0 0.0
  %1792 = vmatprep.subr.mxu0 0.0
  %1793 = vmatpush1.msra.mxu0 0.0
  %1794 = vmatprep.subr.mxu0 0.0
  %1795 = vmatpush1.msra.mxu0 0.0
  %1796 = vmatprep.subr.mxu0 0.0
  %1797 = vmatpush1.msra.mxu0 0.0
  %1798 = vmatprep.subr.mxu0 0.0
  %1799 = vmatpush1.msra.mxu0 0.0
  %1800 = vmatprep.subr.mxu0 0.0
  %1801 = vmatpush1.msra.mxu0 0.0
  %1802 = vmatprep.subr.mxu0 0.0
  %1803 = vmatpush1.msra.mxu0 0.0
  %1804 = vmatprep.subr.mxu0 0.0
  %1805 = vmatpush1.msra.mxu0 0.0
  %1806 = vmatprep.subr.mxu0 0.0
  %1807 = vmatpush1.msra.mxu0 0.0
  %1808 = vmatprep.subr.mxu0 0.0
  %1809 = vmatpush1.msra.mxu0 0.0
  %1810 = vmatprep.subr.mxu0 0.0
  %1811 = vmatpush1.msra.mxu0 0.0
  %1812 = vmatprep.subr.mxu0 0.0
  %1813 = vmatpush1.msra.mxu0 0.0
  %1814 = vmatprep.subr.mxu0 0.0
  %1815 = vmatpush1.msra.mxu0 0.0
  %1816 = vmatprep.subr.mxu0 0.0
  %1817 = vmatpush1.msra.mxu0 0.0
  %1818 = vmatprep.subr.mxu0 0.0
  %1819 = vmatpush1.msra.mxu0 0.0
  %1820 = vmatprep.subr.mxu0 0.0
  %1821 = vmatpush1.msra.mxu0 0.0
  %1822 = vmatprep.mubr.f32.mxu0 0.0
  %1823 = vmatmul.mubr.f32.gmra.mrb[0].mxu0 %v1756
  %v1824 = vpop.f32.mrb[0].mxu0
  %v1825 = vadd.f32 %v106, %v1824
  %v1826 = vpop.f32.mrb[0].mxu0
  %1827 = vdwg.mxu0
  %1828 = vmatprep.subr.mxu0 0.0
  %1829 = vmatpush1.msra.mxu0 %v64
  %1830 = vmatprep.subr.mxu0 0.0
  %1831 = vmatpush1.msra.mxu0 %v65
  %1832 = vmatprep.subr.mxu0 0.0
  %1833 = vmatpush1.msra.mxu0 %v66
  %1834 = vmatprep.subr.mxu0 0.0
  %1835 = vmatpush1.msra.mxu0 %v67
  %1836 = vmatprep.subr.mxu0 0.0
  %1837 = vmatpush1.msra.mxu0 0.0
  %1838 = vmatprep.subr.mxu0 0.0
  %1839 = vmatpush1.msra.mxu0 0.0
  %1840 = vmatprep.subr.mxu0 0.0
  %1841 = vmatpush1.msra.mxu0 0.0
  %1842 = vmatprep.subr.mxu0 0.0
  %1843 = vmatpush1.msra.mxu0 0.0
  %1844 = vmatprep.subr.mxu0 0.0
  %1845 = vmatpush1.msra.mxu0 0.0
  %1846 = vmatprep.subr.mxu0 0.0
  %1847 = vmatpush1.msra.mxu0 0.0
  %1848 = vmatprep.subr.mxu0 0.0
  %1849 = vmatpush1.msra.mxu0 0.0
  %1850 = vmatprep.subr.mxu0 0.0
  %1851 = vmatpush1.msra.mxu0 0.0
  %1852 = vmatprep.subr.mxu0 0.0
  %1853 = vmatpush1.msra.mxu0 0.0
  %1854 = vmatprep.subr.mxu0 0.0
  %1855 = vmatpush1.msra.mxu0 0.0
  %1856 = vmatprep.subr.mxu0 0.0
  %1857 = vmatpush1.msra.mxu0 0.0
  %1858 = vmatprep.subr.mxu0 0.0
  %1859 = vmatpush1.msra.mxu0 0.0
  %1860 = vmatprep.subr.mxu0 0.0
  %1861 = vmatpush1.msra.mxu0 0.0
  %1862 = vmatprep.subr.mxu0 0.0
  %1863 = vmatpush1.msra.mxu0 0.0
  %1864 = vmatprep.subr.mxu0 0.0
  %1865 = vmatpush1.msra.mxu0 0.0
  %1866 = vmatprep.subr.mxu0 0.0
  %1867 = vmatpush1.msra.mxu0 0.0
  %1868 = vmatprep.subr.mxu0 0.0
  %1869 = vmatpush1.msra.mxu0 0.0
  %1870 = vmatprep.subr.mxu0 0.0
  %1871 = vmatpush1.msra.mxu0 0.0
  %1872 = vmatprep.subr.mxu0 0.0
  %1873 = vmatpush1.msra.mxu0 0.0
  %1874 = vmatprep.subr.mxu0 0.0
  %1875 = vmatpush1.msra.mxu0 0.0
  %1876 = vmatprep.subr.mxu0 0.0
  %1877 = vmatpush1.msra.mxu0 0.0
  %1878 = vmatprep.subr.mxu0 0.0
  %1879 = vmatpush1.msra.mxu0 0.0
  %1880 = vmatprep.subr.mxu0 0.0
  %1881 = vmatpush1.msra.mxu0 0.0
  %1882 = vmatprep.subr.mxu0 0.0
  %1883 = vmatpush1.msra.mxu0 0.0
  %1884 = vmatprep.subr.mxu0 0.0
  %1885 = vmatpush1.msra.mxu0 0.0
  %1886 = vmatprep.subr.mxu0 0.0
  %1887 = vmatpush1.msra.mxu0 0.0
  %1888 = vmatprep.subr.mxu0 0.0
  %1889 = vmatpush1.msra.mxu0 0.0
  %1890 = vmatprep.subr.mxu0 0.0
  %1891 = vmatpush1.msra.mxu0 0.0
  %1892 = vmatprep.mubr.f32.mxu0 0.0
  %1893 = vmatmul.mubr.f32.gmra.mrb[0].mxu0 %v1586
  %v1894 = vpop.f32.mrb[0].mxu0
  %v1895 = vadd.f32 0.0, %v1894
  %v1896 = vpop.f32.mrb[0].mxu0
  %1897 = vdwg.mxu0
  %v1898 = vadd.f32 %v1825, %v1895
  %v1899 = vxor.u32 %v1898, 2147483648
  %v1900 = vmul.f32 %v1899, 1.442695
  %v1901 = vpow.pop %v1900
  %v1902 = vadd.f32 %v1901, 1.0
  %v1903 = vrcp.pop %v1902
  %v1904 = vmul.f32 1.0, %v1903
  %v1905 = vmul.f32 %v1904, 2.0
  %v1906 = vsub.f32 %v1905, 1.0
  %v1907 = vsel %vm93, %v1906, %v1904
  %v1908 = vmul.f32 %v1907, %v1144
  %1910 = vrot.lane.b32.xlu0 %v1907, 64
  %v1911 = vpop.permute.xlu0 %1910
  %v1913 = vmul.f32 %v1907, %v1911
  %1915 = vrot.lane.b32.xlu0 %v1913, 32
  %v1916 = vpop.permute.xlu0 %1915
  %v1918 = vadd.f32 %v1908, %v1916
  %v1919 = vtanh.pop %v1918
  %1921 = vrot.lane.b32.xlu0 %v1919, 64
  %v1922 = vpop.permute.xlu0 %1921
  %v1924 = vmul.f32 %v1907, %v1922
  %1926 = vrot.lane.b32.xlu0 %v1582, 32
  %v1927 = vpop.permute.xlu0 %1926
  %v1928 = vsel %vm182, %v1927, 0
  %1930 = vmatprep.subr.mxu0 0.0
  %1931 = vmatpush1.msra.mxu0 %v60
  %1932 = vmatprep.subr.mxu0 0.0
  %1933 = vmatpush1.msra.mxu0 %v61
  %1934 = vmatprep.subr.mxu0 0.0
  %1935 = vmatpush1.msra.mxu0 %v62
  %1936 = vmatprep.subr.mxu0 0.0
  %1937 = vmatpush1.msra.mxu0 %v63
  %1938 = vmatprep.subr.mxu0 0.0
  %1939 = vmatpush1.msra.mxu0 0.0
  %1940 = vmatprep.subr.mxu0 0.0
  %1941 = vmatpush1.msra.mxu0 0.0
  %1942 = vmatprep.subr.mxu0 0.0
  %1943 = vmatpush1.msra.mxu0 0.0
  %1944 = vmatprep.subr.mxu0 0.0
  %1945 = vmatpush1.msra.mxu0 0.0
  %1946 = vmatprep.subr.mxu0 0.0
  %1947 = vmatpush1.msra.mxu0 0.0
  %1948 = vmatprep.subr.mxu0 0.0
  %1949 = vmatpush1.msra.mxu0 0.0
  %1950 = vmatprep.subr.mxu0 0.0
  %1951 = vmatpush1.msra.mxu0 0.0
  %1952 = vmatprep.subr.mxu0 0.0
  %1953 = vmatpush1.msra.mxu0 0.0
  %1954 = vmatprep.subr.mxu0 0.0
  %1955 = vmatpush1.msra.mxu0 0.0
  %1956 = vmatprep.subr.mxu0 0.0
  %1957 = vmatpush1.msra.mxu0 0.0
  %1958 = vmatprep.subr.mxu0 0.0
  %1959 = vmatpush1.msra.mxu0 0.0
  %1960 = vmatprep.subr.mxu0 0.0
  %1961 = vmatpush1.msra.mxu0 0.0
  %1962 = vmatprep.subr.mxu0 0.0
  %1963 = vmatpush1.msra.mxu0 0.0
  %1964 = vmatprep.subr.mxu0 0.0
  %1965 = vmatpush1.msra.mxu0 0.0
  %1966 = vmatprep.subr.mxu0 0.0
  %1967 = vmatpush1.msra.mxu0 0.0
  %1968 = vmatprep.subr.mxu0 0.0
  %1969 = vmatpush1.msra.mxu0 0.0
  %1970 = vmatprep.subr.mxu0 0.0
  %1971 = vmatpush1.msra.mxu0 0.0
  %1972 = vmatprep.subr.mxu0 0.0
  %1973 = vmatpush1.msra.mxu0 0.0
  %1974 = vmatprep.subr.mxu0 0.0
  %1975 = vmatpush1.msra.mxu0 0.0
  %1976 = vmatprep.subr.mxu0 0.0
  %1977 = vmatpush1.msra.mxu0 0.0
  %1978 = vmatprep.subr.mxu0 0.0
  %1979 = vmatpush1.msra.mxu0 0.0
  %1980 = vmatprep.subr.mxu0 0.0
  %1981 = vmatpush1.msra.mxu0 0.0
  %1982 = vmatprep.subr.mxu0 0.0
  %1983 = vmatpush1.msra.mxu0 0.0
  %1984 = vmatprep.subr.mxu0 0.0
  %1985 = vmatpush1.msra.mxu0 0.0
  %1986 = vmatprep.subr.mxu0 0.0
  %1987 = vmatpush1.msra.mxu0 0.0
  %1988 = vmatprep.subr.mxu0 0.0
  %1989 = vmatpush1.msra.mxu0 0.0
  %1990 = vmatprep.subr.mxu0 0.0
  %1991 = vmatpush1.msra.mxu0 0.0
  %1992 = vmatprep.subr.mxu0 0.0
  %1993 = vmatpush1.msra.mxu0 0.0
  %1994 = vmatprep.mubr.f32.mxu0 0.0
  %1995 = vmatmul.mubr.f32.gmra.mrb[0].mxu0 %v1928
  %v1996 = vpop.f32.mrb[0].mxu0
  %v1997 = vadd.f32 %v1155, %v1996
  %v1998 = vpop.f32.mrb[0].mxu0
  %1999 = vdwg.mxu0
  %2000 = vmatprep.subr.mxu0 0.0
  %2001 = vmatpush1.msra.mxu0 %v76
  %2002 = vmatprep.subr.mxu0 0.0
  %2003 = vmatpush1.msra.mxu0 %v77
  %2004 = vmatprep.subr.mxu0 0.0
  %2005 = vmatpush1.msra.mxu0 %v78
  %2006 = vmatprep.subr.mxu0 0.0
  %2007 = vmatpush1.msra.mxu0 %v79
  %2008 = vmatprep.subr.mxu0 0.0
  %2009 = vmatpush1.msra.mxu0 0.0
  %2010 = vmatprep.subr.mxu0 0.0
  %2011 = vmatpush1.msra.mxu0 0.0
  %2012 = vmatprep.subr.mxu0 0.0
  %2013 = vmatpush1.msra.mxu0 0.0
  %2014 = vmatprep.subr.mxu0 0.0
  %2015 = vmatpush1.msra.mxu0 0.0
  %2016 = vmatprep.subr.mxu0 0.0
  %2017 = vmatpush1.msra.mxu0 0.0
  %2018 = vmatprep.subr.mxu0 0.0
  %2019 = vmatpush1.msra.mxu0 0.0
  %2020 = vmatprep.subr.mxu0 0.0
  %2021 = vmatpush1.msra.mxu0 0.0
  %2022 = vmatprep.subr.mxu0 0.0
  %2023 = vmatpush1.msra.mxu0 0.0
  %2024 = vmatprep.subr.mxu0 0.0
  %2025 = vmatpush1.msra.mxu0 0.0
  %2026 = vmatprep.subr.mxu0 0.0
  %2027 = vmatpush1.msra.mxu0 0.0
  %2028 = vmatprep.subr.mxu0 0.0
  %2029 = vmatpush1.msra.mxu0 0.0
  %2030 = vmatprep.subr.mxu0 0.0
  %2031 = vmatpush1.msra.mxu0 0.0
  %2032 = vmatprep.subr.mxu0 0.0
  %2033 = vmatpush1.msra.mxu0 0.0
  %2034 = vmatprep.subr.mxu0 0.0
  %2035 = vmatpush1.msra.mxu0 0.0
  %2036 = vmatprep.subr.mxu0 0.0
  %2037 = vmatpush1.msra.mxu0 0.0
  %2038 = vmatprep.subr.mxu0 0.0
  %2039 = vmatpush1.msra.mxu0 0.0
  %2040 = vmatprep.subr.mxu0 0.0
  %2041 = vmatpush1.msra.mxu0 0.0
  %2042 = vmatprep.subr.mxu0 0.0
  %2043 = vmatpush1.msra.mxu0 0.0
  %2044 = vmatprep.subr.mxu0 0.0
  %2045 = vmatpush1.msra.mxu0 0.0
  %2046 = vmatprep.subr.mxu0 0.0
  %2047 = vmatpush1.msra.mxu0 0.0
  %2048 = vmatprep.subr.mxu0 0.0
  %2049 = vmatpush1.msra.mxu0 0.0
  %2050 = vmatprep.subr.mxu0 0.0
  %2051 = vmatpush1.msra.mxu0 0.0
  %2052 = vmatprep.subr.mxu0 0.0
  %2053 = vmatpush1.msra.mxu0 0.0
  %2054 = vmatprep.subr.mxu0 0.0
  %2055 = vmatpush1.msra.mxu0 0.0
  %2056 = vmatprep.subr.mxu0 0.0
  %2057 = vmatpush1.msra.mxu0 0.0
  %2058 = vmatprep.subr.mxu0 0.0
  %2059 = vmatpush1.msra.mxu0 0.0
  %2060 = vmatprep.subr.mxu0 0.0
  %2061 = vmatpush1.msra.mxu0 0.0
  %2062 = vmatprep.subr.mxu0 0.0
  %2063 = vmatpush1.msra.mxu0 0.0
  %2064 = vmatprep.mubr.f32.mxu0 0.0
  %2065 = vmatmul.mubr.f32.gmra.mrb[0].mxu0 %v1338
  %v2066 = vpop.f32.mrb[0].mxu0
  %v2067 = vadd.f32 0.0, %v2066
  %v2068 = vpop.f32.mrb[0].mxu0
  %2069 = vdwg.mxu0
  %v2070 = vadd.f32 %v1997, %v2067
  %v2071 = vxor.u32 %v2070, 2147483648
  %v2072 = vmul.f32 %v2071, 1.442695
  %v2073 = vpow.pop %v2072
  %v2074 = vadd.f32 %v2073, 1.0
  %v2075 = vrcp.pop %v2074
  %v2076 = vmul.f32 1.0, %v2075
  %v2077 = vmul.f32 %v2076, 2.0
  %v2078 = vsub.f32 %v2077, 1.0
  %v2079 = vsel %vm93, %v2078, %v2076
  %v2080 = vmul.f32 %v2079, %v1322
  %2082 = vrot.lane.b32.xlu0 %v2079, 64
  %v2083 = vpop.permute.xlu0 %2082
  %v2085 = vmul.f32 %v2079, %v2083
  %2087 = vrot.lane.b32.xlu0 %v2085, 32
  %v2088 = vpop.permute.xlu0 %2087
  %v2090 = vadd.f32 %v2080, %v2088
  %v2091 = vtanh.pop %v2090
  %2093 = vrot.lane.b32.xlu0 %v2091, 64
  %v2094 = vpop.permute.xlu0 %2093
  %v2096 = vmul.f32 %v2079, %v2094
  %2098 = vrot.lane.b32.xlu0 %v2096, 32
  %v2099 = vpop.permute.xlu0 %2098
  %v2100 = vsel %vm182, %v2099, 0
  %2102 = vmatprep.subr.mxu0 0.0
  %2103 = vmatpush1.msra.mxu0 %v84
  %2104 = vmatprep.subr.mxu0 0.0
  %2105 = vmatpush1.msra.mxu0 %v85
  %2106 = vmatprep.subr.mxu0 0.0
  %2107 = vmatpush1.msra.mxu0 %v86
  %2108 = vmatprep.subr.mxu0 0.0
  %2109 = vmatpush1.msra.mxu0 %v87
  %2110 = vmatprep.subr.mxu0 0.0
  %2111 = vmatpush1.msra.mxu0 0.0
  %2112 = vmatprep.subr.mxu0 0.0
  %2113 = vmatpush1.msra.mxu0 0.0
  %2114 = vmatprep.subr.mxu0 0.0
  %2115 = vmatpush1.msra.mxu0 0.0
  %2116 = vmatprep.subr.mxu0 0.0
  %2117 = vmatpush1.msra.mxu0 0.0
  %2118 = vmatprep.subr.mxu0 0.0
  %2119 = vmatpush1.msra.mxu0 0.0
  %2120 = vmatprep.subr.mxu0 0.0
  %2121 = vmatpush1.msra.mxu0 0.0
  %2122 = vmatprep.subr.mxu0 0.0
  %2123 = vmatpush1.msra.mxu0 0.0
  %2124 = vmatprep.subr.mxu0 0.0
  %2125 = vmatpush1.msra.mxu0 0.0
  %2126 = vmatprep.subr.mxu0 0.0
  %2127 = vmatpush1.msra.mxu0 0.0
  %2128 = vmatprep.subr.mxu0 0.0
  %2129 = vmatpush1.msra.mxu0 0.0
  %2130 = vmatprep.subr.mxu0 0.0
  %2131 = vmatpush1.msra.mxu0 0.0
  %2132 = vmatprep.subr.mxu0 0.0
  %2133 = vmatpush1.msra.mxu0 0.0
  %2134 = vmatprep.subr.mxu0 0.0
  %2135 = vmatpush1.msra.mxu0 0.0
  %2136 = vmatprep.subr.mxu0 0.0
  %2137 = vmatpush1.msra.mxu0 0.0
  %2138 = vmatprep.subr.mxu0 0.0
  %2139 = vmatpush1.msra.mxu0 0.0
  %2140 = vmatprep.subr.mxu0 0.0
  %2141 = vmatpush1.msra.mxu0 0.0
  %2142 = vmatprep.subr.mxu0 0.0
  %2143 = vmatpush1.msra.mxu0 0.0
  %2144 = vmatprep.subr.mxu0 0.0
  %2145 = vmatpush1.msra.mxu0 0.0
  %2146 = vmatprep.subr.mxu0 0.0
  %2147 = vmatpush1.msra.mxu0 0.0
  %2148 = vmatprep.subr.mxu0 0.0
  %2149 = vmatpush1.msra.mxu0 0.0
  %2150 = vmatprep.subr.mxu0 0.0
  %2151 = vmatpush1.msra.mxu0 0.0
  %2152 = vmatprep.subr.mxu0 0.0
  %2153 = vmatpush1.msra.mxu0 0.0
  %2154 = vmatprep.subr.mxu0 0.0
  %2155 = vmatpush1.msra.mxu0 0.0
  %2156 = vmatprep.subr.mxu0 0.0
  %2157 = vmatpush1.msra.mxu0 0.0
  %2158 = vmatprep.subr.mxu0 0.0
  %2159 = vmatpush1.msra.mxu0 0.0
  %2160 = vmatprep.subr.mxu0 0.0
  %2161 = vmatpush1.msra.mxu0 0.0
  %2162 = vmatprep.subr.mxu0 0.0
  %2163 = vmatpush1.msra.mxu0 0.0
  %2164 = vmatprep.subr.mxu0 0.0
  %2165 = vmatpush1.msra.mxu0 0.0
  %2166 = vmatprep.mubr.f32.mxu0 0.0
  %2167 = vmatmul.mubr.f32.gmra.mrb[0].mxu0 %v2100
  %v2168 = vpop.f32.mrb[0].mxu0
  %v2169 = vadd.f32 %v1333, %v2168
  %v2170 = vpop.f32.mrb[0].mxu0
  %2171 = vdwg.mxu0
  %s2172 = scalar_lea.vmem %s15, 8
  %2173 = vst [vmem:[%s2172] sm:$0xff] %v2169
  %2175 = vrot.lane.b32.xlu0 %v1754, 32
  %v2176 = vpop.permute.xlu0 %2175
  %v2177 = vsel %vm182, %v2176, 0
  %2179 = vmatprep.subr.mxu0 0.0
  %2180 = vmatpush1.msra.mxu0 %v56
  %2181 = vmatprep.subr.mxu0 0.0
  %2182 = vmatpush1.msra.mxu0 %v57
  %2183 = vmatprep.subr.mxu0 0.0
  %2184 = vmatpush1.msra.mxu0 %v58
  %2185 = vmatprep.subr.mxu0 0.0
  %2186 = vmatpush1.msra.mxu0 %v59
  %2187 = vmatprep.subr.mxu0 0.0
  %2188 = vmatpush1.msra.mxu0 0.0
  %2189 = vmatprep.subr.mxu0 0.0
  %2190 = vmatpush1.msra.mxu0 0.0
  %2191 = vmatprep.subr.mxu0 0.0
  %2192 = vmatpush1.msra.mxu0 0.0
  %2193 = vmatprep.subr.mxu0 0.0
  %2194 = vmatpush1.msra.mxu0 0.0
  %2195 = vmatprep.subr.mxu0 0.0
  %2196 = vmatpush1.msra.mxu0 0.0
  %2197 = vmatprep.subr.mxu0 0.0
  %2198 = vmatpush1.msra.mxu0 0.0
  %2199 = vmatprep.subr.mxu0 0.0
  %2200 = vmatpush1.msra.mxu0 0.0
  %2201 = vmatprep.subr.mxu0 0.0
  %2202 = vmatpush1.msra.mxu0 0.0
  %2203 = vmatprep.subr.mxu0 0.0
  %2204 = vmatpush1.msra.mxu0 0.0
  %2205 = vmatprep.subr.mxu0 0.0
  %2206 = vmatpush1.msra.mxu0 0.0
  %2207 = vmatprep.subr.mxu0 0.0
  %2208 = vmatpush1.msra.mxu0 0.0
  %2209 = vmatprep.subr.mxu0 0.0
  %2210 = vmatpush1.msra.mxu0 0.0
  %2211 = vmatprep.subr.mxu0 0.0
  %2212 = vmatpush1.msra.mxu0 0.0
  %2213 = vmatprep.subr.mxu0 0.0
  %2214 = vmatpush1.msra.mxu0 0.0
  %2215 = vmatprep.subr.mxu0 0.0
  %2216 = vmatpush1.msra.mxu0 0.0
  %2217 = vmatprep.subr.mxu0 0.0
  %2218 = vmatpush1.msra.mxu0 0.0
  %2219 = vmatprep.subr.mxu0 0.0
  %2220 = vmatpush1.msra.mxu0 0.0
  %2221 = vmatprep.subr.mxu0 0.0
  %2222 = vmatpush1.msra.mxu0 0.0
  %2223 = vmatprep.subr.mxu0 0.0
  %2224 = vmatpush1.msra.mxu0 0.0
  %2225 = vmatprep.subr.mxu0 0.0
  %2226 = vmatpush1.msra.mxu0 0.0
  %2227 = vmatprep.subr.mxu0 0.0
  %2228 = vmatpush1.msra.mxu0 0.0
  %2229 = vmatprep.subr.mxu0 0.0
  %2230 = vmatpush1.msra.mxu0 0.0
  %2231 = vmatprep.subr.mxu0 0.0
  %2232 = vmatpush1.msra.mxu0 0.0
  %2233 = vmatprep.subr.mxu0 0.0
  %2234 = vmatpush1.msra.mxu0 0.0
  %2235 = vmatprep.subr.mxu0 0.0
  %2236 = vmatpush1.msra.mxu0 0.0
  %2237 = vmatprep.subr.mxu0 0.0
  %2238 = vmatpush1.msra.mxu0 0.0
  %2239 = vmatprep.subr.mxu0 0.0
  %2240 = vmatpush1.msra.mxu0 0.0
  %2241 = vmatprep.subr.mxu0 0.0
  %2242 = vmatpush1.msra.mxu0 0.0
  %2243 = vmatprep.mubr.f32.mxu0 0.0
  %2244 = vmatmul.mubr.f32.gmra.mrb[0].mxu0 %v2177
  %v2245 = vpop.f32.mrb[0].mxu0
  %v2246 = vadd.f32 %v635, %v2245
  %v2247 = vpop.f32.mrb[0].mxu0
  %2248 = vdwg.mxu0
  %2249 = vmatprep.subr.mxu0 0.0
  %2250 = vmatpush1.msra.mxu0 %v72
  %2251 = vmatprep.subr.mxu0 0.0
  %2252 = vmatpush1.msra.mxu0 %v73
  %2253 = vmatprep.subr.mxu0 0.0
  %2254 = vmatpush1.msra.mxu0 %v74
  %2255 = vmatprep.subr.mxu0 0.0
  %2256 = vmatpush1.msra.mxu0 %v75
  %2257 = vmatprep.subr.mxu0 0.0
  %2258 = vmatpush1.msra.mxu0 0.0
  %2259 = vmatprep.subr.mxu0 0.0
  %2260 = vmatpush1.msra.mxu0 0.0
  %2261 = vmatprep.subr.mxu0 0.0
  %2262 = vmatpush1.msra.mxu0 0.0
  %2263 = vmatprep.subr.mxu0 0.0
  %2264 = vmatpush1.msra.mxu0 0.0
  %2265 = vmatprep.subr.mxu0 0.0
  %2266 = vmatpush1.msra.mxu0 0.0
  %2267 = vmatprep.subr.mxu0 0.0
  %2268 = vmatpush1.msra.mxu0 0.0
  %2269 = vmatprep.subr.mxu0 0.0
  %2270 = vmatpush1.msra.mxu0 0.0
  %2271 = vmatprep.subr.mxu0 0.0
  %2272 = vmatpush1.msra.mxu0 0.0
  %2273 = vmatprep.subr.mxu0 0.0
  %2274 = vmatpush1.msra.mxu0 0.0
  %2275 = vmatprep.subr.mxu0 0.0
  %2276 = vmatpush1.msra.mxu0 0.0
  %2277 = vmatprep.subr.mxu0 0.0
  %2278 = vmatpush1.msra.mxu0 0.0
  %2279 = vmatprep.subr.mxu0 0.0
  %2280 = vmatpush1.msra.mxu0 0.0
  %2281 = vmatprep.subr.mxu0 0.0
  %2282 = vmatpush1.msra.mxu0 0.0
  %2283 = vmatprep.subr.mxu0 0.0
  %2284 = vmatpush1.msra.mxu0 0.0
  %2285 = vmatprep.subr.mxu0 0.0
  %2286 = vmatpush1.msra.mxu0 0.0
  %2287 = vmatprep.subr.mxu0 0.0
  %2288 = vmatpush1.msra.mxu0 0.0
  %2289 = vmatprep.subr.mxu0 0.0
  %2290 = vmatpush1.msra.mxu0 0.0
  %2291 = vmatprep.subr.mxu0 0.0
  %2292 = vmatpush1.msra.mxu0 0.0
  %2293 = vmatprep.subr.mxu0 0.0
  %2294 = vmatpush1.msra.mxu0 0.0
  %2295 = vmatprep.subr.mxu0 0.0
  %2296 = vmatpush1.msra.mxu0 0.0
  %2297 = vmatprep.subr.mxu0 0.0
  %2298 = vmatpush1.msra.mxu0 0.0
  %2299 = vmatprep.subr.mxu0 0.0
  %2300 = vmatpush1.msra.mxu0 0.0
  %2301 = vmatprep.subr.mxu0 0.0
  %2302 = vmatpush1.msra.mxu0 0.0
  %2303 = vmatprep.subr.mxu0 0.0
  %2304 = vmatpush1.msra.mxu0 0.0
  %2305 = vmatprep.subr.mxu0 0.0
  %2306 = vmatpush1.msra.mxu0 0.0
  %2307 = vmatprep.subr.mxu0 0.0
  %2308 = vmatpush1.msra.mxu0 0.0
  %2309 = vmatprep.subr.mxu0 0.0
  %2310 = vmatpush1.msra.mxu0 0.0
  %2311 = vmatprep.subr.mxu0 0.0
  %2312 = vmatpush1.msra.mxu0 0.0
  %2313 = vmatprep.mubr.f32.mxu0 0.0
  %2314 = vmatmul.mubr.f32.gmra.mrb[0].mxu0 %v1928
  %v2315 = vpop.f32.mrb[0].mxu0
  %v2316 = vadd.f32 0.0, %v2315
  %v2317 = vpop.f32.mrb[0].mxu0
  %2318 = vdwg.mxu0
  %v2319 = vadd.f32 %v2246, %v2316
  %v2320 = vxor.u32 %v2319, 2147483648
  %v2321 = vmul.f32 %v2320, 1.442695
  %v2322 = vpow.pop %v2321
  %v2323 = vadd.f32 %v2322, 1.0
  %v2324 = vrcp.pop %v2323
  %v2325 = vmul.f32 1.0, %v2324
  %v2326 = vmul.f32 %v2325, 2.0
  %v2327 = vsub.f32 %v2326, 1.0
  %v2328 = vsel %vm93, %v2327, %v2325
  %v2329 = vmul.f32 %v2328, %v1576
  %2331 = vrot.lane.b32.xlu0 %v2328, 64
  %v2332 = vpop.permute.xlu0 %2331
  %v2334 = vmul.f32 %v2328, %v2332
  %2336 = vrot.lane.b32.xlu0 %v2334, 32
  %v2337 = vpop.permute.xlu0 %2336
  %v2339 = vadd.f32 %v2329, %v2337
  %v2340 = vtanh.pop %v2339
  %2342 = vrot.lane.b32.xlu0 %v2340, 64
  %v2343 = vpop.permute.xlu0 %2342
  %v2345 = vmul.f32 %v2328, %v2343
  %2347 = vrot.lane.b32.xlu0 %v1924, 32
  %v2348 = vpop.permute.xlu0 %2347
  %v2349 = vsel %vm182, %v2348, 0
  %2351 = vmatprep.subr.mxu0 0.0
  %2352 = vmatpush1.msra.mxu0 %v52
  %2353 = vmatprep.subr.mxu0 0.0
  %2354 = vmatpush1.msra.mxu0 %v53
  %2355 = vmatprep.subr.mxu0 0.0
  %2356 = vmatpush1.msra.mxu0 %v54
  %2357 = vmatprep.subr.mxu0 0.0
  %2358 = vmatpush1.msra.mxu0 %v55
  %2359 = vmatprep.subr.mxu0 0.0
  %2360 = vmatpush1.msra.mxu0 0.0
  %2361 = vmatprep.subr.mxu0 0.0
  %2362 = vmatpush1.msra.mxu0 0.0
  %2363 = vmatprep.subr.mxu0 0.0
  %2364 = vmatpush1.msra.mxu0 0.0
  %2365 = vmatprep.subr.mxu0 0.0
  %2366 = vmatpush1.msra.mxu0 0.0
  %2367 = vmatprep.subr.mxu0 0.0
  %2368 = vmatpush1.msra.mxu0 0.0
  %2369 = vmatprep.subr.mxu0 0.0
  %2370 = vmatpush1.msra.mxu0 0.0
  %2371 = vmatprep.subr.mxu0 0.0
  %2372 = vmatpush1.msra.mxu0 0.0
  %2373 = vmatprep.subr.mxu0 0.0
  %2374 = vmatpush1.msra.mxu0 0.0
  %2375 = vmatprep.subr.mxu0 0.0
  %2376 = vmatpush1.msra.mxu0 0.0
  %2377 = vmatprep.subr.mxu0 0.0
  %2378 = vmatpush1.msra.mxu0 0.0
  %2379 = vmatprep.subr.mxu0 0.0
  %2380 = vmatpush1.msra.mxu0 0.0
  %2381 = vmatprep.subr.mxu0 0.0
  %2382 = vmatpush1.msra.mxu0 0.0
  %2383 = vmatprep.subr.mxu0 0.0
  %2384 = vmatpush1.msra.mxu0 0.0
  %2385 = vmatprep.subr.mxu0 0.0
  %2386 = vmatpush1.msra.mxu0 0.0
  %2387 = vmatprep.subr.mxu0 0.0
  %2388 = vmatpush1.msra.mxu0 0.0
  %2389 = vmatprep.subr.mxu0 0.0
  %2390 = vmatpush1.msra.mxu0 0.0
  %2391 = vmatprep.subr.mxu0 0.0
  %2392 = vmatpush1.msra.mxu0 0.0
  %2393 = vmatprep.subr.mxu0 0.0
  %2394 = vmatpush1.msra.mxu0 0.0
  %2395 = vmatprep.subr.mxu0 0.0
  %2396 = vmatpush1.msra.mxu0 0.0
  %2397 = vmatprep.subr.mxu0 0.0
  %2398 = vmatpush1.msra.mxu0 0.0
  %2399 = vmatprep.subr.mxu0 0.0
  %2400 = vmatpush1.msra.mxu0 0.0
  %2401 = vmatprep.subr.mxu0 0.0
  %2402 = vmatpush1.msra.mxu0 0.0
  %2403 = vmatprep.subr.mxu0 0.0
  %2404 = vmatpush1.msra.mxu0 0.0
  %2405 = vmatprep.subr.mxu0 0.0
  %2406 = vmatpush1.msra.mxu0 0.0
  %2407 = vmatprep.subr.mxu0 0.0
  %2408 = vmatpush1.msra.mxu0 0.0
  %2409 = vmatprep.subr.mxu0 0.0
  %2410 = vmatpush1.msra.mxu0 0.0
  %2411 = vmatprep.subr.mxu0 0.0
  %2412 = vmatpush1.msra.mxu0 0.0
  %2413 = vmatprep.subr.mxu0 0.0
  %2414 = vmatpush1.msra.mxu0 0.0
  %2415 = vmatprep.mubr.f32.mxu0 0.0
  %2416 = vmatmul.mubr.f32.gmra.mrb[0].mxu0 %v2349
  %v2417 = vpop.f32.mrb[0].mxu0
  %v2418 = vadd.f32 %v287, %v2417
  %v2419 = vpop.f32.mrb[0].mxu0
  %2420 = vdwg.mxu0
  %2421 = vmatprep.subr.mxu0 0.0
  %2422 = vmatpush1.msra.mxu0 %v68
  %2423 = vmatprep.subr.mxu0 0.0
  %2424 = vmatpush1.msra.mxu0 %v69
  %2425 = vmatprep.subr.mxu0 0.0
  %2426 = vmatpush1.msra.mxu0 %v70
  %2427 = vmatprep.subr.mxu0 0.0
  %2428 = vmatpush1.msra.mxu0 %v71
  %2429 = vmatprep.subr.mxu0 0.0
  %2430 = vmatpush1.msra.mxu0 0.0
  %2431 = vmatprep.subr.mxu0 0.0
  %2432 = vmatpush1.msra.mxu0 0.0
  %2433 = vmatprep.subr.mxu0 0.0
  %2434 = vmatpush1.msra.mxu0 0.0
  %2435 = vmatprep.subr.mxu0 0.0
  %2436 = vmatpush1.msra.mxu0 0.0
  %2437 = vmatprep.subr.mxu0 0.0
  %2438 = vmatpush1.msra.mxu0 0.0
  %2439 = vmatprep.subr.mxu0 0.0
  %2440 = vmatpush1.msra.mxu0 0.0
  %2441 = vmatprep.subr.mxu0 0.0
  %2442 = vmatpush1.msra.mxu0 0.0
  %2443 = vmatprep.subr.mxu0 0.0
  %2444 = vmatpush1.msra.mxu0 0.0
  %2445 = vmatprep.subr.mxu0 0.0
  %2446 = vmatpush1.msra.mxu0 0.0
  %2447 = vmatprep.subr.mxu0 0.0
  %2448 = vmatpush1.msra.mxu0 0.0
  %2449 = vmatprep.subr.mxu0 0.0
  %2450 = vmatpush1.msra.mxu0 0.0
  %2451 = vmatprep.subr.mxu0 0.0
  %2452 = vmatpush1.msra.mxu0 0.0
  %2453 = vmatprep.subr.mxu0 0.0
  %2454 = vmatpush1.msra.mxu0 0.0
  %2455 = vmatprep.subr.mxu0 0.0
  %2456 = vmatpush1.msra.mxu0 0.0
  %2457 = vmatprep.subr.mxu0 0.0
  %2458 = vmatpush1.msra.mxu0 0.0
  %2459 = vmatprep.subr.mxu0 0.0
  %2460 = vmatpush1.msra.mxu0 0.0
  %2461 = vmatprep.subr.mxu0 0.0
  %2462 = vmatpush1.msra.mxu0 0.0
  %2463 = vmatprep.subr.mxu0 0.0
  %2464 = vmatpush1.msra.mxu0 0.0
  %2465 = vmatprep.subr.mxu0 0.0
  %2466 = vmatpush1.msra.mxu0 0.0
  %2467 = vmatprep.subr.mxu0 0.0
  %2468 = vmatpush1.msra.mxu0 0.0
  %2469 = vmatprep.subr.mxu0 0.0
  %2470 = vmatpush1.msra.mxu0 0.0
  %2471 = vmatprep.subr.mxu0 0.0
  %2472 = vmatpush1.msra.mxu0 0.0
  %2473 = vmatprep.subr.mxu0 0.0
  %2474 = vmatpush1.msra.mxu0 0.0
  %2475 = vmatprep.subr.mxu0 0.0
  %2476 = vmatpush1.msra.mxu0 0.0
  %2477 = vmatprep.subr.mxu0 0.0
  %2478 = vmatpush1.msra.mxu0 0.0
  %2479 = vmatprep.subr.mxu0 0.0
  %2480 = vmatpush1.msra.mxu0 0.0
  %2481 = vmatprep.subr.mxu0 0.0
  %2482 = vmatpush1.msra.mxu0 0.0
  %2483 = vmatprep.subr.mxu0 0.0
  %2484 = vmatpush1.msra.mxu0 0.0
  %2485 = vmatprep.mubr.f32.mxu0 0.0
  %2486 = vmatmul.mubr.f32.gmra.mrb[0].mxu0 %v2177
  %v2487 = vpop.f32.mrb[0].mxu0
  %v2488 = vadd.f32 0.0, %v2487
  %v2489 = vpop.f32.mrb[0].mxu0
  %2490 = vdwg.mxu0
  %v2491 = vadd.f32 %v2418, %v2488
  %v2492 = vxor.u32 %v2491, 2147483648
  %v2493 = vmul.f32 %v2492, 1.442695
  %v2494 = vpow.pop %v2493
  %v2495 = vadd.f32 %v2494, 1.0
  %v2496 = vrcp.pop %v2495
  %v2497 = vmul.f32 1.0, %v2496
  %v2498 = vmul.f32 %v2497, 2.0
  %v2499 = vsub.f32 %v2498, 1.0
  %v2500 = vsel %vm93, %v2499, %v2497
  %v2501 = vmul.f32 %v2500, %v1748
  %2503 = vrot.lane.b32.xlu0 %v2500, 64
  %v2504 = vpop.permute.xlu0 %2503
  %v2506 = vmul.f32 %v2500, %v2504
  %2508 = vrot.lane.b32.xlu0 %v2506, 32
  %v2509 = vpop.permute.xlu0 %2508
  %v2511 = vadd.f32 %v2501, %v2509
  %v2512 = vtanh.pop %v2511
  %2514 = vrot.lane.b32.xlu0 %v2512, 64
  %v2515 = vpop.permute.xlu0 %2514
  %v2517 = vmul.f32 %v2500, %v2515
  %v2519 = vsel %vm108, %v98, 0
  %2521 = vmatprep.subr.mxu0 0.0
  %2522 = vmatpush1.msra.mxu0 %v50
  %2523 = vmatprep.subr.mxu0 0.0
  %2524 = vmatpush1.msra.mxu0 %v51
  %2525 = vmatprep.subr.mxu0 0.0
  %2526 = vmatpush1.msra.mxu0 0.0
  %2527 = vmatprep.subr.mxu0 0.0
  %2528 = vmatpush1.msra.mxu0 0.0
  %2529 = vmatprep.subr.mxu0 0.0
  %2530 = vmatpush1.msra.mxu0 0.0
  %2531 = vmatprep.subr.mxu0 0.0
  %2532 = vmatpush1.msra.mxu0 0.0
  %2533 = vmatprep.subr.mxu0 0.0
  %2534 = vmatpush1.msra.mxu0 0.0
  %2535 = vmatprep.subr.mxu0 0.0
  %2536 = vmatpush1.msra.mxu0 0.0
  %2537 = vmatprep.subr.mxu0 0.0
  %2538 = vmatpush1.msra.mxu0 0.0
  %2539 = vmatprep.subr.mxu0 0.0
  %2540 = vmatpush1.msra.mxu0 0.0
  %2541 = vmatprep.subr.mxu0 0.0
  %2542 = vmatpush1.msra.mxu0 0.0
  %2543 = vmatprep.subr.mxu0 0.0
  %2544 = vmatpush1.msra.mxu0 0.0
  %2545 = vmatprep.subr.mxu0 0.0
  %2546 = vmatpush1.msra.mxu0 0.0
  %2547 = vmatprep.subr.mxu0 0.0
  %2548 = vmatpush1.msra.mxu0 0.0
  %2549 = vmatprep.subr.mxu0 0.0
  %2550 = vmatpush1.msra.mxu0 0.0
  %2551 = vmatprep.subr.mxu0 0.0
  %2552 = vmatpush1.msra.mxu0 0.0
  %2553 = vmatprep.subr.mxu0 0.0
  %2554 = vmatpush1.msra.mxu0 0.0
  %2555 = vmatprep.subr.mxu0 0.0
  %2556 = vmatpush1.msra.mxu0 0.0
  %2557 = vmatprep.subr.mxu0 0.0
  %2558 = vmatpush1.msra.mxu0 0.0
  %2559 = vmatprep.subr.mxu0 0.0
  %2560 = vmatpush1.msra.mxu0 0.0
  %2561 = vmatprep.subr.mxu0 0.0
  %2562 = vmatpush1.msra.mxu0 0.0
  %2563 = vmatprep.subr.mxu0 0.0
  %2564 = vmatpush1.msra.mxu0 0.0
  %2565 = vmatprep.subr.mxu0 0.0
  %2566 = vmatpush1.msra.mxu0 0.0
  %2567 = vmatprep.subr.mxu0 0.0
  %2568 = vmatpush1.msra.mxu0 0.0
  %2569 = vmatprep.subr.mxu0 0.0
  %2570 = vmatpush1.msra.mxu0 0.0
  %2571 = vmatprep.subr.mxu0 0.0
  %2572 = vmatpush1.msra.mxu0 0.0
  %2573 = vmatprep.subr.mxu0 0.0
  %2574 = vmatpush1.msra.mxu0 0.0
  %2575 = vmatprep.subr.mxu0 0.0
  %2576 = vmatpush1.msra.mxu0 0.0
  %2577 = vmatprep.subr.mxu0 0.0
  %2578 = vmatpush1.msra.mxu0 0.0
  %2579 = vmatprep.subr.mxu0 0.0
  %2580 = vmatpush1.msra.mxu0 0.0
  %2581 = vmatprep.subr.mxu0 0.0
  %2582 = vmatpush1.msra.mxu0 0.0
  %2583 = vmatprep.subr.mxu0 0.0
  %2584 = vmatpush1.msra.mxu0 0.0
  %2585 = vmatprep.mubr.f32.mxu0 0.0
  %2586 = vmatmul.mubr.f32.gmra.mrb[0].mxu0 %v2519
  %v2587 = vpop.f32.mrb[0].mxu0
  %v2588 = vadd.f32 %v106, %v2587
  %v2589 = vpop.f32.mrb[0].mxu0
  %2590 = vdwg.mxu0
  %2591 = vmatprep.subr.mxu0 0.0
  %2592 = vmatpush1.msra.mxu0 %v64
  %2593 = vmatprep.subr.mxu0 0.0
  %2594 = vmatpush1.msra.mxu0 %v65
  %2595 = vmatprep.subr.mxu0 0.0
  %2596 = vmatpush1.msra.mxu0 %v66
  %2597 = vmatprep.subr.mxu0 0.0
  %2598 = vmatpush1.msra.mxu0 %v67
  %2599 = vmatprep.subr.mxu0 0.0
  %2600 = vmatpush1.msra.mxu0 0.0
  %2601 = vmatprep.subr.mxu0 0.0
  %2602 = vmatpush1.msra.mxu0 0.0
  %2603 = vmatprep.subr.mxu0 0.0
  %2604 = vmatpush1.msra.mxu0 0.0
  %2605 = vmatprep.subr.mxu0 0.0
  %2606 = vmatpush1.msra.mxu0 0.0
  %2607 = vmatprep.subr.mxu0 0.0
  %2608 = vmatpush1.msra.mxu0 0.0
  %2609 = vmatprep.subr.mxu0 0.0
  %2610 = vmatpush1.msra.mxu0 0.0
  %2611 = vmatprep.subr.mxu0 0.0
  %2612 = vmatpush1.msra.mxu0 0.0
  %2613 = vmatprep.subr.mxu0 0.0
  %2614 = vmatpush1.msra.mxu0 0.0
  %2615 = vmatprep.subr.mxu0 0.0
  %2616 = vmatpush1.msra.mxu0 0.0
  %2617 = vmatprep.subr.mxu0 0.0
  %2618 = vmatpush1.msra.mxu0 0.0
  %2619 = vmatprep.subr.mxu0 0.0
  %2620 = vmatpush1.msra.mxu0 0.0
  %2621 = vmatprep.subr.mxu0 0.0
  %2622 = vmatpush1.msra.mxu0 0.0
  %2623 = vmatprep.subr.mxu0 0.0
  %2624 = vmatpush1.msra.mxu0 0.0
  %2625 = vmatprep.subr.mxu0 0.0
  %2626 = vmatpush1.msra.mxu0 0.0
  %2627 = vmatprep.subr.mxu0 0.0
  %2628 = vmatpush1.msra.mxu0 0.0
  %2629 = vmatprep.subr.mxu0 0.0
  %2630 = vmatpush1.msra.mxu0 0.0
  %2631 = vmatprep.subr.mxu0 0.0
  %2632 = vmatpush1.msra.mxu0 0.0
  %2633 = vmatprep.subr.mxu0 0.0
  %2634 = vmatpush1.msra.mxu0 0.0
  %2635 = vmatprep.subr.mxu0 0.0
  %2636 = vmatpush1.msra.mxu0 0.0
  %2637 = vmatprep.subr.mxu0 0.0
  %2638 = vmatpush1.msra.mxu0 0.0
  %2639 = vmatprep.subr.mxu0 0.0
  %2640 = vmatpush1.msra.mxu0 0.0
  %2641 = vmatprep.subr.mxu0 0.0
  %2642 = vmatpush1.msra.mxu0 0.0
  %2643 = vmatprep.subr.mxu0 0.0
  %2644 = vmatpush1.msra.mxu0 0.0
  %2645 = vmatprep.subr.mxu0 0.0
  %2646 = vmatpush1.msra.mxu0 0.0
  %2647 = vmatprep.subr.mxu0 0.0
  %2648 = vmatpush1.msra.mxu0 0.0
  %2649 = vmatprep.subr.mxu0 0.0
  %2650 = vmatpush1.msra.mxu0 0.0
  %2651 = vmatprep.subr.mxu0 0.0
  %2652 = vmatpush1.msra.mxu0 0.0
  %2653 = vmatprep.subr.mxu0 0.0
  %2654 = vmatpush1.msra.mxu0 0.0
  %2655 = vmatprep.mubr.f32.mxu0 0.0
  %2656 = vmatmul.mubr.f32.gmra.mrb[0].mxu0 %v2349
  %v2657 = vpop.f32.mrb[0].mxu0
  %v2658 = vadd.f32 0.0, %v2657
  %v2659 = vpop.f32.mrb[0].mxu0
  %2660 = vdwg.mxu0
  %v2661 = vadd.f32 %v2588, %v2658
  %v2662 = vxor.u32 %v2661, 2147483648
  %v2663 = vmul.f32 %v2662, 1.442695
  %v2664 = vpow.pop %v2663
  %v2665 = vadd.f32 %v2664, 1.0
  %v2666 = vrcp.pop %v2665
  %v2667 = vmul.f32 1.0, %v2666
  %v2668 = vmul.f32 %v2667, 2.0
  %v2669 = vsub.f32 %v2668, 1.0
  %v2670 = vsel %vm93, %v2669, %v2667
  %v2671 = vmul.f32 %v2670, %v1918
  %2673 = vrot.lane.b32.xlu0 %v2670, 64
  %v2674 = vpop.permute.xlu0 %2673
  %v2676 = vmul.f32 %v2670, %v2674
  %2678 = vrot.lane.b32.xlu0 %v2676, 32
  %v2679 = vpop.permute.xlu0 %2678
  %v2681 = vadd.f32 %v2671, %v2679
  %v2682 = vtanh.pop %v2681
  %2684 = vrot.lane.b32.xlu0 %v2682, 64
  %v2685 = vpop.permute.xlu0 %2684
  %v2687 = vmul.f32 %v2670, %v2685
  %2689 = vrot.lane.b32.xlu0 %v2345, 32
  %v2690 = vpop.permute.xlu0 %2689
  %v2691 = vsel %vm182, %v2690, 0
  %2693 = vmatprep.subr.mxu0 0.0
  %2694 = vmatpush1.msra.mxu0 %v60
  %2695 = vmatprep.subr.mxu0 0.0
  %2696 = vmatpush1.msra.mxu0 %v61
  %2697 = vmatprep.subr.mxu0 0.0
  %2698 = vmatpush1.msra.mxu0 %v62
  %2699 = vmatprep.subr.mxu0 0.0
  %2700 = vmatpush1.msra.mxu0 %v63
  %2701 = vmatprep.subr.mxu0 0.0
  %2702 = vmatpush1.msra.mxu0 0.0
  %2703 = vmatprep.subr.mxu0 0.0
  %2704 = vmatpush1.msra.mxu0 0.0
  %2705 = vmatprep.subr.mxu0 0.0
  %2706 = vmatpush1.msra.mxu0 0.0
  %2707 = vmatprep.subr.mxu0 0.0
  %2708 = vmatpush1.msra.mxu0 0.0
  %2709 = vmatprep.subr.mxu0 0.0
  %2710 = vmatpush1.msra.mxu0 0.0
  %2711 = vmatprep.subr.mxu0 0.0
  %2712 = vmatpush1.msra.mxu0 0.0
  %2713 = vmatprep.subr.mxu0 0.0
  %2714 = vmatpush1.msra.mxu0 0.0
  %2715 = vmatprep.subr.mxu0 0.0
  %2716 = vmatpush1.msra.mxu0 0.0
  %2717 = vmatprep.subr.mxu0 0.0
  %2718 = vmatpush1.msra.mxu0 0.0
  %2719 = vmatprep.subr.mxu0 0.0
  %2720 = vmatpush1.msra.mxu0 0.0
  %2721 = vmatprep.subr.mxu0 0.0
  %2722 = vmatpush1.msra.mxu0 0.0
  %2723 = vmatprep.subr.mxu0 0.0
  %2724 = vmatpush1.msra.mxu0 0.0
  %2725 = vmatprep.subr.mxu0 0.0
  %2726 = vmatpush1.msra.mxu0 0.0
  %2727 = vmatprep.subr.mxu0 0.0
  %2728 = vmatpush1.msra.mxu0 0.0
  %2729 = vmatprep.subr.mxu0 0.0
  %2730 = vmatpush1.msra.mxu0 0.0
  %2731 = vmatprep.subr.mxu0 0.0
  %2732 = vmatpush1.msra.mxu0 0.0
  %2733 = vmatprep.subr.mxu0 0.0
  %2734 = vmatpush1.msra.mxu0 0.0
  %2735 = vmatprep.subr.mxu0 0.0
  %2736 = vmatpush1.msra.mxu0 0.0
  %2737 = vmatprep.subr.mxu0 0.0
  %2738 = vmatpush1.msra.mxu0 0.0
  %2739 = vmatprep.subr.mxu0 0.0
  %2740 = vmatpush1.msra.mxu0 0.0
  %2741 = vmatprep.subr.mxu0 0.0
  %2742 = vmatpush1.msra.mxu0 0.0
  %2743 = vmatprep.subr.mxu0 0.0
  %2744 = vmatpush1.msra.mxu0 0.0
  %2745 = vmatprep.subr.mxu0 0.0
  %2746 = vmatpush1.msra.mxu0 0.0
  %2747 = vmatprep.subr.mxu0 0.0
  %2748 = vmatpush1.msra.mxu0 0.0
  %2749 = vmatprep.subr.mxu0 0.0
  %2750 = vmatpush1.msra.mxu0 0.0
  %2751 = vmatprep.subr.mxu0 0.0
  %2752 = vmatpush1.msra.mxu0 0.0
  %2753 = vmatprep.subr.mxu0 0.0
  %2754 = vmatpush1.msra.mxu0 0.0
  %2755 = vmatprep.subr.mxu0 0.0
  %2756 = vmatpush1.msra.mxu0 0.0
  %2757 = vmatprep.mubr.f32.mxu0 0.0
  %2758 = vmatmul.mubr.f32.gmra.mrb[0].mxu0 %v2691
  %v2759 = vpop.f32.mrb[0].mxu0
  %v2760 = vadd.f32 %v1155, %v2759
  %v2761 = vpop.f32.mrb[0].mxu0
  %2762 = vdwg.mxu0
  %2763 = vmatprep.subr.mxu0 0.0
  %2764 = vmatpush1.msra.mxu0 %v76
  %2765 = vmatprep.subr.mxu0 0.0
  %2766 = vmatpush1.msra.mxu0 %v77
  %2767 = vmatprep.subr.mxu0 0.0
  %2768 = vmatpush1.msra.mxu0 %v78
  %2769 = vmatprep.subr.mxu0 0.0
  %2770 = vmatpush1.msra.mxu0 %v79
  %2771 = vmatprep.subr.mxu0 0.0
  %2772 = vmatpush1.msra.mxu0 0.0
  %2773 = vmatprep.subr.mxu0 0.0
  %2774 = vmatpush1.msra.mxu0 0.0
  %2775 = vmatprep.subr.mxu0 0.0
  %2776 = vmatpush1.msra.mxu0 0.0
  %2777 = vmatprep.subr.mxu0 0.0
  %2778 = vmatpush1.msra.mxu0 0.0
  %2779 = vmatprep.subr.mxu0 0.0
  %2780 = vmatpush1.msra.mxu0 0.0
  %2781 = vmatprep.subr.mxu0 0.0
  %2782 = vmatpush1.msra.mxu0 0.0
  %2783 = vmatprep.subr.mxu0 0.0
  %2784 = vmatpush1.msra.mxu0 0.0
  %2785 = vmatprep.subr.mxu0 0.0
  %2786 = vmatpush1.msra.mxu0 0.0
  %2787 = vmatprep.subr.mxu0 0.0
  %2788 = vmatpush1.msra.mxu0 0.0
  %2789 = vmatprep.subr.mxu0 0.0
  %2790 = vmatpush1.msra.mxu0 0.0
  %2791 = vmatprep.subr.mxu0 0.0
  %2792 = vmatpush1.msra.mxu0 0.0
  %2793 = vmatprep.subr.mxu0 0.0
  %2794 = vmatpush1.msra.mxu0 0.0
  %2795 = vmatprep.subr.mxu0 0.0
  %2796 = vmatpush1.msra.mxu0 0.0
  %2797 = vmatprep.subr.mxu0 0.0
  %2798 = vmatpush1.msra.mxu0 0.0
  %2799 = vmatprep.subr.mxu0 0.0
  %2800 = vmatpush1.msra.mxu0 0.0
  %2801 = vmatprep.subr.mxu0 0.0
  %2802 = vmatpush1.msra.mxu0 0.0
  %2803 = vmatprep.subr.mxu0 0.0
  %2804 = vmatpush1.msra.mxu0 0.0
  %2805 = vmatprep.subr.mxu0 0.0
  %2806 = vmatpush1.msra.mxu0 0.0
  %2807 = vmatprep.subr.mxu0 0.0
  %2808 = vmatpush1.msra.mxu0 0.0
  %2809 = vmatprep.subr.mxu0 0.0
  %2810 = vmatpush1.msra.mxu0 0.0
  %2811 = vmatprep.subr.mxu0 0.0
  %2812 = vmatpush1.msra.mxu0 0.0
  %2813 = vmatprep.subr.mxu0 0.0
  %2814 = vmatpush1.msra.mxu0 0.0
  %2815 = vmatprep.subr.mxu0 0.0
  %2816 = vmatpush1.msra.mxu0 0.0
  %2817 = vmatprep.subr.mxu0 0.0
  %2818 = vmatpush1.msra.mxu0 0.0
  %2819 = vmatprep.subr.mxu0 0.0
  %2820 = vmatpush1.msra.mxu0 0.0
  %2821 = vmatprep.subr.mxu0 0.0
  %2822 = vmatpush1.msra.mxu0 0.0
  %2823 = vmatprep.subr.mxu0 0.0
  %2824 = vmatpush1.msra.mxu0 0.0
  %2825 = vmatprep.subr.mxu0 0.0
  %2826 = vmatpush1.msra.mxu0 0.0
  %2827 = vmatprep.mubr.f32.mxu0 0.0
  %2828 = vmatmul.mubr.f32.gmra.mrb[0].mxu0 %v2100
  %v2829 = vpop.f32.mrb[0].mxu0
  %v2830 = vadd.f32 0.0, %v2829
  %v2831 = vpop.f32.mrb[0].mxu0
  %2832 = vdwg.mxu0
  %v2833 = vadd.f32 %v2760, %v2830
  %v2834 = vxor.u32 %v2833, 2147483648
  %v2835 = vmul.f32 %v2834, 1.442695
  %v2836 = vpow.pop %v2835
  %v2837 = vadd.f32 %v2836, 1.0
  %v2838 = vrcp.pop %v2837
  %v2839 = vmul.f32 1.0, %v2838
  %v2840 = vmul.f32 %v2839, 2.0
  %v2841 = vsub.f32 %v2840, 1.0
  %v2842 = vsel %vm93, %v2841, %v2839
  %v2843 = vmul.f32 %v2842, %v2090
  %2845 = vrot.lane.b32.xlu0 %v2842, 64
  %v2846 = vpop.permute.xlu0 %2845
  %v2848 = vmul.f32 %v2842, %v2846
  %2850 = vrot.lane.b32.xlu0 %v2848, 32
  %v2851 = vpop.permute.xlu0 %2850
  %v2853 = vadd.f32 %v2843, %v2851
  %v2854 = vtanh.pop %v2853
  %2856 = vrot.lane.b32.xlu0 %v2854, 64
  %v2857 = vpop.permute.xlu0 %2856
  %v2859 = vmul.f32 %v2842, %v2857
  %2861 = vrot.lane.b32.xlu0 %v2859, 32
  %v2862 = vpop.permute.xlu0 %2861
  %v2863 = vsel %vm182, %v2862, 0
  %2865 = vmatprep.subr.mxu0 0.0
  %2866 = vmatpush1.msra.mxu0 %v84
  %2867 = vmatprep.subr.mxu0 0.0
  %2868 = vmatpush1.msra.mxu0 %v85
  %2869 = vmatprep.subr.mxu0 0.0
  %2870 = vmatpush1.msra.mxu0 %v86
  %2871 = vmatprep.subr.mxu0 0.0
  %2872 = vmatpush1.msra.mxu0 %v87
  %2873 = vmatprep.subr.mxu0 0.0
  %2874 = vmatpush1.msra.mxu0 0.0
  %2875 = vmatprep.subr.mxu0 0.0
  %2876 = vmatpush1.msra.mxu0 0.0
  %2877 = vmatprep.subr.mxu0 0.0
  %2878 = vmatpush1.msra.mxu0 0.0
  %2879 = vmatprep.subr.mxu0 0.0
  %2880 = vmatpush1.msra.mxu0 0.0
  %2881 = vmatprep.subr.mxu0 0.0
  %2882 = vmatpush1.msra.mxu0 0.0
  %2883 = vmatprep.subr.mxu0 0.0
  %2884 = vmatpush1.msra.mxu0 0.0
  %2885 = vmatprep.subr.mxu0 0.0
  %2886 = vmatpush1.msra.mxu0 0.0
  %2887 = vmatprep.subr.mxu0 0.0
  %2888 = vmatpush1.msra.mxu0 0.0
  %2889 = vmatprep.subr.mxu0 0.0
  %2890 = vmatpush1.msra.mxu0 0.0
  %2891 = vmatprep.subr.mxu0 0.0
  %2892 = vmatpush1.msra.mxu0 0.0
  %2893 = vmatprep.subr.mxu0 0.0
  %2894 = vmatpush1.msra.mxu0 0.0
  %2895 = vmatprep.subr.mxu0 0.0
  %2896 = vmatpush1.msra.mxu0 0.0
  %2897 = vmatprep.subr.mxu0 0.0
  %2898 = vmatpush1.msra.mxu0 0.0
  %2899 = vmatprep.subr.mxu0 0.0
  %2900 = vmatpush1.msra.mxu0 0.0
  %2901 = vmatprep.subr.mxu0 0.0
  %2902 = vmatpush1.msra.mxu0 0.0
  %2903 = vmatprep.subr.mxu0 0.0
  %2904 = vmatpush1.msra.mxu0 0.0
  %2905 = vmatprep.subr.mxu0 0.0
  %2906 = vmatpush1.msra.mxu0 0.0
  %2907 = vmatprep.subr.mxu0 0.0
  %2908 = vmatpush1.msra.mxu0 0.0
  %2909 = vmatprep.subr.mxu0 0.0
  %2910 = vmatpush1.msra.mxu0 0.0
  %2911 = vmatprep.subr.mxu0 0.0
  %2912 = vmatpush1.msra.mxu0 0.0
  %2913 = vmatprep.subr.mxu0 0.0
  %2914 = vmatpush1.msra.mxu0 0.0
  %2915 = vmatprep.subr.mxu0 0.0
  %2916 = vmatpush1.msra.mxu0 0.0
  %2917 = vmatprep.subr.mxu0 0.0
  %2918 = vmatpush1.msra.mxu0 0.0
  %2919 = vmatprep.subr.mxu0 0.0
  %2920 = vmatpush1.msra.mxu0 0.0
  %2921 = vmatprep.subr.mxu0 0.0
  %2922 = vmatpush1.msra.mxu0 0.0
  %2923 = vmatprep.subr.mxu0 0.0
  %2924 = vmatpush1.msra.mxu0 0.0
  %2925 = vmatprep.subr.mxu0 0.0
  %2926 = vmatpush1.msra.mxu0 0.0
  %2927 = vmatprep.subr.mxu0 0.0
  %2928 = vmatpush1.msra.mxu0 0.0
  %2929 = vmatprep.mubr.f32.mxu0 0.0
  %2930 = vmatmul.mubr.f32.gmra.mrb[0].mxu0 %v2863
  %v2931 = vpop.f32.mrb[0].mxu0
  %v2932 = vadd.f32 %v1333, %v2931
  %v2933 = vpop.f32.mrb[0].mxu0
  %2934 = vdwg.mxu0
  %s2935 = scalar_lea.vmem %s15, 16
  %2936 = vst [vmem:[%s2935] sm:$0xff] %v2932
  %2938 = vrot.lane.b32.xlu0 %v2517, 32
  %v2939 = vpop.permute.xlu0 %2938
  %v2940 = vsel %vm182, %v2939, 0
  %2942 = vmatprep.subr.mxu0 0.0
  %2943 = vmatpush1.msra.mxu0 %v56
  %2944 = vmatprep.subr.mxu0 0.0
  %2945 = vmatpush1.msra.mxu0 %v57
  %2946 = vmatprep.subr.mxu0 0.0
  %2947 = vmatpush1.msra.mxu0 %v58
  %2948 = vmatprep.subr.mxu0 0.0
  %2949 = vmatpush1.msra.mxu0 %v59
  %2950 = vmatprep.subr.mxu0 0.0
  %2951 = vmatpush1.msra.mxu0 0.0
  %2952 = vmatprep.subr.mxu0 0.0
  %2953 = vmatpush1.msra.mxu0 0.0
  %2954 = vmatprep.subr.mxu0 0.0
  %2955 = vmatpush1.msra.mxu0 0.0
  %2956 = vmatprep.subr.mxu0 0.0
  %2957 = vmatpush1.msra.mxu0 0.0
  %2958 = vmatprep.subr.mxu0 0.0
  %2959 = vmatpush1.msra.mxu0 0.0
  %2960 = vmatprep.subr.mxu0 0.0
  %2961 = vmatpush1.msra.mxu0 0.0
  %2962 = vmatprep.subr.mxu0 0.0
  %2963 = vmatpush1.msra.mxu0 0.0
  %2964 = vmatprep.subr.mxu0 0.0
  %2965 = vmatpush1.msra.mxu0 0.0
  %2966 = vmatprep.subr.mxu0 0.0
  %2967 = vmatpush1.msra.mxu0 0.0
  %2968 = vmatprep.subr.mxu0 0.0
  %2969 = vmatpush1.msra.mxu0 0.0
  %2970 = vmatprep.subr.mxu0 0.0
  %2971 = vmatpush1.msra.mxu0 0.0
  %2972 = vmatprep.subr.mxu0 0.0
  %2973 = vmatpush1.msra.mxu0 0.0
  %2974 = vmatprep.subr.mxu0 0.0
  %2975 = vmatpush1.msra.mxu0 0.0
  %2976 = vmatprep.subr.mxu0 0.0
  %2977 = vmatpush1.msra.mxu0 0.0
  %2978 = vmatprep.subr.mxu0 0.0
  %2979 = vmatpush1.msra.mxu0 0.0
  %2980 = vmatprep.subr.mxu0 0.0
  %2981 = vmatpush1.msra.mxu0 0.0
  %2982 = vmatprep.subr.mxu0 0.0
  %2983 = vmatpush1.msra.mxu0 0.0
  %2984 = vmatprep.subr.mxu0 0.0
  %2985 = vmatpush1.msra.mxu0 0.0
  %2986 = vmatprep.subr.mxu0 0.0
  %2987 = vmatpush1.msra.mxu0 0.0
  %2988 = vmatprep.subr.mxu0 0.0
  %2989 = vmatpush1.msra.mxu0 0.0
  %2990 = vmatprep.subr.mxu0 0.0
  %2991 = vmatpush1.msra.mxu0 0.0
  %2992 = vmatprep.subr.mxu0 0.0
  %2993 = vmatpush1.msra.mxu0 0.0
  %2994 = vmatprep.subr.mxu0 0.0
  %2995 = vmatpush1.msra.mxu0 0.0
  %2996 = vmatprep.subr.mxu0 0.0
  %2997 = vmatpush1.msra.mxu0 0.0
  %2998 = vmatprep.subr.mxu0 0.0
  %2999 = vmatpush1.msra.mxu0 0.0
  %3000 = vmatprep.subr.mxu0 0.0
  %3001 = vmatpush1.msra.mxu0 0.0
  %3002 = vmatprep.subr.mxu0 0.0
  %3003 = vmatpush1.msra.mxu0 0.0
  %3004 = vmatprep.subr.mxu0 0.0
  %3005 = vmatpush1.msra.mxu0 0.0
  %3006 = vmatprep.mubr.f32.mxu0 0.0
  %3007 = vmatmul.mubr.f32.gmra.mrb[0].mxu0 %v2940
  %v3008 = vpop.f32.mrb[0].mxu0
  %v3009 = vadd.f32 %v635, %v3008
  %v3010 = vpop.f32.mrb[0].mxu0
  %3011 = vdwg.mxu0
  %3012 = vmatprep.subr.mxu0 0.0
  %3013 = vmatpush1.msra.mxu0 %v72
  %3014 = vmatprep.subr.mxu0 0.0
  %3015 = vmatpush1.msra.mxu0 %v73
  %3016 = vmatprep.subr.mxu0 0.0
  %3017 = vmatpush1.msra.mxu0 %v74
  %3018 = vmatprep.subr.mxu0 0.0
  %3019 = vmatpush1.msra.mxu0 %v75
  %3020 = vmatprep.subr.mxu0 0.0
  %3021 = vmatpush1.msra.mxu0 0.0
  %3022 = vmatprep.subr.mxu0 0.0
  %3023 = vmatpush1.msra.mxu0 0.0
  %3024 = vmatprep.subr.mxu0 0.0
  %3025 = vmatpush1.msra.mxu0 0.0
  %3026 = vmatprep.subr.mxu0 0.0
  %3027 = vmatpush1.msra.mxu0 0.0
  %3028 = vmatprep.subr.mxu0 0.0
  %3029 = vmatpush1.msra.mxu0 0.0
  %3030 = vmatprep.subr.mxu0 0.0
  %3031 = vmatpush1.msra.mxu0 0.0
  %3032 = vmatprep.subr.mxu0 0.0
  %3033 = vmatpush1.msra.mxu0 0.0
  %3034 = vmatprep.subr.mxu0 0.0
  %3035 = vmatpush1.msra.mxu0 0.0
  %3036 = vmatprep.subr.mxu0 0.0
  %3037 = vmatpush1.msra.mxu0 0.0
  %3038 = vmatprep.subr.mxu0 0.0
  %3039 = vmatpush1.msra.mxu0 0.0
  %3040 = vmatprep.subr.mxu0 0.0
  %3041 = vmatpush1.msra.mxu0 0.0
  %3042 = vmatprep.subr.mxu0 0.0
  %3043 = vmatpush1.msra.mxu0 0.0
  %3044 = vmatprep.subr.mxu0 0.0
  %3045 = vmatpush1.msra.mxu0 0.0
  %3046 = vmatprep.subr.mxu0 0.0
  %3047 = vmatpush1.msra.mxu0 0.0
  %3048 = vmatprep.subr.mxu0 0.0
  %3049 = vmatpush1.msra.mxu0 0.0
  %3050 = vmatprep.subr.mxu0 0.0
  %3051 = vmatpush1.msra.mxu0 0.0
  %3052 = vmatprep.subr.mxu0 0.0
  %3053 = vmatpush1.msra.mxu0 0.0
  %3054 = vmatprep.subr.mxu0 0.0
  %3055 = vmatpush1.msra.mxu0 0.0
  %3056 = vmatprep.subr.mxu0 0.0
  %3057 = vmatpush1.msra.mxu0 0.0
  %3058 = vmatprep.subr.mxu0 0.0
  %3059 = vmatpush1.msra.mxu0 0.0
  %3060 = vmatprep.subr.mxu0 0.0
  %3061 = vmatpush1.msra.mxu0 0.0
  %3062 = vmatprep.subr.mxu0 0.0
  %3063 = vmatpush1.msra.mxu0 0.0
  %3064 = vmatprep.subr.mxu0 0.0
  %3065 = vmatpush1.msra.mxu0 0.0
  %3066 = vmatprep.subr.mxu0 0.0
  %3067 = vmatpush1.msra.mxu0 0.0
  %3068 = vmatprep.subr.mxu0 0.0
  %3069 = vmatpush1.msra.mxu0 0.0
  %3070 = vmatprep.subr.mxu0 0.0
  %3071 = vmatpush1.msra.mxu0 0.0
  %3072 = vmatprep.subr.mxu0 0.0
  %3073 = vmatpush1.msra.mxu0 0.0
  %3074 = vmatprep.subr.mxu0 0.0
  %3075 = vmatpush1.msra.mxu0 0.0
  %3076 = vmatprep.mubr.f32.mxu0 0.0
  %3077 = vmatmul.mubr.f32.gmra.mrb[0].mxu0 %v2691
  %v3078 = vpop.f32.mrb[0].mxu0
  %v3079 = vadd.f32 0.0, %v3078
  %v3080 = vpop.f32.mrb[0].mxu0
  %3081 = vdwg.mxu0
  %v3082 = vadd.f32 %v3009, %v3079
  %v3083 = vxor.u32 %v3082, 2147483648
  %v3084 = vmul.f32 %v3083, 1.442695
  %v3085 = vpow.pop %v3084
  %v3086 = vadd.f32 %v3085, 1.0
  %v3087 = vrcp.pop %v3086
  %v3088 = vmul.f32 1.0, %v3087
  %v3089 = vmul.f32 %v3088, 2.0
  %v3090 = vsub.f32 %v3089, 1.0
  %v3091 = vsel %vm93, %v3090, %v3088
  %v3092 = vmul.f32 %v3091, %v2339
  %3094 = vrot.lane.b32.xlu0 %v3091, 64
  %v3095 = vpop.permute.xlu0 %3094
  %v3097 = vmul.f32 %v3091, %v3095
  %3099 = vrot.lane.b32.xlu0 %v3097, 32
  %v3100 = vpop.permute.xlu0 %3099
  %v3102 = vadd.f32 %v3092, %v3100
  %v3103 = vtanh.pop %v3102
  %3105 = vrot.lane.b32.xlu0 %v3103, 64
  %v3106 = vpop.permute.xlu0 %3105
  %v3108 = vmul.f32 %v3091, %v3106
  %3110 = vrot.lane.b32.xlu0 %v2687, 32
  %v3111 = vpop.permute.xlu0 %3110
  %v3112 = vsel %vm182, %v3111, 0
  %3114 = vmatprep.subr.mxu0 0.0
  %3115 = vmatpush1.msra.mxu0 %v52
  %3116 = vmatprep.subr.mxu0 0.0
  %3117 = vmatpush1.msra.mxu0 %v53
  %3118 = vmatprep.subr.mxu0 0.0
  %3119 = vmatpush1.msra.mxu0 %v54
  %3120 = vmatprep.subr.mxu0 0.0
  %3121 = vmatpush1.msra.mxu0 %v55
  %3122 = vmatprep.subr.mxu0 0.0
  %3123 = vmatpush1.msra.mxu0 0.0
  %3124 = vmatprep.subr.mxu0 0.0
  %3125 = vmatpush1.msra.mxu0 0.0
  %3126 = vmatprep.subr.mxu0 0.0
  %3127 = vmatpush1.msra.mxu0 0.0
  %3128 = vmatprep.subr.mxu0 0.0
  %3129 = vmatpush1.msra.mxu0 0.0
  %3130 = vmatprep.subr.mxu0 0.0
  %3131 = vmatpush1.msra.mxu0 0.0
  %3132 = vmatprep.subr.mxu0 0.0
  %3133 = vmatpush1.msra.mxu0 0.0
  %3134 = vmatprep.subr.mxu0 0.0
  %3135 = vmatpush1.msra.mxu0 0.0
  %3136 = vmatprep.subr.mxu0 0.0
  %3137 = vmatpush1.msra.mxu0 0.0
  %3138 = vmatprep.subr.mxu0 0.0
  %3139 = vmatpush1.msra.mxu0 0.0
  %3140 = vmatprep.subr.mxu0 0.0
  %3141 = vmatpush1.msra.mxu0 0.0
  %3142 = vmatprep.subr.mxu0 0.0
  %3143 = vmatpush1.msra.mxu0 0.0
  %3144 = vmatprep.subr.mxu0 0.0
  %3145 = vmatpush1.msra.mxu0 0.0
  %3146 = vmatprep.subr.mxu0 0.0
  %3147 = vmatpush1.msra.mxu0 0.0
  %3148 = vmatprep.subr.mxu0 0.0
  %3149 = vmatpush1.msra.mxu0 0.0
  %3150 = vmatprep.subr.mxu0 0.0
  %3151 = vmatpush1.msra.mxu0 0.0
  %3152 = vmatprep.subr.mxu0 0.0
  %3153 = vmatpush1.msra.mxu0 0.0
  %3154 = vmatprep.subr.mxu0 0.0
  %3155 = vmatpush1.msra.mxu0 0.0
  %3156 = vmatprep.subr.mxu0 0.0
  %3157 = vmatpush1.msra.mxu0 0.0
  %3158 = vmatprep.subr.mxu0 0.0
  %3159 = vmatpush1.msra.mxu0 0.0
  %3160 = vmatprep.subr.mxu0 0.0
  %3161 = vmatpush1.msra.mxu0 0.0
  %3162 = vmatprep.subr.mxu0 0.0
  %3163 = vmatpush1.msra.mxu0 0.0
  %3164 = vmatprep.subr.mxu0 0.0
  %3165 = vmatpush1.msra.mxu0 0.0
  %3166 = vmatprep.subr.mxu0 0.0
  %3167 = vmatpush1.msra.mxu0 0.0
  %3168 = vmatprep.subr.mxu0 0.0
  %3169 = vmatpush1.msra.mxu0 0.0
  %3170 = vmatprep.subr.mxu0 0.0
  %3171 = vmatpush1.msra.mxu0 0.0
  %3172 = vmatprep.subr.mxu0 0.0
  %3173 = vmatpush1.msra.mxu0 0.0
  %3174 = vmatprep.subr.mxu0 0.0
  %3175 = vmatpush1.msra.mxu0 0.0
  %3176 = vmatprep.subr.mxu0 0.0
  %3177 = vmatpush1.msra.mxu0 0.0
  %3178 = vmatprep.mubr.f32.mxu0 0.0
  %3179 = vmatmul.mubr.f32.gmra.mrb[0].mxu0 %v3112
  %v3180 = vpop.f32.mrb[0].mxu0
  %v3181 = vadd.f32 %v287, %v3180
  %v3182 = vpop.f32.mrb[0].mxu0
  %3183 = vdwg.mxu0
  %3184 = vmatprep.subr.mxu0 0.0
  %3185 = vmatpush1.msra.mxu0 %v68
  %3186 = vmatprep.subr.mxu0 0.0
  %3187 = vmatpush1.msra.mxu0 %v69
  %3188 = vmatprep.subr.mxu0 0.0
  %3189 = vmatpush1.msra.mxu0 %v70
  %3190 = vmatprep.subr.mxu0 0.0
  %3191 = vmatpush1.msra.mxu0 %v71
  %3192 = vmatprep.subr.mxu0 0.0
  %3193 = vmatpush1.msra.mxu0 0.0
  %3194 = vmatprep.subr.mxu0 0.0
  %3195 = vmatpush1.msra.mxu0 0.0
  %3196 = vmatprep.subr.mxu0 0.0
  %3197 = vmatpush1.msra.mxu0 0.0
  %3198 = vmatprep.subr.mxu0 0.0
  %3199 = vmatpush1.msra.mxu0 0.0
  %3200 = vmatprep.subr.mxu0 0.0
  %3201 = vmatpush1.msra.mxu0 0.0
  %3202 = vmatprep.subr.mxu0 0.0
  %3203 = vmatpush1.msra.mxu0 0.0
  %3204 = vmatprep.subr.mxu0 0.0
  %3205 = vmatpush1.msra.mxu0 0.0
  %3206 = vmatprep.subr.mxu0 0.0
  %3207 = vmatpush1.msra.mxu0 0.0
  %3208 = vmatprep.subr.mxu0 0.0
  %3209 = vmatpush1.msra.mxu0 0.0
  %3210 = vmatprep.subr.mxu0 0.0
  %3211 = vmatpush1.msra.mxu0 0.0
  %3212 = vmatprep.subr.mxu0 0.0
  %3213 = vmatpush1.msra.mxu0 0.0
  %3214 = vmatprep.subr.mxu0 0.0
  %3215 = vmatpush1.msra.mxu0 0.0
  %3216 = vmatprep.subr.mxu0 0.0
  %3217 = vmatpush1.msra.mxu0 0.0
  %3218 = vmatprep.subr.mxu0 0.0
  %3219 = vmatpush1.msra.mxu0 0.0
  %3220 = vmatprep.subr.mxu0 0.0
  %3221 = vmatpush1.msra.mxu0 0.0
  %3222 = vmatprep.subr.mxu0 0.0
  %3223 = vmatpush1.msra.mxu0 0.0
  %3224 = vmatprep.subr.mxu0 0.0
  %3225 = vmatpush1.msra.mxu0 0.0
  %3226 = vmatprep.subr.mxu0 0.0
  %3227 = vmatpush1.msra.mxu0 0.0
  %3228 = vmatprep.subr.mxu0 0.0
  %3229 = vmatpush1.msra.mxu0 0.0
  %3230 = vmatprep.subr.mxu0 0.0
  %3231 = vmatpush1.msra.mxu0 0.0
  %3232 = vmatprep.subr.mxu0 0.0
  %3233 = vmatpush1.msra.mxu0 0.0
  %3234 = vmatprep.subr.mxu0 0.0
  %3235 = vmatpush1.msra.mxu0 0.0
  %3236 = vmatprep.subr.mxu0 0.0
  %3237 = vmatpush1.msra.mxu0 0.0
  %3238 = vmatprep.subr.mxu0 0.0
  %3239 = vmatpush1.msra.mxu0 0.0
  %3240 = vmatprep.subr.mxu0 0.0
  %3241 = vmatpush1.msra.mxu0 0.0
  %3242 = vmatprep.subr.mxu0 0.0
  %3243 = vmatpush1.msra.mxu0 0.0
  %3244 = vmatprep.subr.mxu0 0.0
  %3245 = vmatpush1.msra.mxu0 0.0
  %3246 = vmatprep.subr.mxu0 0.0
  %3247 = vmatpush1.msra.mxu0 0.0
  %3248 = vmatprep.mubr.f32.mxu0 0.0
  %3249 = vmatmul.mubr.f32.gmra.mrb[0].mxu0 %v2940
  %v3250 = vpop.f32.mrb[0].mxu0
  %v3251 = vadd.f32 0.0, %v3250
  %v3252 = vpop.f32.mrb[0].mxu0
  %3253 = vdwg.mxu0
  %v3254 = vadd.f32 %v3181, %v3251
  %v3255 = vxor.u32 %v3254, 2147483648
  %v3256 = vmul.f32 %v3255, 1.442695
  %v3257 = vpow.pop %v3256
  %v3258 = vadd.f32 %v3257, 1.0
  %v3259 = vrcp.pop %v3258
  %v3260 = vmul.f32 1.0, %v3259
  %v3261 = vmul.f32 %v3260, 2.0
  %v3262 = vsub.f32 %v3261, 1.0
  %v3263 = vsel %vm93, %v3262, %v3260
  %v3264 = vmul.f32 %v3263, %v2511
  %3266 = vrot.lane.b32.xlu0 %v3263, 64
  %v3267 = vpop.permute.xlu0 %3266
  %v3269 = vmul.f32 %v3263, %v3267
  %3271 = vrot.lane.b32.xlu0 %v3269, 32
  %v3272 = vpop.permute.xlu0 %3271
  %v3274 = vadd.f32 %v3264, %v3272
  %v3275 = vtanh.pop %v3274
  %3277 = vrot.lane.b32.xlu0 %v3275, 64
  %v3278 = vpop.permute.xlu0 %3277
  %v3280 = vmul.f32 %v3263, %v3278
  %v3282 = vsel %vm108, %v99, 0
  %3284 = vmatprep.subr.mxu0 0.0
  %3285 = vmatpush1.msra.mxu0 %v50
  %3286 = vmatprep.subr.mxu0 0.0
  %3287 = vmatpush1.msra.mxu0 %v51
  %3288 = vmatprep.subr.mxu0 0.0
  %3289 = vmatpush1.msra.mxu0 0.0
  %3290 = vmatprep.subr.mxu0 0.0
  %3291 = vmatpush1.msra.mxu0 0.0
  %3292 = vmatprep.subr.mxu0 0.0
  %3293 = vmatpush1.msra.mxu0 0.0
  %3294 = vmatprep.subr.mxu0 0.0
  %3295 = vmatpush1.msra.mxu0 0.0
  %3296 = vmatprep.subr.mxu0 0.0
  %3297 = vmatpush1.msra.mxu0 0.0
  %3298 = vmatprep.subr.mxu0 0.0
  %3299 = vmatpush1.msra.mxu0 0.0
  %3300 = vmatprep.subr.mxu0 0.0
  %3301 = vmatpush1.msra.mxu0 0.0
  %3302 = vmatprep.subr.mxu0 0.0
  %3303 = vmatpush1.msra.mxu0 0.0
  %3304 = vmatprep.subr.mxu0 0.0
  %3305 = vmatpush1.msra.mxu0 0.0
  %3306 = vmatprep.subr.mxu0 0.0
  %3307 = vmatpush1.msra.mxu0 0.0
  %3308 = vmatprep.subr.mxu0 0.0
  %3309 = vmatpush1.msra.mxu0 0.0
  %3310 = vmatprep.subr.mxu0 0.0
  %3311 = vmatpush1.msra.mxu0 0.0
  %3312 = vmatprep.subr.mxu0 0.0
  %3313 = vmatpush1.msra.mxu0 0.0
  %3314 = vmatprep.subr.mxu0 0.0
  %3315 = vmatpush1.msra.mxu0 0.0
  %3316 = vmatprep.subr.mxu0 0.0
  %3317 = vmatpush1.msra.mxu0 0.0
  %3318 = vmatprep.subr.mxu0 0.0
  %3319 = vmatpush1.msra.mxu0 0.0
  %3320 = vmatprep.subr.mxu0 0.0
  %3321 = vmatpush1.msra.mxu0 0.0
  %3322 = vmatprep.subr.mxu0 0.0
  %3323 = vmatpush1.msra.mxu0 0.0
  %3324 = vmatprep.subr.mxu0 0.0
  %3325 = vmatpush1.msra.mxu0 0.0
  %3326 = vmatprep.subr.mxu0 0.0
  %3327 = vmatpush1.msra.mxu0 0.0
  %3328 = vmatprep.subr.mxu0 0.0
  %3329 = vmatpush1.msra.mxu0 0.0
  %3330 = vmatprep.subr.mxu0 0.0
  %3331 = vmatpush1.msra.mxu0 0.0
  %3332 = vmatprep.subr.mxu0 0.0
  %3333 = vmatpush1.msra.mxu0 0.0
  %3334 = vmatprep.subr.mxu0 0.0
  %3335 = vmatpush1.msra.mxu0 0.0
  %3336 = vmatprep.subr.mxu0 0.0
  %3337 = vmatpush1.msra.mxu0 0.0
  %3338 = vmatprep.subr.mxu0 0.0
  %3339 = vmatpush1.msra.mxu0 0.0
  %3340 = vmatprep.subr.mxu0 0.0
  %3341 = vmatpush1.msra.mxu0 0.0
  %3342 = vmatprep.subr.mxu0 0.0
  %3343 = vmatpush1.msra.mxu0 0.0
  %3344 = vmatprep.subr.mxu0 0.0
  %3345 = vmatpush1.msra.mxu0 0.0
  %3346 = vmatprep.subr.mxu0 0.0
  %3347 = vmatpush1.msra.mxu0 0.0
  %3348 = vmatprep.mubr.f32.mxu0 0.0
  %3349 = vmatmul.mubr.f32.gmra.mrb[0].mxu0 %v3282
  %v3350 = vpop.f32.mrb[0].mxu0
  %v3351 = vadd.f32 %v106, %v3350
  %v3352 = vpop.f32.mrb[0].mxu0
  %3353 = vdwg.mxu0
  %3354 = vmatprep.subr.mxu0 0.0
  %3355 = vmatpush1.msra.mxu0 %v64
  %3356 = vmatprep.subr.mxu0 0.0
  %3357 = vmatpush1.msra.mxu0 %v65
  %3358 = vmatprep.subr.mxu0 0.0
  %3359 = vmatpush1.msra.mxu0 %v66
  %3360 = vmatprep.subr.mxu0 0.0
  %3361 = vmatpush1.msra.mxu0 %v67
  %3362 = vmatprep.subr.mxu0 0.0
  %3363 = vmatpush1.msra.mxu0 0.0
  %3364 = vmatprep.subr.mxu0 0.0
  %3365 = vmatpush1.msra.mxu0 0.0
  %3366 = vmatprep.subr.mxu0 0.0
  %3367 = vmatpush1.msra.mxu0 0.0
  %3368 = vmatprep.subr.mxu0 0.0
  %3369 = vmatpush1.msra.mxu0 0.0
  %3370 = vmatprep.subr.mxu0 0.0
  %3371 = vmatpush1.msra.mxu0 0.0
  %3372 = vmatprep.subr.mxu0 0.0
  %3373 = vmatpush1.msra.mxu0 0.0
  %3374 = vmatprep.subr.mxu0 0.0
  %3375 = vmatpush1.msra.mxu0 0.0
  %3376 = vmatprep.subr.mxu0 0.0
  %3377 = vmatpush1.msra.mxu0 0.0
  %3378 = vmatprep.subr.mxu0 0.0
  %3379 = vmatpush1.msra.mxu0 0.0
  %3380 = vmatprep.subr.mxu0 0.0
  %3381 = vmatpush1.msra.mxu0 0.0
  %3382 = vmatprep.subr.mxu0 0.0
  %3383 = vmatpush1.msra.mxu0 0.0
  %3384 = vmatprep.subr.mxu0 0.0
  %3385 = vmatpush1.msra.mxu0 0.0
  %3386 = vmatprep.subr.mxu0 0.0
  %3387 = vmatpush1.msra.mxu0 0.0
  %3388 = vmatprep.subr.mxu0 0.0
  %3389 = vmatpush1.msra.mxu0 0.0
  %3390 = vmatprep.subr.mxu0 0.0
  %3391 = vmatpush1.msra.mxu0 0.0
  %3392 = vmatprep.subr.mxu0 0.0
  %3393 = vmatpush1.msra.mxu0 0.0
  %3394 = vmatprep.subr.mxu0 0.0
  %3395 = vmatpush1.msra.mxu0 0.0
  %3396 = vmatprep.subr.mxu0 0.0
  %3397 = vmatpush1.msra.mxu0 0.0
  %3398 = vmatprep.subr.mxu0 0.0
  %3399 = vmatpush1.msra.mxu0 0.0
  %3400 = vmatprep.subr.mxu0 0.0
  %3401 = vmatpush1.msra.mxu0 0.0
  %3402 = vmatprep.subr.mxu0 0.0
  %3403 = vmatpush1.msra.mxu0 0.0
  %3404 = vmatprep.subr.mxu0 0.0
  %3405 = vmatpush1.msra.mxu0 0.0
  %3406 = vmatprep.subr.mxu0 0.0
  %3407 = vmatpush1.msra.mxu0 0.0
  %3408 = vmatprep.subr.mxu0 0.0
  %3409 = vmatpush1.msra.mxu0 0.0
  %3410 = vmatprep.subr.mxu0 0.0
  %3411 = vmatpush1.msra.mxu0 0.0
  %3412 = vmatprep.subr.mxu0 0.0
  %3413 = vmatpush1.msra.mxu0 0.0
  %3414 = vmatprep.subr.mxu0 0.0
  %3415 = vmatpush1.msra.mxu0 0.0
  %3416 = vmatprep.subr.mxu0 0.0
  %3417 = vmatpush1.msra.mxu0 0.0
  %3418 = vmatprep.mubr.f32.mxu0 0.0
  %3419 = vmatmul.mubr.f32.gmra.mrb[0].mxu0 %v3112
  %v3420 = vpop.f32.mrb[0].mxu0
  %v3421 = vadd.f32 0.0, %v3420
  %v3422 = vpop.f32.mrb[0].mxu0
  %3423 = vdwg.mxu0
  %v3424 = vadd.f32 %v3351, %v3421
  %v3425 = vxor.u32 %v3424, 2147483648
  %v3426 = vmul.f32 %v3425, 1.442695
  %v3427 = vpow.pop %v3426
  %v3428 = vadd.f32 %v3427, 1.0
  %v3429 = vrcp.pop %v3428
  %v3430 = vmul.f32 1.0, %v3429
  %v3431 = vmul.f32 %v3430, 2.0
  %v3432 = vsub.f32 %v3431, 1.0
  %v3433 = vsel %vm93, %v3432, %v3430
  %v3434 = vmul.f32 %v3433, %v2681
  %3436 = vrot.lane.b32.xlu0 %v3433, 64
  %v3437 = vpop.permute.xlu0 %3436
  %v3439 = vmul.f32 %v3433, %v3437
  %3441 = vrot.lane.b32.xlu0 %v3439, 32
  %v3442 = vpop.permute.xlu0 %3441
  %v3444 = vadd.f32 %v3434, %v3442
  %v3445 = vtanh.pop %v3444
  %3447 = vrot.lane.b32.xlu0 %v3445, 64
  %v3448 = vpop.permute.xlu0 %3447
  %v3450 = vmul.f32 %v3433, %v3448
  %3452 = vrot.lane.b32.xlu0 %v3108, 32
  %v3453 = vpop.permute.xlu0 %3452
  %v3454 = vsel %vm182, %v3453, 0
  %3456 = vmatprep.subr.mxu0 0.0
  %3457 = vmatpush1.msra.mxu0 %v60
  %3458 = vmatprep.subr.mxu0 0.0
  %3459 = vmatpush1.msra.mxu0 %v61
  %3460 = vmatprep.subr.mxu0 0.0
  %3461 = vmatpush1.msra.mxu0 %v62
  %3462 = vmatprep.subr.mxu0 0.0
  %3463 = vmatpush1.msra.mxu0 %v63
  %3464 = vmatprep.subr.mxu0 0.0
  %3465 = vmatpush1.msra.mxu0 0.0
  %3466 = vmatprep.subr.mxu0 0.0
  %3467 = vmatpush1.msra.mxu0 0.0
  %3468 = vmatprep.subr.mxu0 0.0
  %3469 = vmatpush1.msra.mxu0 0.0
  %3470 = vmatprep.subr.mxu0 0.0
  %3471 = vmatpush1.msra.mxu0 0.0
  %3472 = vmatprep.subr.mxu0 0.0
  %3473 = vmatpush1.msra.mxu0 0.0
  %3474 = vmatprep.subr.mxu0 0.0
  %3475 = vmatpush1.msra.mxu0 0.0
  %3476 = vmatprep.subr.mxu0 0.0
  %3477 = vmatpush1.msra.mxu0 0.0
  %3478 = vmatprep.subr.mxu0 0.0
  %3479 = vmatpush1.msra.mxu0 0.0
  %3480 = vmatprep.subr.mxu0 0.0
  %3481 = vmatpush1.msra.mxu0 0.0
  %3482 = vmatprep.subr.mxu0 0.0
  %3483 = vmatpush1.msra.mxu0 0.0
  %3484 = vmatprep.subr.mxu0 0.0
  %3485 = vmatpush1.msra.mxu0 0.0
  %3486 = vmatprep.subr.mxu0 0.0
  %3487 = vmatpush1.msra.mxu0 0.0
  %3488 = vmatprep.subr.mxu0 0.0
  %3489 = vmatpush1.msra.mxu0 0.0
  %3490 = vmatprep.subr.mxu0 0.0
  %3491 = vmatpush1.msra.mxu0 0.0
  %3492 = vmatprep.subr.mxu0 0.0
  %3493 = vmatpush1.msra.mxu0 0.0
  %3494 = vmatprep.subr.mxu0 0.0
  %3495 = vmatpush1.msra.mxu0 0.0
  %3496 = vmatprep.subr.mxu0 0.0
  %3497 = vmatpush1.msra.mxu0 0.0
  %3498 = vmatprep.subr.mxu0 0.0
  %3499 = vmatpush1.msra.mxu0 0.0
  %3500 = vmatprep.subr.mxu0 0.0
  %3501 = vmatpush1.msra.mxu0 0.0
  %3502 = vmatprep.subr.mxu0 0.0
  %3503 = vmatpush1.msra.mxu0 0.0
  %3504 = vmatprep.subr.mxu0 0.0
  %3505 = vmatpush1.msra.mxu0 0.0
  %3506 = vmatprep.subr.mxu0 0.0
  %3507 = vmatpush1.msra.mxu0 0.0
  %3508 = vmatprep.subr.mxu0 0.0
  %3509 = vmatpush1.msra.mxu0 0.0
  %3510 = vmatprep.subr.mxu0 0.0
  %3511 = vmatpush1.msra.mxu0 0.0
  %3512 = vmatprep.subr.mxu0 0.0
  %3513 = vmatpush1.msra.mxu0 0.0
  %3514 = vmatprep.subr.mxu0 0.0
  %3515 = vmatpush1.msra.mxu0 0.0
  %3516 = vmatprep.subr.mxu0 0.0
  %3517 = vmatpush1.msra.mxu0 0.0
  %3518 = vmatprep.subr.mxu0 0.0
  %3519 = vmatpush1.msra.mxu0 0.0
  %3520 = vmatprep.mubr.f32.mxu0 0.0
  %3521 = vmatmul.mubr.f32.gmra.mrb[0].mxu0 %v3454
  %v3522 = vpop.f32.mrb[0].mxu0
  %v3523 = vadd.f32 %v1155, %v3522
  %v3524 = vpop.f32.mrb[0].mxu0
  %3525 = vdwg.mxu0
  %3526 = vmatprep.subr.mxu0 0.0
  %3527 = vmatpush1.msra.mxu0 %v76
  %3528 = vmatprep.subr.mxu0 0.0
  %3529 = vmatpush1.msra.mxu0 %v77
  %3530 = vmatprep.subr.mxu0 0.0
  %3531 = vmatpush1.msra.mxu0 %v78
  %3532 = vmatprep.subr.mxu0 0.0
  %3533 = vmatpush1.msra.mxu0 %v79
  %3534 = vmatprep.subr.mxu0 0.0
  %3535 = vmatpush1.msra.mxu0 0.0
  %3536 = vmatprep.subr.mxu0 0.0
  %3537 = vmatpush1.msra.mxu0 0.0
  %3538 = vmatprep.subr.mxu0 0.0
  %3539 = vmatpush1.msra.mxu0 0.0
  %3540 = vmatprep.subr.mxu0 0.0
  %3541 = vmatpush1.msra.mxu0 0.0
  %3542 = vmatprep.subr.mxu0 0.0
  %3543 = vmatpush1.msra.mxu0 0.0
  %3544 = vmatprep.subr.mxu0 0.0
  %3545 = vmatpush1.msra.mxu0 0.0
  %3546 = vmatprep.subr.mxu0 0.0
  %3547 = vmatpush1.msra.mxu0 0.0
  %3548 = vmatprep.subr.mxu0 0.0
  %3549 = vmatpush1.msra.mxu0 0.0
  %3550 = vmatprep.subr.mxu0 0.0
  %3551 = vmatpush1.msra.mxu0 0.0
  %3552 = vmatprep.subr.mxu0 0.0
  %3553 = vmatpush1.msra.mxu0 0.0
  %3554 = vmatprep.subr.mxu0 0.0
  %3555 = vmatpush1.msra.mxu0 0.0
  %3556 = vmatprep.subr.mxu0 0.0
  %3557 = vmatpush1.msra.mxu0 0.0
  %3558 = vmatprep.subr.mxu0 0.0
  %3559 = vmatpush1.msra.mxu0 0.0
  %3560 = vmatprep.subr.mxu0 0.0
  %3561 = vmatpush1.msra.mxu0 0.0
  %3562 = vmatprep.subr.mxu0 0.0
  %3563 = vmatpush1.msra.mxu0 0.0
  %3564 = vmatprep.subr.mxu0 0.0
  %3565 = vmatpush1.msra.mxu0 0.0
  %3566 = vmatprep.subr.mxu0 0.0
  %3567 = vmatpush1.msra.mxu0 0.0
  %3568 = vmatprep.subr.mxu0 0.0
  %3569 = vmatpush1.msra.mxu0 0.0
  %3570 = vmatprep.subr.mxu0 0.0
  %3571 = vmatpush1.msra.mxu0 0.0
  %3572 = vmatprep.subr.mxu0 0.0
  %3573 = vmatpush1.msra.mxu0 0.0
  %3574 = vmatprep.subr.mxu0 0.0
  %3575 = vmatpush1.msra.mxu0 0.0
  %3576 = vmatprep.subr.mxu0 0.0
  %3577 = vmatpush1.msra.mxu0 0.0
  %3578 = vmatprep.subr.mxu0 0.0
  %3579 = vmatpush1.msra.mxu0 0.0
  %3580 = vmatprep.subr.mxu0 0.0
  %3581 = vmatpush1.msra.mxu0 0.0
  %3582 = vmatprep.subr.mxu0 0.0
  %3583 = vmatpush1.msra.mxu0 0.0
  %3584 = vmatprep.subr.mxu0 0.0
  %3585 = vmatpush1.msra.mxu0 0.0
  %3586 = vmatprep.subr.mxu0 0.0
  %3587 = vmatpush1.msra.mxu0 0.0
  %3588 = vmatprep.subr.mxu0 0.0
  %3589 = vmatpush1.msra.mxu0 0.0
  %3590 = vmatprep.mubr.f32.mxu0 0.0
  %3591 = vmatmul.mubr.f32.gmra.mrb[0].mxu0 %v2863
  %v3592 = vpop.f32.mrb[0].mxu0
  %v3593 = vadd.f32 0.0, %v3592
  %v3594 = vpop.f32.mrb[0].mxu0
  %3595 = vdwg.mxu0
  %v3596 = vadd.f32 %v3523, %v3593
  %v3597 = vxor.u32 %v3596, 2147483648
  %v3598 = vmul.f32 %v3597, 1.442695
  %v3599 = vpow.pop %v3598
  %v3600 = vadd.f32 %v3599, 1.0
  %v3601 = vrcp.pop %v3600
  %v3602 = vmul.f32 1.0, %v3601
  %v3603 = vmul.f32 %v3602, 2.0
  %v3604 = vsub.f32 %v3603, 1.0
  %v3605 = vsel %vm93, %v3604, %v3602
  %v3606 = vmul.f32 %v3605, %v2853
  %3608 = vrot.lane.b32.xlu0 %v3605, 64
  %v3609 = vpop.permute.xlu0 %3608
  %v3611 = vmul.f32 %v3605, %v3609
  %3613 = vrot.lane.b32.xlu0 %v3611, 32
  %v3614 = vpop.permute.xlu0 %3613
  %v3616 = vadd.f32 %v3606, %v3614
  %v3617 = vtanh.pop %v3616
  %3619 = vrot.lane.b32.xlu0 %v3617, 64
  %v3620 = vpop.permute.xlu0 %3619
  %v3622 = vmul.f32 %v3605, %v3620
  %3624 = vrot.lane.b32.xlu0 %v3622, 32
  %v3625 = vpop.permute.xlu0 %3624
  %v3626 = vsel %vm182, %v3625, 0
  %3628 = vmatprep.subr.mxu0 0.0
  %3629 = vmatpush1.msra.mxu0 %v84
  %3630 = vmatprep.subr.mxu0 0.0
  %3631 = vmatpush1.msra.mxu0 %v85
  %3632 = vmatprep.subr.mxu0 0.0
  %3633 = vmatpush1.msra.mxu0 %v86
  %3634 = vmatprep.subr.mxu0 0.0
  %3635 = vmatpush1.msra.mxu0 %v87
  %3636 = vmatprep.subr.mxu0 0.0
  %3637 = vmatpush1.msra.mxu0 0.0
  %3638 = vmatprep.subr.mxu0 0.0
  %3639 = vmatpush1.msra.mxu0 0.0
  %3640 = vmatprep.subr.mxu0 0.0
  %3641 = vmatpush1.msra.mxu0 0.0
  %3642 = vmatprep.subr.mxu0 0.0
  %3643 = vmatpush1.msra.mxu0 0.0
  %3644 = vmatprep.subr.mxu0 0.0
  %3645 = vmatpush1.msra.mxu0 0.0
  %3646 = vmatprep.subr.mxu0 0.0
  %3647 = vmatpush1.msra.mxu0 0.0
  %3648 = vmatprep.subr.mxu0 0.0
  %3649 = vmatpush1.msra.mxu0 0.0
  %3650 = vmatprep.subr.mxu0 0.0
  %3651 = vmatpush1.msra.mxu0 0.0
  %3652 = vmatprep.subr.mxu0 0.0
  %3653 = vmatpush1.msra.mxu0 0.0
  %3654 = vmatprep.subr.mxu0 0.0
  %3655 = vmatpush1.msra.mxu0 0.0
  %3656 = vmatprep.subr.mxu0 0.0
  %3657 = vmatpush1.msra.mxu0 0.0
  %3658 = vmatprep.subr.mxu0 0.0
  %3659 = vmatpush1.msra.mxu0 0.0
  %3660 = vmatprep.subr.mxu0 0.0
  %3661 = vmatpush1.msra.mxu0 0.0
  %3662 = vmatprep.subr.mxu0 0.0
  %3663 = vmatpush1.msra.mxu0 0.0
  %3664 = vmatprep.subr.mxu0 0.0
  %3665 = vmatpush1.msra.mxu0 0.0
  %3666 = vmatprep.subr.mxu0 0.0
  %3667 = vmatpush1.msra.mxu0 0.0
  %3668 = vmatprep.subr.mxu0 0.0
  %3669 = vmatpush1.msra.mxu0 0.0
  %3670 = vmatprep.subr.mxu0 0.0
  %3671 = vmatpush1.msra.mxu0 0.0
  %3672 = vmatprep.subr.mxu0 0.0
  %3673 = vmatpush1.msra.mxu0 0.0
  %3674 = vmatprep.subr.mxu0 0.0
  %3675 = vmatpush1.msra.mxu0 0.0
  %3676 = vmatprep.subr.mxu0 0.0
  %3677 = vmatpush1.msra.mxu0 0.0
  %3678 = vmatprep.subr.mxu0 0.0
  %3679 = vmatpush1.msra.mxu0 0.0
  %3680 = vmatprep.subr.mxu0 0.0
  %3681 = vmatpush1.msra.mxu0 0.0
  %3682 = vmatprep.subr.mxu0 0.0
  %3683 = vmatpush1.msra.mxu0 0.0
  %3684 = vmatprep.subr.mxu0 0.0
  %3685 = vmatpush1.msra.mxu0 0.0
  %3686 = vmatprep.subr.mxu0 0.0
  %3687 = vmatpush1.msra.mxu0 0.0
  %3688 = vmatprep.subr.mxu0 0.0
  %3689 = vmatpush1.msra.mxu0 0.0
  %3690 = vmatprep.subr.mxu0 0.0
  %3691 = vmatpush1.msra.mxu0 0.0
  %3692 = vmatprep.mubr.f32.mxu0 0.0
  %3693 = vmatmul.mubr.f32.gmra.mrb[0].mxu0 %v3626
  %v3694 = vpop.f32.mrb[0].mxu0
  %v3695 = vadd.f32 %v1333, %v3694
  %v3696 = vpop.f32.mrb[0].mxu0
  %3697 = vdwg.mxu0
  %s3698 = scalar_lea.vmem %s15, 24
  %3699 = vst [vmem:[%s3698] sm:$0xff] %v3695
  %3701 = vrot.lane.b32.xlu0 %v3280, 32
  %v3702 = vpop.permute.xlu0 %3701
  %v3703 = vsel %vm182, %v3702, 0
  %3705 = vmatprep.subr.mxu0 0.0
  %3706 = vmatpush1.msra.mxu0 %v56
  %3707 = vmatprep.subr.mxu0 0.0
  %3708 = vmatpush1.msra.mxu0 %v57
  %3709 = vmatprep.subr.mxu0 0.0
  %3710 = vmatpush1.msra.mxu0 %v58
  %3711 = vmatprep.subr.mxu0 0.0
  %3712 = vmatpush1.msra.mxu0 %v59
  %3713 = vmatprep.subr.mxu0 0.0
  %3714 = vmatpush1.msra.mxu0 0.0
  %3715 = vmatprep.subr.mxu0 0.0
  %3716 = vmatpush1.msra.mxu0 0.0
  %3717 = vmatprep.subr.mxu0 0.0
  %3718 = vmatpush1.msra.mxu0 0.0
  %3719 = vmatprep.subr.mxu0 0.0
  %3720 = vmatpush1.msra.mxu0 0.0
  %3721 = vmatprep.subr.mxu0 0.0
  %3722 = vmatpush1.msra.mxu0 0.0
  %3723 = vmatprep.subr.mxu0 0.0
  %3724 = vmatpush1.msra.mxu0 0.0
  %3725 = vmatprep.subr.mxu0 0.0
  %3726 = vmatpush1.msra.mxu0 0.0
  %3727 = vmatprep.subr.mxu0 0.0
  %3728 = vmatpush1.msra.mxu0 0.0
  %3729 = vmatprep.subr.mxu0 0.0
  %3730 = vmatpush1.msra.mxu0 0.0
  %3731 = vmatprep.subr.mxu0 0.0
  %3732 = vmatpush1.msra.mxu0 0.0
  %3733 = vmatprep.subr.mxu0 0.0
  %3734 = vmatpush1.msra.mxu0 0.0
  %3735 = vmatprep.subr.mxu0 0.0
  %3736 = vmatpush1.msra.mxu0 0.0
  %3737 = vmatprep.subr.mxu0 0.0
  %3738 = vmatpush1.msra.mxu0 0.0
  %3739 = vmatprep.subr.mxu0 0.0
  %3740 = vmatpush1.msra.mxu0 0.0
  %3741 = vmatprep.subr.mxu0 0.0
  %3742 = vmatpush1.msra.mxu0 0.0
  %3743 = vmatprep.subr.mxu0 0.0
  %3744 = vmatpush1.msra.mxu0 0.0
  %3745 = vmatprep.subr.mxu0 0.0
  %3746 = vmatpush1.msra.mxu0 0.0
  %3747 = vmatprep.subr.mxu0 0.0
  %3748 = vmatpush1.msra.mxu0 0.0
  %3749 = vmatprep.subr.mxu0 0.0
  %3750 = vmatpush1.msra.mxu0 0.0
  %3751 = vmatprep.subr.mxu0 0.0
  %3752 = vmatpush1.msra.mxu0 0.0
  %3753 = vmatprep.subr.mxu0 0.0
  %3754 = vmatpush1.msra.mxu0 0.0
  %3755 = vmatprep.subr.mxu0 0.0
  %3756 = vmatpush1.msra.mxu0 0.0
  %3757 = vmatprep.subr.mxu0 0.0
  %3758 = vmatpush1.msra.mxu0 0.0
  %3759 = vmatprep.subr.mxu0 0.0
  %3760 = vmatpush1.msra.mxu0 0.0
  %3761 = vmatprep.subr.mxu0 0.0
  %3762 = vmatpush1.msra.mxu0 0.0
  %3763 = vmatprep.subr.mxu0 0.0
  %3764 = vmatpush1.msra.mxu0 0.0
  %3765 = vmatprep.subr.mxu0 0.0
  %3766 = vmatpush1.msra.mxu0 0.0
  %3767 = vmatprep.subr.mxu0 0.0
  %3768 = vmatpush1.msra.mxu0 0.0
  %3769 = vmatprep.mubr.f32.mxu0 0.0
  %3770 = vmatmul.mubr.f32.gmra.mrb[0].mxu0 %v3703
  %v3771 = vpop.f32.mrb[0].mxu0
  %v3772 = vadd.f32 %v635, %v3771
  %v3773 = vpop.f32.mrb[0].mxu0
  %3774 = vdwg.mxu0
  %3775 = vmatprep.subr.mxu0 0.0
  %3776 = vmatpush1.msra.mxu0 %v72
  %3777 = vmatprep.subr.mxu0 0.0
  %3778 = vmatpush1.msra.mxu0 %v73
  %3779 = vmatprep.subr.mxu0 0.0
  %3780 = vmatpush1.msra.mxu0 %v74
  %3781 = vmatprep.subr.mxu0 0.0
  %3782 = vmatpush1.msra.mxu0 %v75
  %3783 = vmatprep.subr.mxu0 0.0
  %3784 = vmatpush1.msra.mxu0 0.0
  %3785 = vmatprep.subr.mxu0 0.0
  %3786 = vmatpush1.msra.mxu0 0.0
  %3787 = vmatprep.subr.mxu0 0.0
  %3788 = vmatpush1.msra.mxu0 0.0
  %3789 = vmatprep.subr.mxu0 0.0
  %3790 = vmatpush1.msra.mxu0 0.0
  %3791 = vmatprep.subr.mxu0 0.0
  %3792 = vmatpush1.msra.mxu0 0.0
  %3793 = vmatprep.subr.mxu0 0.0
  %3794 = vmatpush1.msra.mxu0 0.0
  %3795 = vmatprep.subr.mxu0 0.0
  %3796 = vmatpush1.msra.mxu0 0.0
  %3797 = vmatprep.subr.mxu0 0.0
  %3798 = vmatpush1.msra.mxu0 0.0
  %3799 = vmatprep.subr.mxu0 0.0
  %3800 = vmatpush1.msra.mxu0 0.0
  %3801 = vmatprep.subr.mxu0 0.0
  %3802 = vmatpush1.msra.mxu0 0.0
  %3803 = vmatprep.subr.mxu0 0.0
  %3804 = vmatpush1.msra.mxu0 0.0
  %3805 = vmatprep.subr.mxu0 0.0
  %3806 = vmatpush1.msra.mxu0 0.0
  %3807 = vmatprep.subr.mxu0 0.0
  %3808 = vmatpush1.msra.mxu0 0.0
  %3809 = vmatprep.subr.mxu0 0.0
  %3810 = vmatpush1.msra.mxu0 0.0
  %3811 = vmatprep.subr.mxu0 0.0
  %3812 = vmatpush1.msra.mxu0 0.0
  %3813 = vmatprep.subr.mxu0 0.0
  %3814 = vmatpush1.msra.mxu0 0.0
  %3815 = vmatprep.subr.mxu0 0.0
  %3816 = vmatpush1.msra.mxu0 0.0
  %3817 = vmatprep.subr.mxu0 0.0
  %3818 = vmatpush1.msra.mxu0 0.0
  %3819 = vmatprep.subr.mxu0 0.0
  %3820 = vmatpush1.msra.mxu0 0.0
  %3821 = vmatprep.subr.mxu0 0.0
  %3822 = vmatpush1.msra.mxu0 0.0
  %3823 = vmatprep.subr.mxu0 0.0
  %3824 = vmatpush1.msra.mxu0 0.0
  %3825 = vmatprep.subr.mxu0 0.0
  %3826 = vmatpush1.msra.mxu0 0.0
  %3827 = vmatprep.subr.mxu0 0.0
  %3828 = vmatpush1.msra.mxu0 0.0
  %3829 = vmatprep.subr.mxu0 0.0
  %3830 = vmatpush1.msra.mxu0 0.0
  %3831 = vmatprep.subr.mxu0 0.0
  %3832 = vmatpush1.msra.mxu0 0.0
  %3833 = vmatprep.subr.mxu0 0.0
  %3834 = vmatpush1.msra.mxu0 0.0
  %3835 = vmatprep.subr.mxu0 0.0
  %3836 = vmatpush1.msra.mxu0 0.0
  %3837 = vmatprep.subr.mxu0 0.0
  %3838 = vmatpush1.msra.mxu0 0.0
  %3839 = vmatprep.mubr.f32.mxu0 0.0
  %3840 = vmatmul.mubr.f32.gmra.mrb[0].mxu0 %v3454
  %v3841 = vpop.f32.mrb[0].mxu0
  %v3842 = vadd.f32 0.0, %v3841
  %v3843 = vpop.f32.mrb[0].mxu0
  %3844 = vdwg.mxu0
  %v3845 = vadd.f32 %v3772, %v3842
  %v3846 = vxor.u32 %v3845, 2147483648
  %v3847 = vmul.f32 %v3846, 1.442695
  %v3848 = vpow.pop %v3847
  %v3849 = vadd.f32 %v3848, 1.0
  %v3850 = vrcp.pop %v3849
  %v3851 = vmul.f32 1.0, %v3850
  %v3852 = vmul.f32 %v3851, 2.0
  %v3853 = vsub.f32 %v3852, 1.0
  %v3854 = vsel %vm93, %v3853, %v3851
  %v3855 = vmul.f32 %v3854, %v3102
  %3857 = vrot.lane.b32.xlu0 %v3854, 64
  %v3858 = vpop.permute.xlu0 %3857
  %v3860 = vmul.f32 %v3854, %v3858
  %3862 = vrot.lane.b32.xlu0 %v3860, 32
  %v3863 = vpop.permute.xlu0 %3862
  %v3865 = vadd.f32 %v3855, %v3863
  %v3866 = vtanh.pop %v3865
  %3868 = vrot.lane.b32.xlu0 %v3866, 64
  %v3869 = vpop.permute.xlu0 %3868
  %v3871 = vmul.f32 %v3854, %v3869
  %3873 = vrot.lane.b32.xlu0 %v3450, 32
  %v3874 = vpop.permute.xlu0 %3873
  %v3875 = vsel %vm182, %v3874, 0
  %3877 = vmatprep.subr.mxu0 0.0
  %3878 = vmatpush1.msra.mxu0 %v52
  %3879 = vmatprep.subr.mxu0 0.0
  %3880 = vmatpush1.msra.mxu0 %v53
  %3881 = vmatprep.subr.mxu0 0.0
  %3882 = vmatpush1.msra.mxu0 %v54
  %3883 = vmatprep.subr.mxu0 0.0
  %3884 = vmatpush1.msra.mxu0 %v55
  %3885 = vmatprep.subr.mxu0 0.0
  %3886 = vmatpush1.msra.mxu0 0.0
  %3887 = vmatprep.subr.mxu0 0.0
  %3888 = vmatpush1.msra.mxu0 0.0
  %3889 = vmatprep.subr.mxu0 0.0
  %3890 = vmatpush1.msra.mxu0 0.0
  %3891 = vmatprep.subr.mxu0 0.0
  %3892 = vmatpush1.msra.mxu0 0.0
  %3893 = vmatprep.subr.mxu0 0.0
  %3894 = vmatpush1.msra.mxu0 0.0
  %3895 = vmatprep.subr.mxu0 0.0
  %3896 = vmatpush1.msra.mxu0 0.0
  %3897 = vmatprep.subr.mxu0 0.0
  %3898 = vmatpush1.msra.mxu0 0.0
  %3899 = vmatprep.subr.mxu0 0.0
  %3900 = vmatpush1.msra.mxu0 0.0
  %3901 = vmatprep.subr.mxu0 0.0
  %3902 = vmatpush1.msra.mxu0 0.0
  %3903 = vmatprep.subr.mxu0 0.0
  %3904 = vmatpush1.msra.mxu0 0.0
  %3905 = vmatprep.subr.mxu0 0.0
  %3906 = vmatpush1.msra.mxu0 0.0
  %3907 = vmatprep.subr.mxu0 0.0
  %3908 = vmatpush1.msra.mxu0 0.0
  %3909 = vmatprep.subr.mxu0 0.0
  %3910 = vmatpush1.msra.mxu0 0.0
  %3911 = vmatprep.subr.mxu0 0.0
  %3912 = vmatpush1.msra.mxu0 0.0
  %3913 = vmatprep.subr.mxu0 0.0
  %3914 = vmatpush1.msra.mxu0 0.0
  %3915 = vmatprep.subr.mxu0 0.0
  %3916 = vmatpush1.msra.mxu0 0.0
  %3917 = vmatprep.subr.mxu0 0.0
  %3918 = vmatpush1.msra.mxu0 0.0
  %3919 = vmatprep.subr.mxu0 0.0
  %3920 = vmatpush1.msra.mxu0 0.0
  %3921 = vmatprep.subr.mxu0 0.0
  %3922 = vmatpush1.msra.mxu0 0.0
  %3923 = vmatprep.subr.mxu0 0.0
  %3924 = vmatpush1.msra.mxu0 0.0
  %3925 = vmatprep.subr.mxu0 0.0
  %3926 = vmatpush1.msra.mxu0 0.0
  %3927 = vmatprep.subr.mxu0 0.0
  %3928 = vmatpush1.msra.mxu0 0.0
  %3929 = vmatprep.subr.mxu0 0.0
  %3930 = vmatpush1.msra.mxu0 0.0
  %3931 = vmatprep.subr.mxu0 0.0
  %3932 = vmatpush1.msra.mxu0 0.0
  %3933 = vmatprep.subr.mxu0 0.0
  %3934 = vmatpush1.msra.mxu0 0.0
  %3935 = vmatprep.subr.mxu0 0.0
  %3936 = vmatpush1.msra.mxu0 0.0
  %3937 = vmatprep.subr.mxu0 0.0
  %3938 = vmatpush1.msra.mxu0 0.0
  %3939 = vmatprep.subr.mxu0 0.0
  %3940 = vmatpush1.msra.mxu0 0.0
  %3941 = vmatprep.mubr.f32.mxu0 0.0
  %3942 = vmatmul.mubr.f32.gmra.mrb[0].mxu0 %v3875
  %v3943 = vpop.f32.mrb[0].mxu0
  %v3944 = vadd.f32 %v287, %v3943
  %v3945 = vpop.f32.mrb[0].mxu0
  %3946 = vdwg.mxu0
  %3947 = vmatprep.subr.mxu0 0.0
  %3948 = vmatpush1.msra.mxu0 %v68
  %3949 = vmatprep.subr.mxu0 0.0
  %3950 = vmatpush1.msra.mxu0 %v69
  %3951 = vmatprep.subr.mxu0 0.0
  %3952 = vmatpush1.msra.mxu0 %v70
  %3953 = vmatprep.subr.mxu0 0.0
  %3954 = vmatpush1.msra.mxu0 %v71
  %3955 = vmatprep.subr.mxu0 0.0
  %3956 = vmatpush1.msra.mxu0 0.0
  %3957 = vmatprep.subr.mxu0 0.0
  %3958 = vmatpush1.msra.mxu0 0.0
  %3959 = vmatprep.subr.mxu0 0.0
  %3960 = vmatpush1.msra.mxu0 0.0
  %3961 = vmatprep.subr.mxu0 0.0
  %3962 = vmatpush1.msra.mxu0 0.0
  %3963 = vmatprep.subr.mxu0 0.0
  %3964 = vmatpush1.msra.mxu0 0.0
  %3965 = vmatprep.subr.mxu0 0.0
  %3966 = vmatpush1.msra.mxu0 0.0
  %3967 = vmatprep.subr.mxu0 0.0
  %3968 = vmatpush1.msra.mxu0 0.0
  %3969 = vmatprep.subr.mxu0 0.0
  %3970 = vmatpush1.msra.mxu0 0.0
  %3971 = vmatprep.subr.mxu0 0.0
  %3972 = vmatpush1.msra.mxu0 0.0
  %3973 = vmatprep.subr.mxu0 0.0
  %3974 = vmatpush1.msra.mxu0 0.0
  %3975 = vmatprep.subr.mxu0 0.0
  %3976 = vmatpush1.msra.mxu0 0.0
  %3977 = vmatprep.subr.mxu0 0.0
  %3978 = vmatpush1.msra.mxu0 0.0
  %3979 = vmatprep.subr.mxu0 0.0
  %3980 = vmatpush1.msra.mxu0 0.0
  %3981 = vmatprep.subr.mxu0 0.0
  %3982 = vmatpush1.msra.mxu0 0.0
  %3983 = vmatprep.subr.mxu0 0.0
  %3984 = vmatpush1.msra.mxu0 0.0
  %3985 = vmatprep.subr.mxu0 0.0
  %3986 = vmatpush1.msra.mxu0 0.0
  %3987 = vmatprep.subr.mxu0 0.0
  %3988 = vmatpush1.msra.mxu0 0.0
  %3989 = vmatprep.subr.mxu0 0.0
  %3990 = vmatpush1.msra.mxu0 0.0
  %3991 = vmatprep.subr.mxu0 0.0
  %3992 = vmatpush1.msra.mxu0 0.0
  %3993 = vmatprep.subr.mxu0 0.0
  %3994 = vmatpush1.msra.mxu0 0.0
  %3995 = vmatprep.subr.mxu0 0.0
  %3996 = vmatpush1.msra.mxu0 0.0
  %3997 = vmatprep.subr.mxu0 0.0
  %3998 = vmatpush1.msra.mxu0 0.0
  %3999 = vmatprep.subr.mxu0 0.0
  %4000 = vmatpush1.msra.mxu0 0.0
  %4001 = vmatprep.subr.mxu0 0.0
  %4002 = vmatpush1.msra.mxu0 0.0
  %4003 = vmatprep.subr.mxu0 0.0
  %4004 = vmatpush1.msra.mxu0 0.0
  %4005 = vmatprep.subr.mxu0 0.0
  %4006 = vmatpush1.msra.mxu0 0.0
  %4007 = vmatprep.subr.mxu0 0.0
  %4008 = vmatpush1.msra.mxu0 0.0
  %4009 = vmatprep.subr.mxu0 0.0
  %4010 = vmatpush1.msra.mxu0 0.0
  %4011 = vmatprep.mubr.f32.mxu0 0.0
  %4012 = vmatmul.mubr.f32.gmra.mrb[0].mxu0 %v3703
  %v4013 = vpop.f32.mrb[0].mxu0
  %v4014 = vadd.f32 0.0, %v4013
  %v4015 = vpop.f32.mrb[0].mxu0
  %4016 = vdwg.mxu0
  %v4017 = vadd.f32 %v3944, %v4014
  %v4018 = vxor.u32 %v4017, 2147483648
  %v4019 = vmul.f32 %v4018, 1.442695
  %v4020 = vpow.pop %v4019
  %v4021 = vadd.f32 %v4020, 1.0
  %v4022 = vrcp.pop %v4021
  %v4023 = vmul.f32 1.0, %v4022
  %v4024 = vmul.f32 %v4023, 2.0
  %v4025 = vsub.f32 %v4024, 1.0
  %v4026 = vsel %vm93, %v4025, %v4023
  %v4027 = vmul.f32 %v4026, %v3274
  %4029 = vrot.lane.b32.xlu0 %v4026, 64
  %v4030 = vpop.permute.xlu0 %4029
  %v4032 = vmul.f32 %v4026, %v4030
  %4034 = vrot.lane.b32.xlu0 %v4032, 32
  %v4035 = vpop.permute.xlu0 %4034
  %v4037 = vadd.f32 %v4027, %v4035
  %v4038 = vtanh.pop %v4037
  %4040 = vrot.lane.b32.xlu0 %v4038, 64
  %v4041 = vpop.permute.xlu0 %4040
  %v4043 = vmul.f32 %v4026, %v4041
  %v4045 = vsel %vm108, %v100, 0
  %4047 = vmatprep.subr.mxu0 0.0
  %4048 = vmatpush1.msra.mxu0 %v50
  %4049 = vmatprep.subr.mxu0 0.0
  %4050 = vmatpush1.msra.mxu0 %v51
  %4051 = vmatprep.subr.mxu0 0.0
  %4052 = vmatpush1.msra.mxu0 0.0
  %4053 = vmatprep.subr.mxu0 0.0
  %4054 = vmatpush1.msra.mxu0 0.0
  %4055 = vmatprep.subr.mxu0 0.0
  %4056 = vmatpush1.msra.mxu0 0.0
  %4057 = vmatprep.subr.mxu0 0.0
  %4058 = vmatpush1.msra.mxu0 0.0
  %4059 = vmatprep.subr.mxu0 0.0
  %4060 = vmatpush1.msra.mxu0 0.0
  %4061 = vmatprep.subr.mxu0 0.0
  %4062 = vmatpush1.msra.mxu0 0.0
  %4063 = vmatprep.subr.mxu0 0.0
  %4064 = vmatpush1.msra.mxu0 0.0
  %4065 = vmatprep.subr.mxu0 0.0
  %4066 = vmatpush1.msra.mxu0 0.0
  %4067 = vmatprep.subr.mxu0 0.0
  %4068 = vmatpush1.msra.mxu0 0.0
  %4069 = vmatprep.subr.mxu0 0.0
  %4070 = vmatpush1.msra.mxu0 0.0
  %4071 = vmatprep.subr.mxu0 0.0
  %4072 = vmatpush1.msra.mxu0 0.0
  %4073 = vmatprep.subr.mxu0 0.0
  %4074 = vmatpush1.msra.mxu0 0.0
  %4075 = vmatprep.subr.mxu0 0.0
  %4076 = vmatpush1.msra.mxu0 0.0
  %4077 = vmatprep.subr.mxu0 0.0
  %4078 = vmatpush1.msra.mxu0 0.0
  %4079 = vmatprep.subr.mxu0 0.0
  %4080 = vmatpush1.msra.mxu0 0.0
  %4081 = vmatprep.subr.mxu0 0.0
  %4082 = vmatpush1.msra.mxu0 0.0
  %4083 = vmatprep.subr.mxu0 0.0
  %4084 = vmatpush1.msra.mxu0 0.0
  %4085 = vmatprep.subr.mxu0 0.0
  %4086 = vmatpush1.msra.mxu0 0.0
  %4087 = vmatprep.subr.mxu0 0.0
  %4088 = vmatpush1.msra.mxu0 0.0
  %4089 = vmatprep.subr.mxu0 0.0
  %4090 = vmatpush1.msra.mxu0 0.0
  %4091 = vmatprep.subr.mxu0 0.0
  %4092 = vmatpush1.msra.mxu0 0.0
  %4093 = vmatprep.subr.mxu0 0.0
  %4094 = vmatpush1.msra.mxu0 0.0
  %4095 = vmatprep.subr.mxu0 0.0
  %4096 = vmatpush1.msra.mxu0 0.0
  %4097 = vmatprep.subr.mxu0 0.0
  %4098 = vmatpush1.msra.mxu0 0.0
  %4099 = vmatprep.subr.mxu0 0.0
  %4100 = vmatpush1.msra.mxu0 0.0
  %4101 = vmatprep.subr.mxu0 0.0
  %4102 = vmatpush1.msra.mxu0 0.0
  %4103 = vmatprep.subr.mxu0 0.0
  %4104 = vmatpush1.msra.mxu0 0.0
  %4105 = vmatprep.subr.mxu0 0.0
  %4106 = vmatpush1.msra.mxu0 0.0
  %4107 = vmatprep.subr.mxu0 0.0
  %4108 = vmatpush1.msra.mxu0 0.0
  %4109 = vmatprep.subr.mxu0 0.0
  %4110 = vmatpush1.msra.mxu0 0.0
  %4111 = vmatprep.mubr.f32.mxu0 0.0
  %4112 = vmatmul.mubr.f32.gmra.mrb[0].mxu0 %v4045
  %v4113 = vpop.f32.mrb[0].mxu0
  %v4114 = vadd.f32 %v106, %v4113
  %v4115 = vpop.f32.mrb[0].mxu0
  %4116 = vdwg.mxu0
  %4117 = vmatprep.subr.mxu0 0.0
  %4118 = vmatpush1.msra.mxu0 %v64
  %4119 = vmatprep.subr.mxu0 0.0
  %4120 = vmatpush1.msra.mxu0 %v65
  %4121 = vmatprep.subr.mxu0 0.0
  %4122 = vmatpush1.msra.mxu0 %v66
  %4123 = vmatprep.subr.mxu0 0.0
  %4124 = vmatpush1.msra.mxu0 %v67
  %4125 = vmatprep.subr.mxu0 0.0
  %4126 = vmatpush1.msra.mxu0 0.0
  %4127 = vmatprep.subr.mxu0 0.0
  %4128 = vmatpush1.msra.mxu0 0.0
  %4129 = vmatprep.subr.mxu0 0.0
  %4130 = vmatpush1.msra.mxu0 0.0
  %4131 = vmatprep.subr.mxu0 0.0
  %4132 = vmatpush1.msra.mxu0 0.0
  %4133 = vmatprep.subr.mxu0 0.0
  %4134 = vmatpush1.msra.mxu0 0.0
  %4135 = vmatprep.subr.mxu0 0.0
  %4136 = vmatpush1.msra.mxu0 0.0
  %4137 = vmatprep.subr.mxu0 0.0
  %4138 = vmatpush1.msra.mxu0 0.0
  %4139 = vmatprep.subr.mxu0 0.0
  %4140 = vmatpush1.msra.mxu0 0.0
  %4141 = vmatprep.subr.mxu0 0.0
  %4142 = vmatpush1.msra.mxu0 0.0
  %4143 = vmatprep.subr.mxu0 0.0
  %4144 = vmatpush1.msra.mxu0 0.0
  %4145 = vmatprep.subr.mxu0 0.0
  %4146 = vmatpush1.msra.mxu0 0.0
  %4147 = vmatprep.subr.mxu0 0.0
  %4148 = vmatpush1.msra.mxu0 0.0
  %4149 = vmatprep.subr.mxu0 0.0
  %4150 = vmatpush1.msra.mxu0 0.0
  %4151 = vmatprep.subr.mxu0 0.0
  %4152 = vmatpush1.msra.mxu0 0.0
  %4153 = vmatprep.subr.mxu0 0.0
  %4154 = vmatpush1.msra.mxu0 0.0
  %4155 = vmatprep.subr.mxu0 0.0
  %4156 = vmatpush1.msra.mxu0 0.0
  %4157 = vmatprep.subr.mxu0 0.0
  %4158 = vmatpush1.msra.mxu0 0.0
  %4159 = vmatprep.subr.mxu0 0.0
  %4160 = vmatpush1.msra.mxu0 0.0
  %4161 = vmatprep.subr.mxu0 0.0
  %4162 = vmatpush1.msra.mxu0 0.0
  %4163 = vmatprep.subr.mxu0 0.0
  %4164 = vmatpush1.msra.mxu0 0.0
  %4165 = vmatprep.subr.mxu0 0.0
  %4166 = vmatpush1.msra.mxu0 0.0
  %4167 = vmatprep.subr.mxu0 0.0
  %4168 = vmatpush1.msra.mxu0 0.0
  %4169 = vmatprep.subr.mxu0 0.0
  %4170 = vmatpush1.msra.mxu0 0.0
  %4171 = vmatprep.subr.mxu0 0.0
  %4172 = vmatpush1.msra.mxu0 0.0
  %4173 = vmatprep.subr.mxu0 0.0
  %4174 = vmatpush1.msra.mxu0 0.0
  %4175 = vmatprep.subr.mxu0 0.0
  %4176 = vmatpush1.msra.mxu0 0.0
  %4177 = vmatprep.subr.mxu0 0.0
  %4178 = vmatpush1.msra.mxu0 0.0
  %4179 = vmatprep.subr.mxu0 0.0
  %4180 = vmatpush1.msra.mxu0 0.0
  %4181 = vmatprep.mubr.f32.mxu0 0.0
  %4182 = vmatmul.mubr.f32.gmra.mrb[0].mxu0 %v3875
  %v4183 = vpop.f32.mrb[0].mxu0
  %v4184 = vadd.f32 0.0, %v4183
  %v4185 = vpop.f32.mrb[0].mxu0
  %4186 = vdwg.mxu0
  %v4187 = vadd.f32 %v4114, %v4184
  %v4188 = vxor.u32 %v4187, 2147483648
  %v4189 = vmul.f32 %v4188, 1.442695
  %v4190 = vpow.pop %v4189
  %v4191 = vadd.f32 %v4190, 1.0
  %v4192 = vrcp.pop %v4191
  %v4193 = vmul.f32 1.0, %v4192
  %v4194 = vmul.f32 %v4193, 2.0
  %v4195 = vsub.f32 %v4194, 1.0
  %v4196 = vsel %vm93, %v4195, %v4193
  %v4197 = vmul.f32 %v4196, %v3444
  %4199 = vrot.lane.b32.xlu0 %v4196, 64
  %v4200 = vpop.permute.xlu0 %4199
  %v4202 = vmul.f32 %v4196, %v4200
  %4204 = vrot.lane.b32.xlu0 %v4202, 32
  %v4205 = vpop.permute.xlu0 %4204
  %v4207 = vadd.f32 %v4197, %v4205
  %v4208 = vtanh.pop %v4207
  %4210 = vrot.lane.b32.xlu0 %v4208, 64
  %v4211 = vpop.permute.xlu0 %4210
  %v4213 = vmul.f32 %v4196, %v4211
  %4215 = vrot.lane.b32.xlu0 %v3871, 32
  %v4216 = vpop.permute.xlu0 %4215
  %v4217 = vsel %vm182, %v4216, 0
  %4219 = vmatprep.subr.mxu0 0.0
  %4220 = vmatpush1.msra.mxu0 %v60
  %4221 = vmatprep.subr.mxu0 0.0
  %4222 = vmatpush1.msra.mxu0 %v61
  %4223 = vmatprep.subr.mxu0 0.0
  %4224 = vmatpush1.msra.mxu0 %v62
  %4225 = vmatprep.subr.mxu0 0.0
  %4226 = vmatpush1.msra.mxu0 %v63
  %4227 = vmatprep.subr.mxu0 0.0
  %4228 = vmatpush1.msra.mxu0 0.0
  %4229 = vmatprep.subr.mxu0 0.0
  %4230 = vmatpush1.msra.mxu0 0.0
  %4231 = vmatprep.subr.mxu0 0.0
  %4232 = vmatpush1.msra.mxu0 0.0
  %4233 = vmatprep.subr.mxu0 0.0
  %4234 = vmatpush1.msra.mxu0 0.0
  %4235 = vmatprep.subr.mxu0 0.0
  %4236 = vmatpush1.msra.mxu0 0.0
  %4237 = vmatprep.subr.mxu0 0.0
  %4238 = vmatpush1.msra.mxu0 0.0
  %4239 = vmatprep.subr.mxu0 0.0
  %4240 = vmatpush1.msra.mxu0 0.0
  %4241 = vmatprep.subr.mxu0 0.0
  %4242 = vmatpush1.msra.mxu0 0.0
  %4243 = vmatprep.subr.mxu0 0.0
  %4244 = vmatpush1.msra.mxu0 0.0
  %4245 = vmatprep.subr.mxu0 0.0
  %4246 = vmatpush1.msra.mxu0 0.0
  %4247 = vmatprep.subr.mxu0 0.0
  %4248 = vmatpush1.msra.mxu0 0.0
  %4249 = vmatprep.subr.mxu0 0.0
  %4250 = vmatpush1.msra.mxu0 0.0
  %4251 = vmatprep.subr.mxu0 0.0
  %4252 = vmatpush1.msra.mxu0 0.0
  %4253 = vmatprep.subr.mxu0 0.0
  %4254 = vmatpush1.msra.mxu0 0.0
  %4255 = vmatprep.subr.mxu0 0.0
  %4256 = vmatpush1.msra.mxu0 0.0
  %4257 = vmatprep.subr.mxu0 0.0
  %4258 = vmatpush1.msra.mxu0 0.0
  %4259 = vmatprep.subr.mxu0 0.0
  %4260 = vmatpush1.msra.mxu0 0.0
  %4261 = vmatprep.subr.mxu0 0.0
  %4262 = vmatpush1.msra.mxu0 0.0
  %4263 = vmatprep.subr.mxu0 0.0
  %4264 = vmatpush1.msra.mxu0 0.0
  %4265 = vmatprep.subr.mxu0 0.0
  %4266 = vmatpush1.msra.mxu0 0.0
  %4267 = vmatprep.subr.mxu0 0.0
  %4268 = vmatpush1.msra.mxu0 0.0
  %4269 = vmatprep.subr.mxu0 0.0
  %4270 = vmatpush1.msra.mxu0 0.0
  %4271 = vmatprep.subr.mxu0 0.0
  %4272 = vmatpush1.msra.mxu0 0.0
  %4273 = vmatprep.subr.mxu0 0.0
  %4274 = vmatpush1.msra.mxu0 0.0
  %4275 = vmatprep.subr.mxu0 0.0
  %4276 = vmatpush1.msra.mxu0 0.0
  %4277 = vmatprep.subr.mxu0 0.0
  %4278 = vmatpush1.msra.mxu0 0.0
  %4279 = vmatprep.subr.mxu0 0.0
  %4280 = vmatpush1.msra.mxu0 0.0
  %4281 = vmatprep.subr.mxu0 0.0
  %4282 = vmatpush1.msra.mxu0 0.0
  %4283 = vmatprep.mubr.f32.mxu0 0.0
  %4284 = vmatmul.mubr.f32.gmra.mrb[0].mxu0 %v4217
  %v4285 = vpop.f32.mrb[0].mxu0
  %v4286 = vadd.f32 %v1155, %v4285
  %v4287 = vpop.f32.mrb[0].mxu0
  %4288 = vdwg.mxu0
  %4289 = vmatprep.subr.mxu0 0.0
  %4290 = vmatpush1.msra.mxu0 %v76
  %4291 = vmatprep.subr.mxu0 0.0
  %4292 = vmatpush1.msra.mxu0 %v77
  %4293 = vmatprep.subr.mxu0 0.0
  %4294 = vmatpush1.msra.mxu0 %v78
  %4295 = vmatprep.subr.mxu0 0.0
  %4296 = vmatpush1.msra.mxu0 %v79
  %4297 = vmatprep.subr.mxu0 0.0
  %4298 = vmatpush1.msra.mxu0 0.0
  %4299 = vmatprep.subr.mxu0 0.0
  %4300 = vmatpush1.msra.mxu0 0.0
  %4301 = vmatprep.subr.mxu0 0.0
  %4302 = vmatpush1.msra.mxu0 0.0
  %4303 = vmatprep.subr.mxu0 0.0
  %4304 = vmatpush1.msra.mxu0 0.0
  %4305 = vmatprep.subr.mxu0 0.0
  %4306 = vmatpush1.msra.mxu0 0.0
  %4307 = vmatprep.subr.mxu0 0.0
  %4308 = vmatpush1.msra.mxu0 0.0
  %4309 = vmatprep.subr.mxu0 0.0
  %4310 = vmatpush1.msra.mxu0 0.0
  %4311 = vmatprep.subr.mxu0 0.0
  %4312 = vmatpush1.msra.mxu0 0.0
  %4313 = vmatprep.subr.mxu0 0.0
  %4314 = vmatpush1.msra.mxu0 0.0
  %4315 = vmatprep.subr.mxu0 0.0
  %4316 = vmatpush1.msra.mxu0 0.0
  %4317 = vmatprep.subr.mxu0 0.0
  %4318 = vmatpush1.msra.mxu0 0.0
  %4319 = vmatprep.subr.mxu0 0.0
  %4320 = vmatpush1.msra.mxu0 0.0
  %4321 = vmatprep.subr.mxu0 0.0
  %4322 = vmatpush1.msra.mxu0 0.0
  %4323 = vmatprep.subr.mxu0 0.0
  %4324 = vmatpush1.msra.mxu0 0.0
  %4325 = vmatprep.subr.mxu0 0.0
  %4326 = vmatpush1.msra.mxu0 0.0
  %4327 = vmatprep.subr.mxu0 0.0
  %4328 = vmatpush1.msra.mxu0 0.0
  %4329 = vmatprep.subr.mxu0 0.0
  %4330 = vmatpush1.msra.mxu0 0.0
  %4331 = vmatprep.subr.mxu0 0.0
  %4332 = vmatpush1.msra.mxu0 0.0
  %4333 = vmatprep.subr.mxu0 0.0
  %4334 = vmatpush1.msra.mxu0 0.0
  %4335 = vmatprep.subr.mxu0 0.0
  %4336 = vmatpush1.msra.mxu0 0.0
  %4337 = vmatprep.subr.mxu0 0.0
  %4338 = vmatpush1.msra.mxu0 0.0
  %4339 = vmatprep.subr.mxu0 0.0
  %4340 = vmatpush1.msra.mxu0 0.0
  %4341 = vmatprep.subr.mxu0 0.0
  %4342 = vmatpush1.msra.mxu0 0.0
  %4343 = vmatprep.subr.mxu0 0.0
  %4344 = vmatpush1.msra.mxu0 0.0
  %4345 = vmatprep.subr.mxu0 0.0
  %4346 = vmatpush1.msra.mxu0 0.0
  %4347 = vmatprep.subr.mxu0 0.0
  %4348 = vmatpush1.msra.mxu0 0.0
  %4349 = vmatprep.subr.mxu0 0.0
  %4350 = vmatpush1.msra.mxu0 0.0
  %4351 = vmatprep.subr.mxu0 0.0
  %4352 = vmatpush1.msra.mxu0 0.0
  %4353 = vmatprep.mubr.f32.mxu0 0.0
  %4354 = vmatmul.mubr.f32.gmra.mrb[0].mxu0 %v3626
  %v4355 = vpop.f32.mrb[0].mxu0
  %v4356 = vadd.f32 0.0, %v4355
  %v4357 = vpop.f32.mrb[0].mxu0
  %4358 = vdwg.mxu0
  %v4359 = vadd.f32 %v4286, %v4356
  %v4360 = vxor.u32 %v4359, 2147483648
  %v4361 = vmul.f32 %v4360, 1.442695
  %v4362 = vpow.pop %v4361
  %v4363 = vadd.f32 %v4362, 1.0
  %v4364 = vrcp.pop %v4363
  %v4365 = vmul.f32 1.0, %v4364
  %v4366 = vmul.f32 %v4365, 2.0
  %v4367 = vsub.f32 %v4366, 1.0
  %v4368 = vsel %vm93, %v4367, %v4365
  %v4369 = vmul.f32 %v4368, %v3616
  %4371 = vrot.lane.b32.xlu0 %v4368, 64
  %v4372 = vpop.permute.xlu0 %4371
  %v4374 = vmul.f32 %v4368, %v4372
  %4376 = vrot.lane.b32.xlu0 %v4374, 32
  %v4377 = vpop.permute.xlu0 %4376
  %v4379 = vadd.f32 %v4369, %v4377
  %v4380 = vtanh.pop %v4379
  %4382 = vrot.lane.b32.xlu0 %v4380, 64
  %v4383 = vpop.permute.xlu0 %4382
  %v4385 = vmul.f32 %v4368, %v4383
  %4387 = vrot.lane.b32.xlu0 %v4385, 32
  %v4388 = vpop.permute.xlu0 %4387
  %v4389 = vsel %vm182, %v4388, 0
  %4391 = vmatprep.subr.mxu0 0.0
  %4392 = vmatpush1.msra.mxu0 %v84
  %4393 = vmatprep.subr.mxu0 0.0
  %4394 = vmatpush1.msra.mxu0 %v85
  %4395 = vmatprep.subr.mxu0 0.0
  %4396 = vmatpush1.msra.mxu0 %v86
  %4397 = vmatprep.subr.mxu0 0.0
  %4398 = vmatpush1.msra.mxu0 %v87
  %4399 = vmatprep.subr.mxu0 0.0
  %4400 = vmatpush1.msra.mxu0 0.0
  %4401 = vmatprep.subr.mxu0 0.0
  %4402 = vmatpush1.msra.mxu0 0.0
  %4403 = vmatprep.subr.mxu0 0.0
  %4404 = vmatpush1.msra.mxu0 0.0
  %4405 = vmatprep.subr.mxu0 0.0
  %4406 = vmatpush1.msra.mxu0 0.0
  %4407 = vmatprep.subr.mxu0 0.0
  %4408 = vmatpush1.msra.mxu0 0.0
  %4409 = vmatprep.subr.mxu0 0.0
  %4410 = vmatpush1.msra.mxu0 0.0
  %4411 = vmatprep.subr.mxu0 0.0
  %4412 = vmatpush1.msra.mxu0 0.0
  %4413 = vmatprep.subr.mxu0 0.0
  %4414 = vmatpush1.msra.mxu0 0.0
  %4415 = vmatprep.subr.mxu0 0.0
  %4416 = vmatpush1.msra.mxu0 0.0
  %4417 = vmatprep.subr.mxu0 0.0
  %4418 = vmatpush1.msra.mxu0 0.0
  %4419 = vmatprep.subr.mxu0 0.0
  %4420 = vmatpush1.msra.mxu0 0.0
  %4421 = vmatprep.subr.mxu0 0.0
  %4422 = vmatpush1.msra.mxu0 0.0
  %4423 = vmatprep.subr.mxu0 0.0
  %4424 = vmatpush1.msra.mxu0 0.0
  %4425 = vmatprep.subr.mxu0 0.0
  %4426 = vmatpush1.msra.mxu0 0.0
  %4427 = vmatprep.subr.mxu0 0.0
  %4428 = vmatpush1.msra.mxu0 0.0
  %4429 = vmatprep.subr.mxu0 0.0
  %4430 = vmatpush1.msra.mxu0 0.0
  %4431 = vmatprep.subr.mxu0 0.0
  %4432 = vmatpush1.msra.mxu0 0.0
  %4433 = vmatprep.subr.mxu0 0.0
  %4434 = vmatpush1.msra.mxu0 0.0
  %4435 = vmatprep.subr.mxu0 0.0
  %4436 = vmatpush1.msra.mxu0 0.0
  %4437 = vmatprep.subr.mxu0 0.0
  %4438 = vmatpush1.msra.mxu0 0.0
  %4439 = vmatprep.subr.mxu0 0.0
  %4440 = vmatpush1.msra.mxu0 0.0
  %4441 = vmatprep.subr.mxu0 0.0
  %4442 = vmatpush1.msra.mxu0 0.0
  %4443 = vmatprep.subr.mxu0 0.0
  %4444 = vmatpush1.msra.mxu0 0.0
  %4445 = vmatprep.subr.mxu0 0.0
  %4446 = vmatpush1.msra.mxu0 0.0
  %4447 = vmatprep.subr.mxu0 0.0
  %4448 = vmatpush1.msra.mxu0 0.0
  %4449 = vmatprep.subr.mxu0 0.0
  %4450 = vmatpush1.msra.mxu0 0.0
  %4451 = vmatprep.subr.mxu0 0.0
  %4452 = vmatpush1.msra.mxu0 0.0
  %4453 = vmatprep.subr.mxu0 0.0
  %4454 = vmatpush1.msra.mxu0 0.0
  %4455 = vmatprep.mubr.f32.mxu0 0.0
  %4456 = vmatmul.mubr.f32.gmra.mrb[0].mxu0 %v4389
  %v4457 = vpop.f32.mrb[0].mxu0
  %v4458 = vadd.f32 %v1333, %v4457
  %v4459 = vpop.f32.mrb[0].mxu0
  %4460 = vdwg.mxu0
  %s4461 = scalar_lea.vmem %s15, 32
  %4462 = vst [vmem:[%s4461] sm:$0xff] %v4458
  %4464 = vrot.lane.b32.xlu0 %v4043, 32
  %v4465 = vpop.permute.xlu0 %4464
  %v4466 = vsel %vm182, %v4465, 0
  %4468 = vmatprep.subr.mxu0 0.0
  %4469 = vmatpush1.msra.mxu0 %v56
  %4470 = vmatprep.subr.mxu0 0.0
  %4471 = vmatpush1.msra.mxu0 %v57
  %4472 = vmatprep.subr.mxu0 0.0
  %4473 = vmatpush1.msra.mxu0 %v58
  %4474 = vmatprep.subr.mxu0 0.0
  %4475 = vmatpush1.msra.mxu0 %v59
  %4476 = vmatprep.subr.mxu0 0.0
  %4477 = vmatpush1.msra.mxu0 0.0
  %4478 = vmatprep.subr.mxu0 0.0
  %4479 = vmatpush1.msra.mxu0 0.0
  %4480 = vmatprep.subr.mxu0 0.0
  %4481 = vmatpush1.msra.mxu0 0.0
  %4482 = vmatprep.subr.mxu0 0.0
  %4483 = vmatpush1.msra.mxu0 0.0
  %4484 = vmatprep.subr.mxu0 0.0
  %4485 = vmatpush1.msra.mxu0 0.0
  %4486 = vmatprep.subr.mxu0 0.0
  %4487 = vmatpush1.msra.mxu0 0.0
  %4488 = vmatprep.subr.mxu0 0.0
  %4489 = vmatpush1.msra.mxu0 0.0
  %4490 = vmatprep.subr.mxu0 0.0
  %4491 = vmatpush1.msra.mxu0 0.0
  %4492 = vmatprep.subr.mxu0 0.0
  %4493 = vmatpush1.msra.mxu0 0.0
  %4494 = vmatprep.subr.mxu0 0.0
  %4495 = vmatpush1.msra.mxu0 0.0
  %4496 = vmatprep.subr.mxu0 0.0
  %4497 = vmatpush1.msra.mxu0 0.0
  %4498 = vmatprep.subr.mxu0 0.0
  %4499 = vmatpush1.msra.mxu0 0.0
  %4500 = vmatprep.subr.mxu0 0.0
  %4501 = vmatpush1.msra.mxu0 0.0
  %4502 = vmatprep.subr.mxu0 0.0
  %4503 = vmatpush1.msra.mxu0 0.0
  %4504 = vmatprep.subr.mxu0 0.0
  %4505 = vmatpush1.msra.mxu0 0.0
  %4506 = vmatprep.subr.mxu0 0.0
  %4507 = vmatpush1.msra.mxu0 0.0
  %4508 = vmatprep.subr.mxu0 0.0
  %4509 = vmatpush1.msra.mxu0 0.0
  %4510 = vmatprep.subr.mxu0 0.0
  %4511 = vmatpush1.msra.mxu0 0.0
  %4512 = vmatprep.subr.mxu0 0.0
  %4513 = vmatpush1.msra.mxu0 0.0
  %4514 = vmatprep.subr.mxu0 0.0
  %4515 = vmatpush1.msra.mxu0 0.0
  %4516 = vmatprep.subr.mxu0 0.0
  %4517 = vmatpush1.msra.mxu0 0.0
  %4518 = vmatprep.subr.mxu0 0.0
  %4519 = vmatpush1.msra.mxu0 0.0
  %4520 = vmatprep.subr.mxu0 0.0
  %4521 = vmatpush1.msra.mxu0 0.0
  %4522 = vmatprep.subr.mxu0 0.0
  %4523 = vmatpush1.msra.mxu0 0.0
  %4524 = vmatprep.subr.mxu0 0.0
  %4525 = vmatpush1.msra.mxu0 0.0
  %4526 = vmatprep.subr.mxu0 0.0
  %4527 = vmatpush1.msra.mxu0 0.0
  %4528 = vmatprep.subr.mxu0 0.0
  %4529 = vmatpush1.msra.mxu0 0.0
  %4530 = vmatprep.subr.mxu0 0.0
  %4531 = vmatpush1.msra.mxu0 0.0
  %4532 = vmatprep.mubr.f32.mxu0 0.0
  %4533 = vmatmul.mubr.f32.gmra.mrb[0].mxu0 %v4466
  %v4534 = vpop.f32.mrb[0].mxu0
  %v4535 = vadd.f32 %v635, %v4534
  %v4536 = vpop.f32.mrb[0].mxu0
  %4537 = vdwg.mxu0
  %4538 = vmatprep.subr.mxu0 0.0
  %4539 = vmatpush1.msra.mxu0 %v72
  %4540 = vmatprep.subr.mxu0 0.0
  %4541 = vmatpush1.msra.mxu0 %v73
  %4542 = vmatprep.subr.mxu0 0.0
  %4543 = vmatpush1.msra.mxu0 %v74
  %4544 = vmatprep.subr.mxu0 0.0
  %4545 = vmatpush1.msra.mxu0 %v75
  %4546 = vmatprep.subr.mxu0 0.0
  %4547 = vmatpush1.msra.mxu0 0.0
  %4548 = vmatprep.subr.mxu0 0.0
  %4549 = vmatpush1.msra.mxu0 0.0
  %4550 = vmatprep.subr.mxu0 0.0
  %4551 = vmatpush1.msra.mxu0 0.0
  %4552 = vmatprep.subr.mxu0 0.0
  %4553 = vmatpush1.msra.mxu0 0.0
  %4554 = vmatprep.subr.mxu0 0.0
  %4555 = vmatpush1.msra.mxu0 0.0
  %4556 = vmatprep.subr.mxu0 0.0
  %4557 = vmatpush1.msra.mxu0 0.0
  %4558 = vmatprep.subr.mxu0 0.0
  %4559 = vmatpush1.msra.mxu0 0.0
  %4560 = vmatprep.subr.mxu0 0.0
  %4561 = vmatpush1.msra.mxu0 0.0
  %4562 = vmatprep.subr.mxu0 0.0
  %4563 = vmatpush1.msra.mxu0 0.0
  %4564 = vmatprep.subr.mxu0 0.0
  %4565 = vmatpush1.msra.mxu0 0.0
  %4566 = vmatprep.subr.mxu0 0.0
  %4567 = vmatpush1.msra.mxu0 0.0
  %4568 = vmatprep.subr.mxu0 0.0
  %4569 = vmatpush1.msra.mxu0 0.0
  %4570 = vmatprep.subr.mxu0 0.0
  %4571 = vmatpush1.msra.mxu0 0.0
  %4572 = vmatprep.subr.mxu0 0.0
  %4573 = vmatpush1.msra.mxu0 0.0
  %4574 = vmatprep.subr.mxu0 0.0
  %4575 = vmatpush1.msra.mxu0 0.0
  %4576 = vmatprep.subr.mxu0 0.0
  %4577 = vmatpush1.msra.mxu0 0.0
  %4578 = vmatprep.subr.mxu0 0.0
  %4579 = vmatpush1.msra.mxu0 0.0
  %4580 = vmatprep.subr.mxu0 0.0
  %4581 = vmatpush1.msra.mxu0 0.0
  %4582 = vmatprep.subr.mxu0 0.0
  %4583 = vmatpush1.msra.mxu0 0.0
  %4584 = vmatprep.subr.mxu0 0.0
  %4585 = vmatpush1.msra.mxu0 0.0
  %4586 = vmatprep.subr.mxu0 0.0
  %4587 = vmatpush1.msra.mxu0 0.0
  %4588 = vmatprep.subr.mxu0 0.0
  %4589 = vmatpush1.msra.mxu0 0.0
  %4590 = vmatprep.subr.mxu0 0.0
  %4591 = vmatpush1.msra.mxu0 0.0
  %4592 = vmatprep.subr.mxu0 0.0
  %4593 = vmatpush1.msra.mxu0 0.0
  %4594 = vmatprep.subr.mxu0 0.0
  %4595 = vmatpush1.msra.mxu0 0.0
  %4596 = vmatprep.subr.mxu0 0.0
  %4597 = vmatpush1.msra.mxu0 0.0
  %4598 = vmatprep.subr.mxu0 0.0
  %4599 = vmatpush1.msra.mxu0 0.0
  %4600 = vmatprep.subr.mxu0 0.0
  %4601 = vmatpush1.msra.mxu0 0.0
  %4602 = vmatprep.mubr.f32.mxu0 0.0
  %4603 = vmatmul.mubr.f32.gmra.mrb[0].mxu0 %v4217
  %v4604 = vpop.f32.mrb[0].mxu0
  %v4605 = vadd.f32 0.0, %v4604
  %v4606 = vpop.f32.mrb[0].mxu0
  %4607 = vdwg.mxu0
  %v4608 = vadd.f32 %v4535, %v4605
  %v4609 = vxor.u32 %v4608, 2147483648
  %v4610 = vmul.f32 %v4609, 1.442695
  %v4611 = vpow.pop %v4610
  %v4612 = vadd.f32 %v4611, 1.0
  %v4613 = vrcp.pop %v4612
  %v4614 = vmul.f32 1.0, %v4613
  %v4615 = vmul.f32 %v4614, 2.0
  %v4616 = vsub.f32 %v4615, 1.0
  %v4617 = vsel %vm93, %v4616, %v4614
  %v4618 = vmul.f32 %v4617, %v3865
  %4620 = vrot.lane.b32.xlu0 %v4617, 64
  %v4621 = vpop.permute.xlu0 %4620
  %v4623 = vmul.f32 %v4617, %v4621
  %4625 = vrot.lane.b32.xlu0 %v4623, 32
  %v4626 = vpop.permute.xlu0 %4625
  %v4628 = vadd.f32 %v4618, %v4626
  %v4629 = vtanh.pop %v4628
  %4631 = vrot.lane.b32.xlu0 %v4629, 64
  %v4632 = vpop.permute.xlu0 %4631
  %v4634 = vmul.f32 %v4617, %v4632
  %4636 = vrot.lane.b32.xlu0 %v4213, 32
  %v4637 = vpop.permute.xlu0 %4636
  %v4638 = vsel %vm182, %v4637, 0
  %4640 = vmatprep.subr.mxu0 0.0
  %4641 = vmatpush1.msra.mxu0 %v52
  %4642 = vmatprep.subr.mxu0 0.0
  %4643 = vmatpush1.msra.mxu0 %v53
  %4644 = vmatprep.subr.mxu0 0.0
  %4645 = vmatpush1.msra.mxu0 %v54
  %4646 = vmatprep.subr.mxu0 0.0
  %4647 = vmatpush1.msra.mxu0 %v55
  %4648 = vmatprep.subr.mxu0 0.0
  %4649 = vmatpush1.msra.mxu0 0.0
  %4650 = vmatprep.subr.mxu0 0.0
  %4651 = vmatpush1.msra.mxu0 0.0
  %4652 = vmatprep.subr.mxu0 0.0
  %4653 = vmatpush1.msra.mxu0 0.0
  %4654 = vmatprep.subr.mxu0 0.0
  %4655 = vmatpush1.msra.mxu0 0.0
  %4656 = vmatprep.subr.mxu0 0.0
  %4657 = vmatpush1.msra.mxu0 0.0
  %4658 = vmatprep.subr.mxu0 0.0
  %4659 = vmatpush1.msra.mxu0 0.0
  %4660 = vmatprep.subr.mxu0 0.0
  %4661 = vmatpush1.msra.mxu0 0.0
  %4662 = vmatprep.subr.mxu0 0.0
  %4663 = vmatpush1.msra.mxu0 0.0
  %4664 = vmatprep.subr.mxu0 0.0
  %4665 = vmatpush1.msra.mxu0 0.0
  %4666 = vmatprep.subr.mxu0 0.0
  %4667 = vmatpush1.msra.mxu0 0.0
  %4668 = vmatprep.subr.mxu0 0.0
  %4669 = vmatpush1.msra.mxu0 0.0
  %4670 = vmatprep.subr.mxu0 0.0
  %4671 = vmatpush1.msra.mxu0 0.0
  %4672 = vmatprep.subr.mxu0 0.0
  %4673 = vmatpush1.msra.mxu0 0.0
  %4674 = vmatprep.subr.mxu0 0.0
  %4675 = vmatpush1.msra.mxu0 0.0
  %4676 = vmatprep.subr.mxu0 0.0
  %4677 = vmatpush1.msra.mxu0 0.0
  %4678 = vmatprep.subr.mxu0 0.0
  %4679 = vmatpush1.msra.mxu0 0.0
  %4680 = vmatprep.subr.mxu0 0.0
  %4681 = vmatpush1.msra.mxu0 0.0
  %4682 = vmatprep.subr.mxu0 0.0
  %4683 = vmatpush1.msra.mxu0 0.0
  %4684 = vmatprep.subr.mxu0 0.0
  %4685 = vmatpush1.msra.mxu0 0.0
  %4686 = vmatprep.subr.mxu0 0.0
  %4687 = vmatpush1.msra.mxu0 0.0
  %4688 = vmatprep.subr.mxu0 0.0
  %4689 = vmatpush1.msra.mxu0 0.0
  %4690 = vmatprep.subr.mxu0 0.0
  %4691 = vmatpush1.msra.mxu0 0.0
  %4692 = vmatprep.subr.mxu0 0.0
  %4693 = vmatpush1.msra.mxu0 0.0
  %4694 = vmatprep.subr.mxu0 0.0
  %4695 = vmatpush1.msra.mxu0 0.0
  %4696 = vmatprep.subr.mxu0 0.0
  %4697 = vmatpush1.msra.mxu0 0.0
  %4698 = vmatprep.subr.mxu0 0.0
  %4699 = vmatpush1.msra.mxu0 0.0
  %4700 = vmatprep.subr.mxu0 0.0
  %4701 = vmatpush1.msra.mxu0 0.0
  %4702 = vmatprep.subr.mxu0 0.0
  %4703 = vmatpush1.msra.mxu0 0.0
  %4704 = vmatprep.mubr.f32.mxu0 0.0
  %4705 = vmatmul.mubr.f32.gmra.mrb[0].mxu0 %v4638
  %v4706 = vpop.f32.mrb[0].mxu0
  %v4707 = vadd.f32 %v287, %v4706
  %v4708 = vpop.f32.mrb[0].mxu0
  %4709 = vdwg.mxu0
  %4710 = vmatprep.subr.mxu0 0.0
  %4711 = vmatpush1.msra.mxu0 %v68
  %4712 = vmatprep.subr.mxu0 0.0
  %4713 = vmatpush1.msra.mxu0 %v69
  %4714 = vmatprep.subr.mxu0 0.0
  %4715 = vmatpush1.msra.mxu0 %v70
  %4716 = vmatprep.subr.mxu0 0.0
  %4717 = vmatpush1.msra.mxu0 %v71
  %4718 = vmatprep.subr.mxu0 0.0
  %4719 = vmatpush1.msra.mxu0 0.0
  %4720 = vmatprep.subr.mxu0 0.0
  %4721 = vmatpush1.msra.mxu0 0.0
  %4722 = vmatprep.subr.mxu0 0.0
  %4723 = vmatpush1.msra.mxu0 0.0
  %4724 = vmatprep.subr.mxu0 0.0
  %4725 = vmatpush1.msra.mxu0 0.0
  %4726 = vmatprep.subr.mxu0 0.0
  %4727 = vmatpush1.msra.mxu0 0.0
  %4728 = vmatprep.subr.mxu0 0.0
  %4729 = vmatpush1.msra.mxu0 0.0
  %4730 = vmatprep.subr.mxu0 0.0
  %4731 = vmatpush1.msra.mxu0 0.0
  %4732 = vmatprep.subr.mxu0 0.0
  %4733 = vmatpush1.msra.mxu0 0.0
  %4734 = vmatprep.subr.mxu0 0.0
  %4735 = vmatpush1.msra.mxu0 0.0
  %4736 = vmatprep.subr.mxu0 0.0
  %4737 = vmatpush1.msra.mxu0 0.0
  %4738 = vmatprep.subr.mxu0 0.0
  %4739 = vmatpush1.msra.mxu0 0.0
  %4740 = vmatprep.subr.mxu0 0.0
  %4741 = vmatpush1.msra.mxu0 0.0
  %4742 = vmatprep.subr.mxu0 0.0
  %4743 = vmatpush1.msra.mxu0 0.0
  %4744 = vmatprep.subr.mxu0 0.0
  %4745 = vmatpush1.msra.mxu0 0.0
  %4746 = vmatprep.subr.mxu0 0.0
  %4747 = vmatpush1.msra.mxu0 0.0
  %4748 = vmatprep.subr.mxu0 0.0
  %4749 = vmatpush1.msra.mxu0 0.0
  %4750 = vmatprep.subr.mxu0 0.0
  %4751 = vmatpush1.msra.mxu0 0.0
  %4752 = vmatprep.subr.mxu0 0.0
  %4753 = vmatpush1.msra.mxu0 0.0
  %4754 = vmatprep.subr.mxu0 0.0
  %4755 = vmatpush1.msra.mxu0 0.0
  %4756 = vmatprep.subr.mxu0 0.0
  %4757 = vmatpush1.msra.mxu0 0.0
  %4758 = vmatprep.subr.mxu0 0.0
  %4759 = vmatpush1.msra.mxu0 0.0
  %4760 = vmatprep.subr.mxu0 0.0
  %4761 = vmatpush1.msra.mxu0 0.0
  %4762 = vmatprep.subr.mxu0 0.0
  %4763 = vmatpush1.msra.mxu0 0.0
  %4764 = vmatprep.subr.mxu0 0.0
  %4765 = vmatpush1.msra.mxu0 0.0
  %4766 = vmatprep.subr.mxu0 0.0
  %4767 = vmatpush1.msra.mxu0 0.0
  %4768 = vmatprep.subr.mxu0 0.0
  %4769 = vmatpush1.msra.mxu0 0.0
  %4770 = vmatprep.subr.mxu0 0.0
  %4771 = vmatpush1.msra.mxu0 0.0
  %4772 = vmatprep.subr.mxu0 0.0
  %4773 = vmatpush1.msra.mxu0 0.0
  %4774 = vmatprep.mubr.f32.mxu0 0.0
  %4775 = vmatmul.mubr.f32.gmra.mrb[0].mxu0 %v4466
  %v4776 = vpop.f32.mrb[0].mxu0
  %v4777 = vadd.f32 0.0, %v4776
  %v4778 = vpop.f32.mrb[0].mxu0
  %4779 = vdwg.mxu0
  %v4780 = vadd.f32 %v4707, %v4777
  %v4781 = vxor.u32 %v4780, 2147483648
  %v4782 = vmul.f32 %v4781, 1.442695
  %v4783 = vpow.pop %v4782
  %v4784 = vadd.f32 %v4783, 1.0
  %v4785 = vrcp.pop %v4784
  %v4786 = vmul.f32 1.0, %v4785
  %v4787 = vmul.f32 %v4786, 2.0
  %v4788 = vsub.f32 %v4787, 1.0
  %v4789 = vsel %vm93, %v4788, %v4786
  %v4790 = vmul.f32 %v4789, %v4037
  %4792 = vrot.lane.b32.xlu0 %v4789, 64
  %v4793 = vpop.permute.xlu0 %4792
  %v4795 = vmul.f32 %v4789, %v4793
  %4797 = vrot.lane.b32.xlu0 %v4795, 32
  %v4798 = vpop.permute.xlu0 %4797
  %v4800 = vadd.f32 %v4790, %v4798
  %v4801 = vtanh.pop %v4800
  %4803 = vrot.lane.b32.xlu0 %v4801, 64
  %v4804 = vpop.permute.xlu0 %4803
  %v4806 = vmul.f32 %v4789, %v4804
  %v4808 = vsel %vm108, %v101, 0
  %4810 = vmatprep.subr.mxu0 0.0
  %4811 = vmatpush1.msra.mxu0 %v50
  %4812 = vmatprep.subr.mxu0 0.0
  %4813 = vmatpush1.msra.mxu0 %v51
  %4814 = vmatprep.subr.mxu0 0.0
  %4815 = vmatpush1.msra.mxu0 0.0
  %4816 = vmatprep.subr.mxu0 0.0
  %4817 = vmatpush1.msra.mxu0 0.0
  %4818 = vmatprep.subr.mxu0 0.0
  %4819 = vmatpush1.msra.mxu0 0.0
  %4820 = vmatprep.subr.mxu0 0.0
  %4821 = vmatpush1.msra.mxu0 0.0
  %4822 = vmatprep.subr.mxu0 0.0
  %4823 = vmatpush1.msra.mxu0 0.0
  %4824 = vmatprep.subr.mxu0 0.0
  %4825 = vmatpush1.msra.mxu0 0.0
  %4826 = vmatprep.subr.mxu0 0.0
  %4827 = vmatpush1.msra.mxu0 0.0
  %4828 = vmatprep.subr.mxu0 0.0
  %4829 = vmatpush1.msra.mxu0 0.0
  %4830 = vmatprep.subr.mxu0 0.0
  %4831 = vmatpush1.msra.mxu0 0.0
  %4832 = vmatprep.subr.mxu0 0.0
  %4833 = vmatpush1.msra.mxu0 0.0
  %4834 = vmatprep.subr.mxu0 0.0
  %4835 = vmatpush1.msra.mxu0 0.0
  %4836 = vmatprep.subr.mxu0 0.0
  %4837 = vmatpush1.msra.mxu0 0.0
  %4838 = vmatprep.subr.mxu0 0.0
  %4839 = vmatpush1.msra.mxu0 0.0
  %4840 = vmatprep.subr.mxu0 0.0
  %4841 = vmatpush1.msra.mxu0 0.0
  %4842 = vmatprep.subr.mxu0 0.0
  %4843 = vmatpush1.msra.mxu0 0.0
  %4844 = vmatprep.subr.mxu0 0.0
  %4845 = vmatpush1.msra.mxu0 0.0
  %4846 = vmatprep.subr.mxu0 0.0
  %4847 = vmatpush1.msra.mxu0 0.0
  %4848 = vmatprep.subr.mxu0 0.0
  %4849 = vmatpush1.msra.mxu0 0.0
  %4850 = vmatprep.subr.mxu0 0.0
  %4851 = vmatpush1.msra.mxu0 0.0
  %4852 = vmatprep.subr.mxu0 0.0
  %4853 = vmatpush1.msra.mxu0 0.0
  %4854 = vmatprep.subr.mxu0 0.0
  %4855 = vmatpush1.msra.mxu0 0.0
  %4856 = vmatprep.subr.mxu0 0.0
  %4857 = vmatpush1.msra.mxu0 0.0
  %4858 = vmatprep.subr.mxu0 0.0
  %4859 = vmatpush1.msra.mxu0 0.0
  %4860 = vmatprep.subr.mxu0 0.0
  %4861 = vmatpush1.msra.mxu0 0.0
  %4862 = vmatprep.subr.mxu0 0.0
  %4863 = vmatpush1.msra.mxu0 0.0
  %4864 = vmatprep.subr.mxu0 0.0
  %4865 = vmatpush1.msra.mxu0 0.0
  %4866 = vmatprep.subr.mxu0 0.0
  %4867 = vmatpush1.msra.mxu0 0.0
  %4868 = vmatprep.subr.mxu0 0.0
  %4869 = vmatpush1.msra.mxu0 0.0
  %4870 = vmatprep.subr.mxu0 0.0
  %4871 = vmatpush1.msra.mxu0 0.0
  %4872 = vmatprep.subr.mxu0 0.0
  %4873 = vmatpush1.msra.mxu0 0.0
  %4874 = vmatprep.mubr.f32.mxu0 0.0
  %4875 = vmatmul.mubr.f32.gmra.mrb[0].mxu0 %v4808
  %v4876 = vpop.f32.mrb[0].mxu0
  %v4877 = vadd.f32 %v106, %v4876
  %v4878 = vpop.f32.mrb[0].mxu0
  %4879 = vdwg.mxu0
  %4880 = vmatprep.subr.mxu0 0.0
  %4881 = vmatpush1.msra.mxu0 %v64
  %4882 = vmatprep.subr.mxu0 0.0
  %4883 = vmatpush1.msra.mxu0 %v65
  %4884 = vmatprep.subr.mxu0 0.0
  %4885 = vmatpush1.msra.mxu0 %v66
  %4886 = vmatprep.subr.mxu0 0.0
  %4887 = vmatpush1.msra.mxu0 %v67
  %4888 = vmatprep.subr.mxu0 0.0
  %4889 = vmatpush1.msra.mxu0 0.0
  %4890 = vmatprep.subr.mxu0 0.0
  %4891 = vmatpush1.msra.mxu0 0.0
  %4892 = vmatprep.subr.mxu0 0.0
  %4893 = vmatpush1.msra.mxu0 0.0
  %4894 = vmatprep.subr.mxu0 0.0
  %4895 = vmatpush1.msra.mxu0 0.0
  %4896 = vmatprep.subr.mxu0 0.0
  %4897 = vmatpush1.msra.mxu0 0.0
  %4898 = vmatprep.subr.mxu0 0.0
  %4899 = vmatpush1.msra.mxu0 0.0
  %4900 = vmatprep.subr.mxu0 0.0
  %4901 = vmatpush1.msra.mxu0 0.0
  %4902 = vmatprep.subr.mxu0 0.0
  %4903 = vmatpush1.msra.mxu0 0.0
  %4904 = vmatprep.subr.mxu0 0.0
  %4905 = vmatpush1.msra.mxu0 0.0
  %4906 = vmatprep.subr.mxu0 0.0
  %4907 = vmatpush1.msra.mxu0 0.0
  %4908 = vmatprep.subr.mxu0 0.0
  %4909 = vmatpush1.msra.mxu0 0.0
  %4910 = vmatprep.subr.mxu0 0.0
  %4911 = vmatpush1.msra.mxu0 0.0
  %4912 = vmatprep.subr.mxu0 0.0
  %4913 = vmatpush1.msra.mxu0 0.0
  %4914 = vmatprep.subr.mxu0 0.0
  %4915 = vmatpush1.msra.mxu0 0.0
  %4916 = vmatprep.subr.mxu0 0.0
  %4917 = vmatpush1.msra.mxu0 0.0
  %4918 = vmatprep.subr.mxu0 0.0
  %4919 = vmatpush1.msra.mxu0 0.0
  %4920 = vmatprep.subr.mxu0 0.0
  %4921 = vmatpush1.msra.mxu0 0.0
  %4922 = vmatprep.subr.mxu0 0.0
  %4923 = vmatpush1.msra.mxu0 0.0
  %4924 = vmatprep.subr.mxu0 0.0
  %4925 = vmatpush1.msra.mxu0 0.0
  %4926 = vmatprep.subr.mxu0 0.0
  %4927 = vmatpush1.msra.mxu0 0.0
  %4928 = vmatprep.subr.mxu0 0.0
  %4929 = vmatpush1.msra.mxu0 0.0
  %4930 = vmatprep.subr.mxu0 0.0
  %4931 = vmatpush1.msra.mxu0 0.0
  %4932 = vmatprep.subr.mxu0 0.0
  %4933 = vmatpush1.msra.mxu0 0.0
  %4934 = vmatprep.subr.mxu0 0.0
  %4935 = vmatpush1.msra.mxu0 0.0
  %4936 = vmatprep.subr.mxu0 0.0
  %4937 = vmatpush1.msra.mxu0 0.0
  %4938 = vmatprep.subr.mxu0 0.0
  %4939 = vmatpush1.msra.mxu0 0.0
  %4940 = vmatprep.subr.mxu0 0.0
  %4941 = vmatpush1.msra.mxu0 0.0
  %4942 = vmatprep.subr.mxu0 0.0
  %4943 = vmatpush1.msra.mxu0 0.0
  %4944 = vmatprep.mubr.f32.mxu0 0.0
  %4945 = vmatmul.mubr.f32.gmra.mrb[0].mxu0 %v4638
  %v4946 = vpop.f32.mrb[0].mxu0
  %v4947 = vadd.f32 0.0, %v4946
  %v4948 = vpop.f32.mrb[0].mxu0
  %4949 = vdwg.mxu0
  %v4950 = vadd.f32 %v4877, %v4947
  %v4951 = vxor.u32 %v4950, 2147483648
  %v4952 = vmul.f32 %v4951, 1.442695
  %v4953 = vpow.pop %v4952
  %v4954 = vadd.f32 %v4953, 1.0
  %v4955 = vrcp.pop %v4954
  %v4956 = vmul.f32 1.0, %v4955
  %v4957 = vmul.f32 %v4956, 2.0
  %v4958 = vsub.f32 %v4957, 1.0
  %v4959 = vsel %vm93, %v4958, %v4956
  %v4960 = vmul.f32 %v4959, %v4207
  %4962 = vrot.lane.b32.xlu0 %v4959, 64
  %v4963 = vpop.permute.xlu0 %4962
  %v4965 = vmul.f32 %v4959, %v4963
  %4967 = vrot.lane.b32.xlu0 %v4965, 32
  %v4968 = vpop.permute.xlu0 %4967
  %v4970 = vadd.f32 %v4960, %v4968
  %v4971 = vtanh.pop %v4970
  %4973 = vrot.lane.b32.xlu0 %v4971, 64
  %v4974 = vpop.permute.xlu0 %4973
  %v4976 = vmul.f32 %v4959, %v4974
  %4978 = vrot.lane.b32.xlu0 %v4634, 32
  %v4979 = vpop.permute.xlu0 %4978
  %v4980 = vsel %vm182, %v4979, 0
  %4982 = vmatprep.subr.mxu0 0.0
  %4983 = vmatpush1.msra.mxu0 %v60
  %4984 = vmatprep.subr.mxu0 0.0
  %4985 = vmatpush1.msra.mxu0 %v61
  %4986 = vmatprep.subr.mxu0 0.0
  %4987 = vmatpush1.msra.mxu0 %v62
  %4988 = vmatprep.subr.mxu0 0.0
  %4989 = vmatpush1.msra.mxu0 %v63
  %4990 = vmatprep.subr.mxu0 0.0
  %4991 = vmatpush1.msra.mxu0 0.0
  %4992 = vmatprep.subr.mxu0 0.0
  %4993 = vmatpush1.msra.mxu0 0.0
  %4994 = vmatprep.subr.mxu0 0.0
  %4995 = vmatpush1.msra.mxu0 0.0
  %4996 = vmatprep.subr.mxu0 0.0
  %4997 = vmatpush1.msra.mxu0 0.0
  %4998 = vmatprep.subr.mxu0 0.0
  %4999 = vmatpush1.msra.mxu0 0.0
  %5000 = vmatprep.subr.mxu0 0.0
  %5001 = vmatpush1.msra.mxu0 0.0
  %5002 = vmatprep.subr.mxu0 0.0
  %5003 = vmatpush1.msra.mxu0 0.0
  %5004 = vmatprep.subr.mxu0 0.0
  %5005 = vmatpush1.msra.mxu0 0.0
  %5006 = vmatprep.subr.mxu0 0.0
  %5007 = vmatpush1.msra.mxu0 0.0
  %5008 = vmatprep.subr.mxu0 0.0
  %5009 = vmatpush1.msra.mxu0 0.0
  %5010 = vmatprep.subr.mxu0 0.0
  %5011 = vmatpush1.msra.mxu0 0.0
  %5012 = vmatprep.subr.mxu0 0.0
  %5013 = vmatpush1.msra.mxu0 0.0
  %5014 = vmatprep.subr.mxu0 0.0
  %5015 = vmatpush1.msra.mxu0 0.0
  %5016 = vmatprep.subr.mxu0 0.0
  %5017 = vmatpush1.msra.mxu0 0.0
  %5018 = vmatprep.subr.mxu0 0.0
  %5019 = vmatpush1.msra.mxu0 0.0
  %5020 = vmatprep.subr.mxu0 0.0
  %5021 = vmatpush1.msra.mxu0 0.0
  %5022 = vmatprep.subr.mxu0 0.0
  %5023 = vmatpush1.msra.mxu0 0.0
  %5024 = vmatprep.subr.mxu0 0.0
  %5025 = vmatpush1.msra.mxu0 0.0
  %5026 = vmatprep.subr.mxu0 0.0
  %5027 = vmatpush1.msra.mxu0 0.0
  %5028 = vmatprep.subr.mxu0 0.0
  %5029 = vmatpush1.msra.mxu0 0.0
  %5030 = vmatprep.subr.mxu0 0.0
  %5031 = vmatpush1.msra.mxu0 0.0
  %5032 = vmatprep.subr.mxu0 0.0
  %5033 = vmatpush1.msra.mxu0 0.0
  %5034 = vmatprep.subr.mxu0 0.0
  %5035 = vmatpush1.msra.mxu0 0.0
  %5036 = vmatprep.subr.mxu0 0.0
  %5037 = vmatpush1.msra.mxu0 0.0
  %5038 = vmatprep.subr.mxu0 0.0
  %5039 = vmatpush1.msra.mxu0 0.0
  %5040 = vmatprep.subr.mxu0 0.0
  %5041 = vmatpush1.msra.mxu0 0.0
  %5042 = vmatprep.subr.mxu0 0.0
  %5043 = vmatpush1.msra.mxu0 0.0
  %5044 = vmatprep.subr.mxu0 0.0
  %5045 = vmatpush1.msra.mxu0 0.0
  %5046 = vmatprep.mubr.f32.mxu0 0.0
  %5047 = vmatmul.mubr.f32.gmra.mrb[0].mxu0 %v4980
  %v5048 = vpop.f32.mrb[0].mxu0
  %v5049 = vadd.f32 %v1155, %v5048
  %v5050 = vpop.f32.mrb[0].mxu0
  %5051 = vdwg.mxu0
  %5052 = vmatprep.subr.mxu0 0.0
  %5053 = vmatpush1.msra.mxu0 %v76
  %5054 = vmatprep.subr.mxu0 0.0
  %5055 = vmatpush1.msra.mxu0 %v77
  %5056 = vmatprep.subr.mxu0 0.0
  %5057 = vmatpush1.msra.mxu0 %v78
  %5058 = vmatprep.subr.mxu0 0.0
  %5059 = vmatpush1.msra.mxu0 %v79
  %5060 = vmatprep.subr.mxu0 0.0
  %5061 = vmatpush1.msra.mxu0 0.0
  %5062 = vmatprep.subr.mxu0 0.0
  %5063 = vmatpush1.msra.mxu0 0.0
  %5064 = vmatprep.subr.mxu0 0.0
  %5065 = vmatpush1.msra.mxu0 0.0
  %5066 = vmatprep.subr.mxu0 0.0
  %5067 = vmatpush1.msra.mxu0 0.0
  %5068 = vmatprep.subr.mxu0 0.0
  %5069 = vmatpush1.msra.mxu0 0.0
  %5070 = vmatprep.subr.mxu0 0.0
  %5071 = vmatpush1.msra.mxu0 0.0
  %5072 = vmatprep.subr.mxu0 0.0
  %5073 = vmatpush1.msra.mxu0 0.0
  %5074 = vmatprep.subr.mxu0 0.0
  %5075 = vmatpush1.msra.mxu0 0.0
  %5076 = vmatprep.subr.mxu0 0.0
  %5077 = vmatpush1.msra.mxu0 0.0
  %5078 = vmatprep.subr.mxu0 0.0
  %5079 = vmatpush1.msra.mxu0 0.0
  %5080 = vmatprep.subr.mxu0 0.0
  %5081 = vmatpush1.msra.mxu0 0.0
  %5082 = vmatprep.subr.mxu0 0.0
  %5083 = vmatpush1.msra.mxu0 0.0
  %5084 = vmatprep.subr.mxu0 0.0
  %5085 = vmatpush1.msra.mxu0 0.0
  %5086 = vmatprep.subr.mxu0 0.0
  %5087 = vmatpush1.msra.mxu0 0.0
  %5088 = vmatprep.subr.mxu0 0.0
  %5089 = vmatpush1.msra.mxu0 0.0
  %5090 = vmatprep.subr.mxu0 0.0
  %5091 = vmatpush1.msra.mxu0 0.0
  %5092 = vmatprep.subr.mxu0 0.0
  %5093 = vmatpush1.msra.mxu0 0.0
  %5094 = vmatprep.subr.mxu0 0.0
  %5095 = vmatpush1.msra.mxu0 0.0
  %5096 = vmatprep.subr.mxu0 0.0
  %5097 = vmatpush1.msra.mxu0 0.0
  %5098 = vmatprep.subr.mxu0 0.0
  %5099 = vmatpush1.msra.mxu0 0.0
  %5100 = vmatprep.subr.mxu0 0.0
  %5101 = vmatpush1.msra.mxu0 0.0
  %5102 = vmatprep.subr.mxu0 0.0
  %5103 = vmatpush1.msra.mxu0 0.0
  %5104 = vmatprep.subr.mxu0 0.0
  %5105 = vmatpush1.msra.mxu0 0.0
  %5106 = vmatprep.subr.mxu0 0.0
  %5107 = vmatpush1.msra.mxu0 0.0
  %5108 = vmatprep.subr.mxu0 0.0
  %5109 = vmatpush1.msra.mxu0 0.0
  %5110 = vmatprep.subr.mxu0 0.0
  %5111 = vmatpush1.msra.mxu0 0.0
  %5112 = vmatprep.subr.mxu0 0.0
  %5113 = vmatpush1.msra.mxu0 0.0
  %5114 = vmatprep.subr.mxu0 0.0
  %5115 = vmatpush1.msra.mxu0 0.0
  %5116 = vmatprep.mubr.f32.mxu0 0.0
  %5117 = vmatmul.mubr.f32.gmra.mrb[0].mxu0 %v4389
  %v5118 = vpop.f32.mrb[0].mxu0
  %v5119 = vadd.f32 0.0, %v5118
  %v5120 = vpop.f32.mrb[0].mxu0
  %5121 = vdwg.mxu0
  %v5122 = vadd.f32 %v5049, %v5119
  %v5123 = vxor.u32 %v5122, 2147483648
  %v5124 = vmul.f32 %v5123, 1.442695
  %v5125 = vpow.pop %v5124
  %v5126 = vadd.f32 %v5125, 1.0
  %v5127 = vrcp.pop %v5126
  %v5128 = vmul.f32 1.0, %v5127
  %v5129 = vmul.f32 %v5128, 2.0
  %v5130 = vsub.f32 %v5129, 1.0
  %v5131 = vsel %vm93, %v5130, %v5128
  %v5132 = vmul.f32 %v5131, %v4379
  %5134 = vrot.lane.b32.xlu0 %v5131, 64
  %v5135 = vpop.permute.xlu0 %5134
  %v5137 = vmul.f32 %v5131, %v5135
  %5139 = vrot.lane.b32.xlu0 %v5137, 32
  %v5140 = vpop.permute.xlu0 %5139
  %v5142 = vadd.f32 %v5132, %v5140
  %v5143 = vtanh.pop %v5142
  %5145 = vrot.lane.b32.xlu0 %v5143, 64
  %v5146 = vpop.permute.xlu0 %5145
  %v5148 = vmul.f32 %v5131, %v5146
  %5150 = vrot.lane.b32.xlu0 %v5148, 32
  %v5151 = vpop.permute.xlu0 %5150
  %v5152 = vsel %vm182, %v5151, 0
  %5154 = vmatprep.subr.mxu0 0.0
  %5155 = vmatpush1.msra.mxu0 %v84
  %5156 = vmatprep.subr.mxu0 0.0
  %5157 = vmatpush1.msra.mxu0 %v85
  %5158 = vmatprep.subr.mxu0 0.0
  %5159 = vmatpush1.msra.mxu0 %v86
  %5160 = vmatprep.subr.mxu0 0.0
  %5161 = vmatpush1.msra.mxu0 %v87
  %5162 = vmatprep.subr.mxu0 0.0
  %5163 = vmatpush1.msra.mxu0 0.0
  %5164 = vmatprep.subr.mxu0 0.0
  %5165 = vmatpush1.msra.mxu0 0.0
  %5166 = vmatprep.subr.mxu0 0.0
  %5167 = vmatpush1.msra.mxu0 0.0
  %5168 = vmatprep.subr.mxu0 0.0
  %5169 = vmatpush1.msra.mxu0 0.0
  %5170 = vmatprep.subr.mxu0 0.0
  %5171 = vmatpush1.msra.mxu0 0.0
  %5172 = vmatprep.subr.mxu0 0.0
  %5173 = vmatpush1.msra.mxu0 0.0
  %5174 = vmatprep.subr.mxu0 0.0
  %5175 = vmatpush1.msra.mxu0 0.0
  %5176 = vmatprep.subr.mxu0 0.0
  %5177 = vmatpush1.msra.mxu0 0.0
  %5178 = vmatprep.subr.mxu0 0.0
  %5179 = vmatpush1.msra.mxu0 0.0
  %5180 = vmatprep.subr.mxu0 0.0
  %5181 = vmatpush1.msra.mxu0 0.0
  %5182 = vmatprep.subr.mxu0 0.0
  %5183 = vmatpush1.msra.mxu0 0.0
  %5184 = vmatprep.subr.mxu0 0.0
  %5185 = vmatpush1.msra.mxu0 0.0
  %5186 = vmatprep.subr.mxu0 0.0
  %5187 = vmatpush1.msra.mxu0 0.0
  %5188 = vmatprep.subr.mxu0 0.0
  %5189 = vmatpush1.msra.mxu0 0.0
  %5190 = vmatprep.subr.mxu0 0.0
  %5191 = vmatpush1.msra.mxu0 0.0
  %5192 = vmatprep.subr.mxu0 0.0
  %5193 = vmatpush1.msra.mxu0 0.0
  %5194 = vmatprep.subr.mxu0 0.0
  %5195 = vmatpush1.msra.mxu0 0.0
  %5196 = vmatprep.subr.mxu0 0.0
  %5197 = vmatpush1.msra.mxu0 0.0
  %5198 = vmatprep.subr.mxu0 0.0
  %5199 = vmatpush1.msra.mxu0 0.0
  %5200 = vmatprep.subr.mxu0 0.0
  %5201 = vmatpush1.msra.mxu0 0.0
  %5202 = vmatprep.subr.mxu0 0.0
  %5203 = vmatpush1.msra.mxu0 0.0
  %5204 = vmatprep.subr.mxu0 0.0
  %5205 = vmatpush1.msra.mxu0 0.0
  %5206 = vmatprep.subr.mxu0 0.0
  %5207 = vmatpush1.msra.mxu0 0.0
  %5208 = vmatprep.subr.mxu0 0.0
  %5209 = vmatpush1.msra.mxu0 0.0
  %5210 = vmatprep.subr.mxu0 0.0
  %5211 = vmatpush1.msra.mxu0 0.0
  %5212 = vmatprep.subr.mxu0 0.0
  %5213 = vmatpush1.msra.mxu0 0.0
  %5214 = vmatprep.subr.mxu0 0.0
  %5215 = vmatpush1.msra.mxu0 0.0
  %5216 = vmatprep.subr.mxu0 0.0
  %5217 = vmatpush1.msra.mxu0 0.0
  %5218 = vmatprep.mubr.f32.mxu0 0.0
  %5219 = vmatmul.mubr.f32.gmra.mrb[0].mxu0 %v5152
  %v5220 = vpop.f32.mrb[0].mxu0
  %v5221 = vadd.f32 %v1333, %v5220
  %v5222 = vpop.f32.mrb[0].mxu0
  %5223 = vdwg.mxu0
  %s5224 = scalar_lea.vmem %s15, 40
  %5225 = vst [vmem:[%s5224] sm:$0xff] %v5221
  %5227 = vrot.lane.b32.xlu0 %v4806, 32
  %v5228 = vpop.permute.xlu0 %5227
  %v5229 = vsel %vm182, %v5228, 0
  %5231 = vmatprep.subr.mxu0 0.0
  %5232 = vmatpush1.msra.mxu0 %v56
  %5233 = vmatprep.subr.mxu0 0.0
  %5234 = vmatpush1.msra.mxu0 %v57
  %5235 = vmatprep.subr.mxu0 0.0
  %5236 = vmatpush1.msra.mxu0 %v58
  %5237 = vmatprep.subr.mxu0 0.0
  %5238 = vmatpush1.msra.mxu0 %v59
  %5239 = vmatprep.subr.mxu0 0.0
  %5240 = vmatpush1.msra.mxu0 0.0
  %5241 = vmatprep.subr.mxu0 0.0
  %5242 = vmatpush1.msra.mxu0 0.0
  %5243 = vmatprep.subr.mxu0 0.0
  %5244 = vmatpush1.msra.mxu0 0.0
  %5245 = vmatprep.subr.mxu0 0.0
  %5246 = vmatpush1.msra.mxu0 0.0
  %5247 = vmatprep.subr.mxu0 0.0
  %5248 = vmatpush1.msra.mxu0 0.0
  %5249 = vmatprep.subr.mxu0 0.0
  %5250 = vmatpush1.msra.mxu0 0.0
  %5251 = vmatprep.subr.mxu0 0.0
  %5252 = vmatpush1.msra.mxu0 0.0
  %5253 = vmatprep.subr.mxu0 0.0
  %5254 = vmatpush1.msra.mxu0 0.0
  %5255 = vmatprep.subr.mxu0 0.0
  %5256 = vmatpush1.msra.mxu0 0.0
  %5257 = vmatprep.subr.mxu0 0.0
  %5258 = vmatpush1.msra.mxu0 0.0
  %5259 = vmatprep.subr.mxu0 0.0
  %5260 = vmatpush1.msra.mxu0 0.0
  %5261 = vmatprep.subr.mxu0 0.0
  %5262 = vmatpush1.msra.mxu0 0.0
  %5263 = vmatprep.subr.mxu0 0.0
  %5264 = vmatpush1.msra.mxu0 0.0
  %5265 = vmatprep.subr.mxu0 0.0
  %5266 = vmatpush1.msra.mxu0 0.0
  %5267 = vmatprep.subr.mxu0 0.0
  %5268 = vmatpush1.msra.mxu0 0.0
  %5269 = vmatprep.subr.mxu0 0.0
  %5270 = vmatpush1.msra.mxu0 0.0
  %5271 = vmatprep.subr.mxu0 0.0
  %5272 = vmatpush1.msra.mxu0 0.0
  %5273 = vmatprep.subr.mxu0 0.0
  %5274 = vmatpush1.msra.mxu0 0.0
  %5275 = vmatprep.subr.mxu0 0.0
  %5276 = vmatpush1.msra.mxu0 0.0
  %5277 = vmatprep.subr.mxu0 0.0
  %5278 = vmatpush1.msra.mxu0 0.0
  %5279 = vmatprep.subr.mxu0 0.0
  %5280 = vmatpush1.msra.mxu0 0.0
  %5281 = vmatprep.subr.mxu0 0.0
  %5282 = vmatpush1.msra.mxu0 0.0
  %5283 = vmatprep.subr.mxu0 0.0
  %5284 = vmatpush1.msra.mxu0 0.0
  %5285 = vmatprep.subr.mxu0 0.0
  %5286 = vmatpush1.msra.mxu0 0.0
  %5287 = vmatprep.subr.mxu0 0.0
  %5288 = vmatpush1.msra.mxu0 0.0
  %5289 = vmatprep.subr.mxu0 0.0
  %5290 = vmatpush1.msra.mxu0 0.0
  %5291 = vmatprep.subr.mxu0 0.0
  %5292 = vmatpush1.msra.mxu0 0.0
  %5293 = vmatprep.subr.mxu0 0.0
  %5294 = vmatpush1.msra.mxu0 0.0
  %5295 = vmatprep.mubr.f32.mxu0 0.0
  %5296 = vmatmul.mubr.f32.gmra.mrb[0].mxu0 %v5229
  %v5297 = vpop.f32.mrb[0].mxu0
  %v5298 = vadd.f32 %v635, %v5297
  %v5299 = vpop.f32.mrb[0].mxu0
  %5300 = vdwg.mxu0
  %5301 = vmatprep.subr.mxu0 0.0
  %5302 = vmatpush1.msra.mxu0 %v72
  %5303 = vmatprep.subr.mxu0 0.0
  %5304 = vmatpush1.msra.mxu0 %v73
  %5305 = vmatprep.subr.mxu0 0.0
  %5306 = vmatpush1.msra.mxu0 %v74
  %5307 = vmatprep.subr.mxu0 0.0
  %5308 = vmatpush1.msra.mxu0 %v75
  %5309 = vmatprep.subr.mxu0 0.0
  %5310 = vmatpush1.msra.mxu0 0.0
  %5311 = vmatprep.subr.mxu0 0.0
  %5312 = vmatpush1.msra.mxu0 0.0
  %5313 = vmatprep.subr.mxu0 0.0
  %5314 = vmatpush1.msra.mxu0 0.0
  %5315 = vmatprep.subr.mxu0 0.0
  %5316 = vmatpush1.msra.mxu0 0.0
  %5317 = vmatprep.subr.mxu0 0.0
  %5318 = vmatpush1.msra.mxu0 0.0
  %5319 = vmatprep.subr.mxu0 0.0
  %5320 = vmatpush1.msra.mxu0 0.0
  %5321 = vmatprep.subr.mxu0 0.0
  %5322 = vmatpush1.msra.mxu0 0.0
  %5323 = vmatprep.subr.mxu0 0.0
  %5324 = vmatpush1.msra.mxu0 0.0
  %5325 = vmatprep.subr.mxu0 0.0
  %5326 = vmatpush1.msra.mxu0 0.0
  %5327 = vmatprep.subr.mxu0 0.0
  %5328 = vmatpush1.msra.mxu0 0.0
  %5329 = vmatprep.subr.mxu0 0.0
  %5330 = vmatpush1.msra.mxu0 0.0
  %5331 = vmatprep.subr.mxu0 0.0
  %5332 = vmatpush1.msra.mxu0 0.0
  %5333 = vmatprep.subr.mxu0 0.0
  %5334 = vmatpush1.msra.mxu0 0.0
  %5335 = vmatprep.subr.mxu0 0.0
  %5336 = vmatpush1.msra.mxu0 0.0
  %5337 = vmatprep.subr.mxu0 0.0
  %5338 = vmatpush1.msra.mxu0 0.0
  %5339 = vmatprep.subr.mxu0 0.0
  %5340 = vmatpush1.msra.mxu0 0.0
  %5341 = vmatprep.subr.mxu0 0.0
  %5342 = vmatpush1.msra.mxu0 0.0
  %5343 = vmatprep.subr.mxu0 0.0
  %5344 = vmatpush1.msra.mxu0 0.0
  %5345 = vmatprep.subr.mxu0 0.0
  %5346 = vmatpush1.msra.mxu0 0.0
  %5347 = vmatprep.subr.mxu0 0.0
  %5348 = vmatpush1.msra.mxu0 0.0
  %5349 = vmatprep.subr.mxu0 0.0
  %5350 = vmatpush1.msra.mxu0 0.0
  %5351 = vmatprep.subr.mxu0 0.0
  %5352 = vmatpush1.msra.mxu0 0.0
  %5353 = vmatprep.subr.mxu0 0.0
  %5354 = vmatpush1.msra.mxu0 0.0
  %5355 = vmatprep.subr.mxu0 0.0
  %5356 = vmatpush1.msra.mxu0 0.0
  %5357 = vmatprep.subr.mxu0 0.0
  %5358 = vmatpush1.msra.mxu0 0.0
  %5359 = vmatprep.subr.mxu0 0.0
  %5360 = vmatpush1.msra.mxu0 0.0
  %5361 = vmatprep.subr.mxu0 0.0
  %5362 = vmatpush1.msra.mxu0 0.0
  %5363 = vmatprep.subr.mxu0 0.0
  %5364 = vmatpush1.msra.mxu0 0.0
  %5365 = vmatprep.mubr.f32.mxu0 0.0
  %5366 = vmatmul.mubr.f32.gmra.mrb[0].mxu0 %v4980
  %v5367 = vpop.f32.mrb[0].mxu0
  %v5368 = vadd.f32 0.0, %v5367
  %v5369 = vpop.f32.mrb[0].mxu0
  %5370 = vdwg.mxu0
  %v5371 = vadd.f32 %v5298, %v5368
  %v5372 = vxor.u32 %v5371, 2147483648
  %v5373 = vmul.f32 %v5372, 1.442695
  %v5374 = vpow.pop %v5373
  %v5375 = vadd.f32 %v5374, 1.0
  %v5376 = vrcp.pop %v5375
  %v5377 = vmul.f32 1.0, %v5376
  %v5378 = vmul.f32 %v5377, 2.0
  %v5379 = vsub.f32 %v5378, 1.0
  %v5380 = vsel %vm93, %v5379, %v5377
  %v5381 = vmul.f32 %v5380, %v4628
  %5383 = vrot.lane.b32.xlu0 %v5380, 64
  %v5384 = vpop.permute.xlu0 %5383
  %v5386 = vmul.f32 %v5380, %v5384
  %5388 = vrot.lane.b32.xlu0 %v5386, 32
  %v5389 = vpop.permute.xlu0 %5388
  %v5391 = vadd.f32 %v5381, %v5389
  %v5392 = vtanh.pop %v5391
  %5394 = vrot.lane.b32.xlu0 %v5392, 64
  %v5395 = vpop.permute.xlu0 %5394
  %v5397 = vmul.f32 %v5380, %v5395
  %5399 = vrot.lane.b32.xlu0 %v4976, 32
  %v5400 = vpop.permute.xlu0 %5399
  %v5401 = vsel %vm182, %v5400, 0
  %5403 = vmatprep.subr.mxu0 0.0
  %5404 = vmatpush1.msra.mxu0 %v52
  %5405 = vmatprep.subr.mxu0 0.0
  %5406 = vmatpush1.msra.mxu0 %v53
  %5407 = vmatprep.subr.mxu0 0.0
  %5408 = vmatpush1.msra.mxu0 %v54
  %5409 = vmatprep.subr.mxu0 0.0
  %5410 = vmatpush1.msra.mxu0 %v55
  %5411 = vmatprep.subr.mxu0 0.0
  %5412 = vmatpush1.msra.mxu0 0.0
  %5413 = vmatprep.subr.mxu0 0.0
  %5414 = vmatpush1.msra.mxu0 0.0
  %5415 = vmatprep.subr.mxu0 0.0
  %5416 = vmatpush1.msra.mxu0 0.0
  %5417 = vmatprep.subr.mxu0 0.0
  %5418 = vmatpush1.msra.mxu0 0.0
  %5419 = vmatprep.subr.mxu0 0.0
  %5420 = vmatpush1.msra.mxu0 0.0
  %5421 = vmatprep.subr.mxu0 0.0
  %5422 = vmatpush1.msra.mxu0 0.0
  %5423 = vmatprep.subr.mxu0 0.0
  %5424 = vmatpush1.msra.mxu0 0.0
  %5425 = vmatprep.subr.mxu0 0.0
  %5426 = vmatpush1.msra.mxu0 0.0
  %5427 = vmatprep.subr.mxu0 0.0
  %5428 = vmatpush1.msra.mxu0 0.0
  %5429 = vmatprep.subr.mxu0 0.0
  %5430 = vmatpush1.msra.mxu0 0.0
  %5431 = vmatprep.subr.mxu0 0.0
  %5432 = vmatpush1.msra.mxu0 0.0
  %5433 = vmatprep.subr.mxu0 0.0
  %5434 = vmatpush1.msra.mxu0 0.0
  %5435 = vmatprep.subr.mxu0 0.0
  %5436 = vmatpush1.msra.mxu0 0.0
  %5437 = vmatprep.subr.mxu0 0.0
  %5438 = vmatpush1.msra.mxu0 0.0
  %5439 = vmatprep.subr.mxu0 0.0
  %5440 = vmatpush1.msra.mxu0 0.0
  %5441 = vmatprep.subr.mxu0 0.0
  %5442 = vmatpush1.msra.mxu0 0.0
  %5443 = vmatprep.subr.mxu0 0.0
  %5444 = vmatpush1.msra.mxu0 0.0
  %5445 = vmatprep.subr.mxu0 0.0
  %5446 = vmatpush1.msra.mxu0 0.0
  %5447 = vmatprep.subr.mxu0 0.0
  %5448 = vmatpush1.msra.mxu0 0.0
  %5449 = vmatprep.subr.mxu0 0.0
  %5450 = vmatpush1.msra.mxu0 0.0
  %5451 = vmatprep.subr.mxu0 0.0
  %5452 = vmatpush1.msra.mxu0 0.0
  %5453 = vmatprep.subr.mxu0 0.0
  %5454 = vmatpush1.msra.mxu0 0.0
  %5455 = vmatprep.subr.mxu0 0.0
  %5456 = vmatpush1.msra.mxu0 0.0
  %5457 = vmatprep.subr.mxu0 0.0
  %5458 = vmatpush1.msra.mxu0 0.0
  %5459 = vmatprep.subr.mxu0 0.0
  %5460 = vmatpush1.msra.mxu0 0.0
  %5461 = vmatprep.subr.mxu0 0.0
  %5462 = vmatpush1.msra.mxu0 0.0
  %5463 = vmatprep.subr.mxu0 0.0
  %5464 = vmatpush1.msra.mxu0 0.0
  %5465 = vmatprep.subr.mxu0 0.0
  %5466 = vmatpush1.msra.mxu0 0.0
  %5467 = vmatprep.mubr.f32.mxu0 0.0
  %5468 = vmatmul.mubr.f32.gmra.mrb[0].mxu0 %v5401
  %v5469 = vpop.f32.mrb[0].mxu0
  %v5470 = vadd.f32 %v287, %v5469
  %v5471 = vpop.f32.mrb[0].mxu0
  %5472 = vdwg.mxu0
  %5473 = vmatprep.subr.mxu0 0.0
  %5474 = vmatpush1.msra.mxu0 %v68
  %5475 = vmatprep.subr.mxu0 0.0
  %5476 = vmatpush1.msra.mxu0 %v69
  %5477 = vmatprep.subr.mxu0 0.0
  %5478 = vmatpush1.msra.mxu0 %v70
  %5479 = vmatprep.subr.mxu0 0.0
  %5480 = vmatpush1.msra.mxu0 %v71
  %5481 = vmatprep.subr.mxu0 0.0
  %5482 = vmatpush1.msra.mxu0 0.0
  %5483 = vmatprep.subr.mxu0 0.0
  %5484 = vmatpush1.msra.mxu0 0.0
  %5485 = vmatprep.subr.mxu0 0.0
  %5486 = vmatpush1.msra.mxu0 0.0
  %5487 = vmatprep.subr.mxu0 0.0
  %5488 = vmatpush1.msra.mxu0 0.0
  %5489 = vmatprep.subr.mxu0 0.0
  %5490 = vmatpush1.msra.mxu0 0.0
  %5491 = vmatprep.subr.mxu0 0.0
  %5492 = vmatpush1.msra.mxu0 0.0
  %5493 = vmatprep.subr.mxu0 0.0
  %5494 = vmatpush1.msra.mxu0 0.0
  %5495 = vmatprep.subr.mxu0 0.0
  %5496 = vmatpush1.msra.mxu0 0.0
  %5497 = vmatprep.subr.mxu0 0.0
  %5498 = vmatpush1.msra.mxu0 0.0
  %5499 = vmatprep.subr.mxu0 0.0
  %5500 = vmatpush1.msra.mxu0 0.0
  %5501 = vmatprep.subr.mxu0 0.0
  %5502 = vmatpush1.msra.mxu0 0.0
  %5503 = vmatprep.subr.mxu0 0.0
  %5504 = vmatpush1.msra.mxu0 0.0
  %5505 = vmatprep.subr.mxu0 0.0
  %5506 = vmatpush1.msra.mxu0 0.0
  %5507 = vmatprep.subr.mxu0 0.0
  %5508 = vmatpush1.msra.mxu0 0.0
  %5509 = vmatprep.subr.mxu0 0.0
  %5510 = vmatpush1.msra.mxu0 0.0
  %5511 = vmatprep.subr.mxu0 0.0
  %5512 = vmatpush1.msra.mxu0 0.0
  %5513 = vmatprep.subr.mxu0 0.0
  %5514 = vmatpush1.msra.mxu0 0.0
  %5515 = vmatprep.subr.mxu0 0.0
  %5516 = vmatpush1.msra.mxu0 0.0
  %5517 = vmatprep.subr.mxu0 0.0
  %5518 = vmatpush1.msra.mxu0 0.0
  %5519 = vmatprep.subr.mxu0 0.0
  %5520 = vmatpush1.msra.mxu0 0.0
  %5521 = vmatprep.subr.mxu0 0.0
  %5522 = vmatpush1.msra.mxu0 0.0
  %5523 = vmatprep.subr.mxu0 0.0
  %5524 = vmatpush1.msra.mxu0 0.0
  %5525 = vmatprep.subr.mxu0 0.0
  %5526 = vmatpush1.msra.mxu0 0.0
  %5527 = vmatprep.subr.mxu0 0.0
  %5528 = vmatpush1.msra.mxu0 0.0
  %5529 = vmatprep.subr.mxu0 0.0
  %5530 = vmatpush1.msra.mxu0 0.0
  %5531 = vmatprep.subr.mxu0 0.0
  %5532 = vmatpush1.msra.mxu0 0.0
  %5533 = vmatprep.subr.mxu0 0.0
  %5534 = vmatpush1.msra.mxu0 0.0
  %5535 = vmatprep.subr.mxu0 0.0
  %5536 = vmatpush1.msra.mxu0 0.0
  %5537 = vmatprep.mubr.f32.mxu0 0.0
  %5538 = vmatmul.mubr.f32.gmra.mrb[0].mxu0 %v5229
  %v5539 = vpop.f32.mrb[0].mxu0
  %v5540 = vadd.f32 0.0, %v5539
  %v5541 = vpop.f32.mrb[0].mxu0
  %5542 = vdwg.mxu0
  %v5543 = vadd.f32 %v5470, %v5540
  %v5544 = vxor.u32 %v5543, 2147483648
  %v5545 = vmul.f32 %v5544, 1.442695
  %v5546 = vpow.pop %v5545
  %v5547 = vadd.f32 %v5546, 1.0
  %v5548 = vrcp.pop %v5547
  %v5549 = vmul.f32 1.0, %v5548
  %v5550 = vmul.f32 %v5549, 2.0
  %v5551 = vsub.f32 %v5550, 1.0
  %v5552 = vsel %vm93, %v5551, %v5549
  %v5553 = vmul.f32 %v5552, %v4800
  %5555 = vrot.lane.b32.xlu0 %v5552, 64
  %v5556 = vpop.permute.xlu0 %5555
  %v5558 = vmul.f32 %v5552, %v5556
  %5560 = vrot.lane.b32.xlu0 %v5558, 32
  %v5561 = vpop.permute.xlu0 %5560
  %v5563 = vadd.f32 %v5553, %v5561
  %v5564 = vtanh.pop %v5563
  %5566 = vrot.lane.b32.xlu0 %v5564, 64
  %v5567 = vpop.permute.xlu0 %5566
  %v5569 = vmul.f32 %v5552, %v5567
  %5571 = vrot.lane.b32.xlu0 %v5397, 32
  %v5572 = vpop.permute.xlu0 %5571
  %v5573 = vsel %vm182, %v5572, 0
  %5575 = vmatprep.subr.mxu0 0.0
  %5576 = vmatpush1.msra.mxu0 %v60
  %5577 = vmatprep.subr.mxu0 0.0
  %5578 = vmatpush1.msra.mxu0 %v61
  %5579 = vmatprep.subr.mxu0 0.0
  %5580 = vmatpush1.msra.mxu0 %v62
  %5581 = vmatprep.subr.mxu0 0.0
  %5582 = vmatpush1.msra.mxu0 %v63
  %5583 = vmatprep.subr.mxu0 0.0
  %5584 = vmatpush1.msra.mxu0 0.0
  %5585 = vmatprep.subr.mxu0 0.0
  %5586 = vmatpush1.msra.mxu0 0.0
  %5587 = vmatprep.subr.mxu0 0.0
  %5588 = vmatpush1.msra.mxu0 0.0
  %5589 = vmatprep.subr.mxu0 0.0
  %5590 = vmatpush1.msra.mxu0 0.0
  %5591 = vmatprep.subr.mxu0 0.0
  %5592 = vmatpush1.msra.mxu0 0.0
  %5593 = vmatprep.subr.mxu0 0.0
  %5594 = vmatpush1.msra.mxu0 0.0
  %5595 = vmatprep.subr.mxu0 0.0
  %5596 = vmatpush1.msra.mxu0 0.0
  %5597 = vmatprep.subr.mxu0 0.0
  %5598 = vmatpush1.msra.mxu0 0.0
  %5599 = vmatprep.subr.mxu0 0.0
  %5600 = vmatpush1.msra.mxu0 0.0
  %5601 = vmatprep.subr.mxu0 0.0
  %5602 = vmatpush1.msra.mxu0 0.0
  %5603 = vmatprep.subr.mxu0 0.0
  %5604 = vmatpush1.msra.mxu0 0.0
  %5605 = vmatprep.subr.mxu0 0.0
  %5606 = vmatpush1.msra.mxu0 0.0
  %5607 = vmatprep.subr.mxu0 0.0
  %5608 = vmatpush1.msra.mxu0 0.0
  %5609 = vmatprep.subr.mxu0 0.0
  %5610 = vmatpush1.msra.mxu0 0.0
  %5611 = vmatprep.subr.mxu0 0.0
  %5612 = vmatpush1.msra.mxu0 0.0
  %5613 = vmatprep.subr.mxu0 0.0
  %5614 = vmatpush1.msra.mxu0 0.0
  %5615 = vmatprep.subr.mxu0 0.0
  %5616 = vmatpush1.msra.mxu0 0.0
  %5617 = vmatprep.subr.mxu0 0.0
  %5618 = vmatpush1.msra.mxu0 0.0
  %5619 = vmatprep.subr.mxu0 0.0
  %5620 = vmatpush1.msra.mxu0 0.0
  %5621 = vmatprep.subr.mxu0 0.0
  %5622 = vmatpush1.msra.mxu0 0.0
  %5623 = vmatprep.subr.mxu0 0.0
  %5624 = vmatpush1.msra.mxu0 0.0
  %5625 = vmatprep.subr.mxu0 0.0
  %5626 = vmatpush1.msra.mxu0 0.0
  %5627 = vmatprep.subr.mxu0 0.0
  %5628 = vmatpush1.msra.mxu0 0.0
  %5629 = vmatprep.subr.mxu0 0.0
  %5630 = vmatpush1.msra.mxu0 0.0
  %5631 = vmatprep.subr.mxu0 0.0
  %5632 = vmatpush1.msra.mxu0 0.0
  %5633 = vmatprep.subr.mxu0 0.0
  %5634 = vmatpush1.msra.mxu0 0.0
  %5635 = vmatprep.subr.mxu0 0.0
  %5636 = vmatpush1.msra.mxu0 0.0
  %5637 = vmatprep.subr.mxu0 0.0
  %5638 = vmatpush1.msra.mxu0 0.0
  %5639 = vmatprep.mubr.f32.mxu0 0.0
  %5640 = vmatmul.mubr.f32.gmra.mrb[0].mxu0 %v5573
  %v5641 = vpop.f32.mrb[0].mxu0
  %v5642 = vadd.f32 %v1155, %v5641
  %v5643 = vpop.f32.mrb[0].mxu0
  %5644 = vdwg.mxu0
  %5645 = vmatprep.subr.mxu0 0.0
  %5646 = vmatpush1.msra.mxu0 %v76
  %5647 = vmatprep.subr.mxu0 0.0
  %5648 = vmatpush1.msra.mxu0 %v77
  %5649 = vmatprep.subr.mxu0 0.0
  %5650 = vmatpush1.msra.mxu0 %v78
  %5651 = vmatprep.subr.mxu0 0.0
  %5652 = vmatpush1.msra.mxu0 %v79
  %5653 = vmatprep.subr.mxu0 0.0
  %5654 = vmatpush1.msra.mxu0 0.0
  %5655 = vmatprep.subr.mxu0 0.0
  %5656 = vmatpush1.msra.mxu0 0.0
  %5657 = vmatprep.subr.mxu0 0.0
  %5658 = vmatpush1.msra.mxu0 0.0
  %5659 = vmatprep.subr.mxu0 0.0
  %5660 = vmatpush1.msra.mxu0 0.0
  %5661 = vmatprep.subr.mxu0 0.0
  %5662 = vmatpush1.msra.mxu0 0.0
  %5663 = vmatprep.subr.mxu0 0.0
  %5664 = vmatpush1.msra.mxu0 0.0
  %5665 = vmatprep.subr.mxu0 0.0
  %5666 = vmatpush1.msra.mxu0 0.0
  %5667 = vmatprep.subr.mxu0 0.0
  %5668 = vmatpush1.msra.mxu0 0.0
  %5669 = vmatprep.subr.mxu0 0.0
  %5670 = vmatpush1.msra.mxu0 0.0
  %5671 = vmatprep.subr.mxu0 0.0
  %5672 = vmatpush1.msra.mxu0 0.0
  %5673 = vmatprep.subr.mxu0 0.0
  %5674 = vmatpush1.msra.mxu0 0.0
  %5675 = vmatprep.subr.mxu0 0.0
  %5676 = vmatpush1.msra.mxu0 0.0
  %5677 = vmatprep.subr.mxu0 0.0
  %5678 = vmatpush1.msra.mxu0 0.0
  %5679 = vmatprep.subr.mxu0 0.0
  %5680 = vmatpush1.msra.mxu0 0.0
  %5681 = vmatprep.subr.mxu0 0.0
  %5682 = vmatpush1.msra.mxu0 0.0
  %5683 = vmatprep.subr.mxu0 0.0
  %5684 = vmatpush1.msra.mxu0 0.0
  %5685 = vmatprep.subr.mxu0 0.0
  %5686 = vmatpush1.msra.mxu0 0.0
  %5687 = vmatprep.subr.mxu0 0.0
  %5688 = vmatpush1.msra.mxu0 0.0
  %5689 = vmatprep.subr.mxu0 0.0
  %5690 = vmatpush1.msra.mxu0 0.0
  %5691 = vmatprep.subr.mxu0 0.0
  %5692 = vmatpush1.msra.mxu0 0.0
  %5693 = vmatprep.subr.mxu0 0.0
  %5694 = vmatpush1.msra.mxu0 0.0
  %5695 = vmatprep.subr.mxu0 0.0
  %5696 = vmatpush1.msra.mxu0 0.0
  %5697 = vmatprep.subr.mxu0 0.0
  %5698 = vmatpush1.msra.mxu0 0.0
  %5699 = vmatprep.subr.mxu0 0.0
  %5700 = vmatpush1.msra.mxu0 0.0
  %5701 = vmatprep.subr.mxu0 0.0
  %5702 = vmatpush1.msra.mxu0 0.0
  %5703 = vmatprep.subr.mxu0 0.0
  %5704 = vmatpush1.msra.mxu0 0.0
  %5705 = vmatprep.subr.mxu0 0.0
  %5706 = vmatpush1.msra.mxu0 0.0
  %5707 = vmatprep.subr.mxu0 0.0
  %5708 = vmatpush1.msra.mxu0 0.0
  %5709 = vmatprep.mubr.f32.mxu0 0.0
  %5710 = vmatmul.mubr.f32.gmra.mrb[0].mxu0 %v5152
  %v5711 = vpop.f32.mrb[0].mxu0
  %v5712 = vadd.f32 0.0, %v5711
  %v5713 = vpop.f32.mrb[0].mxu0
  %5714 = vdwg.mxu0
  %v5715 = vadd.f32 %v5642, %v5712
  %v5716 = vxor.u32 %v5715, 2147483648
  %v5717 = vmul.f32 %v5716, 1.442695
  %v5718 = vpow.pop %v5717
  %v5719 = vadd.f32 %v5718, 1.0
  %v5720 = vrcp.pop %v5719
  %v5721 = vmul.f32 1.0, %v5720
  %v5722 = vmul.f32 %v5721, 2.0
  %v5723 = vsub.f32 %v5722, 1.0
  %v5724 = vsel %vm93, %v5723, %v5721
  %v5725 = vmul.f32 %v5724, %v5142
  %5727 = vrot.lane.b32.xlu0 %v5724, 64
  %v5728 = vpop.permute.xlu0 %5727
  %v5730 = vmul.f32 %v5724, %v5728
  %5732 = vrot.lane.b32.xlu0 %v5730, 32
  %v5733 = vpop.permute.xlu0 %5732
  %v5735 = vadd.f32 %v5725, %v5733
  %v5736 = vtanh.pop %v5735
  %5738 = vrot.lane.b32.xlu0 %v5736, 64
  %v5739 = vpop.permute.xlu0 %5738
  %v5741 = vmul.f32 %v5724, %v5739
  %5743 = vrot.lane.b32.xlu0 %v5741, 32
  %v5744 = vpop.permute.xlu0 %5743
  %v5745 = vsel %vm182, %v5744, 0
  %5747 = vmatprep.subr.mxu0 0.0
  %5748 = vmatpush1.msra.mxu0 %v84
  %5749 = vmatprep.subr.mxu0 0.0
  %5750 = vmatpush1.msra.mxu0 %v85
  %5751 = vmatprep.subr.mxu0 0.0
  %5752 = vmatpush1.msra.mxu0 %v86
  %5753 = vmatprep.subr.mxu0 0.0
  %5754 = vmatpush1.msra.mxu0 %v87
  %5755 = vmatprep.subr.mxu0 0.0
  %5756 = vmatpush1.msra.mxu0 0.0
  %5757 = vmatprep.subr.mxu0 0.0
  %5758 = vmatpush1.msra.mxu0 0.0
  %5759 = vmatprep.subr.mxu0 0.0
  %5760 = vmatpush1.msra.mxu0 0.0
  %5761 = vmatprep.subr.mxu0 0.0
  %5762 = vmatpush1.msra.mxu0 0.0
  %5763 = vmatprep.subr.mxu0 0.0
  %5764 = vmatpush1.msra.mxu0 0.0
  %5765 = vmatprep.subr.mxu0 0.0
  %5766 = vmatpush1.msra.mxu0 0.0
  %5767 = vmatprep.subr.mxu0 0.0
  %5768 = vmatpush1.msra.mxu0 0.0
  %5769 = vmatprep.subr.mxu0 0.0
  %5770 = vmatpush1.msra.mxu0 0.0
  %5771 = vmatprep.subr.mxu0 0.0
  %5772 = vmatpush1.msra.mxu0 0.0
  %5773 = vmatprep.subr.mxu0 0.0
  %5774 = vmatpush1.msra.mxu0 0.0
  %5775 = vmatprep.subr.mxu0 0.0
  %5776 = vmatpush1.msra.mxu0 0.0
  %5777 = vmatprep.subr.mxu0 0.0
  %5778 = vmatpush1.msra.mxu0 0.0
  %5779 = vmatprep.subr.mxu0 0.0
  %5780 = vmatpush1.msra.mxu0 0.0
  %5781 = vmatprep.subr.mxu0 0.0
  %5782 = vmatpush1.msra.mxu0 0.0
  %5783 = vmatprep.subr.mxu0 0.0
  %5784 = vmatpush1.msra.mxu0 0.0
  %5785 = vmatprep.subr.mxu0 0.0
  %5786 = vmatpush1.msra.mxu0 0.0
  %5787 = vmatprep.subr.mxu0 0.0
  %5788 = vmatpush1.msra.mxu0 0.0
  %5789 = vmatprep.subr.mxu0 0.0
  %5790 = vmatpush1.msra.mxu0 0.0
  %5791 = vmatprep.subr.mxu0 0.0
  %5792 = vmatpush1.msra.mxu0 0.0
  %5793 = vmatprep.subr.mxu0 0.0
  %5794 = vmatpush1.msra.mxu0 0.0
  %5795 = vmatprep.subr.mxu0 0.0
  %5796 = vmatpush1.msra.mxu0 0.0
  %5797 = vmatprep.subr.mxu0 0.0
  %5798 = vmatpush1.msra.mxu0 0.0
  %5799 = vmatprep.subr.mxu0 0.0
  %5800 = vmatpush1.msra.mxu0 0.0
  %5801 = vmatprep.subr.mxu0 0.0
  %5802 = vmatpush1.msra.mxu0 0.0
  %5803 = vmatprep.subr.mxu0 0.0
  %5804 = vmatpush1.msra.mxu0 0.0
  %5805 = vmatprep.subr.mxu0 0.0
  %5806 = vmatpush1.msra.mxu0 0.0
  %5807 = vmatprep.subr.mxu0 0.0
  %5808 = vmatpush1.msra.mxu0 0.0
  %5809 = vmatprep.subr.mxu0 0.0
  %5810 = vmatpush1.msra.mxu0 0.0
  %5811 = vmatprep.mubr.f32.mxu0 0.0
  %5812 = vmatmul.mubr.f32.gmra.mrb[0].mxu0 %v5745
  %v5813 = vpop.f32.mrb[0].mxu0
  %v5814 = vadd.f32 %v1333, %v5813
  %v5815 = vpop.f32.mrb[0].mxu0
  %5816 = vdwg.mxu0
  %s5817 = scalar_lea.vmem %s15, 48
  %5818 = vst [vmem:[%s5817] sm:$0xff] %v5814
  %5820 = vrot.lane.b32.xlu0 %v5569, 32
  %v5821 = vpop.permute.xlu0 %5820
  %v5822 = vsel %vm182, %v5821, 0
  %5824 = vmatprep.subr.mxu0 0.0
  %5825 = vmatpush1.msra.mxu0 %v56
  %5826 = vmatprep.subr.mxu0 0.0
  %5827 = vmatpush1.msra.mxu0 %v57
  %5828 = vmatprep.subr.mxu0 0.0
  %5829 = vmatpush1.msra.mxu0 %v58
  %5830 = vmatprep.subr.mxu0 0.0
  %5831 = vmatpush1.msra.mxu0 %v59
  %5832 = vmatprep.subr.mxu0 0.0
  %5833 = vmatpush1.msra.mxu0 0.0
  %5834 = vmatprep.subr.mxu0 0.0
  %5835 = vmatpush1.msra.mxu0 0.0
  %5836 = vmatprep.subr.mxu0 0.0
  %5837 = vmatpush1.msra.mxu0 0.0
  %5838 = vmatprep.subr.mxu0 0.0
  %5839 = vmatpush1.msra.mxu0 0.0
  %5840 = vmatprep.subr.mxu0 0.0
  %5841 = vmatpush1.msra.mxu0 0.0
  %5842 = vmatprep.subr.mxu0 0.0
  %5843 = vmatpush1.msra.mxu0 0.0
  %5844 = vmatprep.subr.mxu0 0.0
  %5845 = vmatpush1.msra.mxu0 0.0
  %5846 = vmatprep.subr.mxu0 0.0
  %5847 = vmatpush1.msra.mxu0 0.0
  %5848 = vmatprep.subr.mxu0 0.0
  %5849 = vmatpush1.msra.mxu0 0.0
  %5850 = vmatprep.subr.mxu0 0.0
  %5851 = vmatpush1.msra.mxu0 0.0
  %5852 = vmatprep.subr.mxu0 0.0
  %5853 = vmatpush1.msra.mxu0 0.0
  %5854 = vmatprep.subr.mxu0 0.0
  %5855 = vmatpush1.msra.mxu0 0.0
  %5856 = vmatprep.subr.mxu0 0.0
  %5857 = vmatpush1.msra.mxu0 0.0
  %5858 = vmatprep.subr.mxu0 0.0
  %5859 = vmatpush1.msra.mxu0 0.0
  %5860 = vmatprep.subr.mxu0 0.0
  %5861 = vmatpush1.msra.mxu0 0.0
  %5862 = vmatprep.subr.mxu0 0.0
  %5863 = vmatpush1.msra.mxu0 0.0
  %5864 = vmatprep.subr.mxu0 0.0
  %5865 = vmatpush1.msra.mxu0 0.0
  %5866 = vmatprep.subr.mxu0 0.0
  %5867 = vmatpush1.msra.mxu0 0.0
  %5868 = vmatprep.subr.mxu0 0.0
  %5869 = vmatpush1.msra.mxu0 0.0
  %5870 = vmatprep.subr.mxu0 0.0
  %5871 = vmatpush1.msra.mxu0 0.0
  %5872 = vmatprep.subr.mxu0 0.0
  %5873 = vmatpush1.msra.mxu0 0.0
  %5874 = vmatprep.subr.mxu0 0.0
  %5875 = vmatpush1.msra.mxu0 0.0
  %5876 = vmatprep.subr.mxu0 0.0
  %5877 = vmatpush1.msra.mxu0 0.0
  %5878 = vmatprep.subr.mxu0 0.0
  %5879 = vmatpush1.msra.mxu0 0.0
  %5880 = vmatprep.subr.mxu0 0.0
  %5881 = vmatpush1.msra.mxu0 0.0
  %5882 = vmatprep.subr.mxu0 0.0
  %5883 = vmatpush1.msra.mxu0 0.0
  %5884 = vmatprep.subr.mxu0 0.0
  %5885 = vmatpush1.msra.mxu0 0.0
  %5886 = vmatprep.subr.mxu0 0.0
  %5887 = vmatpush1.msra.mxu0 0.0
  %5888 = vmatprep.mubr.f32.mxu0 0.0
  %5889 = vmatmul.mubr.f32.gmra.mrb[0].mxu0 %v5822
  %v5890 = vpop.f32.mrb[0].mxu0
  %v5891 = vadd.f32 %v635, %v5890
  %v5892 = vpop.f32.mrb[0].mxu0
  %5893 = vdwg.mxu0
  %5894 = vmatprep.subr.mxu0 0.0
  %5895 = vmatpush1.msra.mxu0 %v72
  %5896 = vmatprep.subr.mxu0 0.0
  %5897 = vmatpush1.msra.mxu0 %v73
  %5898 = vmatprep.subr.mxu0 0.0
  %5899 = vmatpush1.msra.mxu0 %v74
  %5900 = vmatprep.subr.mxu0 0.0
  %5901 = vmatpush1.msra.mxu0 %v75
  %5902 = vmatprep.subr.mxu0 0.0
  %5903 = vmatpush1.msra.mxu0 0.0
  %5904 = vmatprep.subr.mxu0 0.0
  %5905 = vmatpush1.msra.mxu0 0.0
  %5906 = vmatprep.subr.mxu0 0.0
  %5907 = vmatpush1.msra.mxu0 0.0
  %5908 = vmatprep.subr.mxu0 0.0
  %5909 = vmatpush1.msra.mxu0 0.0
  %5910 = vmatprep.subr.mxu0 0.0
  %5911 = vmatpush1.msra.mxu0 0.0
  %5912 = vmatprep.subr.mxu0 0.0
  %5913 = vmatpush1.msra.mxu0 0.0
  %5914 = vmatprep.subr.mxu0 0.0
  %5915 = vmatpush1.msra.mxu0 0.0
  %5916 = vmatprep.subr.mxu0 0.0
  %5917 = vmatpush1.msra.mxu0 0.0
  %5918 = vmatprep.subr.mxu0 0.0
  %5919 = vmatpush1.msra.mxu0 0.0
  %5920 = vmatprep.subr.mxu0 0.0
  %5921 = vmatpush1.msra.mxu0 0.0
  %5922 = vmatprep.subr.mxu0 0.0
  %5923 = vmatpush1.msra.mxu0 0.0
  %5924 = vmatprep.subr.mxu0 0.0
  %5925 = vmatpush1.msra.mxu0 0.0
  %5926 = vmatprep.subr.mxu0 0.0
  %5927 = vmatpush1.msra.mxu0 0.0
  %5928 = vmatprep.subr.mxu0 0.0
  %5929 = vmatpush1.msra.mxu0 0.0
  %5930 = vmatprep.subr.mxu0 0.0
  %5931 = vmatpush1.msra.mxu0 0.0
  %5932 = vmatprep.subr.mxu0 0.0
  %5933 = vmatpush1.msra.mxu0 0.0
  %5934 = vmatprep.subr.mxu0 0.0
  %5935 = vmatpush1.msra.mxu0 0.0
  %5936 = vmatprep.subr.mxu0 0.0
  %5937 = vmatpush1.msra.mxu0 0.0
  %5938 = vmatprep.subr.mxu0 0.0
  %5939 = vmatpush1.msra.mxu0 0.0
  %5940 = vmatprep.subr.mxu0 0.0
  %5941 = vmatpush1.msra.mxu0 0.0
  %5942 = vmatprep.subr.mxu0 0.0
  %5943 = vmatpush1.msra.mxu0 0.0
  %5944 = vmatprep.subr.mxu0 0.0
  %5945 = vmatpush1.msra.mxu0 0.0
  %5946 = vmatprep.subr.mxu0 0.0
  %5947 = vmatpush1.msra.mxu0 0.0
  %5948 = vmatprep.subr.mxu0 0.0
  %5949 = vmatpush1.msra.mxu0 0.0
  %5950 = vmatprep.subr.mxu0 0.0
  %5951 = vmatpush1.msra.mxu0 0.0
  %5952 = vmatprep.subr.mxu0 0.0
  %5953 = vmatpush1.msra.mxu0 0.0
  %5954 = vmatprep.subr.mxu0 0.0
  %5955 = vmatpush1.msra.mxu0 0.0
  %5956 = vmatprep.subr.mxu0 0.0
  %5957 = vmatpush1.msra.mxu0 0.0
  %5958 = vmatprep.mubr.f32.mxu0 0.0
  %5959 = vmatmul.mubr.f32.gmra.mrb[0].mxu0 %v5573
  %v5960 = vpop.f32.mrb[0].mxu0
  %v5961 = vadd.f32 0.0, %v5960
  %v5962 = vpop.f32.mrb[0].mxu0
  %5963 = vdwg.mxu0
  %v5964 = vadd.f32 %v5891, %v5961
  %v5965 = vxor.u32 %v5964, 2147483648
  %v5966 = vmul.f32 %v5965, 1.442695
  %v5967 = vpow.pop %v5966
  %v5968 = vadd.f32 %v5967, 1.0
  %v5969 = vrcp.pop %v5968
  %v5970 = vmul.f32 1.0, %v5969
  %v5971 = vmul.f32 %v5970, 2.0
  %v5972 = vsub.f32 %v5971, 1.0
  %v5973 = vsel %vm93, %v5972, %v5970
  %v5974 = vmul.f32 %v5973, %v5391
  %5976 = vrot.lane.b32.xlu0 %v5973, 64
  %v5977 = vpop.permute.xlu0 %5976
  %v5979 = vmul.f32 %v5973, %v5977
  %5981 = vrot.lane.b32.xlu0 %v5979, 32
  %v5982 = vpop.permute.xlu0 %5981
  %v5984 = vadd.f32 %v5974, %v5982
  %v5985 = vtanh.pop %v5984
  %5987 = vrot.lane.b32.xlu0 %v5985, 64
  %v5988 = vpop.permute.xlu0 %5987
  %v5990 = vmul.f32 %v5973, %v5988
  %5992 = vrot.lane.b32.xlu0 %v5990, 32
  %v5993 = vpop.permute.xlu0 %5992
  %v5994 = vsel %vm182, %v5993, 0
  %5996 = vmatprep.subr.mxu0 0.0
  %5997 = vmatpush1.msra.mxu0 %v60
  %5998 = vmatprep.subr.mxu0 0.0
  %5999 = vmatpush1.msra.mxu0 %v61
  %6000 = vmatprep.subr.mxu0 0.0
  %6001 = vmatpush1.msra.mxu0 %v62
  %6002 = vmatprep.subr.mxu0 0.0
  %6003 = vmatpush1.msra.mxu0 %v63
  %6004 = vmatprep.subr.mxu0 0.0
  %6005 = vmatpush1.msra.mxu0 0.0
  %6006 = vmatprep.subr.mxu0 0.0
  %6007 = vmatpush1.msra.mxu0 0.0
  %6008 = vmatprep.subr.mxu0 0.0
  %6009 = vmatpush1.msra.mxu0 0.0
  %6010 = vmatprep.subr.mxu0 0.0
  %6011 = vmatpush1.msra.mxu0 0.0
  %6012 = vmatprep.subr.mxu0 0.0
  %6013 = vmatpush1.msra.mxu0 0.0
  %6014 = vmatprep.subr.mxu0 0.0
  %6015 = vmatpush1.msra.mxu0 0.0
  %6016 = vmatprep.subr.mxu0 0.0
  %6017 = vmatpush1.msra.mxu0 0.0
  %6018 = vmatprep.subr.mxu0 0.0
  %6019 = vmatpush1.msra.mxu0 0.0
  %6020 = vmatprep.subr.mxu0 0.0
  %6021 = vmatpush1.msra.mxu0 0.0
  %6022 = vmatprep.subr.mxu0 0.0
  %6023 = vmatpush1.msra.mxu0 0.0
  %6024 = vmatprep.subr.mxu0 0.0
  %6025 = vmatpush1.msra.mxu0 0.0
  %6026 = vmatprep.subr.mxu0 0.0
  %6027 = vmatpush1.msra.mxu0 0.0
  %6028 = vmatprep.subr.mxu0 0.0
  %6029 = vmatpush1.msra.mxu0 0.0
  %6030 = vmatprep.subr.mxu0 0.0
  %6031 = vmatpush1.msra.mxu0 0.0
  %6032 = vmatprep.subr.mxu0 0.0
  %6033 = vmatpush1.msra.mxu0 0.0
  %6034 = vmatprep.subr.mxu0 0.0
  %6035 = vmatpush1.msra.mxu0 0.0
  %6036 = vmatprep.subr.mxu0 0.0
  %6037 = vmatpush1.msra.mxu0 0.0
  %6038 = vmatprep.subr.mxu0 0.0
  %6039 = vmatpush1.msra.mxu0 0.0
  %6040 = vmatprep.subr.mxu0 0.0
  %6041 = vmatpush1.msra.mxu0 0.0
  %6042 = vmatprep.subr.mxu0 0.0
  %6043 = vmatpush1.msra.mxu0 0.0
  %6044 = vmatprep.subr.mxu0 0.0
  %6045 = vmatpush1.msra.mxu0 0.0
  %6046 = vmatprep.subr.mxu0 0.0
  %6047 = vmatpush1.msra.mxu0 0.0
  %6048 = vmatprep.subr.mxu0 0.0
  %6049 = vmatpush1.msra.mxu0 0.0
  %6050 = vmatprep.subr.mxu0 0.0
  %6051 = vmatpush1.msra.mxu0 0.0
  %6052 = vmatprep.subr.mxu0 0.0
  %6053 = vmatpush1.msra.mxu0 0.0
  %6054 = vmatprep.subr.mxu0 0.0
  %6055 = vmatpush1.msra.mxu0 0.0
  %6056 = vmatprep.subr.mxu0 0.0
  %6057 = vmatpush1.msra.mxu0 0.0
  %6058 = vmatprep.subr.mxu0 0.0
  %6059 = vmatpush1.msra.mxu0 0.0
  %6060 = vmatprep.mubr.f32.mxu0 0.0
  %6061 = vmatmul.mubr.f32.gmra.mrb[0].mxu0 %v5994
  %v6062 = vpop.f32.mrb[0].mxu0
  %v6063 = vadd.f32 %v1155, %v6062
  %v6064 = vpop.f32.mrb[0].mxu0
  %6065 = vdwg.mxu0
  %6066 = vmatprep.subr.mxu0 0.0
  %6067 = vmatpush1.msra.mxu0 %v76
  %6068 = vmatprep.subr.mxu0 0.0
  %6069 = vmatpush1.msra.mxu0 %v77
  %6070 = vmatprep.subr.mxu0 0.0
  %6071 = vmatpush1.msra.mxu0 %v78
  %6072 = vmatprep.subr.mxu0 0.0
  %6073 = vmatpush1.msra.mxu0 %v79
  %6074 = vmatprep.subr.mxu0 0.0
  %6075 = vmatpush1.msra.mxu0 0.0
  %6076 = vmatprep.subr.mxu0 0.0
  %6077 = vmatpush1.msra.mxu0 0.0
  %6078 = vmatprep.subr.mxu0 0.0
  %6079 = vmatpush1.msra.mxu0 0.0
  %6080 = vmatprep.subr.mxu0 0.0
  %6081 = vmatpush1.msra.mxu0 0.0
  %6082 = vmatprep.subr.mxu0 0.0
  %6083 = vmatpush1.msra.mxu0 0.0
  %6084 = vmatprep.subr.mxu0 0.0
  %6085 = vmatpush1.msra.mxu0 0.0
  %6086 = vmatprep.subr.mxu0 0.0
  %6087 = vmatpush1.msra.mxu0 0.0
  %6088 = vmatprep.subr.mxu0 0.0
  %6089 = vmatpush1.msra.mxu0 0.0
  %6090 = vmatprep.subr.mxu0 0.0
  %6091 = vmatpush1.msra.mxu0 0.0
  %6092 = vmatprep.subr.mxu0 0.0
  %6093 = vmatpush1.msra.mxu0 0.0
  %6094 = vmatprep.subr.mxu0 0.0
  %6095 = vmatpush1.msra.mxu0 0.0
  %6096 = vmatprep.subr.mxu0 0.0
  %6097 = vmatpush1.msra.mxu0 0.0
  %6098 = vmatprep.subr.mxu0 0.0
  %6099 = vmatpush1.msra.mxu0 0.0
  %6100 = vmatprep.subr.mxu0 0.0
  %6101 = vmatpush1.msra.mxu0 0.0
  %6102 = vmatprep.subr.mxu0 0.0
  %6103 = vmatpush1.msra.mxu0 0.0
  %6104 = vmatprep.subr.mxu0 0.0
  %6105 = vmatpush1.msra.mxu0 0.0
  %6106 = vmatprep.subr.mxu0 0.0
  %6107 = vmatpush1.msra.mxu0 0.0
  %6108 = vmatprep.subr.mxu0 0.0
  %6109 = vmatpush1.msra.mxu0 0.0
  %6110 = vmatprep.subr.mxu0 0.0
  %6111 = vmatpush1.msra.mxu0 0.0
  %6112 = vmatprep.subr.mxu0 0.0
  %6113 = vmatpush1.msra.mxu0 0.0
  %6114 = vmatprep.subr.mxu0 0.0
  %6115 = vmatpush1.msra.mxu0 0.0
  %6116 = vmatprep.subr.mxu0 0.0
  %6117 = vmatpush1.msra.mxu0 0.0
  %6118 = vmatprep.subr.mxu0 0.0
  %6119 = vmatpush1.msra.mxu0 0.0
  %6120 = vmatprep.subr.mxu0 0.0
  %6121 = vmatpush1.msra.mxu0 0.0
  %6122 = vmatprep.subr.mxu0 0.0
  %6123 = vmatpush1.msra.mxu0 0.0
  %6124 = vmatprep.subr.mxu0 0.0
  %6125 = vmatpush1.msra.mxu0 0.0
  %6126 = vmatprep.subr.mxu0 0.0
  %6127 = vmatpush1.msra.mxu0 0.0
  %6128 = vmatprep.subr.mxu0 0.0
  %6129 = vmatpush1.msra.mxu0 0.0
  %6130 = vmatprep.mubr.f32.mxu0 0.0
  %6131 = vmatmul.mubr.f32.gmra.mrb[0].mxu0 %v5745
  %v6132 = vpop.f32.mrb[0].mxu0
  %v6133 = vadd.f32 0.0, %v6132
  %v6134 = vpop.f32.mrb[0].mxu0
  %6135 = vdwg.mxu0
  %v6136 = vadd.f32 %v6063, %v6133
  %v6137 = vxor.u32 %v6136, 2147483648
  %v6138 = vmul.f32 %v6137, 1.442695
  %v6139 = vpow.pop %v6138
  %v6140 = vadd.f32 %v6139, 1.0
  %v6141 = vrcp.pop %v6140
  %v6142 = vmul.f32 1.0, %v6141
  %v6143 = vmul.f32 %v6142, 2.0
  %v6144 = vsub.f32 %v6143, 1.0
  %v6145 = vsel %vm93, %v6144, %v6142
  %v6146 = vmul.f32 %v6145, %v5735
  %6148 = vrot.lane.b32.xlu0 %v6145, 64
  %v6149 = vpop.permute.xlu0 %6148
  %v6151 = vmul.f32 %v6145, %v6149
  %6153 = vrot.lane.b32.xlu0 %v6151, 32
  %v6154 = vpop.permute.xlu0 %6153
  %v6156 = vadd.f32 %v6146, %v6154
  %v6157 = vtanh.pop %v6156
  %6159 = vrot.lane.b32.xlu0 %v6157, 64
  %v6160 = vpop.permute.xlu0 %6159
  %v6162 = vmul.f32 %v6145, %v6160
  %6164 = vrot.lane.b32.xlu0 %v6162, 32
  %v6165 = vpop.permute.xlu0 %6164
  %v6166 = vsel %vm182, %v6165, 0
  %6168 = vmatprep.subr.mxu0 0.0
  %6169 = vmatpush1.msra.mxu0 %v84
  %6170 = vmatprep.subr.mxu0 0.0
  %6171 = vmatpush1.msra.mxu0 %v85
  %6172 = vmatprep.subr.mxu0 0.0
  %6173 = vmatpush1.msra.mxu0 %v86
  %6174 = vmatprep.subr.mxu0 0.0
  %6175 = vmatpush1.msra.mxu0 %v87
  %6176 = vmatprep.subr.mxu0 0.0
  %6177 = vmatpush1.msra.mxu0 0.0
  %6178 = vmatprep.subr.mxu0 0.0
  %6179 = vmatpush1.msra.mxu0 0.0
  %6180 = vmatprep.subr.mxu0 0.0
  %6181 = vmatpush1.msra.mxu0 0.0
  %6182 = vmatprep.subr.mxu0 0.0
  %6183 = vmatpush1.msra.mxu0 0.0
  %6184 = vmatprep.subr.mxu0 0.0
  %6185 = vmatpush1.msra.mxu0 0.0
  %6186 = vmatprep.subr.mxu0 0.0
  %6187 = vmatpush1.msra.mxu0 0.0
  %6188 = vmatprep.subr.mxu0 0.0
  %6189 = vmatpush1.msra.mxu0 0.0
  %6190 = vmatprep.subr.mxu0 0.0
  %6191 = vmatpush1.msra.mxu0 0.0
  %6192 = vmatprep.subr.mxu0 0.0
  %6193 = vmatpush1.msra.mxu0 0.0
  %6194 = vmatprep.subr.mxu0 0.0
  %6195 = vmatpush1.msra.mxu0 0.0
  %6196 = vmatprep.subr.mxu0 0.0
  %6197 = vmatpush1.msra.mxu0 0.0
  %6198 = vmatprep.subr.mxu0 0.0
  %6199 = vmatpush1.msra.mxu0 0.0
  %6200 = vmatprep.subr.mxu0 0.0
  %6201 = vmatpush1.msra.mxu0 0.0
  %6202 = vmatprep.subr.mxu0 0.0
  %6203 = vmatpush1.msra.mxu0 0.0
  %6204 = vmatprep.subr.mxu0 0.0
  %6205 = vmatpush1.msra.mxu0 0.0
  %6206 = vmatprep.subr.mxu0 0.0
  %6207 = vmatpush1.msra.mxu0 0.0
  %6208 = vmatprep.subr.mxu0 0.0
  %6209 = vmatpush1.msra.mxu0 0.0
  %6210 = vmatprep.subr.mxu0 0.0
  %6211 = vmatpush1.msra.mxu0 0.0
  %6212 = vmatprep.subr.mxu0 0.0
  %6213 = vmatpush1.msra.mxu0 0.0
  %6214 = vmatprep.subr.mxu0 0.0
  %6215 = vmatpush1.msra.mxu0 0.0
  %6216 = vmatprep.subr.mxu0 0.0
  %6217 = vmatpush1.msra.mxu0 0.0
  %6218 = vmatprep.subr.mxu0 0.0
  %6219 = vmatpush1.msra.mxu0 0.0
  %6220 = vmatprep.subr.mxu0 0.0
  %6221 = vmatpush1.msra.mxu0 0.0
  %6222 = vmatprep.subr.mxu0 0.0
  %6223 = vmatpush1.msra.mxu0 0.0
  %6224 = vmatprep.subr.mxu0 0.0
  %6225 = vmatpush1.msra.mxu0 0.0
  %6226 = vmatprep.subr.mxu0 0.0
  %6227 = vmatpush1.msra.mxu0 0.0
  %6228 = vmatprep.subr.mxu0 0.0
  %6229 = vmatpush1.msra.mxu0 0.0
  %6230 = vmatprep.subr.mxu0 0.0
  %6231 = vmatpush1.msra.mxu0 0.0
  %6232 = vmatprep.mubr.f32.mxu0 0.0
  %6233 = vmatmul.mubr.f32.gmra.mrb[0].mxu0 %v6166
  %v6234 = vpop.f32.mrb[0].mxu0
  %v6235 = vadd.f32 %v1333, %v6234
  %v6236 = vpop.f32.mrb[0].mxu0
  %6237 = vdwg.mxu0
  %s6238 = scalar_lea.vmem %s15, 56
  %6239 = vst [vmem:[%s6238] sm:$0xff] %v6235
  // Predicated region
  $region62: #{music_generation_forward.1} parent=0 // pred_check
    _
  $region63: #{music_generation_forward.1} parent=0 // pred_check_branch
    %6241 = sbr.rel (0) target = $region65
  $region64: #{music_generation_forward.1} parent=0 // pred_region
    _
  $region65: #{music_generation_forward.1} parent=0 // pred_fallthru
    _
  // Predicated region
  $region66: #{music_generation_forward.1} parent=0 // pred_check
    _
  $region67: #{music_generation_forward.1} parent=0 // pred_check_branch
    %6243 = sbr.rel (0) target = $region69
  $region68: #{music_generation_forward.1} parent=0 // pred_region
    _
  $region69: #{music_generation_forward.1} parent=0 // pred_fallthru
    _

</llo_original>
